<compile_context>
chip_gen: v7x
topology: tpu7x:2x2x1
jax: 0.10.0
libtpu: 0.0.40
codegen_flags: <defaults>
</compile_context>

<pallas_src>
import functools

import jax
import jax.numpy as jnp
from jax.experimental import pallas as pl
from jax.experimental.pallas import tpu as pltpu  # noqa: F401  (kept for TPU-specific params if scaled up)


# ----------------------------------------------------------------------------
# Kernel 1: node embedding (lin0 + ReLU) + fused edge-network MLP
# ----------------------------------------------------------------------------
def _encode_kernel(x_ref, ea_ref, w0_ref, b0_ref, wm1_ref, bm1_ref,
                   wm2_ref, bm2_ref, out0_ref, wflat_ref):
    # out0 = relu(x @ W0_T + b0)                                    [N, D]
    out0_ref[...] = jnp.maximum(
        jnp.dot(x_ref[...], w0_ref[...], preferred_element_type=jnp.float32)
        + b0_ref[...], 0.0)
    # edge network: (relu(edge_attr @ Wm1_T + bm1)) @ Wm2_T + bm2   [E, D*D]
    eh = jnp.maximum(
        jnp.dot(ea_ref[...], wm1_ref[...], preferred_element_type=jnp.float32)
        + bm1_ref[...], 0.0)
    wflat_ref[...] = (
        jnp.dot(eh, wm2_ref[...], preferred_element_type=jnp.float32) + bm2_ref[...])


def encode(x, edge_attr, p):
    n = x.shape[0]
    e = edge_attr.shape[0]
    d = p["b0"].shape[1]
    return pl.pallas_call(
        _encode_kernel,
        out_shape=(jax.ShapeDtypeStruct((n, d), jnp.float32),
                   jax.ShapeDtypeStruct((e, d * d), jnp.float32)),
    )(x, edge_attr, p["W0_T"], p["b0"], p["Wm1_T"], p["bm1"],
      p["Wm2_T"], p["bm2"])


# ----------------------------------------------------------------------------
# Kernel 2: 3x(NNConv-mean + GRU)  ->  3x Set2Set(LSTM + attention)  ->  head
# ----------------------------------------------------------------------------
def _propagate_readout_kernel(out0_ref, wet_ref, gat_ref, inc_ref, convb_ref,
                              gwih_ref, gwhh_ref, gbih_ref, gbhh_ref,
                              oh_ref, oht_ref,
                              lwih_ref, lwhh_ref, lbih_ref, lbhh_ref,
                              wf1_ref, bf1_ref, wf2_ref, bf2_ref,
                              y_ref):
    d = out0_ref.shape[1]
    b = oht_ref.shape[0]

    # ---- loop-invariant loads: stay resident across all iterations ----
    w_et = wet_ref[...]        # [E, D, D] with w_et[e, f, k] = W_e[k, f]
    gat = gat_ref[...]         # [E, N] one-hot(src) gather matrix
    inc = inc_ref[...]         # [N, E] one-hot(dst) / in_degree (mean folded in)
    convb = convb_ref[...]     # [1, D]
    gwih = gwih_ref[...]       # [D, 3D]
    gwhh = gwhh_ref[...]       # [D, 3D]
    gbih = gbih_ref[...]       # [1, 3D]
    gbhh = gbhh_ref[...]       # [1, 3D]

    # ---- MPNN propagation: 3 x (NNConv mean aggregation + GRU cell) ----
    def mpnn_step(_, h):
        x_src = jnp.dot(gat, h, preferred_element_type=jnp.float32)          # [E, D]
        # per-edge message x_j @ W_e  ==  sum_k x_src[e,k] * w_et[e,:,k]
        msgs = jnp.sum(x_src[:, None, :] * w_et, axis=2)                     # [E, D]
        m = jnp.maximum(
            jnp.dot(inc, msgs, preferred_element_type=jnp.float32) + convb, 0.0)  # [N, D]
        # GRU cell (PyTorch gate order r, z, n; b_hn stays inside r * (.))
        gi = jnp.dot(m, gwih, preferred_element_type=jnp.float32) + gbih     # [N, 3D]
        gh = jnp.dot(h, gwhh, preferred_element_type=jnp.float32) + gbhh     # [N, 3D]
        rz = jax.nn.sigmoid(gi[:, :2 * d] + gh[:, :2 * d])                   # [N, 2D]
        r = rz[:, :d]
        z = rz[:, d:]
        ng = jnp.tanh(gi[:, 2 * d:] + r * gh[:, 2 * d:])
        return (1.0 - z) * ng + z * h

    out = jax.lax.fori_loop(0, 3, mpnn_step, out0_ref[...], unroll=True)     # [N, D]

    # ---- Set2Set readout (processing_steps = 3) ----
    oh = oh_ref[...]           # [N, B]
    oht = oht_ref[...]         # [B, N]
    lwih = lwih_ref[...]       # [2D, 4D]
    lwhh = lwhh_ref[...]       # [D, 4D]
    lbias = lbih_ref[...] + lbhh_ref[...]                                    # [1, 4D]
    lwih_q = lwih[:d, :]       # acts on the q (= prev hidden) half of q_star
    lwih_r = lwih[d:, :]       # acts on the r (attention readout) half

    def s2s_step(_, carry):
        hs, cs, r = carry      # q_star == concat([hs, r], axis=-1)
        g = (jnp.dot(hs, lwih_q, preferred_element_type=jnp.float32)
             + jnp.dot(r, lwih_r, preferred_element_type=jnp.float32)
             + jnp.dot(hs, lwhh, preferred_element_type=jnp.float32)
             + lbias)                                                        # [B, 4D]
        sg = jax.nn.sigmoid(g)             # lane-dense sigmoid over full 4D block
        i_g = sg[:, :d]
        f_g = sg[:, d:2 * d]
        g_g = jnp.tanh(g[:, 2 * d:3 * d])
        o_g = sg[:, 3 * d:]
        cs = f_g * cs + i_g * g_g
        hs = o_g * jnp.tanh(cs)
        # per-graph masked softmax attention over nodes
        qn = jnp.dot(oh, hs, preferred_element_type=jnp.float32)             # [N, D]
        e = jnp.sum(out * qn, axis=-1, keepdims=True)                        # [N, 1]
        emask = jnp.where(oh > 0.5, e, -1e30)                                # [N, B]
        emax = jnp.max(emask, axis=0, keepdims=True)                         # [1, B]
        emax_n = jnp.sum(oh * emax, axis=1, keepdims=True)                   # [N, 1]
        ex = jnp.exp(e - emax_n)                                             # [N, 1]
        denom = jnp.dot(oht, ex, preferred_element_type=jnp.float32)         # [B, 1]
        denom_n = jnp.dot(oh, denom, preferred_element_type=jnp.float32)     # [N, 1]
        a = ex / denom_n
        r = jnp.dot(oht, a * out, preferred_element_type=jnp.float32)        # [B, D]
        return hs, cs, r

    init = (jnp.zeros((b, d), jnp.float32),   # h
            jnp.zeros((b, d), jnp.float32),   # c
            jnp.zeros((b, d), jnp.float32))   # r  (q_star starts at zeros)
    hs, _, r = jax.lax.fori_loop(0, 3, s2s_step, init, unroll=True)

    # ---- head: relu(fc1(q_star)) -> fc2  (q_star = [hs, r]) ----
    wf1 = wf1_ref[...]                                                       # [2D, D]
    y1 = jnp.maximum(
        jnp.dot(hs, wf1[:d, :], preferred_element_type=jnp.float32)
        + jnp.dot(r, wf1[d:, :], preferred_element_type=jnp.float32)
        + bf1_ref[...], 0.0)                                                 # [B, D]
    y_ref[...] = (
        jnp.dot(y1, wf2_ref[...], preferred_element_type=jnp.float32) + bf2_ref[...])


def propagate_and_readout(out0, w_et, gat, inc_mean, oh, oht, p):
    b = oht.shape[0]
    return pl.pallas_call(
        _propagate_readout_kernel,
        out_shape=jax.ShapeDtypeStruct((b, 1), jnp.float32),
    )(out0, w_et, gat, inc_mean, p["conv_b"],
      p["gru_Wih_T"], p["gru_Whh_T"], p["gru_bih"], p["gru_bhh"],
      oh, oht,
      p["lstm_Wih_T"], p["lstm_Whh_T"], p["lstm_bih"], p["lstm_bhh"],
      p["Wf1_T"], p["bf1"], p["Wf2_T"], p["bf2"])


# ----------------------------------------------------------------------------
# Parameter init (deterministic, mirrors module shapes; xavier for Linears,
# zero bias as in init_emb; uniform(-1/sqrt(d), 1/sqrt(d)) for RNN/conv bias).
# Stored pre-transposed ([in, out]) and biases as [1, out] -> no per-forward .T
# ----------------------------------------------------------------------------
def _xavier_uniform(key, shape):
    fan_out, fan_in = shape
    limit = (6.0 / (fan_in + fan_out)) ** 0.5
    return jax.random.uniform(key, shape, jnp.float32, -limit, limit)


def _uniform_pm(key, shape, bound):
    return jax.random.uniform(key, shape, jnp.float32, -bound, bound)


def init_params(key, num_features, dim):
    d = dim
    ks = jax.random.split(key, 14)
    bnd = 1.0 / (d ** 0.5)
    # Column permutation so that the edge-MLP output, reshaped as [E, D, D],
    # directly holds W_e transposed: w_flat.reshape(E,D,D)[e, f, k] == W_e[k, f].
    # (Equivalent reparametrization of w_flat.view(E, D_in, D_out); applied to
    #  the i.i.d. random init it does not change the model class.)
    perm = jnp.arange(d * d).reshape(d, d).T.reshape(-1)
    p = {
        "W0_T": _xavier_uniform(ks[0], (d, num_features)).T,           # [F, D]
        "b0": jnp.zeros((1, d), jnp.float32),
        "Wm1_T": _xavier_uniform(ks[1], (128, 5)).T,                   # [5, 128]
        "bm1": jnp.zeros((1, 128), jnp.float32),
        "Wm2_T": _xavier_uniform(ks[2], (d * d, 128)).T[:, perm],      # [128, D*D] (permuted)
        "bm2": jnp.zeros((1, d * d), jnp.float32),                     # zeros -> perm is a no-op
        "conv_b": _uniform_pm(ks[3], (1, d), bnd),
        "gru_Wih_T": _uniform_pm(ks[4], (3 * d, d), bnd).T,            # [D, 3D]
        "gru_Whh_T": _uniform_pm(ks[5], (3 * d, d), bnd).T,            # [D, 3D]
        "gru_bih": _uniform_pm(ks[6], (1, 3 * d), bnd),
        "gru_bhh": _uniform_pm(ks[7], (1, 3 * d), bnd),
        "lstm_Wih_T": _uniform_pm(ks[8], (4 * d, 2 * d), bnd).T,       # [2D, 4D]
        "lstm_Whh_T": _uniform_pm(ks[9], (4 * d, d), bnd).T,           # [D, 4D]
        "lstm_bih": _uniform_pm(ks[10], (1, 4 * d), bnd),
        "lstm_bhh": _uniform_pm(ks[11], (1, 4 * d), bnd),
        "Wf1_T": _xavier_uniform(ks[12], (d, 2 * d)).T,                # [2D, D]
        "bf1": jnp.zeros((1, d), jnp.float32),
        "Wf2_T": _xavier_uniform(ks[13], (1, d)).T,                    # [D, 1]
        "bf2": jnp.zeros((1, 1), jnp.float32),
    }
    return p


# ----------------------------------------------------------------------------
# Forward pass (Net.forward)
# ----------------------------------------------------------------------------
def net_forward(params, x, edge_index, edge_attr, batch, *, num_graphs):
    n = x.shape[0]
    e = edge_attr.shape[0]
    d = params["b0"].shape[1]
    src = edge_index[0]
    dst = edge_index[1]

    # Graph-structure matrices: built ONCE per forward (loop-invariant glue).
    gat = (src[:, None] == jnp.arange(n)[None, :]).astype(jnp.float32)        # [E, N]
    inc = (dst[None, :] == jnp.arange(n)[:, None]).astype(jnp.float32)        # [N, E]
    inc_mean = inc / jnp.maximum(jnp.sum(inc, axis=1, keepdims=True), 1.0)    # mean folded in
    oh = (batch[:, None] == jnp.arange(num_graphs)[None, :]).astype(jnp.float32)  # [N, B]
    oht = oh.T                                                                # [B, N]

    # Kernel 1: relu(lin0(x)) + fused edge-network MLP.
    out0, w_flat = encode(x, edge_attr, params)
    w_et = w_flat.reshape(e, d, d)     # [E, D, D], w_et[e, f, k] == W_e[k, f] (see init)

    # Kernel 2: fused 3-step NNConv(mean)+GRU, 3-step Set2Set, fc1/relu/fc2.
    y = propagate_and_readout(out0, w_et, gat, inc_mean, oh, oht, params)     # [B, 1]
    return y.reshape(-1)                                                      # [B]


# ----------------------------------------------------------------------------
if __name__ == "__main__":
    NUM_FEATURES = 16
    DIM = 32
    N_NODES = 10          # 5 nodes per graph
    NUM_GRAPHS = 2
    E_PER_GRAPH = 12
    E_TOTAL = 2 * E_PER_GRAPH

    key = jax.random.PRNGKey(0)
    kx, ks0, kd0, ks1, kd1, ka, kp = jax.random.split(key, 7)

    x = jax.random.normal(kx, (N_NODES, NUM_FEATURES), jnp.float32)
    src0 = jax.random.randint(ks0, (E_PER_GRAPH,), 0, 5)
    dst0 = jax.random.randint(kd0, (E_PER_GRAPH,), 0, 5)
    src1 = jax.random.randint(ks1, (E_PER_GRAPH,), 5, 10)
    dst1 = jax.random.randint(kd1, (E_PER_GRAPH,), 5, 10)
    edge_index = jnp.stack([jnp.concatenate([src0, src1]),
                            jnp.concatenate([dst0, dst1])], axis=0).astype(jnp.int32)
    edge_attr = jax.random.normal(ka, (E_TOTAL, 5), jnp.float32)
    batch = jnp.array([0] * 5 + [1] * 5, jnp.int32)

    params = init_params(kp, NUM_FEATURES, DIM)

    fwd = jax.jit(functools.partial(net_forward, num_graphs=NUM_GRAPHS))
    y = fwd(params, x, edge_index, edge_attr, batch)
    y = jax.block_until_ready(y)
    assert y.shape == (NUM_GRAPHS,)
    print("KERNEL_OK")
</pallas_src>

<mosaic_0001>
module attributes {stable_mosaic.version = 11 : i64} {
  func.func @_encode_kernel(%arg0: memref<10x16xf32, #tpu.memory_space<vmem>>, %arg1: memref<24x5xf32, #tpu.memory_space<vmem>>, %arg2: memref<16x32xf32, #tpu.memory_space<vmem>>, %arg3: memref<1x32xf32, #tpu.memory_space<vmem>>, %arg4: memref<5x128xf32, #tpu.memory_space<vmem>>, %arg5: memref<1x128xf32, #tpu.memory_space<vmem>>, %arg6: memref<128x1024xf32, #tpu.memory_space<vmem>>, %arg7: memref<1x1024xf32, #tpu.memory_space<vmem>>, %arg8: memref<10x32xf32, #tpu.memory_space<vmem>>, %arg9: memref<24x1024xf32, #tpu.memory_space<vmem>>) attributes {dimension_semantics = [], scalar_prefetch = 0 : i64, scratch_operands = 0 : i64, tpu.core_type = #tpu.core_type<tc>} {
    %c0 = arith.constant 0 : index
    %c0_0 = arith.constant 0 : index
    %0 = vector.load %arg0[%c0, %c0_0] : memref<10x16xf32, #tpu.memory_space<vmem>>, vector<10x16xf32>
    %c0_1 = arith.constant 0 : index
    %c0_2 = arith.constant 0 : index
    %1 = vector.load %arg2[%c0_1, %c0_2] : memref<16x32xf32, #tpu.memory_space<vmem>>, vector<16x32xf32>
    %cst = arith.constant dense<0.000000e+00> : vector<10x32xf32>
    %2 = tpu.matmul %0, %1, %cst {dimension_numbers = #tpu.dot_dimension_numbers<[1], [0], [0], [1], [0, 0, 1, 1], [], []>} : vector<10x16xf32>, vector<16x32xf32>, vector<10x32xf32> -> vector<10x32xf32>
    %c0_3 = arith.constant 0 : index
    %c0_4 = arith.constant 0 : index
    %3 = vector.load %arg3[%c0_3, %c0_4] : memref<1x32xf32, #tpu.memory_space<vmem>>, vector<1x32xf32>
    %4 = vector.broadcast %3 : vector<1x32xf32> to vector<10x32xf32>
    %5 = arith.addf %2, %4 : vector<10x32xf32>
    %cst_5 = arith.constant 0.000000e+00 : f32
    %6 = vector.broadcast %cst_5 : f32 to vector<10x32xf32>
    %7 = arith.maximumf %5, %6 : vector<10x32xf32>
    %c0_6 = arith.constant 0 : index
    %c0_7 = arith.constant 0 : index
    %8 = vector.load %arg8[%c0_6, %c0_7] : memref<10x32xf32, #tpu.memory_space<vmem>>, vector<10x32xf32>
    tpu.vector_store %arg8[%c0_6, %c0_7], %7 {strides = array<i32>} : memref<10x32xf32, #tpu.memory_space<vmem>>, vector<10x32xf32>,
    %c0_8 = arith.constant 0 : index
    %c0_9 = arith.constant 0 : index
    %9 = vector.load %arg1[%c0_8, %c0_9] : memref<24x5xf32, #tpu.memory_space<vmem>>, vector<24x5xf32>
    %c0_10 = arith.constant 0 : index
    %c0_11 = arith.constant 0 : index
    %10 = vector.load %arg4[%c0_10, %c0_11] : memref<5x128xf32, #tpu.memory_space<vmem>>, vector<5x128xf32>
    %cst_12 = arith.constant dense<0.000000e+00> : vector<24x128xf32>
    %11 = tpu.matmul %9, %10, %cst_12 {dimension_numbers = #tpu.dot_dimension_numbers<[1], [0], [0], [1], [0, 0, 1, 1], [], []>} : vector<24x5xf32>, vector<5x128xf32>, vector<24x128xf32> -> vector<24x128xf32>
    %c0_13 = arith.constant 0 : index
    %c0_14 = arith.constant 0 : index
    %12 = vector.load %arg5[%c0_13, %c0_14] : memref<1x128xf32, #tpu.memory_space<vmem>>, vector<1x128xf32>
    %13 = vector.broadcast %12 : vector<1x128xf32> to vector<24x128xf32>
    %14 = arith.addf %11, %13 : vector<24x128xf32>
    %cst_15 = arith.constant 0.000000e+00 : f32
    %15 = vector.broadcast %cst_15 : f32 to vector<24x128xf32>
    %16 = arith.maximumf %14, %15 : vector<24x128xf32>
    %c0_16 = arith.constant 0 : index
    %c0_17 = arith.constant 0 : index
    %17 = vector.load %arg6[%c0_16, %c0_17] : memref<128x1024xf32, #tpu.memory_space<vmem>>, vector<128x1024xf32>
    %cst_18 = arith.constant dense<0.000000e+00> : vector<24x1024xf32>
    %18 = tpu.matmul %16, %17, %cst_18 {dimension_numbers = #tpu.dot_dimension_numbers<[1], [0], [0], [1], [0, 0, 1, 1], [], []>} : vector<24x128xf32>, vector<128x1024xf32>, vector<24x1024xf32> -> vector<24x1024xf32>
    %c0_19 = arith.constant 0 : index
    %c0_20 = arith.constant 0 : index
    %19 = vector.load %arg7[%c0_19, %c0_20] : memref<1x1024xf32, #tpu.memory_space<vmem>>, vector<1x1024xf32>
    %20 = vector.broadcast %19 : vector<1x1024xf32> to vector<24x1024xf32>
    %21 = arith.addf %18, %20 : vector<24x1024xf32>
    %c0_21 = arith.constant 0 : index
    %c0_22 = arith.constant 0 : index
    %22 = vector.load %arg9[%c0_21, %c0_22] : memref<24x1024xf32, #tpu.memory_space<vmem>>, vector<24x1024xf32>
    tpu.vector_store %arg9[%c0_21, %c0_22], %21 {strides = array<i32>} : memref<24x1024xf32, #tpu.memory_space<vmem>>, vector<24x1024xf32>,
    return
  }
}

module attributes {stable_mosaic.version = 11 : i64} {
  func.func @_propagate_readout_kernel(%arg0: memref<10x32xf32, #tpu.memory_space<vmem>>, %arg1: memref<24x32x32xf32, #tpu.memory_space<vmem>>, %arg2: memref<24x10xf32, #tpu.memory_space<vmem>>, %arg3: memref<10x24xf32, #tpu.memory_space<vmem>>, %arg4: memref<1x32xf32, #tpu.memory_space<vmem>>, %arg5: memref<32x96xf32, #tpu.memory_space<vmem>>, %arg6: memref<32x96xf32, #tpu.memory_space<vmem>>, %arg7: memref<1x96xf32, #tpu.memory_space<vmem>>, %arg8: memref<1x96xf32, #tpu.memory_space<vmem>>, %arg9: memref<10x2xf32, #tpu.memory_space<vmem>>, %arg10: memref<2x10xf32, #tpu.memory_space<vmem>>, %arg11: memref<64x128xf32, #tpu.memory_space<vmem>>, %arg12: memref<32x128xf32, #tpu.memory_space<vmem>>, %arg13: memref<1x128xf32, #tpu.memory_space<vmem>>, %arg14: memref<1x128xf32, #tpu.memory_space<vmem>>, %arg15: memref<64x32xf32, #tpu.memory_space<vmem>>, %arg16: memref<1x32xf32, #tpu.memory_space<vmem>>, %arg17: memref<32x1xf32, #tpu.memory_space<vmem>>, %arg18: memref<1x1xf32, #tpu.memory_space<vmem>>, %arg19: memref<2x1xf32, #tpu.memory_space<vmem>>) attributes {dimension_semantics = [], scalar_prefetch = 0 : i64, scratch_operands = 0 : i64, tpu.core_type = #tpu.core_type<tc>} {
    %c0 = arith.constant 0 : index
    %c0_0 = arith.constant 0 : index
    %c0_1 = arith.constant 0 : index
    %0 = vector.load %arg1[%c0, %c0_0, %c0_1] : memref<24x32x32xf32, #tpu.memory_space<vmem>>, vector<24x32x32xf32>
    %c0_2 = arith.constant 0 : index
    %c0_3 = arith.constant 0 : index
    %1 = vector.load %arg2[%c0_2, %c0_3] : memref<24x10xf32, #tpu.memory_space<vmem>>, vector<24x10xf32>
    %c0_4 = arith.constant 0 : index
    %c0_5 = arith.constant 0 : index
    %2 = vector.load %arg3[%c0_4, %c0_5] : memref<10x24xf32, #tpu.memory_space<vmem>>, vector<10x24xf32>
    %c0_6 = arith.constant 0 : index
    %c0_7 = arith.constant 0 : index
    %3 = vector.load %arg4[%c0_6, %c0_7] : memref<1x32xf32, #tpu.memory_space<vmem>>, vector<1x32xf32>
    %c0_8 = arith.constant 0 : index
    %c0_9 = arith.constant 0 : index
    %4 = vector.load %arg5[%c0_8, %c0_9] : memref<32x96xf32, #tpu.memory_space<vmem>>, vector<32x96xf32>
    %c0_10 = arith.constant 0 : index
    %c0_11 = arith.constant 0 : index
    %5 = vector.load %arg6[%c0_10, %c0_11] : memref<32x96xf32, #tpu.memory_space<vmem>>, vector<32x96xf32>
    %c0_12 = arith.constant 0 : index
    %c0_13 = arith.constant 0 : index
    %6 = vector.load %arg7[%c0_12, %c0_13] : memref<1x96xf32, #tpu.memory_space<vmem>>, vector<1x96xf32>
    %c0_14 = arith.constant 0 : index
    %c0_15 = arith.constant 0 : index
    %7 = vector.load %arg8[%c0_14, %c0_15] : memref<1x96xf32, #tpu.memory_space<vmem>>, vector<1x96xf32>
    %c0_16 = arith.constant 0 : index
    %c0_17 = arith.constant 0 : index
    %8 = vector.load %arg0[%c0_16, %c0_17] : memref<10x32xf32, #tpu.memory_space<vmem>>, vector<10x32xf32>
    %c0_i32 = arith.constant 0 : i32
    %cst = arith.constant dense<0.000000e+00> : vector<24x32xf32>
    %9 = tpu.matmul %1, %8, %cst {dimension_numbers = #tpu.dot_dimension_numbers<[1], [0], [0], [1], [0, 0, 1, 1], [], []>} : vector<24x10xf32>, vector<10x32xf32>, vector<24x32xf32> -> vector<24x32xf32>
    %10 = vector.shape_cast %9 : vector<24x32xf32> to vector<24x1x32xf32>
    %11 = vector.broadcast %10 : vector<24x1x32xf32> to vector<24x32x32xf32>
    %12 = arith.mulf %11, %0 : vector<24x32x32xf32>
    %cst_18 = arith.constant dense<0.000000e+00> : vector<24x32xf32>
    %13 = vector.multi_reduction <add>, %12, %cst_18 [2] : vector<24x32x32xf32> to vector<24x32xf32>
    %cst_19 = arith.constant dense<0.000000e+00> : vector<10x32xf32>
    %14 = tpu.matmul %2, %13, %cst_19 {dimension_numbers = #tpu.dot_dimension_numbers<[1], [0], [0], [1], [0, 0, 1, 1], [], []>} : vector<10x24xf32>, vector<24x32xf32>, vector<10x32xf32> -> vector<10x32xf32>
    %15 = vector.broadcast %3 : vector<1x32xf32> to vector<10x32xf32>
    %16 = arith.addf %14, %15 : vector<10x32xf32>
    %cst_20 = arith.constant 0.000000e+00 : f32
    %17 = vector.broadcast %cst_20 : f32 to vector<10x32xf32>
    %18 = arith.maximumf %16, %17 : vector<10x32xf32>
    %cst_21 = arith.constant dense<0.000000e+00> : vector<10x96xf32>
    %19 = tpu.matmul %18, %4, %cst_21 {dimension_numbers = #tpu.dot_dimension_numbers<[1], [0], [0], [1], [0, 0, 1, 1], [], []>} : vector<10x32xf32>, vector<32x96xf32>, vector<10x96xf32> -> vector<10x96xf32>
    %20 = vector.broadcast %6 : vector<1x96xf32> to vector<10x96xf32>
    %21 = arith.addf %19, %20 : vector<10x96xf32>
    %cst_22 = arith.constant dense<0.000000e+00> : vector<10x96xf32>
    %22 = tpu.matmul %8, %5, %cst_22 {dimension_numbers = #tpu.dot_dimension_numbers<[1], [0], [0], [1], [0, 0, 1, 1], [], []>} : vector<10x32xf32>, vector<32x96xf32>, vector<10x96xf32> -> vector<10x96xf32>
    %23 = vector.broadcast %7 : vector<1x96xf32> to vector<10x96xf32>
    %24 = arith.addf %22, %23 : vector<10x96xf32>
    %25 = vector.extract_strided_slice %21 {offsets = [0, 0], sizes = [10, 64], strides = [1, 1]} : vector<10x96xf32> to vector<10x64xf32>
    %26 = vector.extract_strided_slice %24 {offsets = [0, 0], sizes = [10, 64], strides = [1, 1]} : vector<10x96xf32> to vector<10x64xf32>
    %27 = arith.addf %25, %26 : vector<10x64xf32>
    %28 = arith.negf %27 : vector<10x64xf32>
    %29 = math.exp %28 : vector<10x64xf32>
    %cst_23 = arith.constant 1.000000e+00 : f32
    %30 = vector.broadcast %cst_23 : f32 to vector<10x64xf32>
    %31 = arith.addf %30, %29 : vector<10x64xf32>
    %32 = arith.divf %30, %31 : vector<10x64xf32>
    %33 = vector.extract_strided_slice %32 {offsets = [0, 0], sizes = [10, 32], strides = [1, 1]} : vector<10x64xf32> to vector<10x32xf32>
    %34 = vector.extract_strided_slice %32 {offsets = [0, 32], sizes = [10, 32], strides = [1, 1]} : vector<10x64xf32> to vector<10x32xf32>
    %35 = vector.extract_strided_slice %21 {offsets = [0, 64], sizes = [10, 32], strides = [1, 1]} : vector<10x96xf32> to vector<10x32xf32>
    %36 = vector.extract_strided_slice %24 {offsets = [0, 64], sizes = [10, 32], strides = [1, 1]} : vector<10x96xf32> to vector<10x32xf32>
    %37 = arith.mulf %33, %36 : vector<10x32xf32>
    %38 = arith.addf %35, %37 : vector<10x32xf32>
    %39 = math.tanh %38 : vector<10x32xf32>
    %cst_24 = arith.constant 1.000000e+00 : f32
    %40 = vector.broadcast %cst_24 : f32 to vector<10x32xf32>
    %41 = arith.subf %40, %34 : vector<10x32xf32>
    %42 = arith.mulf %41, %39 : vector<10x32xf32>
    %43 = arith.mulf %34, %8 : vector<10x32xf32>
    %44 = arith.addf %42, %43 : vector<10x32xf32>
    %c1_i32 = arith.constant 1 : i32
    %cst_25 = arith.constant dense<0.000000e+00> : vector<24x32xf32>
    %45 = tpu.matmul %1, %44, %cst_25 {dimension_numbers = #tpu.dot_dimension_numbers<[1], [0], [0], [1], [0, 0, 1, 1], [], []>} : vector<24x10xf32>, vector<10x32xf32>, vector<24x32xf32> -> vector<24x32xf32>
    %46 = vector.shape_cast %45 : vector<24x32xf32> to vector<24x1x32xf32>
    %47 = vector.broadcast %46 : vector<24x1x32xf32> to vector<24x32x32xf32>
    %48 = arith.mulf %47, %0 : vector<24x32x32xf32>
    %cst_26 = arith.constant dense<0.000000e+00> : vector<24x32xf32>
    %49 = vector.multi_reduction <add>, %48, %cst_26 [2] : vector<24x32x32xf32> to vector<24x32xf32>
    %cst_27 = arith.constant dense<0.000000e+00> : vector<10x32xf32>
    %50 = tpu.matmul %2, %49, %cst_27 {dimension_numbers = #tpu.dot_dimension_numbers<[1], [0], [0], [1], [0, 0, 1, 1], [], []>} : vector<10x24xf32>, vector<24x32xf32>, vector<10x32xf32> -> vector<10x32xf32>
    %51 = vector.broadcast %3 : vector<1x32xf32> to vector<10x32xf32>
    %52 = arith.addf %50, %51 : vector<10x32xf32>
    %cst_28 = arith.constant 0.000000e+00 : f32
    %53 = vector.broadcast %cst_28 : f32 to vector<10x32xf32>
    %54 = arith.maximumf %52, %53 : vector<10x32xf32>
    %cst_29 = arith.constant dense<0.000000e+00> : vector<10x96xf32>
    %55 = tpu.matmul %54, %4, %cst_29 {dimension_numbers = #tpu.dot_dimension_numbers<[1], [0], [0], [1], [0, 0, 1, 1], [], []>} : vector<10x32xf32>, vector<32x96xf32>, vector<10x96xf32> -> vector<10x96xf32>
    %56 = vector.broadcast %6 : vector<1x96xf32> to vector<10x96xf32>
    %57 = arith.addf %55, %56 : vector<10x96xf32>
    %cst_30 = arith.constant dense<0.000000e+00> : vector<10x96xf32>
    %58 = tpu.matmul %44, %5, %cst_30 {dimension_numbers = #tpu.dot_dimension_numbers<[1], [0], [0], [1], [0, 0, 1, 1], [], []>} : vector<10x32xf32>, vector<32x96xf32>, vector<10x96xf32> -> vector<10x96xf32>
    %59 = vector.broadcast %7 : vector<1x96xf32> to vector<10x96xf32>
    %60 = arith.addf %58, %59 : vector<10x96xf32>
    %61 = vector.extract_strided_slice %57 {offsets = [0, 0], sizes = [10, 64], strides = [1, 1]} : vector<10x96xf32> to vector<10x64xf32>
    %62 = vector.extract_strided_slice %60 {offsets = [0, 0], sizes = [10, 64], strides = [1, 1]} : vector<10x96xf32> to vector<10x64xf32>
    %63 = arith.addf %61, %62 : vector<10x64xf32>
    %64 = arith.negf %63 : vector<10x64xf32>
    %65 = math.exp %64 : vector<10x64xf32>
    %cst_31 = arith.constant 1.000000e+00 : f32
    %66 = vector.broadcast %cst_31 : f32 to vector<10x64xf32>
    %67 = arith.addf %66, %65 : vector<10x64xf32>
    %68 = arith.divf %66, %67 : vector<10x64xf32>
    %69 = vector.extract_strided_slice %68 {offsets = [0, 0], sizes = [10, 32], strides = [1, 1]} : vector<10x64xf32> to vector<10x32xf32>
    %70 = vector.extract_strided_slice %68 {offsets = [0, 32], sizes = [10, 32], strides = [1, 1]} : vector<10x64xf32> to vector<10x32xf32>
    %71 = vector.extract_strided_slice %57 {offsets = [0, 64], sizes = [10, 32], strides = [1, 1]} : vector<10x96xf32> to vector<10x32xf32>
    %72 = vector.extract_strided_slice %60 {offsets = [0, 64], sizes = [10, 32], strides = [1, 1]} : vector<10x96xf32> to vector<10x32xf32>
    %73 = arith.mulf %69, %72 : vector<10x32xf32>
    %74 = arith.addf %71, %73 : vector<10x32xf32>
    %75 = math.tanh %74 : vector<10x32xf32>
    %cst_32 = arith.constant 1.000000e+00 : f32
    %76 = vector.broadcast %cst_32 : f32 to vector<10x32xf32>
    %77 = arith.subf %76, %70 : vector<10x32xf32>
    %78 = arith.mulf %77, %75 : vector<10x32xf32>
    %79 = arith.mulf %70, %44 : vector<10x32xf32>
    %80 = arith.addf %78, %79 : vector<10x32xf32>
    %c2_i32 = arith.constant 2 : i32
    %cst_33 = arith.constant dense<0.000000e+00> : vector<24x32xf32>
    %81 = tpu.matmul %1, %80, %cst_33 {dimension_numbers = #tpu.dot_dimension_numbers<[1], [0], [0], [1], [0, 0, 1, 1], [], []>} : vector<24x10xf32>, vector<10x32xf32>, vector<24x32xf32> -> vector<24x32xf32>
    %82 = vector.shape_cast %81 : vector<24x32xf32> to vector<24x1x32xf32>
    %83 = vector.broadcast %82 : vector<24x1x32xf32> to vector<24x32x32xf32>
    %84 = arith.mulf %83, %0 : vector<24x32x32xf32>
    %cst_34 = arith.constant dense<0.000000e+00> : vector<24x32xf32>
    %85 = vector.multi_reduction <add>, %84, %cst_34 [2] : vector<24x32x32xf32> to vector<24x32xf32>
    %cst_35 = arith.constant dense<0.000000e+00> : vector<10x32xf32>
    %86 = tpu.matmul %2, %85, %cst_35 {dimension_numbers = #tpu.dot_dimension_numbers<[1], [0], [0], [1], [0, 0, 1, 1], [], []>} : vector<10x24xf32>, vector<24x32xf32>, vector<10x32xf32> -> vector<10x32xf32>
    %87 = vector.broadcast %3 : vector<1x32xf32> to vector<10x32xf32>
    %88 = arith.addf %86, %87 : vector<10x32xf32>
    %cst_36 = arith.constant 0.000000e+00 : f32
    %89 = vector.broadcast %cst_36 : f32 to vector<10x32xf32>
    %90 = arith.maximumf %88, %89 : vector<10x32xf32>
    %cst_37 = arith.constant dense<0.000000e+00> : vector<10x96xf32>
    %91 = tpu.matmul %90, %4, %cst_37 {dimension_numbers = #tpu.dot_dimension_numbers<[1], [0], [0], [1], [0, 0, 1, 1], [], []>} : vector<10x32xf32>, vector<32x96xf32>, vector<10x96xf32> -> vector<10x96xf32>
    %92 = vector.broadcast %6 : vector<1x96xf32> to vector<10x96xf32>
    %93 = arith.addf %91, %92 : vector<10x96xf32>
    %cst_38 = arith.constant dense<0.000000e+00> : vector<10x96xf32>
    %94 = tpu.matmul %80, %5, %cst_38 {dimension_numbers = #tpu.dot_dimension_numbers<[1], [0], [0], [1], [0, 0, 1, 1], [], []>} : vector<10x32xf32>, vector<32x96xf32>, vector<10x96xf32> -> vector<10x96xf32>
    %95 = vector.broadcast %7 : vector<1x96xf32> to vector<10x96xf32>
    %96 = arith.addf %94, %95 : vector<10x96xf32>
    %97 = vector.extract_strided_slice %93 {offsets = [0, 0], sizes = [10, 64], strides = [1, 1]} : vector<10x96xf32> to vector<10x64xf32>
    %98 = vector.extract_strided_slice %96 {offsets = [0, 0], sizes = [10, 64], strides = [1, 1]} : vector<10x96xf32> to vector<10x64xf32>
    %99 = arith.addf %97, %98 : vector<10x64xf32>
    %100 = arith.negf %99 : vector<10x64xf32>
    %101 = math.exp %100 : vector<10x64xf32>
    %cst_39 = arith.constant 1.000000e+00 : f32
    %102 = vector.broadcast %cst_39 : f32 to vector<10x64xf32>
    %103 = arith.addf %102, %101 : vector<10x64xf32>
    %104 = arith.divf %102, %103 : vector<10x64xf32>
    %105 = vector.extract_strided_slice %104 {offsets = [0, 0], sizes = [10, 32], strides = [1, 1]} : vector<10x64xf32> to vector<10x32xf32>
    %106 = vector.extract_strided_slice %104 {offsets = [0, 32], sizes = [10, 32], strides = [1, 1]} : vector<10x64xf32> to vector<10x32xf32>
    %107 = vector.extract_strided_slice %93 {offsets = [0, 64], sizes = [10, 32], strides = [1, 1]} : vector<10x96xf32> to vector<10x32xf32>
    %108 = vector.extract_strided_slice %96 {offsets = [0, 64], sizes = [10, 32], strides = [1, 1]} : vector<10x96xf32> to vector<10x32xf32>
    %109 = arith.mulf %105, %108 : vector<10x32xf32>
    %110 = arith.addf %107, %109 : vector<10x32xf32>
    %111 = math.tanh %110 : vector<10x32xf32>
    %cst_40 = arith.constant 1.000000e+00 : f32
    %112 = vector.broadcast %cst_40 : f32 to vector<10x32xf32>
    %113 = arith.subf %112, %106 : vector<10x32xf32>
    %114 = arith.mulf %113, %111 : vector<10x32xf32>
    %115 = arith.mulf %106, %80 : vector<10x32xf32>
    %116 = arith.addf %114, %115 : vector<10x32xf32>
    %c0_41 = arith.constant 0 : index
    %c0_42 = arith.constant 0 : index
    %117 = vector.load %arg9[%c0_41, %c0_42] : memref<10x2xf32, #tpu.memory_space<vmem>>, vector<10x2xf32>
    %c0_43 = arith.constant 0 : index
    %c0_44 = arith.constant 0 : index
    %118 = vector.load %arg10[%c0_43, %c0_44] : memref<2x10xf32, #tpu.memory_space<vmem>>, vector<2x10xf32>
    %c0_45 = arith.constant 0 : index
    %c0_46 = arith.constant 0 : index
    %119 = vector.load %arg11[%c0_45, %c0_46] : memref<64x128xf32, #tpu.memory_space<vmem>>, vector<64x128xf32>
    %c0_47 = arith.constant 0 : index
    %c0_48 = arith.constant 0 : index
    %120 = vector.load %arg12[%c0_47, %c0_48] : memref<32x128xf32, #tpu.memory_space<vmem>>, vector<32x128xf32>
    %c0_49 = arith.constant 0 : index
    %c0_50 = arith.constant 0 : index
    %121 = vector.load %arg13[%c0_49, %c0_50] : memref<1x128xf32, #tpu.memory_space<vmem>>, vector<1x128xf32>
    %c0_51 = arith.constant 0 : index
    %c0_52 = arith.constant 0 : index
    %122 = vector.load %arg14[%c0_51, %c0_52] : memref<1x128xf32, #tpu.memory_space<vmem>>, vector<1x128xf32>
    %123 = arith.addf %121, %122 : vector<1x128xf32>
    %124 = vector.extract_strided_slice %119 {offsets = [0, 0], sizes = [32, 128], strides = [1, 1]} : vector<64x128xf32> to vector<32x128xf32>
    %125 = vector.extract_strided_slice %119 {offsets = [32, 0], sizes = [32, 128], strides = [1, 1]} : vector<64x128xf32> to vector<32x128xf32>
    %cst_53 = arith.constant 0.000000e+00 : f32
    %126 = vector.broadcast %cst_53 : f32 to vector<2x32xf32>
    %cst_54 = arith.constant 0.000000e+00 : f32
    %127 = vector.broadcast %cst_54 : f32 to vector<2x32xf32>
    %cst_55 = arith.constant 0.000000e+00 : f32
    %128 = vector.broadcast %cst_55 : f32 to vector<2x32xf32>
    %c0_i32_56 = arith.constant 0 : i32
    %cst_57 = arith.constant dense<0.000000e+00> : vector<2x128xf32>
    %129 = tpu.matmul %126, %124, %cst_57 {dimension_numbers = #tpu.dot_dimension_numbers<[1], [0], [0], [1], [0, 0, 1, 1], [], []>} : vector<2x32xf32>, vector<32x128xf32>, vector<2x128xf32> -> vector<2x128xf32>
    %cst_58 = arith.constant dense<0.000000e+00> : vector<2x128xf32>
    %130 = tpu.matmul %128, %125, %cst_58 {dimension_numbers = #tpu.dot_dimension_numbers<[1], [0], [0], [1], [0, 0, 1, 1], [], []>} : vector<2x32xf32>, vector<32x128xf32>, vector<2x128xf32> -> vector<2x128xf32>
    %131 = arith.addf %129, %130 : vector<2x128xf32>
    %cst_59 = arith.constant dense<0.000000e+00> : vector<2x128xf32>
    %132 = tpu.matmul %126, %120, %cst_59 {dimension_numbers = #tpu.dot_dimension_numbers<[1], [0], [0], [1], [0, 0, 1, 1], [], []>} : vector<2x32xf32>, vector<32x128xf32>, vector<2x128xf32> -> vector<2x128xf32>
    %133 = arith.addf %131, %132 : vector<2x128xf32>
    %134 = vector.broadcast %123 : vector<1x128xf32> to vector<2x128xf32>
    %135 = arith.addf %133, %134 : vector<2x128xf32>
    %136 = arith.negf %135 : vector<2x128xf32>
    %137 = math.exp %136 : vector<2x128xf32>
    %cst_60 = arith.constant 1.000000e+00 : f32
    %138 = vector.broadcast %cst_60 : f32 to vector<2x128xf32>
    %139 = arith.addf %138, %137 : vector<2x128xf32>
    %140 = arith.divf %138, %139 : vector<2x128xf32>
    %141 = vector.extract_strided_slice %140 {offsets = [0, 0], sizes = [2, 32], strides = [1, 1]} : vector<2x128xf32> to vector<2x32xf32>
    %142 = vector.extract_strided_slice %140 {offsets = [0, 32], sizes = [2, 32], strides = [1, 1]} : vector<2x128xf32> to vector<2x32xf32>
    %143 = vector.extract_strided_slice %135 {offsets = [0, 64], sizes = [2, 32], strides = [1, 1]} : vector<2x128xf32> to vector<2x32xf32>
    %144 = math.tanh %143 : vector<2x32xf32>
    %145 = vector.extract_strided_slice %140 {offsets = [0, 96], sizes = [2, 32], strides = [1, 1]} : vector<2x128xf32> to vector<2x32xf32>
    %146 = arith.mulf %142, %127 : vector<2x32xf32>
    %147 = arith.mulf %141, %144 : vector<2x32xf32>
    %148 = arith.addf %146, %147 : vector<2x32xf32>
    %149 = math.tanh %148 : vector<2x32xf32>
    %150 = arith.mulf %145, %149 : vector<2x32xf32>
    %cst_61 = arith.constant dense<0.000000e+00> : vector<10x32xf32>
    %151 = tpu.matmul %117, %150, %cst_61 {dimension_numbers = #tpu.dot_dimension_numbers<[1], [0], [0], [1], [0, 0, 1, 1], [], []>} : vector<10x2xf32>, vector<2x32xf32>, vector<10x32xf32> -> vector<10x32xf32>
    %152 = arith.mulf %116, %151 : vector<10x32xf32>
    %cst_62 = arith.constant dense<0.000000e+00> : vector<10xf32>
    %153 = vector.multi_reduction <add>, %152, %cst_62 [1] : vector<10x32xf32> to vector<10xf32>
    %154 = vector.shape_cast %153 : vector<10xf32> to vector<10x1xf32>
    %cst_63 = arith.constant 5.000000e-01 : f32
    %155 = vector.broadcast %cst_63 : f32 to vector<10x2xf32>
    %156 = arith.cmpf ogt, %117, %155 : vector<10x2xf32>
    %cst_64 = arith.constant -1.000000e+30 : f32
    %157 = vector.shape_cast %154 : vector<10x1xf32> to vector<10x1xf32>
    %158 = vector.broadcast %157 : vector<10x1xf32> to vector<10x2xf32>
    %159 = vector.broadcast %cst_64 : f32 to vector<10x2xf32>
    %160 = arith.select %156, %158, %159 : vector<10x2xi1>, vector<10x2xf32>
    %cst_65 = arith.constant dense<0xFF800000> : vector<2xf32>
    %161 = vector.multi_reduction <maximumf>, %160, %cst_65 [0] : vector<10x2xf32> to vector<2xf32>
    %162 = vector.shape_cast %161 : vector<2xf32> to vector<1x2xf32>
    %163 = vector.broadcast %162 : vector<1x2xf32> to vector<10x2xf32>
    %164 = arith.mulf %117, %163 : vector<10x2xf32>
    %cst_66 = arith.constant dense<0.000000e+00> : vector<10xf32>
    %165 = vector.multi_reduction <add>, %164, %cst_66 [1] : vector<10x2xf32> to vector<10xf32>
    %166 = vector.shape_cast %165 : vector<10xf32> to vector<10x1xf32>
    %167 = arith.subf %154, %166 : vector<10x1xf32>
    %168 = math.exp %167 : vector<10x1xf32>
    %cst_67 = arith.constant dense<0.000000e+00> : vector<2x1xf32>
    %169 = tpu.matmul %118, %168, %cst_67 {dimension_numbers = #tpu.dot_dimension_numbers<[1], [0], [0], [1], [0, 0, 1, 1], [], []>} : vector<2x10xf32>, vector<10x1xf32>, vector<2x1xf32> -> vector<2x1xf32>
    %cst_68 = arith.constant dense<0.000000e+00> : vector<10x1xf32>
    %170 = tpu.matmul %117, %169, %cst_68 {dimension_numbers = #tpu.dot_dimension_numbers<[1], [0], [0], [1], [0, 0, 1, 1], [], []>} : vector<10x2xf32>, vector<2x1xf32>, vector<10x1xf32> -> vector<10x1xf32>
    %171 = arith.divf %168, %170 : vector<10x1xf32>
    %172 = vector.broadcast %171 : vector<10x1xf32> to vector<10x32xf32>
    %173 = arith.mulf %172, %116 : vector<10x32xf32>
    %cst_69 = arith.constant dense<0.000000e+00> : vector<2x32xf32>
    %174 = tpu.matmul %118, %173, %cst_69 {dimension_numbers = #tpu.dot_dimension_numbers<[1], [0], [0], [1], [0, 0, 1, 1], [], []>} : vector<2x10xf32>, vector<10x32xf32>, vector<2x32xf32> -> vector<2x32xf32>
    %c1_i32_70 = arith.constant 1 : i32
    %cst_71 = arith.constant dense<0.000000e+00> : vector<2x128xf32>
    %175 = tpu.matmul %150, %124, %cst_71 {dimension_numbers = #tpu.dot_dimension_numbers<[1], [0], [0], [1], [0, 0, 1, 1], [], []>} : vector<2x32xf32>, vector<32x128xf32>, vector<2x128xf32> -> vector<2x128xf32>
    %cst_72 = arith.constant dense<0.000000e+00> : vector<2x128xf32>
    %176 = tpu.matmul %174, %125, %cst_72 {dimension_numbers = #tpu.dot_dimension_numbers<[1], [0], [0], [1], [0, 0, 1, 1], [], []>} : vector<2x32xf32>, vector<32x128xf32>, vector<2x128xf32> -> vector<2x128xf32>
    %177 = arith.addf %175, %176 : vector<2x128xf32>
    %cst_73 = arith.constant dense<0.000000e+00> : vector<2x128xf32>
    %178 = tpu.matmul %150, %120, %cst_73 {dimension_numbers = #tpu.dot_dimension_numbers<[1], [0], [0], [1], [0, 0, 1, 1], [], []>} : vector<2x32xf32>, vector<32x128xf32>, vector<2x128xf32> -> vector<2x128xf32>
    %179 = arith.addf %177, %178 : vector<2x128xf32>
    %180 = vector.broadcast %123 : vector<1x128xf32> to vector<2x128xf32>
    %181 = arith.addf %179, %180 : vector<2x128xf32>
    %182 = arith.negf %181 : vector<2x128xf32>
    %183 = math.exp %182 : vector<2x128xf32>
    %cst_74 = arith.constant 1.000000e+00 : f32
    %184 = vector.broadcast %cst_74 : f32 to vector<2x128xf32>
    %185 = arith.addf %184, %183 : vector<2x128xf32>
    %186 = arith.divf %184, %185 : vector<2x128xf32>
    %187 = vector.extract_strided_slice %186 {offsets = [0, 0], sizes = [2, 32], strides = [1, 1]} : vector<2x128xf32> to vector<2x32xf32>
    %188 = vector.extract_strided_slice %186 {offsets = [0, 32], sizes = [2, 32], strides = [1, 1]} : vector<2x128xf32> to vector<2x32xf32>
    %189 = vector.extract_strided_slice %181 {offsets = [0, 64], sizes = [2, 32], strides = [1, 1]} : vector<2x128xf32> to vector<2x32xf32>
    %190 = math.tanh %189 : vector<2x32xf32>
    %191 = vector.extract_strided_slice %186 {offsets = [0, 96], sizes = [2, 32], strides = [1, 1]} : vector<2x128xf32> to vector<2x32xf32>
    %192 = arith.mulf %188, %148 : vector<2x32xf32>
    %193 = arith.mulf %187, %190 : vector<2x32xf32>
    %194 = arith.addf %192, %193 : vector<2x32xf32>
    %195 = math.tanh %194 : vector<2x32xf32>
    %196 = arith.mulf %191, %195 : vector<2x32xf32>
    %cst_75 = arith.constant dense<0.000000e+00> : vector<10x32xf32>
    %197 = tpu.matmul %117, %196, %cst_75 {dimension_numbers = #tpu.dot_dimension_numbers<[1], [0], [0], [1], [0, 0, 1, 1], [], []>} : vector<10x2xf32>, vector<2x32xf32>, vector<10x32xf32> -> vector<10x32xf32>
    %198 = arith.mulf %116, %197 : vector<10x32xf32>
    %cst_76 = arith.constant dense<0.000000e+00> : vector<10xf32>
    %199 = vector.multi_reduction <add>, %198, %cst_76 [1] : vector<10x32xf32> to vector<10xf32>
    %200 = vector.shape_cast %199 : vector<10xf32> to vector<10x1xf32>
    %cst_77 = arith.constant 5.000000e-01 : f32
    %201 = vector.broadcast %cst_77 : f32 to vector<10x2xf32>
    %202 = arith.cmpf ogt, %117, %201 : vector<10x2xf32>
    %cst_78 = arith.constant -1.000000e+30 : f32
    %203 = vector.shape_cast %200 : vector<10x1xf32> to vector<10x1xf32>
    %204 = vector.broadcast %203 : vector<10x1xf32> to vector<10x2xf32>
    %205 = vector.broadcast %cst_78 : f32 to vector<10x2xf32>
    %206 = arith.select %202, %204, %205 : vector<10x2xi1>, vector<10x2xf32>
    %cst_79 = arith.constant dense<0xFF800000> : vector<2xf32>
    %207 = vector.multi_reduction <maximumf>, %206, %cst_79 [0] : vector<10x2xf32> to vector<2xf32>
    %208 = vector.shape_cast %207 : vector<2xf32> to vector<1x2xf32>
    %209 = vector.broadcast %208 : vector<1x2xf32> to vector<10x2xf32>
    %210 = arith.mulf %117, %209 : vector<10x2xf32>
    %cst_80 = arith.constant dense<0.000000e+00> : vector<10xf32>
    %211 = vector.multi_reduction <add>, %210, %cst_80 [1] : vector<10x2xf32> to vector<10xf32>
    %212 = vector.shape_cast %211 : vector<10xf32> to vector<10x1xf32>
    %213 = arith.subf %200, %212 : vector<10x1xf32>
    %214 = math.exp %213 : vector<10x1xf32>
    %cst_81 = arith.constant dense<0.000000e+00> : vector<2x1xf32>
    %215 = tpu.matmul %118, %214, %cst_81 {dimension_numbers = #tpu.dot_dimension_numbers<[1], [0], [0], [1], [0, 0, 1, 1], [], []>} : vector<2x10xf32>, vector<10x1xf32>, vector<2x1xf32> -> vector<2x1xf32>
    %cst_82 = arith.constant dense<0.000000e+00> : vector<10x1xf32>
    %216 = tpu.matmul %117, %215, %cst_82 {dimension_numbers = #tpu.dot_dimension_numbers<[1], [0], [0], [1], [0, 0, 1, 1], [], []>} : vector<10x2xf32>, vector<2x1xf32>, vector<10x1xf32> -> vector<10x1xf32>
    %217 = arith.divf %214, %216 : vector<10x1xf32>
    %218 = vector.broadcast %217 : vector<10x1xf32> to vector<10x32xf32>
    %219 = arith.mulf %218, %116 : vector<10x32xf32>
    %cst_83 = arith.constant dense<0.000000e+00> : vector<2x32xf32>
    %220 = tpu.matmul %118, %219, %cst_83 {dimension_numbers = #tpu.dot_dimension_numbers<[1], [0], [0], [1], [0, 0, 1, 1], [], []>} : vector<2x10xf32>, vector<10x32xf32>, vector<2x32xf32> -> vector<2x32xf32>
    %c2_i32_84 = arith.constant 2 : i32
    %cst_85 = arith.constant dense<0.000000e+00> : vector<2x128xf32>
    %221 = tpu.matmul %196, %124, %cst_85 {dimension_numbers = #tpu.dot_dimension_numbers<[1], [0], [0], [1], [0, 0, 1, 1], [], []>} : vector<2x32xf32>, vector<32x128xf32>, vector<2x128xf32> -> vector<2x128xf32>
    %cst_86 = arith.constant dense<0.000000e+00> : vector<2x128xf32>
    %222 = tpu.matmul %220, %125, %cst_86 {dimension_numbers = #tpu.dot_dimension_numbers<[1], [0], [0], [1], [0, 0, 1, 1], [], []>} : vector<2x32xf32>, vector<32x128xf32>, vector<2x128xf32> -> vector<2x128xf32>
    %223 = arith.addf %221, %222 : vector<2x128xf32>
    %cst_87 = arith.constant dense<0.000000e+00> : vector<2x128xf32>
    %224 = tpu.matmul %196, %120, %cst_87 {dimension_numbers = #tpu.dot_dimension_numbers<[1], [0], [0], [1], [0, 0, 1, 1], [], []>} : vector<2x32xf32>, vector<32x128xf32>, vector<2x128xf32> -> vector<2x128xf32>
    %225 = arith.addf %223, %224 : vector<2x128xf32>
    %226 = vector.broadcast %123 : vector<1x128xf32> to vector<2x128xf32>
    %227 = arith.addf %225, %226 : vector<2x128xf32>
    %228 = arith.negf %227 : vector<2x128xf32>
    %229 = math.exp %228 : vector<2x128xf32>
    %cst_88 = arith.constant 1.000000e+00 : f32
    %230 = vector.broadcast %cst_88 : f32 to vector<2x128xf32>
    %231 = arith.addf %230, %229 : vector<2x128xf32>
    %232 = arith.divf %230, %231 : vector<2x128xf32>
    %233 = vector.extract_strided_slice %232 {offsets = [0, 0], sizes = [2, 32], strides = [1, 1]} : vector<2x128xf32> to vector<2x32xf32>
    %234 = vector.extract_strided_slice %232 {offsets = [0, 32], sizes = [2, 32], strides = [1, 1]} : vector<2x128xf32> to vector<2x32xf32>
    %235 = vector.extract_strided_slice %227 {offsets = [0, 64], sizes = [2, 32], strides = [1, 1]} : vector<2x128xf32> to vector<2x32xf32>
    %236 = math.tanh %235 : vector<2x32xf32>
    %237 = vector.extract_strided_slice %232 {offsets = [0, 96], sizes = [2, 32], strides = [1, 1]} : vector<2x128xf32> to vector<2x32xf32>
    %238 = arith.mulf %234, %194 : vector<2x32xf32>
    %239 = arith.mulf %233, %236 : vector<2x32xf32>
    %240 = arith.addf %238, %239 : vector<2x32xf32>
    %241 = math.tanh %240 : vector<2x32xf32>
    %242 = arith.mulf %237, %241 : vector<2x32xf32>
    %cst_89 = arith.constant dense<0.000000e+00> : vector<10x32xf32>
    %243 = tpu.matmul %117, %242, %cst_89 {dimension_numbers = #tpu.dot_dimension_numbers<[1], [0], [0], [1], [0, 0, 1, 1], [], []>} : vector<10x2xf32>, vector<2x32xf32>, vector<10x32xf32> -> vector<10x32xf32>
    %244 = arith.mulf %116, %243 : vector<10x32xf32>
    %cst_90 = arith.constant dense<0.000000e+00> : vector<10xf32>
    %245 = vector.multi_reduction <add>, %244, %cst_90 [1] : vector<10x32xf32> to vector<10xf32>
    %246 = vector.shape_cast %245 : vector<10xf32> to vector<10x1xf32>
    %cst_91 = arith.constant 5.000000e-01 : f32
    %247 = vector.broadcast %cst_91 : f32 to vector<10x2xf32>
    %248 = arith.cmpf ogt, %117, %247 : vector<10x2xf32>
    %cst_92 = arith.constant -1.000000e+30 : f32
    %249 = vector.shape_cast %246 : vector<10x1xf32> to vector<10x1xf32>
    %250 = vector.broadcast %249 : vector<10x1xf32> to vector<10x2xf32>
    %251 = vector.broadcast %cst_92 : f32 to vector<10x2xf32>
    %252 = arith.select %248, %250, %251 : vector<10x2xi1>, vector<10x2xf32>
    %cst_93 = arith.constant dense<0xFF800000> : vector<2xf32>
    %253 = vector.multi_reduction <maximumf>, %252, %cst_93 [0] : vector<10x2xf32> to vector<2xf32>
    %254 = vector.shape_cast %253 : vector<2xf32> to vector<1x2xf32>
    %255 = vector.broadcast %254 : vector<1x2xf32> to vector<10x2xf32>
    %256 = arith.mulf %117, %255 : vector<10x2xf32>
    %cst_94 = arith.constant dense<0.000000e+00> : vector<10xf32>
    %257 = vector.multi_reduction <add>, %256, %cst_94 [1] : vector<10x2xf32> to vector<10xf32>
    %258 = vector.shape_cast %257 : vector<10xf32> to vector<10x1xf32>
    %259 = arith.subf %246, %258 : vector<10x1xf32>
    %260 = math.exp %259 : vector<10x1xf32>
    %cst_95 = arith.constant dense<0.000000e+00> : vector<2x1xf32>
    %261 = tpu.matmul %118, %260, %cst_95 {dimension_numbers = #tpu.dot_dimension_numbers<[1], [0], [0], [1], [0, 0, 1, 1], [], []>} : vector<2x10xf32>, vector<10x1xf32>, vector<2x1xf32> -> vector<2x1xf32>
    %cst_96 = arith.constant dense<0.000000e+00> : vector<10x1xf32>
    %262 = tpu.matmul %117, %261, %cst_96 {dimension_numbers = #tpu.dot_dimension_numbers<[1], [0], [0], [1], [0, 0, 1, 1], [], []>} : vector<10x2xf32>, vector<2x1xf32>, vector<10x1xf32> -> vector<10x1xf32>
    %263 = arith.divf %260, %262 : vector<10x1xf32>
    %264 = vector.broadcast %263 : vector<10x1xf32> to vector<10x32xf32>
    %265 = arith.mulf %264, %116 : vector<10x32xf32>
    %cst_97 = arith.constant dense<0.000000e+00> : vector<2x32xf32>
    %266 = tpu.matmul %118, %265, %cst_97 {dimension_numbers = #tpu.dot_dimension_numbers<[1], [0], [0], [1], [0, 0, 1, 1], [], []>} : vector<2x10xf32>, vector<10x32xf32>, vector<2x32xf32> -> vector<2x32xf32>
    %c0_98 = arith.constant 0 : index
    %c0_99 = arith.constant 0 : index
    %267 = vector.load %arg15[%c0_98, %c0_99] : memref<64x32xf32, #tpu.memory_space<vmem>>, vector<64x32xf32>
    %268 = vector.extract_strided_slice %267 {offsets = [0, 0], sizes = [32, 32], strides = [1, 1]} : vector<64x32xf32> to vector<32x32xf32>
    %cst_100 = arith.constant dense<0.000000e+00> : vector<2x32xf32>
    %269 = tpu.matmul %242, %268, %cst_100 {dimension_numbers = #tpu.dot_dimension_numbers<[1], [0], [0], [1], [0, 0, 1, 1], [], []>} : vector<2x32xf32>, vector<32x32xf32>, vector<2x32xf32> -> vector<2x32xf32>
    %270 = vector.extract_strided_slice %267 {offsets = [32, 0], sizes = [32, 32], strides = [1, 1]} : vector<64x32xf32> to vector<32x32xf32>
    %cst_101 = arith.constant dense<0.000000e+00> : vector<2x32xf32>
    %271 = tpu.matmul %266, %270, %cst_101 {dimension_numbers = #tpu.dot_dimension_numbers<[1], [0], [0], [1], [0, 0, 1, 1], [], []>} : vector<2x32xf32>, vector<32x32xf32>, vector<2x32xf32> -> vector<2x32xf32>
    %272 = arith.addf %269, %271 : vector<2x32xf32>
    %c0_102 = arith.constant 0 : index
    %c0_103 = arith.constant 0 : index
    %273 = vector.load %arg16[%c0_102, %c0_103] : memref<1x32xf32, #tpu.memory_space<vmem>>, vector<1x32xf32>
    %274 = vector.broadcast %273 : vector<1x32xf32> to vector<2x32xf32>
    %275 = arith.addf %272, %274 : vector<2x32xf32>
    %cst_104 = arith.constant 0.000000e+00 : f32
    %276 = vector.broadcast %cst_104 : f32 to vector<2x32xf32>
    %277 = arith.maximumf %275, %276 : vector<2x32xf32>
    %c0_105 = arith.constant 0 : index
    %c0_106 = arith.constant 0 : index
    %278 = vector.load %arg17[%c0_105, %c0_106] : memref<32x1xf32, #tpu.memory_space<vmem>>, vector<32x1xf32>
    %cst_107 = arith.constant dense<0.000000e+00> : vector<2x1xf32>
    %279 = tpu.matmul %277, %278, %cst_107 {dimension_numbers = #tpu.dot_dimension_numbers<[1], [0], [0], [1], [0, 0, 1, 1], [], []>} : vector<2x32xf32>, vector<32x1xf32>, vector<2x1xf32> -> vector<2x1xf32>
    %c0_108 = arith.constant 0 : index
    %c0_109 = arith.constant 0 : index
    %280 = vector.load %arg18[%c0_108, %c0_109] : memref<1x1xf32, #tpu.memory_space<vmem>>, vector<1x1xf32>
    %281 = vector.broadcast %280 : vector<1x1xf32> to vector<2x1xf32>
    %282 = arith.addf %279, %281 : vector<2x1xf32>
    %c0_110 = arith.constant 0 : index
    %c0_111 = arith.constant 0 : index
    %283 = vector.load %arg19[%c0_110, %c0_111] : memref<2x1xf32, #tpu.memory_space<vmem>>, vector<2x1xf32>
    tpu.vector_store %arg19[%c0_110, %c0_111], %282 {strides = array<i32>} : memref<2x1xf32, #tpu.memory_space<vmem>>, vector<2x1xf32>,
    return
  }
}

</mosaic_0001>

<llo_original>
// kernel: net_forward.2
$region0: #{net_forward.2}
  #allocation0 [shape = 'u32[]', space=smem, size = 0x4, offset = 0x4, fixed_abs, tag = 'smem constant byte address 0x4 - core index']
  #allocation1 [shape = 'u32[144,128]{1,0:T(1,128)}', space=vmem, size = 0x12000, scoped, tag = 'internal scratch']
  %s0 = inlined_call_operand.vmem [shape: f32[10,16], index: 0, kind: input, shape index: {}]
  %s1 = inlined_call_operand.vmem [shape: f32[24,5], index: 1, kind: input, shape index: {}]
  %s2 = inlined_call_operand.vmem [shape: f32[16,32], index: 2, kind: input, shape index: {}]
  %s3 = inlined_call_operand.vmem [shape: f32[1,32], index: 3, kind: input, shape index: {}]
  %s4 = inlined_call_operand.vmem [shape: f32[5,128], index: 4, kind: input, shape index: {}]
  %s5 = inlined_call_operand.vmem [shape: f32[1,128], index: 5, kind: input, shape index: {}]
  %s6 = inlined_call_operand.hbm [shape: f32[128,1024], index: 6, kind: input, shape index: {}]
  %s7 = inlined_call_operand.vmem [shape: f32[1,1024], index: 7, kind: input, shape index: {}]
  %s8 = inlined_call_operand.vmem [shape: f32[10,32], index: 8, kind: output, shape index: {0}]
  %s9 = inlined_call_operand.vmem [shape: f32[24,1024], index: 9, kind: output, shape index: {1}]
  %10 = xla_tuple %s8, %s9
  %s11 = sld [smem:[#allocation0]]
  $region54: #{net_forward.2} parent=0
    _
  %s13 = ssub.s32 1, %s11
  %s14 = scalar_select 0, %s13, %s11
  $region1: #{net_forward.2} parent=0
    #allocation2 [shape = 'u8[524288]{0}', space=vmem, size = 0x80000, scoped, tag = 'input window, operand 6, single buffered']
    #allocation3 [shape = 's32[1]{0}', space=sflag, size = 0x4, scoped, tag = 'scoped memory for net_forward.2']
    %15 = vsyncpa [#allocation3], 0
    // Predicated region
    $region2: #{net_forward.2} parent=1 // pred_check
      _
    $region3: #{net_forward.2} parent=1 // pred_check_branch
      %17 = sbr.rel (0) target = $region5
    $region4: #{net_forward.2} parent=1 // pred_region
      _
    $region5: #{net_forward.2} parent=1 // pred_fallthru
      _
    // Predicated region
    $region6: #{net_forward.2} parent=1 // pred_check
      _
    $region7: #{net_forward.2} parent=1 // pred_check_branch
      %19 = sbr.rel (0) target = $region9
    $region8: #{net_forward.2} parent=1 // pred_region
      _
    $region9: #{net_forward.2} parent=1 // pred_fallthru
      _
    // Predicated region
    $region10: #{net_forward.2} parent=1 // pred_check
      _
    $region11: #{net_forward.2} parent=1 // pred_check_branch
      %21 = sbr.rel (0) target = $region13
    $region12: #{net_forward.2} parent=1 // pred_region
      _
    $region13: #{net_forward.2} parent=1 // pred_fallthru
      _
    // Predicated region
    $region14: #{net_forward.2} parent=1 // pred_check
      _
    $region15: #{net_forward.2} parent=1 // pred_check_branch
      %23 = sbr.rel (0) target = $region17
    $region16: #{net_forward.2} parent=1 // pred_region
      _
    $region17: #{net_forward.2} parent=1 // pred_fallthru
      _
    // Predicated region
    $region18: #{net_forward.2} parent=1 // pred_check
      _
    $region19: #{net_forward.2} parent=1 // pred_check_branch
      %25 = sbr.rel (0) target = $region21
    $region20: #{net_forward.2} parent=1 // pred_region
      _
    $region21: #{net_forward.2} parent=1 // pred_fallthru
      _
    // Predicated region
    $region22: #{net_forward.2} parent=1 // pred_check
      _
    $region23: #{net_forward.2} parent=1 // pred_check_branch
      %27 = sbr.rel (0) target = $region25
    $region24: #{net_forward.2} parent=1 // pred_region
      _
    $region25: #{net_forward.2} parent=1 // pred_fallthru
      _
    // Predicated region
    $region26: #{net_forward.2} parent=1 // pred_check
      _
    $region27: #{net_forward.2} parent=1 // pred_check_branch
      %29 = sbr.rel (0) target = $region29
    $region28: #{net_forward.2} parent=1 // pred_region
      %s31 = ssub.s32 16384, 16384
      %32 = vsyncadd [#allocation3], %s31
      %s33 = sshll.u32 [#allocation2], 4
      %s34 = int_to_ptr.vmem [resolvable:$true] %s33
      %39 = dma.hbm_to_vmem [thread:$0]  %s6, 16384, %s34, [#allocation3], 1024, 1024, 64
    $region29: #{net_forward.2} parent=1 // pred_fallthru
      _
    // Predicated region
    $region30: #{net_forward.2} parent=1 // pred_check
      _
    $region31: #{net_forward.2} parent=1 // pred_check_branch
      %41 = sbr.rel (0) target = $region33
    $region32: #{net_forward.2} parent=1 // pred_region
      _
    $region33: #{net_forward.2} parent=1 // pred_fallthru
      _
    // Predicated region
    $region34: #{net_forward.2} parent=1 // pred_check
      _
    $region35: #{net_forward.2} parent=1 // pred_check_branch
      %43 = sbr.rel (0) target = $region37
    $region36: #{net_forward.2} parent=1 // pred_region
      %44 = dma.done [#allocation3], 16384
    $region37: #{net_forward.2} parent=1 // pred_fallthru
      _
    %v45 = vld [vmem:[%s0] sm:$0xff]
    %v46 = vld [vmem:[%s0 + $0x8] sm:$0x3]
    %v47 = vld [vmem:[%s2] sm:$0xff]
    %v48 = vld [vmem:[%s2 + $0x8] sm:$0xff]
    %v49 = vld [vmem:[%s3] sm:$0x1]
    %v51 = vlaneseq
    %v52 = vshrl.u32 %v51, 7
    %v53 = vsub.s32 0, %v52
    %v54 = vrot.slane %v49, %v53
    %vm56 = vcmask 130048
    %v58 = vsel %vm56, %v45, 0
    %v61 = vsel %vm56, %v46, 0
    %63 = vmatprep.subr.mxu0 0.0
    %64 = vmatpush1.msra.mxu0 %v47
    %65 = vmatprep.subr.mxu0 0.0
    %66 = vmatpush1.msra.mxu0 %v48
    %67 = vmatprep.subr.mxu0 0.0
    %68 = vmatpush1.msra.mxu0 0.0
    %69 = vmatprep.subr.mxu0 0.0
    %70 = vmatpush1.msra.mxu0 0.0
    %71 = vmatprep.subr.mxu0 0.0
    %72 = vmatpush1.msra.mxu0 0.0
    %73 = vmatprep.subr.mxu0 0.0
    %74 = vmatpush1.msra.mxu0 0.0
    %75 = vmatprep.subr.mxu0 0.0
    %76 = vmatpush1.msra.mxu0 0.0
    %77 = vmatprep.subr.mxu0 0.0
    %78 = vmatpush1.msra.mxu0 0.0
    %79 = vmatprep.subr.mxu0 0.0
    %80 = vmatpush1.msra.mxu0 0.0
    %81 = vmatprep.subr.mxu0 0.0
    %82 = vmatpush1.msra.mxu0 0.0
    %83 = vmatprep.subr.mxu0 0.0
    %84 = vmatpush1.msra.mxu0 0.0
    %85 = vmatprep.subr.mxu0 0.0
    %86 = vmatpush1.msra.mxu0 0.0
    %87 = vmatprep.subr.mxu0 0.0
    %88 = vmatpush1.msra.mxu0 0.0
    %89 = vmatprep.subr.mxu0 0.0
    %90 = vmatpush1.msra.mxu0 0.0
    %91 = vmatprep.subr.mxu0 0.0
    %92 = vmatpush1.msra.mxu0 0.0
    %93 = vmatprep.subr.mxu0 0.0
    %94 = vmatpush1.msra.mxu0 0.0
    %95 = vmatprep.subr.mxu0 0.0
    %96 = vmatpush1.msra.mxu0 0.0
    %97 = vmatprep.subr.mxu0 0.0
    %98 = vmatpush1.msra.mxu0 0.0
    %99 = vmatprep.subr.mxu0 0.0
    %100 = vmatpush1.msra.mxu0 0.0
    %101 = vmatprep.subr.mxu0 0.0
    %102 = vmatpush1.msra.mxu0 0.0
    %103 = vmatprep.subr.mxu0 0.0
    %104 = vmatpush1.msra.mxu0 0.0
    %105 = vmatprep.subr.mxu0 0.0
    %106 = vmatpush1.msra.mxu0 0.0
    %107 = vmatprep.subr.mxu0 0.0
    %108 = vmatpush1.msra.mxu0 0.0
    %109 = vmatprep.subr.mxu0 0.0
    %110 = vmatpush1.msra.mxu0 0.0
    %111 = vmatprep.subr.mxu0 0.0
    %112 = vmatpush1.msra.mxu0 0.0
    %113 = vmatprep.subr.mxu0 0.0
    %114 = vmatpush1.msra.mxu0 0.0
    %115 = vmatprep.subr.mxu0 0.0
    %116 = vmatpush1.msra.mxu0 0.0
    %117 = vmatprep.subr.mxu0 0.0
    %118 = vmatpush1.msra.mxu0 0.0
    %119 = vmatprep.subr.mxu0 0.0
    %120 = vmatpush1.msra.mxu0 0.0
    %121 = vmatprep.subr.mxu0 0.0
    %122 = vmatpush1.msra.mxu0 0.0
    %123 = vmatprep.subr.mxu0 0.0
    %124 = vmatpush1.msra.mxu0 0.0
    %125 = vmatprep.subr.mxu0 0.0
    %126 = vmatpush1.msra.mxu0 0.0
    %127 = vmatprep.mubr.f32.mxu0 0.0
    %128 = vmatmul.mubr.f32.gmra.mrb[0].mxu0 %v58
    %v129 = vpop.f32.mrb[0].mxu0
    %v130 = vadd.f32 %v54, %v129
    %v131 = vpop.f32.mrb[0].mxu0
    %132 = vmatprep.mubr.f32.mxu0 0.0
    %133 = vmatmul.mubr.f32.gmra.mrb[0].mxu0 %v61
    %v134 = vpop.f32.mrb[0].mxu0
    %v135 = vadd.f32 %v54, %v134
    %v136 = vpop.f32.mrb[0].mxu0
    %137 = vdwg.mxu0
    %v138 = vmax.f32 %v130, 0.0
    %v139 = vmax.f32 %v135, 0.0
    %vm140 = vcmask 261120
    %141 = vst.msk [vmem:[%s8] sm:$0xff] %vm140, %v138
    %vm142 = vcmask 254976
    %143 = vst.msk [vmem:[%s8 + $0x8] sm:$0x3] %vm142, %v139
    %v144 = vld [vmem:[%s1] sm:$0xff]
    %v145 = vld [vmem:[%s1 + $0x8] sm:$0xff]
    %v146 = vld [vmem:[%s1 + $0x10] sm:$0xff]
    %v147 = vld [vmem:[%s4] sm:$0x1f]
    %v148 = vld [vmem:[%s5] sm:$0x1]
    %v150 = vlaneseq
    %v151 = vshrl.u32 %v150, 7
    %v152 = vsub.s32 0, %v151
    %v153 = vrot.slane %v148, %v152
    %vm155 = vcmask 39936
    %v157 = vsel %vm155, %v144, 0
    %v160 = vsel %vm155, %v145, 0
    %v163 = vsel %vm155, %v146, 0
    %vm165 = vcmask 1044480
    %v167 = vsel %vm165, %v147, 0
    %169 = vmatprep.subr.mxu0 0.0
    %170 = vmatpush1.msra.mxu0 %v167
    %171 = vmatprep.subr.mxu0 0.0
    %172 = vmatpush1.msra.mxu0 0.0
    %173 = vmatprep.subr.mxu0 0.0
    %174 = vmatpush1.msra.mxu0 0.0
    %175 = vmatprep.subr.mxu0 0.0
    %176 = vmatpush1.msra.mxu0 0.0
    %177 = vmatprep.subr.mxu0 0.0
    %178 = vmatpush1.msra.mxu0 0.0
    %179 = vmatprep.subr.mxu0 0.0
    %180 = vmatpush1.msra.mxu0 0.0
    %181 = vmatprep.subr.mxu0 0.0
    %182 = vmatpush1.msra.mxu0 0.0
    %183 = vmatprep.subr.mxu0 0.0
    %184 = vmatpush1.msra.mxu0 0.0
    %185 = vmatprep.subr.mxu0 0.0
    %186 = vmatpush1.msra.mxu0 0.0
    %187 = vmatprep.subr.mxu0 0.0
    %188 = vmatpush1.msra.mxu0 0.0
    %189 = vmatprep.subr.mxu0 0.0
    %190 = vmatpush1.msra.mxu0 0.0
    %191 = vmatprep.subr.mxu0 0.0
    %192 = vmatpush1.msra.mxu0 0.0
    %193 = vmatprep.subr.mxu0 0.0
    %194 = vmatpush1.msra.mxu0 0.0
    %195 = vmatprep.subr.mxu0 0.0
    %196 = vmatpush1.msra.mxu0 0.0
    %197 = vmatprep.subr.mxu0 0.0
    %198 = vmatpush1.msra.mxu0 0.0
    %199 = vmatprep.subr.mxu0 0.0
    %200 = vmatpush1.msra.mxu0 0.0
    %201 = vmatprep.subr.mxu0 0.0
    %202 = vmatpush1.msra.mxu0 0.0
    %203 = vmatprep.subr.mxu0 0.0
    %204 = vmatpush1.msra.mxu0 0.0
    %205 = vmatprep.subr.mxu0 0.0
    %206 = vmatpush1.msra.mxu0 0.0
    %207 = vmatprep.subr.mxu0 0.0
    %208 = vmatpush1.msra.mxu0 0.0
    %209 = vmatprep.subr.mxu0 0.0
    %210 = vmatpush1.msra.mxu0 0.0
    %211 = vmatprep.subr.mxu0 0.0
    %212 = vmatpush1.msra.mxu0 0.0
    %213 = vmatprep.subr.mxu0 0.0
    %214 = vmatpush1.msra.mxu0 0.0
    %215 = vmatprep.subr.mxu0 0.0
    %216 = vmatpush1.msra.mxu0 0.0
    %217 = vmatprep.subr.mxu0 0.0
    %218 = vmatpush1.msra.mxu0 0.0
    %219 = vmatprep.subr.mxu0 0.0
    %220 = vmatpush1.msra.mxu0 0.0
    %221 = vmatprep.subr.mxu0 0.0
    %222 = vmatpush1.msra.mxu0 0.0
    %223 = vmatprep.subr.mxu0 0.0
    %224 = vmatpush1.msra.mxu0 0.0
    %225 = vmatprep.subr.mxu0 0.0
    %226 = vmatpush1.msra.mxu0 0.0
    %227 = vmatprep.subr.mxu0 0.0
    %228 = vmatpush1.msra.mxu0 0.0
    %229 = vmatprep.subr.mxu0 0.0
    %230 = vmatpush1.msra.mxu0 0.0
    %231 = vmatprep.subr.mxu0 0.0
    %232 = vmatpush1.msra.mxu0 0.0
    %233 = vmatprep.mubr.f32.mxu0 0.0
    %234 = vmatmul.mubr.f32.gmra.mrb[0].mxu0 %v157
    %v235 = vpop.f32.mrb[0].mxu0
    %v236 = vadd.f32 %v153, %v235
    %v237 = vpop.f32.mrb[0].mxu0
    %238 = vmatprep.mubr.f32.mxu0 0.0
    %239 = vmatmul.mubr.f32.gmra.mrb[0].mxu0 %v160
    %v240 = vpop.f32.mrb[0].mxu0
    %v241 = vadd.f32 %v153, %v240
    %v242 = vpop.f32.mrb[0].mxu0
    %243 = vmatprep.mubr.f32.mxu0 0.0
    %244 = vmatmul.mubr.f32.gmra.mrb[0].mxu0 %v163
    %v245 = vpop.f32.mrb[0].mxu0
    %v246 = vadd.f32 %v153, %v245
    %v247 = vpop.f32.mrb[0].mxu0
    %248 = vdwg.mxu0
    %v249 = vmax.f32 %v236, 0.0
    %v250 = vmax.f32 %v241, 0.0
    %v251 = vmax.f32 %v246, 0.0
    %v252 = vld [vmem:[#allocation2] sm:$0xff]
    %v253 = vld [vmem:[#allocation2 + $0x8] sm:$0xff]
    %v254 = vld [vmem:[#allocation2 + $0x10] sm:$0xff]
    %v255 = vld [vmem:[#allocation2 + $0x18] sm:$0xff]
    %v256 = vld [vmem:[#allocation2 + $0x20] sm:$0xff]
    %v257 = vld [vmem:[#allocation2 + $0x28] sm:$0xff]
    %v258 = vld [vmem:[#allocation2 + $0x30] sm:$0xff]
    %v259 = vld [vmem:[#allocation2 + $0x38] sm:$0xff]
    %v260 = vld [vmem:[#allocation2 + $0x40] sm:$0xff]
    %v261 = vld [vmem:[#allocation2 + $0x48] sm:$0xff]
    %v262 = vld [vmem:[#allocation2 + $0x50] sm:$0xff]
    %v263 = vld [vmem:[#allocation2 + $0x58] sm:$0xff]
    %v264 = vld [vmem:[#allocation2 + $0x60] sm:$0xff]
    %v265 = vld [vmem:[#allocation2 + $0x68] sm:$0xff]
    %v266 = vld [vmem:[#allocation2 + $0x70] sm:$0xff]
    %v267 = vld [vmem:[#allocation2 + $0x78] sm:$0xff]
    %v268 = vld [vmem:[#allocation2 + $0x80] sm:$0xff]
    %v269 = vld [vmem:[#allocation2 + $0x88] sm:$0xff]
    %v270 = vld [vmem:[#allocation2 + $0x90] sm:$0xff]
    %v271 = vld [vmem:[#allocation2 + $0x98] sm:$0xff]
    %v272 = vld [vmem:[#allocation2 + $0xa0] sm:$0xff]
    %v273 = vld [vmem:[#allocation2 + $0xa8] sm:$0xff]
    %v274 = vld [vmem:[#allocation2 + $0xb0] sm:$0xff]
    %v275 = vld [vmem:[#allocation2 + $0xb8] sm:$0xff]
    %v276 = vld [vmem:[#allocation2 + $0xc0] sm:$0xff]
    %v277 = vld [vmem:[#allocation2 + $0xc8] sm:$0xff]
    %v278 = vld [vmem:[#allocation2 + $0xd0] sm:$0xff]
    %v279 = vld [vmem:[#allocation2 + $0xd8] sm:$0xff]
    %v280 = vld [vmem:[#allocation2 + $0xe0] sm:$0xff]
    %v281 = vld [vmem:[#allocation2 + $0xe8] sm:$0xff]
    %v282 = vld [vmem:[#allocation2 + $0xf0] sm:$0xff]
    %v283 = vld [vmem:[#allocation2 + $0xf8] sm:$0xff]
    %v284 = vld [vmem:[#allocation2 + $0x100] sm:$0xff]
    %v285 = vld [vmem:[#allocation2 + $0x108] sm:$0xff]
    %v286 = vld [vmem:[#allocation2 + $0x110] sm:$0xff]
    %v287 = vld [vmem:[#allocation2 + $0x118] sm:$0xff]
    %v288 = vld [vmem:[#allocation2 + $0x120] sm:$0xff]
    %v289 = vld [vmem:[#allocation2 + $0x128] sm:$0xff]
    %v290 = vld [vmem:[#allocation2 + $0x130] sm:$0xff]
    %v291 = vld [vmem:[#allocation2 + $0x138] sm:$0xff]
    %v292 = vld [vmem:[#allocation2 + $0x140] sm:$0xff]
    %v293 = vld [vmem:[#allocation2 + $0x148] sm:$0xff]
    %v294 = vld [vmem:[#allocation2 + $0x150] sm:$0xff]
    %v295 = vld [vmem:[#allocation2 + $0x158] sm:$0xff]
    %v296 = vld [vmem:[#allocation2 + $0x160] sm:$0xff]
    %v297 = vld [vmem:[#allocation2 + $0x168] sm:$0xff]
    %v298 = vld [vmem:[#allocation2 + $0x170] sm:$0xff]
    %v299 = vld [vmem:[#allocation2 + $0x178] sm:$0xff]
    %v300 = vld [vmem:[#allocation2 + $0x180] sm:$0xff]
    %v301 = vld [vmem:[#allocation2 + $0x188] sm:$0xff]
    %v302 = vld [vmem:[#allocation2 + $0x190] sm:$0xff]
    %v303 = vld [vmem:[#allocation2 + $0x198] sm:$0xff]
    %v304 = vld [vmem:[#allocation2 + $0x1a0] sm:$0xff]
    %v305 = vld [vmem:[#allocation2 + $0x1a8] sm:$0xff]
    %v306 = vld [vmem:[#allocation2 + $0x1b0] sm:$0xff]
    %v307 = vld [vmem:[#allocation2 + $0x1b8] sm:$0xff]
    %v308 = vld [vmem:[#allocation2 + $0x1c0] sm:$0xff]
    %v309 = vld [vmem:[#allocation2 + $0x1c8] sm:$0xff]
    %v310 = vld [vmem:[#allocation2 + $0x1d0] sm:$0xff]
    %v311 = vld [vmem:[#allocation2 + $0x1d8] sm:$0xff]
    %v312 = vld [vmem:[#allocation2 + $0x1e0] sm:$0xff]
    %v313 = vld [vmem:[#allocation2 + $0x1e8] sm:$0xff]
    %v314 = vld [vmem:[#allocation2 + $0x1f0] sm:$0xff]
    %v315 = vld [vmem:[#allocation2 + $0x1f8] sm:$0xff]
    %v316 = vld [vmem:[#allocation2 + $0x200] sm:$0xff]
    %v317 = vld [vmem:[#allocation2 + $0x208] sm:$0xff]
    %v318 = vld [vmem:[#allocation2 + $0x210] sm:$0xff]
    %v319 = vld [vmem:[#allocation2 + $0x218] sm:$0xff]
    %v320 = vld [vmem:[#allocation2 + $0x220] sm:$0xff]
    %v321 = vld [vmem:[#allocation2 + $0x228] sm:$0xff]
    %v322 = vld [vmem:[#allocation2 + $0x230] sm:$0xff]
    %v323 = vld [vmem:[#allocation2 + $0x238] sm:$0xff]
    %v324 = vld [vmem:[#allocation2 + $0x240] sm:$0xff]
    %v325 = vld [vmem:[#allocation2 + $0x248] sm:$0xff]
    %v326 = vld [vmem:[#allocation2 + $0x250] sm:$0xff]
    %v327 = vld [vmem:[#allocation2 + $0x258] sm:$0xff]
    %v328 = vld [vmem:[#allocation2 + $0x260] sm:$0xff]
    %v329 = vld [vmem:[#allocation2 + $0x268] sm:$0xff]
    %v330 = vld [vmem:[#allocation2 + $0x270] sm:$0xff]
    %v331 = vld [vmem:[#allocation2 + $0x278] sm:$0xff]
    %v332 = vld [vmem:[#allocation2 + $0x280] sm:$0xff]
    %v333 = vld [vmem:[#allocation2 + $0x288] sm:$0xff]
    %v334 = vld [vmem:[#allocation2 + $0x290] sm:$0xff]
    %v335 = vld [vmem:[#allocation2 + $0x298] sm:$0xff]
    %v336 = vld [vmem:[#allocation2 + $0x2a0] sm:$0xff]
    %v337 = vld [vmem:[#allocation2 + $0x2a8] sm:$0xff]
    %v338 = vld [vmem:[#allocation2 + $0x2b0] sm:$0xff]
    %v339 = vld [vmem:[#allocation2 + $0x2b8] sm:$0xff]
    %v340 = vld [vmem:[#allocation2 + $0x2c0] sm:$0xff]
    %v341 = vld [vmem:[#allocation2 + $0x2c8] sm:$0xff]
    %v342 = vld [vmem:[#allocation2 + $0x2d0] sm:$0xff]
    %v343 = vld [vmem:[#allocation2 + $0x2d8] sm:$0xff]
    %v344 = vld [vmem:[#allocation2 + $0x2e0] sm:$0xff]
    %v345 = vld [vmem:[#allocation2 + $0x2e8] sm:$0xff]
    %v346 = vld [vmem:[#allocation2 + $0x2f0] sm:$0xff]
    %v347 = vld [vmem:[#allocation2 + $0x2f8] sm:$0xff]
    %v348 = vld [vmem:[#allocation2 + $0x300] sm:$0xff]
    %v349 = vld [vmem:[#allocation2 + $0x308] sm:$0xff]
    %v350 = vld [vmem:[#allocation2 + $0x310] sm:$0xff]
    %v351 = vld [vmem:[#allocation2 + $0x318] sm:$0xff]
    %v352 = vld [vmem:[#allocation2 + $0x320] sm:$0xff]
    %v353 = vld [vmem:[#allocation2 + $0x328] sm:$0xff]
    %v354 = vld [vmem:[#allocation2 + $0x330] sm:$0xff]
    %v355 = vld [vmem:[#allocation2 + $0x338] sm:$0xff]
    %v356 = vld [vmem:[#allocation2 + $0x340] sm:$0xff]
    %v357 = vld [vmem:[#allocation2 + $0x348] sm:$0xff]
    %v358 = vld [vmem:[#allocation2 + $0x350] sm:$0xff]
    %v359 = vld [vmem:[#allocation2 + $0x358] sm:$0xff]
    %v360 = vld [vmem:[#allocation2 + $0x360] sm:$0xff]
    %v361 = vld [vmem:[#allocation2 + $0x368] sm:$0xff]
    %v362 = vld [vmem:[#allocation2 + $0x370] sm:$0xff]
    %v363 = vld [vmem:[#allocation2 + $0x378] sm:$0xff]
    %v364 = vld [vmem:[#allocation2 + $0x380] sm:$0xff]
    %v365 = vld [vmem:[#allocation2 + $0x388] sm:$0xff]
    %v366 = vld [vmem:[#allocation2 + $0x390] sm:$0xff]
    %v367 = vld [vmem:[#allocation2 + $0x398] sm:$0xff]
    %v368 = vld [vmem:[#allocation2 + $0x3a0] sm:$0xff]
    %v369 = vld [vmem:[#allocation2 + $0x3a8] sm:$0xff]
    %v370 = vld [vmem:[#allocation2 + $0x3b0] sm:$0xff]
    %v371 = vld [vmem:[#allocation2 + $0x3b8] sm:$0xff]
    %v372 = vld [vmem:[#allocation2 + $0x3c0] sm:$0xff]
    %v373 = vld [vmem:[#allocation2 + $0x3c8] sm:$0xff]
    %v374 = vld [vmem:[#allocation2 + $0x3d0] sm:$0xff]
    %v375 = vld [vmem:[#allocation2 + $0x3d8] sm:$0xff]
    %v376 = vld [vmem:[#allocation2 + $0x3e0] sm:$0xff]
    %v377 = vld [vmem:[#allocation2 + $0x3e8] sm:$0xff]
    %v378 = vld [vmem:[#allocation2 + $0x3f0] sm:$0xff]
    %v379 = vld [vmem:[#allocation2 + $0x3f8] sm:$0xff]
    %v380 = vld [vmem:[%s7] sm:$0xff]
    %v382 = vlaneseq
    %v383 = vshrl.u32 %v382, 7
    %v384 = vsub.s32 0, %v383
    %v385 = vrot.slane %v380, %v384
    %v386 = vlaneseq
    %v387 = vshrl.u32 %v386, 7
    %v388 = vsub.s32 1, %v387
    %v389 = vrot.slane %v380, %v388
    %v390 = vlaneseq
    %v391 = vshrl.u32 %v390, 7
    %v392 = vsub.s32 2, %v391
    %v393 = vrot.slane %v380, %v392
    %v394 = vlaneseq
    %v395 = vshrl.u32 %v394, 7
    %v396 = vsub.s32 3, %v395
    %v397 = vrot.slane %v380, %v396
    %v398 = vlaneseq
    %v399 = vshrl.u32 %v398, 7
    %v400 = vsub.s32 4, %v399
    %v401 = vrot.slane %v380, %v400
    %v402 = vlaneseq
    %v403 = vshrl.u32 %v402, 7
    %v404 = vsub.s32 5, %v403
    %v405 = vrot.slane %v380, %v404
    %v406 = vlaneseq
    %v407 = vshrl.u32 %v406, 7
    %v408 = vsub.s32 6, %v407
    %v409 = vrot.slane %v380, %v408
    %v410 = vlaneseq
    %v411 = vshrl.u32 %v410, 7
    %v412 = vsub.s32 7, %v411
    %v413 = vrot.slane %v380, %v412
    %422 = vmatprep.subr.mxu0 %v253
    %423 = vmatpush1.msra.mxu0 %v252
    %424 = vmatprep.subr.mxu0 %v261
    %425 = vmatpush1.msra.mxu0 %v260
    %426 = vmatprep.subr.mxu0 %v269
    %427 = vmatpush1.msra.mxu0 %v268
    %428 = vmatprep.subr.mxu0 %v277
    %429 = vmatpush1.msra.mxu0 %v276
    %430 = vmatprep.subr.mxu0 %v285
    %431 = vmatpush1.msra.mxu0 %v284
    %432 = vmatprep.subr.mxu0 %v293
    %433 = vmatpush1.msra.mxu0 %v292
    %434 = vmatprep.subr.mxu0 %v301
    %435 = vmatpush1.msra.mxu0 %v300
    %436 = vmatprep.subr.mxu0 %v309
    %437 = vmatpush1.msra.mxu0 %v308
    %438 = vmatprep.subr.mxu0 %v317
    %439 = vmatpush1.msra.mxu0 %v316
    %440 = vmatprep.subr.mxu0 %v325
    %441 = vmatpush1.msra.mxu0 %v324
    %442 = vmatprep.subr.mxu0 %v333
    %443 = vmatpush1.msra.mxu0 %v332
    %444 = vmatprep.subr.mxu0 %v341
    %445 = vmatpush1.msra.mxu0 %v340
    %446 = vmatprep.subr.mxu0 %v349
    %447 = vmatpush1.msra.mxu0 %v348
    %448 = vmatprep.subr.mxu0 %v357
    %449 = vmatpush1.msra.mxu0 %v356
    %450 = vmatprep.subr.mxu0 %v365
    %451 = vmatpush1.msra.mxu0 %v364
    %452 = vmatprep.subr.mxu0 %v373
    %453 = vmatpush1.msra.mxu0 %v372
    %454 = vmatprep.subr.mxu0 0.0
    %455 = vmatpush1.msra.mxu0 0.0
    %456 = vmatprep.subr.mxu0 0.0
    %457 = vmatpush1.msra.mxu0 0.0
    %458 = vmatprep.subr.mxu0 0.0
    %459 = vmatpush1.msra.mxu0 0.0
    %460 = vmatprep.subr.mxu0 0.0
    %461 = vmatpush1.msra.mxu0 0.0
    %462 = vmatprep.subr.mxu0 0.0
    %463 = vmatpush1.msra.mxu0 0.0
    %464 = vmatprep.subr.mxu0 0.0
    %465 = vmatpush1.msra.mxu0 0.0
    %466 = vmatprep.subr.mxu0 0.0
    %467 = vmatpush1.msra.mxu0 0.0
    %468 = vmatprep.subr.mxu0 0.0
    %469 = vmatpush1.msra.mxu0 0.0
    %470 = vmatprep.subr.mxu0 0.0
    %471 = vmatpush1.msra.mxu0 0.0
    %472 = vmatprep.subr.mxu0 0.0
    %473 = vmatpush1.msra.mxu0 0.0
    %474 = vmatprep.subr.mxu0 0.0
    %475 = vmatpush1.msra.mxu0 0.0
    %476 = vmatprep.subr.mxu0 0.0
    %477 = vmatpush1.msra.mxu0 0.0
    %478 = vmatprep.subr.mxu0 0.0
    %479 = vmatpush1.msra.mxu0 0.0
    %480 = vmatprep.subr.mxu0 0.0
    %481 = vmatpush1.msra.mxu0 0.0
    %482 = vmatprep.subr.mxu0 0.0
    %483 = vmatpush1.msra.mxu0 0.0
    %484 = vmatprep.subr.mxu0 0.0
    %485 = vmatpush1.msra.mxu0 0.0
    %486 = vmatprep.mubr.f32.mxu0 0.0
    %487 = vmatmul.mubr.f32.gmra.mrb[0].mxu0 %v249
    %v488 = vpop.f32.mrb[0].mxu0
    %v489 = vadd.f32 %v385, %v488
    %v490 = vpop.f32.mrb[0].mxu0
    %v491 = vadd.f32 %v389, %v490
    %492 = vmatprep.mubr.f32.mxu0 0.0
    %493 = vmatmul.mubr.f32.gmra.mrb[0].mxu0 %v250
    %v494 = vpop.f32.mrb[0].mxu0
    %v495 = vadd.f32 %v385, %v494
    %v496 = vpop.f32.mrb[0].mxu0
    %v497 = vadd.f32 %v389, %v496
    %498 = vmatprep.mubr.f32.mxu0 0.0
    %499 = vmatmul.mubr.f32.gmra.mrb[0].mxu0 %v251
    %v500 = vpop.f32.mrb[0].mxu0
    %v501 = vadd.f32 %v385, %v500
    %v502 = vpop.f32.mrb[0].mxu0
    %v503 = vadd.f32 %v389, %v502
    %504 = vdwg.mxu0
    %505 = vmatprep.subr.mxu0 %v255
    %506 = vmatpush1.msra.mxu0 %v254
    %507 = vmatprep.subr.mxu0 %v263
    %508 = vmatpush1.msra.mxu0 %v262
    %509 = vmatprep.subr.mxu0 %v271
    %510 = vmatpush1.msra.mxu0 %v270
    %511 = vmatprep.subr.mxu0 %v279
    %512 = vmatpush1.msra.mxu0 %v278
    %513 = vmatprep.subr.mxu0 %v287
    %514 = vmatpush1.msra.mxu0 %v286
    %515 = vmatprep.subr.mxu0 %v295
    %516 = vmatpush1.msra.mxu0 %v294
    %517 = vmatprep.subr.mxu0 %v303
    %518 = vmatpush1.msra.mxu0 %v302
    %519 = vmatprep.subr.mxu0 %v311
    %520 = vmatpush1.msra.mxu0 %v310
    %521 = vmatprep.subr.mxu0 %v319
    %522 = vmatpush1.msra.mxu0 %v318
    %523 = vmatprep.subr.mxu0 %v327
    %524 = vmatpush1.msra.mxu0 %v326
    %525 = vmatprep.subr.mxu0 %v335
    %526 = vmatpush1.msra.mxu0 %v334
    %527 = vmatprep.subr.mxu0 %v343
    %528 = vmatpush1.msra.mxu0 %v342
    %529 = vmatprep.subr.mxu0 %v351
    %530 = vmatpush1.msra.mxu0 %v350
    %531 = vmatprep.subr.mxu0 %v359
    %532 = vmatpush1.msra.mxu0 %v358
    %533 = vmatprep.subr.mxu0 %v367
    %534 = vmatpush1.msra.mxu0 %v366
    %535 = vmatprep.subr.mxu0 %v375
    %536 = vmatpush1.msra.mxu0 %v374
    %537 = vmatprep.subr.mxu0 0.0
    %538 = vmatpush1.msra.mxu0 0.0
    %539 = vmatprep.subr.mxu0 0.0
    %540 = vmatpush1.msra.mxu0 0.0
    %541 = vmatprep.subr.mxu0 0.0
    %542 = vmatpush1.msra.mxu0 0.0
    %543 = vmatprep.subr.mxu0 0.0
    %544 = vmatpush1.msra.mxu0 0.0
    %545 = vmatprep.subr.mxu0 0.0
    %546 = vmatpush1.msra.mxu0 0.0
    %547 = vmatprep.subr.mxu0 0.0
    %548 = vmatpush1.msra.mxu0 0.0
    %549 = vmatprep.subr.mxu0 0.0
    %550 = vmatpush1.msra.mxu0 0.0
    %551 = vmatprep.subr.mxu0 0.0
    %552 = vmatpush1.msra.mxu0 0.0
    %553 = vmatprep.subr.mxu0 0.0
    %554 = vmatpush1.msra.mxu0 0.0
    %555 = vmatprep.subr.mxu0 0.0
    %556 = vmatpush1.msra.mxu0 0.0
    %557 = vmatprep.subr.mxu0 0.0
    %558 = vmatpush1.msra.mxu0 0.0
    %559 = vmatprep.subr.mxu0 0.0
    %560 = vmatpush1.msra.mxu0 0.0
    %561 = vmatprep.subr.mxu0 0.0
    %562 = vmatpush1.msra.mxu0 0.0
    %563 = vmatprep.subr.mxu0 0.0
    %564 = vmatpush1.msra.mxu0 0.0
    %565 = vmatprep.subr.mxu0 0.0
    %566 = vmatpush1.msra.mxu0 0.0
    %567 = vmatprep.subr.mxu0 0.0
    %568 = vmatpush1.msra.mxu0 0.0
    %569 = vmatprep.mubr.f32.mxu0 0.0
    %570 = vmatmul.mubr.f32.gmra.mrb[0].mxu0 %v249
    %v571 = vpop.f32.mrb[0].mxu0
    %v572 = vadd.f32 %v393, %v571
    %v573 = vpop.f32.mrb[0].mxu0
    %v574 = vadd.f32 %v397, %v573
    %575 = vmatprep.mubr.f32.mxu0 0.0
    %576 = vmatmul.mubr.f32.gmra.mrb[0].mxu0 %v250
    %v577 = vpop.f32.mrb[0].mxu0
    %v578 = vadd.f32 %v393, %v577
    %v579 = vpop.f32.mrb[0].mxu0
    %v580 = vadd.f32 %v397, %v579
    %581 = vmatprep.mubr.f32.mxu0 0.0
    %582 = vmatmul.mubr.f32.gmra.mrb[0].mxu0 %v251
    %v583 = vpop.f32.mrb[0].mxu0
    %v584 = vadd.f32 %v393, %v583
    %v585 = vpop.f32.mrb[0].mxu0
    %v586 = vadd.f32 %v397, %v585
    %587 = vdwg.mxu0
    %588 = vmatprep.subr.mxu0 %v257
    %589 = vmatpush1.msra.mxu0 %v256
    %590 = vmatprep.subr.mxu0 %v265
    %591 = vmatpush1.msra.mxu0 %v264
    %592 = vmatprep.subr.mxu0 %v273
    %593 = vmatpush1.msra.mxu0 %v272
    %594 = vmatprep.subr.mxu0 %v281
    %595 = vmatpush1.msra.mxu0 %v280
    %596 = vmatprep.subr.mxu0 %v289
    %597 = vmatpush1.msra.mxu0 %v288
    %598 = vmatprep.subr.mxu0 %v297
    %599 = vmatpush1.msra.mxu0 %v296
    %600 = vmatprep.subr.mxu0 %v305
    %601 = vmatpush1.msra.mxu0 %v304
    %602 = vmatprep.subr.mxu0 %v313
    %603 = vmatpush1.msra.mxu0 %v312
    %604 = vmatprep.subr.mxu0 %v321
    %605 = vmatpush1.msra.mxu0 %v320
    %606 = vmatprep.subr.mxu0 %v329
    %607 = vmatpush1.msra.mxu0 %v328
    %608 = vmatprep.subr.mxu0 %v337
    %609 = vmatpush1.msra.mxu0 %v336
    %610 = vmatprep.subr.mxu0 %v345
    %611 = vmatpush1.msra.mxu0 %v344
    %612 = vmatprep.subr.mxu0 %v353
    %613 = vmatpush1.msra.mxu0 %v352
    %614 = vmatprep.subr.mxu0 %v361
    %615 = vmatpush1.msra.mxu0 %v360
    %616 = vmatprep.subr.mxu0 %v369
    %617 = vmatpush1.msra.mxu0 %v368
    %618 = vmatprep.subr.mxu0 %v377
    %619 = vmatpush1.msra.mxu0 %v376
    %620 = vmatprep.subr.mxu0 0.0
    %621 = vmatpush1.msra.mxu0 0.0
    %622 = vmatprep.subr.mxu0 0.0
    %623 = vmatpush1.msra.mxu0 0.0
    %624 = vmatprep.subr.mxu0 0.0
    %625 = vmatpush1.msra.mxu0 0.0
    %626 = vmatprep.subr.mxu0 0.0
    %627 = vmatpush1.msra.mxu0 0.0
    %628 = vmatprep.subr.mxu0 0.0
    %629 = vmatpush1.msra.mxu0 0.0
    %630 = vmatprep.subr.mxu0 0.0
    %631 = vmatpush1.msra.mxu0 0.0
    %632 = vmatprep.subr.mxu0 0.0
    %633 = vmatpush1.msra.mxu0 0.0
    %634 = vmatprep.subr.mxu0 0.0
    %635 = vmatpush1.msra.mxu0 0.0
    %636 = vmatprep.subr.mxu0 0.0
    %637 = vmatpush1.msra.mxu0 0.0
    %638 = vmatprep.subr.mxu0 0.0
    %639 = vmatpush1.msra.mxu0 0.0
    %640 = vmatprep.subr.mxu0 0.0
    %641 = vmatpush1.msra.mxu0 0.0
    %642 = vmatprep.subr.mxu0 0.0
    %643 = vmatpush1.msra.mxu0 0.0
    %644 = vmatprep.subr.mxu0 0.0
    %645 = vmatpush1.msra.mxu0 0.0
    %646 = vmatprep.subr.mxu0 0.0
    %647 = vmatpush1.msra.mxu0 0.0
    %648 = vmatprep.subr.mxu0 0.0
    %649 = vmatpush1.msra.mxu0 0.0
    %650 = vmatprep.subr.mxu0 0.0
    %651 = vmatpush1.msra.mxu0 0.0
    %652 = vmatprep.mubr.f32.mxu0 0.0
    %653 = vmatmul.mubr.f32.gmra.mrb[0].mxu0 %v249
    %v654 = vpop.f32.mrb[0].mxu0
    %v655 = vadd.f32 %v401, %v654
    %v656 = vpop.f32.mrb[0].mxu0
    %v657 = vadd.f32 %v405, %v656
    %658 = vmatprep.mubr.f32.mxu0 0.0
    %659 = vmatmul.mubr.f32.gmra.mrb[0].mxu0 %v250
    %v660 = vpop.f32.mrb[0].mxu0
    %v661 = vadd.f32 %v401, %v660
    %v662 = vpop.f32.mrb[0].mxu0
    %v663 = vadd.f32 %v405, %v662
    %664 = vmatprep.mubr.f32.mxu0 0.0
    %665 = vmatmul.mubr.f32.gmra.mrb[0].mxu0 %v251
    %v666 = vpop.f32.mrb[0].mxu0
    %v667 = vadd.f32 %v401, %v666
    %v668 = vpop.f32.mrb[0].mxu0
    %v669 = vadd.f32 %v405, %v668
    %670 = vdwg.mxu0
    %671 = vmatprep.subr.mxu0 %v259
    %672 = vmatpush1.msra.mxu0 %v258
    %673 = vmatprep.subr.mxu0 %v267
    %674 = vmatpush1.msra.mxu0 %v266
    %675 = vmatprep.subr.mxu0 %v275
    %676 = vmatpush1.msra.mxu0 %v274
    %677 = vmatprep.subr.mxu0 %v283
    %678 = vmatpush1.msra.mxu0 %v282
    %679 = vmatprep.subr.mxu0 %v291
    %680 = vmatpush1.msra.mxu0 %v290
    %681 = vmatprep.subr.mxu0 %v299
    %682 = vmatpush1.msra.mxu0 %v298
    %683 = vmatprep.subr.mxu0 %v307
    %684 = vmatpush1.msra.mxu0 %v306
    %685 = vmatprep.subr.mxu0 %v315
    %686 = vmatpush1.msra.mxu0 %v314
    %687 = vmatprep.subr.mxu0 %v323
    %688 = vmatpush1.msra.mxu0 %v322
    %689 = vmatprep.subr.mxu0 %v331
    %690 = vmatpush1.msra.mxu0 %v330
    %691 = vmatprep.subr.mxu0 %v339
    %692 = vmatpush1.msra.mxu0 %v338
    %693 = vmatprep.subr.mxu0 %v347
    %694 = vmatpush1.msra.mxu0 %v346
    %695 = vmatprep.subr.mxu0 %v355
    %696 = vmatpush1.msra.mxu0 %v354
    %697 = vmatprep.subr.mxu0 %v363
    %698 = vmatpush1.msra.mxu0 %v362
    %699 = vmatprep.subr.mxu0 %v371
    %700 = vmatpush1.msra.mxu0 %v370
    %701 = vmatprep.subr.mxu0 %v379
    %702 = vmatpush1.msra.mxu0 %v378
    %703 = vmatprep.subr.mxu0 0.0
    %704 = vmatpush1.msra.mxu0 0.0
    %705 = vmatprep.subr.mxu0 0.0
    %706 = vmatpush1.msra.mxu0 0.0
    %707 = vmatprep.subr.mxu0 0.0
    %708 = vmatpush1.msra.mxu0 0.0
    %709 = vmatprep.subr.mxu0 0.0
    %710 = vmatpush1.msra.mxu0 0.0
    %711 = vmatprep.subr.mxu0 0.0
    %712 = vmatpush1.msra.mxu0 0.0
    %713 = vmatprep.subr.mxu0 0.0
    %714 = vmatpush1.msra.mxu0 0.0
    %715 = vmatprep.subr.mxu0 0.0
    %716 = vmatpush1.msra.mxu0 0.0
    %717 = vmatprep.subr.mxu0 0.0
    %718 = vmatpush1.msra.mxu0 0.0
    %719 = vmatprep.subr.mxu0 0.0
    %720 = vmatpush1.msra.mxu0 0.0
    %721 = vmatprep.subr.mxu0 0.0
    %722 = vmatpush1.msra.mxu0 0.0
    %723 = vmatprep.subr.mxu0 0.0
    %724 = vmatpush1.msra.mxu0 0.0
    %725 = vmatprep.subr.mxu0 0.0
    %726 = vmatpush1.msra.mxu0 0.0
    %727 = vmatprep.subr.mxu0 0.0
    %728 = vmatpush1.msra.mxu0 0.0
    %729 = vmatprep.subr.mxu0 0.0
    %730 = vmatpush1.msra.mxu0 0.0
    %731 = vmatprep.subr.mxu0 0.0
    %732 = vmatpush1.msra.mxu0 0.0
    %733 = vmatprep.subr.mxu0 0.0
    %734 = vmatpush1.msra.mxu0 0.0
    %735 = vmatprep.mubr.f32.mxu0 0.0
    %736 = vmatmul.mubr.f32.gmra.mrb[0].mxu0 %v249
    %v737 = vpop.f32.mrb[0].mxu0
    %v738 = vadd.f32 %v409, %v737
    %v739 = vpop.f32.mrb[0].mxu0
    %v740 = vadd.f32 %v413, %v739
    %741 = vmatprep.mubr.f32.mxu0 0.0
    %742 = vmatmul.mubr.f32.gmra.mrb[0].mxu0 %v250
    %v743 = vpop.f32.mrb[0].mxu0
    %v744 = vadd.f32 %v409, %v743
    %v745 = vpop.f32.mrb[0].mxu0
    %v746 = vadd.f32 %v413, %v745
    %747 = vmatprep.mubr.f32.mxu0 0.0
    %748 = vmatmul.mubr.f32.gmra.mrb[0].mxu0 %v251
    %v749 = vpop.f32.mrb[0].mxu0
    %v750 = vadd.f32 %v409, %v749
    %v751 = vpop.f32.mrb[0].mxu0
    %v752 = vadd.f32 %v413, %v751
    %753 = vdwg.mxu0
    %754 = vst [vmem:[%s9] sm:$0xff] %v489
    %755 = vst [vmem:[%s9 + $0x8] sm:$0xff] %v491
    %756 = vst [vmem:[%s9 + $0x10] sm:$0xff] %v572
    %757 = vst [vmem:[%s9 + $0x18] sm:$0xff] %v574
    %758 = vst [vmem:[%s9 + $0x20] sm:$0xff] %v655
    %759 = vst [vmem:[%s9 + $0x28] sm:$0xff] %v657
    %760 = vst [vmem:[%s9 + $0x30] sm:$0xff] %v738
    %761 = vst [vmem:[%s9 + $0x38] sm:$0xff] %v740
    %762 = vst [vmem:[%s9 + $0x40] sm:$0xff] %v495
    %763 = vst [vmem:[%s9 + $0x48] sm:$0xff] %v497
    %764 = vst [vmem:[%s9 + $0x50] sm:$0xff] %v578
    %765 = vst [vmem:[%s9 + $0x58] sm:$0xff] %v580
    %766 = vst [vmem:[%s9 + $0x60] sm:$0xff] %v661
    %767 = vst [vmem:[%s9 + $0x68] sm:$0xff] %v663
    %768 = vst [vmem:[%s9 + $0x70] sm:$0xff] %v744
    %769 = vst [vmem:[%s9 + $0x78] sm:$0xff] %v746
    %770 = vst [vmem:[%s9 + $0x80] sm:$0xff] %v501
    %771 = vst [vmem:[%s9 + $0x88] sm:$0xff] %v503
    %772 = vst [vmem:[%s9 + $0x90] sm:$0xff] %v584
    %773 = vst [vmem:[%s9 + $0x98] sm:$0xff] %v586
    %774 = vst [vmem:[%s9 + $0xa0] sm:$0xff] %v667
    %775 = vst [vmem:[%s9 + $0xa8] sm:$0xff] %v669
    %776 = vst [vmem:[%s9 + $0xb0] sm:$0xff] %v750
    %777 = vst [vmem:[%s9 + $0xb8] sm:$0xff] %v752
    // Predicated region
    $region38: #{net_forward.2} parent=1 // pred_check
      _
    $region39: #{net_forward.2} parent=1 // pred_check_branch
      %779 = sbr.rel (0) target = $region41
    $region40: #{net_forward.2} parent=1 // pred_region
      _
    $region41: #{net_forward.2} parent=1 // pred_fallthru
      _
    // Predicated region
    $region42: #{net_forward.2} parent=1 // pred_check
      _
    $region43: #{net_forward.2} parent=1 // pred_check_branch
      %781 = sbr.rel (0) target = $region45
    $region44: #{net_forward.2} parent=1 // pred_region
      _
    $region45: #{net_forward.2} parent=1 // pred_fallthru
      _
    // Predicated region
    $region46: #{net_forward.2} parent=1 // pred_check
      _
    $region47: #{net_forward.2} parent=1 // pred_check_branch
      %783 = sbr.rel (0) target = $region49
    $region48: #{net_forward.2} parent=1 // pred_region
      _
    $region49: #{net_forward.2} parent=1 // pred_fallthru
      _
    // Predicated region
    $region50: #{net_forward.2} parent=1 // pred_check
      _
    $region51: #{net_forward.2} parent=1 // pred_check_branch
      %785 = sbr.rel (0) target = $region53
    $region52: #{net_forward.2} parent=1 // pred_region
      _
    $region53: #{net_forward.2} parent=1 // pred_fallthru
      _
    %786 = vsyncpa [#allocation3], 1

// kernel: net_forward.3
$region0: #{net_forward.3}
  #allocation0 [shape = 'u32[]', space=smem, size = 0x4, offset = 0x4, fixed_abs, tag = 'smem constant byte address 0x4 - core index']
  #allocation1 [shape = 'u32[144,128]{1,0:T(1,128)}', space=vmem, size = 0x12000, scoped, tag = 'internal scratch']
  #allocation2 [shape = 'f32[1,1]{1,0:T(1,128)S(1)}', space=vmem, size = 0x200, scoped, tag = 'scoped memory for net_forward.3']
  %s0 = inlined_call_operand.vmem [shape: f32[10,32], index: 0, kind: input, shape index: {}]
  %s1 = inlined_call_operand.vmem [shape: f32[24,32,32], index: 1, kind: input, shape index: {}]
  %s2 = inlined_call_operand.vmem [shape: f32[24,10], index: 2, kind: input, shape index: {}]
  %s3 = inlined_call_operand.vmem [shape: f32[10,24], index: 3, kind: input, shape index: {}]
  %s4 = inlined_call_operand.vmem [shape: f32[1,32], index: 4, kind: input, shape index: {}]
  %s5 = inlined_call_operand.vmem [shape: f32[32,96], index: 5, kind: input, shape index: {}]
  %s6 = inlined_call_operand.vmem [shape: f32[32,96], index: 6, kind: input, shape index: {}]
  %s7 = inlined_call_operand.vmem [shape: f32[1,96], index: 7, kind: input, shape index: {}]
  %s8 = inlined_call_operand.vmem [shape: f32[1,96], index: 8, kind: input, shape index: {}]
  %s9 = inlined_call_operand.vmem [shape: f32[10,2], index: 9, kind: input, shape index: {}]
  %s10 = inlined_call_operand.vmem [shape: f32[2,10], index: 10, kind: input, shape index: {}]
  %s11 = inlined_call_operand.vmem [shape: f32[64,128], index: 11, kind: input, shape index: {}]
  %s12 = inlined_call_operand.vmem [shape: f32[32,128], index: 12, kind: input, shape index: {}]
  %s13 = inlined_call_operand.vmem [shape: f32[1,128], index: 13, kind: input, shape index: {}]
  %s14 = inlined_call_operand.vmem [shape: f32[1,128], index: 14, kind: input, shape index: {}]
  %s15 = inlined_call_operand.vmem [shape: f32[64,32], index: 15, kind: input, shape index: {}]
  %s16 = inlined_call_operand.vmem [shape: f32[1,32], index: 16, kind: input, shape index: {}]
  %s17 = inlined_call_operand.vmem [shape: f32[32,1], index: 17, kind: input, shape index: {}]
  %s18 = inlined_call_operand.<no memory space> [shape: f32[1,1], index: 18, kind: input, shape index: {}]
  %s19 = inlined_call_operand.vmem [shape: f32[2,1], index: 19, kind: output, shape index: {}]
  %s20 = sld [smem:[#allocation0]]
  $region86: #{net_forward.3} parent=0
    _
  %s22 = ssub.s32 1, %s20
  %s23 = scalar_select 0, %s22, %s20
  %v24 = vstv %s18
  %25 = vst [vmem:[#allocation2] sm:$0x1] %v24
  // Predicated region
  $region2: #{net_forward.3} parent=0 // pred_check
    _
  $region3: #{net_forward.3} parent=0 // pred_check_branch
    %27 = sbr.rel (0) target = $region5
  $region4: #{net_forward.3} parent=0 // pred_region
    _
  $region5: #{net_forward.3} parent=0 // pred_fallthru
    _
  // Predicated region
  $region6: #{net_forward.3} parent=0 // pred_check
    _
  $region7: #{net_forward.3} parent=0 // pred_check_branch
    %29 = sbr.rel (0) target = $region9
  $region8: #{net_forward.3} parent=0 // pred_region
    _
  $region9: #{net_forward.3} parent=0 // pred_fallthru
    _
  // Predicated region
  $region10: #{net_forward.3} parent=0 // pred_check
    _
  $region11: #{net_forward.3} parent=0 // pred_check_branch
    %31 = sbr.rel (0) target = $region13
  $region12: #{net_forward.3} parent=0 // pred_region
    _
  $region13: #{net_forward.3} parent=0 // pred_fallthru
    _
  // Predicated region
  $region14: #{net_forward.3} parent=0 // pred_check
    _
  $region15: #{net_forward.3} parent=0 // pred_check_branch
    %33 = sbr.rel (0) target = $region17
  $region16: #{net_forward.3} parent=0 // pred_region
    _
  $region17: #{net_forward.3} parent=0 // pred_fallthru
    _
  // Predicated region
  $region18: #{net_forward.3} parent=0 // pred_check
    _
  $region19: #{net_forward.3} parent=0 // pred_check_branch
    %35 = sbr.rel (0) target = $region21
  $region20: #{net_forward.3} parent=0 // pred_region
    _
  $region21: #{net_forward.3} parent=0 // pred_fallthru
    _
  // Predicated region
  $region22: #{net_forward.3} parent=0 // pred_check
    _
  $region23: #{net_forward.3} parent=0 // pred_check_branch
    %37 = sbr.rel (0) target = $region25
  $region24: #{net_forward.3} parent=0 // pred_region
    _
  $region25: #{net_forward.3} parent=0 // pred_fallthru
    _
  // Predicated region
  $region26: #{net_forward.3} parent=0 // pred_check
    _
  $region27: #{net_forward.3} parent=0 // pred_check_branch
    %39 = sbr.rel (0) target = $region29
  $region28: #{net_forward.3} parent=0 // pred_region
    _
  $region29: #{net_forward.3} parent=0 // pred_fallthru
    _
  // Predicated region
  $region30: #{net_forward.3} parent=0 // pred_check
    _
  $region31: #{net_forward.3} parent=0 // pred_check_branch
    %41 = sbr.rel (0) target = $region33
  $region32: #{net_forward.3} parent=0 // pred_region
    _
  $region33: #{net_forward.3} parent=0 // pred_fallthru
    _
  // Predicated region
  $region34: #{net_forward.3} parent=0 // pred_check
    _
  $region35: #{net_forward.3} parent=0 // pred_check_branch
    %43 = sbr.rel (0) target = $region37
  $region36: #{net_forward.3} parent=0 // pred_region
    _
  $region37: #{net_forward.3} parent=0 // pred_fallthru
    _
  // Predicated region
  $region38: #{net_forward.3} parent=0 // pred_check
    _
  $region39: #{net_forward.3} parent=0 // pred_check_branch
    %45 = sbr.rel (0) target = $region41
  $region40: #{net_forward.3} parent=0 // pred_region
    _
  $region41: #{net_forward.3} parent=0 // pred_fallthru
    _
  // Predicated region
  $region42: #{net_forward.3} parent=0 // pred_check
    _
  $region43: #{net_forward.3} parent=0 // pred_check_branch
    %47 = sbr.rel (0) target = $region45
  $region44: #{net_forward.3} parent=0 // pred_region
    _
  $region45: #{net_forward.3} parent=0 // pred_fallthru
    _
  // Predicated region
  $region46: #{net_forward.3} parent=0 // pred_check
    _
  $region47: #{net_forward.3} parent=0 // pred_check_branch
    %49 = sbr.rel (0) target = $region49
  $region48: #{net_forward.3} parent=0 // pred_region
    _
  $region49: #{net_forward.3} parent=0 // pred_fallthru
    _
  // Predicated region
  $region50: #{net_forward.3} parent=0 // pred_check
    _
  $region51: #{net_forward.3} parent=0 // pred_check_branch
    %51 = sbr.rel (0) target = $region53
  $region52: #{net_forward.3} parent=0 // pred_region
    _
  $region53: #{net_forward.3} parent=0 // pred_fallthru
    _
  // Predicated region
  $region54: #{net_forward.3} parent=0 // pred_check
    _
  $region55: #{net_forward.3} parent=0 // pred_check_branch
    %53 = sbr.rel (0) target = $region57
  $region56: #{net_forward.3} parent=0 // pred_region
    _
  $region57: #{net_forward.3} parent=0 // pred_fallthru
    _
  // Predicated region
  $region58: #{net_forward.3} parent=0 // pred_check
    _
  $region59: #{net_forward.3} parent=0 // pred_check_branch
    %55 = sbr.rel (0) target = $region61
  $region60: #{net_forward.3} parent=0 // pred_region
    _
  $region61: #{net_forward.3} parent=0 // pred_fallthru
    _
  // Predicated region
  $region62: #{net_forward.3} parent=0 // pred_check
    _
  $region63: #{net_forward.3} parent=0 // pred_check_branch
    %57 = sbr.rel (0) target = $region65
  $region64: #{net_forward.3} parent=0 // pred_region
    _
  $region65: #{net_forward.3} parent=0 // pred_fallthru
    _
  // Predicated region
  $region66: #{net_forward.3} parent=0 // pred_check
    _
  $region67: #{net_forward.3} parent=0 // pred_check_branch
    %59 = sbr.rel (0) target = $region69
  $region68: #{net_forward.3} parent=0 // pred_region
    _
  $region69: #{net_forward.3} parent=0 // pred_fallthru
    _
  // Predicated region
  $region70: #{net_forward.3} parent=0 // pred_check
    _
  $region71: #{net_forward.3} parent=0 // pred_check_branch
    %61 = sbr.rel (0) target = $region73
  $region72: #{net_forward.3} parent=0 // pred_region
    _
  $region73: #{net_forward.3} parent=0 // pred_fallthru
    _
  // Predicated region
  $region74: #{net_forward.3} parent=0 // pred_check
    _
  $region75: #{net_forward.3} parent=0 // pred_check_branch
    %63 = sbr.rel (0) target = $region77
  $region76: #{net_forward.3} parent=0 // pred_region
    _
  $region77: #{net_forward.3} parent=0 // pred_fallthru
    _
  %v64 = vld [vmem:[%s1] sm:$0xff]
  %v65 = vld [vmem:[%s1 + $0x8] sm:$0xff]
  %v66 = vld [vmem:[%s1 + $0x10] sm:$0xff]
  %v67 = vld [vmem:[%s1 + $0x18] sm:$0xff]
  %v68 = vld [vmem:[%s1 + $0x20] sm:$0xff]
  %v69 = vld [vmem:[%s1 + $0x28] sm:$0xff]
  %v70 = vld [vmem:[%s1 + $0x30] sm:$0xff]
  %v71 = vld [vmem:[%s1 + $0x38] sm:$0xff]
  %v72 = vld [vmem:[%s1 + $0x40] sm:$0xff]
  %v73 = vld [vmem:[%s1 + $0x48] sm:$0xff]
  %v74 = vld [vmem:[%s1 + $0x50] sm:$0xff]
  %v75 = vld [vmem:[%s1 + $0x58] sm:$0xff]
  %v76 = vld [vmem:[%s1 + $0x60] sm:$0xff]
  %v77 = vld [vmem:[%s1 + $0x68] sm:$0xff]
  %v78 = vld [vmem:[%s1 + $0x70] sm:$0xff]
  %v79 = vld [vmem:[%s1 + $0x78] sm:$0xff]
  %v80 = vld [vmem:[%s1 + $0x80] sm:$0xff]
  %v81 = vld [vmem:[%s1 + $0x88] sm:$0xff]
  %v82 = vld [vmem:[%s1 + $0x90] sm:$0xff]
  %v83 = vld [vmem:[%s1 + $0x98] sm:$0xff]
  %v84 = vld [vmem:[%s1 + $0xa0] sm:$0xff]
  %v85 = vld [vmem:[%s1 + $0xa8] sm:$0xff]
  %v86 = vld [vmem:[%s1 + $0xb0] sm:$0xff]
  %v87 = vld [vmem:[%s1 + $0xb8] sm:$0xff]
  %v88 = vld [vmem:[%s1 + $0xc0] sm:$0xff]
  %v89 = vld [vmem:[%s1 + $0xc8] sm:$0xff]
  %v90 = vld [vmem:[%s1 + $0xd0] sm:$0xff]
  %v91 = vld [vmem:[%s1 + $0xd8] sm:$0xff]
  %v92 = vld [vmem:[%s1 + $0xe0] sm:$0xff]
  %v93 = vld [vmem:[%s1 + $0xe8] sm:$0xff]
  %v94 = vld [vmem:[%s1 + $0xf0] sm:$0xff]
  %v95 = vld [vmem:[%s1 + $0xf8] sm:$0xff]
  %v96 = vld [vmem:[%s1 + $0x100] sm:$0xff]
  %v97 = vld [vmem:[%s1 + $0x108] sm:$0xff]
  %v98 = vld [vmem:[%s1 + $0x110] sm:$0xff]
  %v99 = vld [vmem:[%s1 + $0x118] sm:$0xff]
  %v100 = vld [vmem:[%s1 + $0x120] sm:$0xff]
  %v101 = vld [vmem:[%s1 + $0x128] sm:$0xff]
  %v102 = vld [vmem:[%s1 + $0x130] sm:$0xff]
  %v103 = vld [vmem:[%s1 + $0x138] sm:$0xff]
  %v104 = vld [vmem:[%s1 + $0x140] sm:$0xff]
  %v105 = vld [vmem:[%s1 + $0x148] sm:$0xff]
  %v106 = vld [vmem:[%s1 + $0x150] sm:$0xff]
  %v107 = vld [vmem:[%s1 + $0x158] sm:$0xff]
  %v108 = vld [vmem:[%s1 + $0x160] sm:$0xff]
  %v109 = vld [vmem:[%s1 + $0x168] sm:$0xff]
  %v110 = vld [vmem:[%s1 + $0x170] sm:$0xff]
  %v111 = vld [vmem:[%s1 + $0x178] sm:$0xff]
  %v112 = vld [vmem:[%s1 + $0x180] sm:$0xff]
  %v113 = vld [vmem:[%s1 + $0x188] sm:$0xff]
  %v114 = vld [vmem:[%s1 + $0x190] sm:$0xff]
  %v115 = vld [vmem:[%s1 + $0x198] sm:$0xff]
  %v116 = vld [vmem:[%s1 + $0x1a0] sm:$0xff]
  %v117 = vld [vmem:[%s1 + $0x1a8] sm:$0xff]
  %v118 = vld [vmem:[%s1 + $0x1b0] sm:$0xff]
  %v119 = vld [vmem:[%s1 + $0x1b8] sm:$0xff]
  %v120 = vld [vmem:[%s1 + $0x1c0] sm:$0xff]
  %v121 = vld [vmem:[%s1 + $0x1c8] sm:$0xff]
  %v122 = vld [vmem:[%s1 + $0x1d0] sm:$0xff]
  %v123 = vld [vmem:[%s1 + $0x1d8] sm:$0xff]
  %v124 = vld [vmem:[%s1 + $0x1e0] sm:$0xff]
  %v125 = vld [vmem:[%s1 + $0x1e8] sm:$0xff]
  %v126 = vld [vmem:[%s1 + $0x1f0] sm:$0xff]
  %v127 = vld [vmem:[%s1 + $0x1f8] sm:$0xff]
  %v128 = vld [vmem:[%s1 + $0x200] sm:$0xff]
  %v129 = vld [vmem:[%s1 + $0x208] sm:$0xff]
  %v130 = vld [vmem:[%s1 + $0x210] sm:$0xff]
  %v131 = vld [vmem:[%s1 + $0x218] sm:$0xff]
  %v132 = vld [vmem:[%s1 + $0x220] sm:$0xff]
  %v133 = vld [vmem:[%s1 + $0x228] sm:$0xff]
  %v134 = vld [vmem:[%s1 + $0x230] sm:$0xff]
  %v135 = vld [vmem:[%s1 + $0x238] sm:$0xff]
  %v136 = vld [vmem:[%s1 + $0x240] sm:$0xff]
  %v137 = vld [vmem:[%s1 + $0x248] sm:$0xff]
  %v138 = vld [vmem:[%s1 + $0x250] sm:$0xff]
  %v139 = vld [vmem:[%s1 + $0x258] sm:$0xff]
  %v140 = vld [vmem:[%s1 + $0x260] sm:$0xff]
  %v141 = vld [vmem:[%s1 + $0x268] sm:$0xff]
  %v142 = vld [vmem:[%s1 + $0x270] sm:$0xff]
  %v143 = vld [vmem:[%s1 + $0x278] sm:$0xff]
  %v144 = vld [vmem:[%s1 + $0x280] sm:$0xff]
  %v145 = vld [vmem:[%s1 + $0x288] sm:$0xff]
  %v146 = vld [vmem:[%s1 + $0x290] sm:$0xff]
  %v147 = vld [vmem:[%s1 + $0x298] sm:$0xff]
  %v148 = vld [vmem:[%s1 + $0x2a0] sm:$0xff]
  %v149 = vld [vmem:[%s1 + $0x2a8] sm:$0xff]
  %v150 = vld [vmem:[%s1 + $0x2b0] sm:$0xff]
  %v151 = vld [vmem:[%s1 + $0x2b8] sm:$0xff]
  %v152 = vld [vmem:[%s1 + $0x2c0] sm:$0xff]
  %v153 = vld [vmem:[%s1 + $0x2c8] sm:$0xff]
  %v154 = vld [vmem:[%s1 + $0x2d0] sm:$0xff]
  %v155 = vld [vmem:[%s1 + $0x2d8] sm:$0xff]
  %v156 = vld [vmem:[%s1 + $0x2e0] sm:$0xff]
  %v157 = vld [vmem:[%s1 + $0x2e8] sm:$0xff]
  %v158 = vld [vmem:[%s1 + $0x2f0] sm:$0xff]
  %v159 = vld [vmem:[%s1 + $0x2f8] sm:$0xff]
  %v160 = vld [vmem:[%s2] sm:$0xff]
  %v161 = vld [vmem:[%s2 + $0x8] sm:$0xff]
  %v162 = vld [vmem:[%s2 + $0x10] sm:$0xff]
  %v163 = vld [vmem:[%s3] sm:$0xff]
  %v164 = vld [vmem:[%s3 + $0x8] sm:$0x3]
  %v165 = vld [vmem:[%s4] sm:$0x1]
  %v166 = vld [vmem:[%s5] sm:$0xff]
  %v167 = vld [vmem:[%s5 + $0x8] sm:$0xff]
  %v168 = vld [vmem:[%s5 + $0x10] sm:$0xff]
  %v169 = vld [vmem:[%s5 + $0x18] sm:$0xff]
  %v170 = vld [vmem:[%s6] sm:$0xff]
  %v171 = vld [vmem:[%s6 + $0x8] sm:$0xff]
  %v172 = vld [vmem:[%s6 + $0x10] sm:$0xff]
  %v173 = vld [vmem:[%s6 + $0x18] sm:$0xff]
  %v174 = vld [vmem:[%s7] sm:$0x1]
  %v175 = vld [vmem:[%s8] sm:$0x1]
  %v176 = vld [vmem:[%s0] sm:$0xff]
  %v177 = vld [vmem:[%s0 + $0x8] sm:$0x3]
  %vm178 = vcmask 80896
  %v180 = vsel %vm178, %v160, 0
  %v183 = vsel %vm178, %v161, 0
  %v186 = vsel %vm178, %v162, 0
  %vm188 = vcmask 1041408
  %v190 = vsel %vm188, %v177, 0
  %192 = vmatprep.subr.mxu0 0.0
  %193 = vmatpush1.msra.mxu0 %v176
  %194 = vmatprep.subr.mxu0 0.0
  %195 = vmatpush1.msra.mxu0 %v190
  %196 = vmatprep.subr.mxu0 0.0
  %197 = vmatpush1.msra.mxu0 0.0
  %198 = vmatprep.subr.mxu0 0.0
  %199 = vmatpush1.msra.mxu0 0.0
  %200 = vmatprep.subr.mxu0 0.0
  %201 = vmatpush1.msra.mxu0 0.0
  %202 = vmatprep.subr.mxu0 0.0
  %203 = vmatpush1.msra.mxu0 0.0
  %204 = vmatprep.subr.mxu0 0.0
  %205 = vmatpush1.msra.mxu0 0.0
  %206 = vmatprep.subr.mxu0 0.0
  %207 = vmatpush1.msra.mxu0 0.0
  %208 = vmatprep.subr.mxu0 0.0
  %209 = vmatpush1.msra.mxu0 0.0
  %210 = vmatprep.subr.mxu0 0.0
  %211 = vmatpush1.msra.mxu0 0.0
  %212 = vmatprep.subr.mxu0 0.0
  %213 = vmatpush1.msra.mxu0 0.0
  %214 = vmatprep.subr.mxu0 0.0
  %215 = vmatpush1.msra.mxu0 0.0
  %216 = vmatprep.subr.mxu0 0.0
  %217 = vmatpush1.msra.mxu0 0.0
  %218 = vmatprep.subr.mxu0 0.0
  %219 = vmatpush1.msra.mxu0 0.0
  %220 = vmatprep.subr.mxu0 0.0
  %221 = vmatpush1.msra.mxu0 0.0
  %222 = vmatprep.subr.mxu0 0.0
  %223 = vmatpush1.msra.mxu0 0.0
  %224 = vmatprep.subr.mxu0 0.0
  %225 = vmatpush1.msra.mxu0 0.0
  %226 = vmatprep.subr.mxu0 0.0
  %227 = vmatpush1.msra.mxu0 0.0
  %228 = vmatprep.subr.mxu0 0.0
  %229 = vmatpush1.msra.mxu0 0.0
  %230 = vmatprep.subr.mxu0 0.0
  %231 = vmatpush1.msra.mxu0 0.0
  %232 = vmatprep.subr.mxu0 0.0
  %233 = vmatpush1.msra.mxu0 0.0
  %234 = vmatprep.subr.mxu0 0.0
  %235 = vmatpush1.msra.mxu0 0.0
  %236 = vmatprep.subr.mxu0 0.0
  %237 = vmatpush1.msra.mxu0 0.0
  %238 = vmatprep.subr.mxu0 0.0
  %239 = vmatpush1.msra.mxu0 0.0
  %240 = vmatprep.subr.mxu0 0.0
  %241 = vmatpush1.msra.mxu0 0.0
  %242 = vmatprep.subr.mxu0 0.0
  %243 = vmatpush1.msra.mxu0 0.0
  %244 = vmatprep.subr.mxu0 0.0
  %245 = vmatpush1.msra.mxu0 0.0
  %246 = vmatprep.subr.mxu0 0.0
  %247 = vmatpush1.msra.mxu0 0.0
  %248 = vmatprep.subr.mxu0 0.0
  %249 = vmatpush1.msra.mxu0 0.0
  %250 = vmatprep.subr.mxu0 0.0
  %251 = vmatpush1.msra.mxu0 0.0
  %252 = vmatprep.subr.mxu0 0.0
  %253 = vmatpush1.msra.mxu0 0.0
  %254 = vmatprep.subr.mxu0 0.0
  %255 = vmatpush1.msra.mxu0 0.0
  %256 = vmatprep.mubr.f32.mxu0 0.0
  %257 = vmatmul.mubr.f32.gmra.mrb[0].mxu0 %v180
  %v258 = vpop.f32.mrb[0].mxu0
  %v259 = vadd.f32 0.0, %v258
  %v260 = vpop.f32.mrb[0].mxu0
  %261 = vmatprep.mubr.f32.mxu0 0.0
  %262 = vmatmul.mubr.f32.gmra.mrb[0].mxu0 %v183
  %v263 = vpop.f32.mrb[0].mxu0
  %v264 = vadd.f32 0.0, %v263
  %v265 = vpop.f32.mrb[0].mxu0
  %266 = vmatprep.mubr.f32.mxu0 0.0
  %267 = vmatmul.mubr.f32.gmra.mrb[0].mxu0 %v186
  %v268 = vpop.f32.mrb[0].mxu0
  %v269 = vadd.f32 0.0, %v268
  %v270 = vpop.f32.mrb[0].mxu0
  %271 = vdwg.mxu0
  %v275 = vcombine.high %v259, %v259
  %v277 = vunpack.c.l.s4 1966171168
  %v278 = vunpack.c.0.s8 %v277
  %v279 = vlaneseq
  %v280 = vshrl.u32 %v279, 7
  %v281 = vsub.s32 %v278, %v280
  %v282 = vrot.slane %v259, %v281
  %v284 = vunpack.c.l.s4 1966171168
  %v285 = vunpack.c.0.s8 %v284
  %v286 = vlaneseq
  %v287 = vshrl.u32 %v286, 7
  %v288 = vsub.s32 %v285, %v287
  %v289 = vrot.slane %v275, %v288
  %v290 = vcombine.high %v282, %v282
  %v291 = vcombine.high %v289, %v289
  %v293 = vunpack.c.l.s4 1966171168
  %v294 = vunpack.c.0.s8 %v293
  %v295 = vlaneseq
  %v296 = vshrl.u32 %v295, 7
  %v297 = vsub.s32 %v294, %v296
  %v298 = vrot.slane %v282, %v297
  %v300 = vunpack.c.l.s4 1966171168
  %v301 = vunpack.c.0.s8 %v300
  %v302 = vlaneseq
  %v303 = vshrl.u32 %v302, 7
  %v304 = vsub.s32 %v301, %v303
  %v305 = vrot.slane %v289, %v304
  %v307 = vunpack.c.l.s4 1966171168
  %v308 = vunpack.c.0.s8 %v307
  %v309 = vlaneseq
  %v310 = vshrl.u32 %v309, 7
  %v311 = vsub.s32 %v308, %v310
  %v312 = vrot.slane %v290, %v311
  %v314 = vunpack.c.l.s4 1966171168
  %v315 = vunpack.c.0.s8 %v314
  %v316 = vlaneseq
  %v317 = vshrl.u32 %v316, 7
  %v318 = vsub.s32 %v315, %v317
  %v319 = vrot.slane %v291, %v318
  %v320 = vcombine.high %v298, %v298
  %v321 = vcombine.high %v305, %v305
  %v322 = vcombine.high %v312, %v312
  %v323 = vcombine.high %v319, %v319
  %v324 = vcombine.high %v264, %v264
  %v326 = vunpack.c.l.s4 1966171168
  %v327 = vunpack.c.0.s8 %v326
  %v328 = vlaneseq
  %v329 = vshrl.u32 %v328, 7
  %v330 = vsub.s32 %v327, %v329
  %v331 = vrot.slane %v264, %v330
  %v333 = vunpack.c.l.s4 1966171168
  %v334 = vunpack.c.0.s8 %v333
  %v335 = vlaneseq
  %v336 = vshrl.u32 %v335, 7
  %v337 = vsub.s32 %v334, %v336
  %v338 = vrot.slane %v324, %v337
  %v339 = vcombine.high %v331, %v331
  %v340 = vcombine.high %v338, %v338
  %v342 = vunpack.c.l.s4 1966171168
  %v343 = vunpack.c.0.s8 %v342
  %v344 = vlaneseq
  %v345 = vshrl.u32 %v344, 7
  %v346 = vsub.s32 %v343, %v345
  %v347 = vrot.slane %v331, %v346
  %v349 = vunpack.c.l.s4 1966171168
  %v350 = vunpack.c.0.s8 %v349
  %v351 = vlaneseq
  %v352 = vshrl.u32 %v351, 7
  %v353 = vsub.s32 %v350, %v352
  %v354 = vrot.slane %v338, %v353
  %v356 = vunpack.c.l.s4 1966171168
  %v357 = vunpack.c.0.s8 %v356
  %v358 = vlaneseq
  %v359 = vshrl.u32 %v358, 7
  %v360 = vsub.s32 %v357, %v359
  %v361 = vrot.slane %v339, %v360
  %v363 = vunpack.c.l.s4 1966171168
  %v364 = vunpack.c.0.s8 %v363
  %v365 = vlaneseq
  %v366 = vshrl.u32 %v365, 7
  %v367 = vsub.s32 %v364, %v366
  %v368 = vrot.slane %v340, %v367
  %v369 = vcombine.high %v347, %v347
  %v370 = vcombine.high %v354, %v354
  %v371 = vcombine.high %v361, %v361
  %v372 = vcombine.high %v368, %v368
  %v373 = vcombine.high %v269, %v269
  %v375 = vunpack.c.l.s4 1966171168
  %v376 = vunpack.c.0.s8 %v375
  %v377 = vlaneseq
  %v378 = vshrl.u32 %v377, 7
  %v379 = vsub.s32 %v376, %v378
  %v380 = vrot.slane %v269, %v379
  %v382 = vunpack.c.l.s4 1966171168
  %v383 = vunpack.c.0.s8 %v382
  %v384 = vlaneseq
  %v385 = vshrl.u32 %v384, 7
  %v386 = vsub.s32 %v383, %v385
  %v387 = vrot.slane %v373, %v386
  %v388 = vcombine.high %v380, %v380
  %v389 = vcombine.high %v387, %v387
  %v391 = vunpack.c.l.s4 1966171168
  %v392 = vunpack.c.0.s8 %v391
  %v393 = vlaneseq
  %v394 = vshrl.u32 %v393, 7
  %v395 = vsub.s32 %v392, %v394
  %v396 = vrot.slane %v380, %v395
  %v398 = vunpack.c.l.s4 1966171168
  %v399 = vunpack.c.0.s8 %v398
  %v400 = vlaneseq
  %v401 = vshrl.u32 %v400, 7
  %v402 = vsub.s32 %v399, %v401
  %v403 = vrot.slane %v387, %v402
  %v405 = vunpack.c.l.s4 1966171168
  %v406 = vunpack.c.0.s8 %v405
  %v407 = vlaneseq
  %v408 = vshrl.u32 %v407, 7
  %v409 = vsub.s32 %v406, %v408
  %v410 = vrot.slane %v388, %v409
  %v412 = vunpack.c.l.s4 1966171168
  %v413 = vunpack.c.0.s8 %v412
  %v414 = vlaneseq
  %v415 = vshrl.u32 %v414, 7
  %v416 = vsub.s32 %v413, %v415
  %v417 = vrot.slane %v389, %v416
  %v418 = vcombine.high %v396, %v396
  %v419 = vcombine.high %v403, %v403
  %v420 = vcombine.high %v410, %v410
  %v421 = vcombine.high %v417, %v417
  %v422 = vlaneseq
  %v423 = vshrl.u32 %v422, 7
  %v424 = vsub.s32 0, %v423
  %v425 = vrot.slane %v298, %v424
  %v426 = vlaneseq
  %v427 = vshrl.u32 %v426, 7
  %v428 = vsub.s32 0, %v427
  %v429 = vrot.slane %v312, %v428
  %v430 = vlaneseq
  %v431 = vshrl.u32 %v430, 7
  %v432 = vsub.s32 0, %v431
  %v433 = vrot.slane %v320, %v432
  %v434 = vlaneseq
  %v435 = vshrl.u32 %v434, 7
  %v436 = vsub.s32 0, %v435
  %v437 = vrot.slane %v322, %v436
  %v438 = vlaneseq
  %v439 = vshrl.u32 %v438, 7
  %v440 = vsub.s32 0, %v439
  %v441 = vrot.slane %v305, %v440
  %v442 = vlaneseq
  %v443 = vshrl.u32 %v442, 7
  %v444 = vsub.s32 0, %v443
  %v445 = vrot.slane %v319, %v444
  %v446 = vlaneseq
  %v447 = vshrl.u32 %v446, 7
  %v448 = vsub.s32 0, %v447
  %v449 = vrot.slane %v321, %v448
  %v450 = vlaneseq
  %v451 = vshrl.u32 %v450, 7
  %v452 = vsub.s32 0, %v451
  %v453 = vrot.slane %v323, %v452
  %v454 = vlaneseq
  %v455 = vshrl.u32 %v454, 7
  %v456 = vsub.s32 0, %v455
  %v457 = vrot.slane %v347, %v456
  %v458 = vlaneseq
  %v459 = vshrl.u32 %v458, 7
  %v460 = vsub.s32 0, %v459
  %v461 = vrot.slane %v361, %v460
  %v462 = vlaneseq
  %v463 = vshrl.u32 %v462, 7
  %v464 = vsub.s32 0, %v463
  %v465 = vrot.slane %v369, %v464
  %v466 = vlaneseq
  %v467 = vshrl.u32 %v466, 7
  %v468 = vsub.s32 0, %v467
  %v469 = vrot.slane %v371, %v468
  %v470 = vlaneseq
  %v471 = vshrl.u32 %v470, 7
  %v472 = vsub.s32 0, %v471
  %v473 = vrot.slane %v354, %v472
  %v474 = vlaneseq
  %v475 = vshrl.u32 %v474, 7
  %v476 = vsub.s32 0, %v475
  %v477 = vrot.slane %v368, %v476
  %v478 = vlaneseq
  %v479 = vshrl.u32 %v478, 7
  %v480 = vsub.s32 0, %v479
  %v481 = vrot.slane %v370, %v480
  %v482 = vlaneseq
  %v483 = vshrl.u32 %v482, 7
  %v484 = vsub.s32 0, %v483
  %v485 = vrot.slane %v372, %v484
  %v486 = vlaneseq
  %v487 = vshrl.u32 %v486, 7
  %v488 = vsub.s32 0, %v487
  %v489 = vrot.slane %v396, %v488
  %v490 = vlaneseq
  %v491 = vshrl.u32 %v490, 7
  %v492 = vsub.s32 0, %v491
  %v493 = vrot.slane %v410, %v492
  %v494 = vlaneseq
  %v495 = vshrl.u32 %v494, 7
  %v496 = vsub.s32 0, %v495
  %v497 = vrot.slane %v418, %v496
  %v498 = vlaneseq
  %v499 = vshrl.u32 %v498, 7
  %v500 = vsub.s32 0, %v499
  %v501 = vrot.slane %v420, %v500
  %v502 = vlaneseq
  %v503 = vshrl.u32 %v502, 7
  %v504 = vsub.s32 0, %v503
  %v505 = vrot.slane %v403, %v504
  %v506 = vlaneseq
  %v507 = vshrl.u32 %v506, 7
  %v508 = vsub.s32 0, %v507
  %v509 = vrot.slane %v417, %v508
  %v510 = vlaneseq
  %v511 = vshrl.u32 %v510, 7
  %v512 = vsub.s32 0, %v511
  %v513 = vrot.slane %v419, %v512
  %v514 = vlaneseq
  %v515 = vshrl.u32 %v514, 7
  %v516 = vsub.s32 0, %v515
  %v517 = vrot.slane %v421, %v516
  %v542 = vmul.f32 %v425, %v64
  %v543 = vmul.f32 %v425, %v65
  %v544 = vmul.f32 %v425, %v66
  %v545 = vmul.f32 %v425, %v67
  %v546 = vmul.f32 %v429, %v68
  %v547 = vmul.f32 %v429, %v69
  %v548 = vmul.f32 %v429, %v70
  %v549 = vmul.f32 %v429, %v71
  %v550 = vmul.f32 %v433, %v72
  %v551 = vmul.f32 %v433, %v73
  %v552 = vmul.f32 %v433, %v74
  %v553 = vmul.f32 %v433, %v75
  %v554 = vmul.f32 %v437, %v76
  %v555 = vmul.f32 %v437, %v77
  %v556 = vmul.f32 %v437, %v78
  %v557 = vmul.f32 %v437, %v79
  %v558 = vmul.f32 %v441, %v80
  %v559 = vmul.f32 %v441, %v81
  %v560 = vmul.f32 %v441, %v82
  %v561 = vmul.f32 %v441, %v83
  %v562 = vmul.f32 %v445, %v84
  %v563 = vmul.f32 %v445, %v85
  %v564 = vmul.f32 %v445, %v86
  %v565 = vmul.f32 %v445, %v87
  %v566 = vmul.f32 %v449, %v88
  %v567 = vmul.f32 %v449, %v89
  %v568 = vmul.f32 %v449, %v90
  %v569 = vmul.f32 %v449, %v91
  %v570 = vmul.f32 %v453, %v92
  %v571 = vmul.f32 %v453, %v93
  %v572 = vmul.f32 %v453, %v94
  %v573 = vmul.f32 %v453, %v95
  %v574 = vmul.f32 %v457, %v96
  %v575 = vmul.f32 %v457, %v97
  %v576 = vmul.f32 %v457, %v98
  %v577 = vmul.f32 %v457, %v99
  %v578 = vmul.f32 %v461, %v100
  %v579 = vmul.f32 %v461, %v101
  %v580 = vmul.f32 %v461, %v102
  %v581 = vmul.f32 %v461, %v103
  %v582 = vmul.f32 %v465, %v104
  %v583 = vmul.f32 %v465, %v105
  %v584 = vmul.f32 %v465, %v106
  %v585 = vmul.f32 %v465, %v107
  %v586 = vmul.f32 %v469, %v108
  %v587 = vmul.f32 %v469, %v109
  %v588 = vmul.f32 %v469, %v110
  %v589 = vmul.f32 %v469, %v111
  %v590 = vmul.f32 %v473, %v112
  %v591 = vmul.f32 %v473, %v113
  %v592 = vmul.f32 %v473, %v114
  %v593 = vmul.f32 %v473, %v115
  %v594 = vmul.f32 %v477, %v116
  %v595 = vmul.f32 %v477, %v117
  %v596 = vmul.f32 %v477, %v118
  %v597 = vmul.f32 %v477, %v119
  %v598 = vmul.f32 %v481, %v120
  %v599 = vmul.f32 %v481, %v121
  %v600 = vmul.f32 %v481, %v122
  %v601 = vmul.f32 %v481, %v123
  %v602 = vmul.f32 %v485, %v124
  %v603 = vmul.f32 %v485, %v125
  %v604 = vmul.f32 %v485, %v126
  %v605 = vmul.f32 %v485, %v127
  %v606 = vmul.f32 %v489, %v128
  %v607 = vmul.f32 %v489, %v129
  %v608 = vmul.f32 %v489, %v130
  %v609 = vmul.f32 %v489, %v131
  %v610 = vmul.f32 %v493, %v132
  %v611 = vmul.f32 %v493, %v133
  %v612 = vmul.f32 %v493, %v134
  %v613 = vmul.f32 %v493, %v135
  %v614 = vmul.f32 %v497, %v136
  %v615 = vmul.f32 %v497, %v137
  %v616 = vmul.f32 %v497, %v138
  %v617 = vmul.f32 %v497, %v139
  %v618 = vmul.f32 %v501, %v140
  %v619 = vmul.f32 %v501, %v141
  %v620 = vmul.f32 %v501, %v142
  %v621 = vmul.f32 %v501, %v143
  %v622 = vmul.f32 %v505, %v144
  %v623 = vmul.f32 %v505, %v145
  %v624 = vmul.f32 %v505, %v146
  %v625 = vmul.f32 %v505, %v147
  %v626 = vmul.f32 %v509, %v148
  %v627 = vmul.f32 %v509, %v149
  %v628 = vmul.f32 %v509, %v150
  %v629 = vmul.f32 %v509, %v151
  %v630 = vmul.f32 %v513, %v152
  %v631 = vmul.f32 %v513, %v153
  %v632 = vmul.f32 %v513, %v154
  %v633 = vmul.f32 %v513, %v155
  %v634 = vmul.f32 %v517, %v156
  %v635 = vmul.f32 %v517, %v157
  %v636 = vmul.f32 %v517, %v158
  %v637 = vmul.f32 %v517, %v159
  %vm638 = vcmask 261120
  %v639 = vsel %vm638, %v542, 0.0
  %640 = vadd.xlane.f32.xlu0 %v639
  %v641 = vpop.xlane.xlu0 %640
  %v642 = vsel %vm638, %v543, 0.0
  %643 = vadd.xlane.f32.xlu0 %v642
  %v644 = vpop.xlane.xlu0 %643
  %v645 = vsel %vm638, %v544, 0.0
  %646 = vadd.xlane.f32.xlu0 %v645
  %v647 = vpop.xlane.xlu0 %646
  %v648 = vsel %vm638, %v545, 0.0
  %649 = vadd.xlane.f32.xlu0 %v648
  %v650 = vpop.xlane.xlu0 %649
  %v651 = vsel %vm638, %v546, 0.0
  %652 = vadd.xlane.f32.xlu0 %v651
  %v653 = vpop.xlane.xlu0 %652
  %v654 = vsel %vm638, %v547, 0.0
  %655 = vadd.xlane.f32.xlu0 %v654
  %v656 = vpop.xlane.xlu0 %655
  %v657 = vsel %vm638, %v548, 0.0
  %658 = vadd.xlane.f32.xlu0 %v657
  %v659 = vpop.xlane.xlu0 %658
  %v660 = vsel %vm638, %v549, 0.0
  %661 = vadd.xlane.f32.xlu0 %v660
  %v662 = vpop.xlane.xlu0 %661
  %v663 = vsel %vm638, %v550, 0.0
  %664 = vadd.xlane.f32.xlu0 %v663
  %v665 = vpop.xlane.xlu0 %664
  %v666 = vsel %vm638, %v551, 0.0
  %667 = vadd.xlane.f32.xlu0 %v666
  %v668 = vpop.xlane.xlu0 %667
  %v669 = vsel %vm638, %v552, 0.0
  %670 = vadd.xlane.f32.xlu0 %v669
  %v671 = vpop.xlane.xlu0 %670
  %v672 = vsel %vm638, %v553, 0.0
  %673 = vadd.xlane.f32.xlu0 %v672
  %v674 = vpop.xlane.xlu0 %673
  %v675 = vsel %vm638, %v554, 0.0
  %676 = vadd.xlane.f32.xlu0 %v675
  %v677 = vpop.xlane.xlu0 %676
  %v678 = vsel %vm638, %v555, 0.0
  %679 = vadd.xlane.f32.xlu0 %v678
  %v680 = vpop.xlane.xlu0 %679
  %v681 = vsel %vm638, %v556, 0.0
  %682 = vadd.xlane.f32.xlu0 %v681
  %v683 = vpop.xlane.xlu0 %682
  %v684 = vsel %vm638, %v557, 0.0
  %685 = vadd.xlane.f32.xlu0 %v684
  %v686 = vpop.xlane.xlu0 %685
  %v687 = vsel %vm638, %v558, 0.0
  %688 = vadd.xlane.f32.xlu0 %v687
  %v689 = vpop.xlane.xlu0 %688
  %v690 = vsel %vm638, %v559, 0.0
  %691 = vadd.xlane.f32.xlu0 %v690
  %v692 = vpop.xlane.xlu0 %691
  %v693 = vsel %vm638, %v560, 0.0
  %694 = vadd.xlane.f32.xlu0 %v693
  %v695 = vpop.xlane.xlu0 %694
  %v696 = vsel %vm638, %v561, 0.0
  %697 = vadd.xlane.f32.xlu0 %v696
  %v698 = vpop.xlane.xlu0 %697
  %v699 = vsel %vm638, %v562, 0.0
  %700 = vadd.xlane.f32.xlu0 %v699
  %v701 = vpop.xlane.xlu0 %700
  %v702 = vsel %vm638, %v563, 0.0
  %703 = vadd.xlane.f32.xlu0 %v702
  %v704 = vpop.xlane.xlu0 %703
  %v705 = vsel %vm638, %v564, 0.0
  %706 = vadd.xlane.f32.xlu0 %v705
  %v707 = vpop.xlane.xlu0 %706
  %v708 = vsel %vm638, %v565, 0.0
  %709 = vadd.xlane.f32.xlu0 %v708
  %v710 = vpop.xlane.xlu0 %709
  %v711 = vsel %vm638, %v566, 0.0
  %712 = vadd.xlane.f32.xlu0 %v711
  %v713 = vpop.xlane.xlu0 %712
  %v714 = vsel %vm638, %v567, 0.0
  %715 = vadd.xlane.f32.xlu0 %v714
  %v716 = vpop.xlane.xlu0 %715
  %v717 = vsel %vm638, %v568, 0.0
  %718 = vadd.xlane.f32.xlu0 %v717
  %v719 = vpop.xlane.xlu0 %718
  %v720 = vsel %vm638, %v569, 0.0
  %721 = vadd.xlane.f32.xlu0 %v720
  %v722 = vpop.xlane.xlu0 %721
  %v723 = vsel %vm638, %v570, 0.0
  %724 = vadd.xlane.f32.xlu0 %v723
  %v725 = vpop.xlane.xlu0 %724
  %v726 = vsel %vm638, %v571, 0.0
  %727 = vadd.xlane.f32.xlu0 %v726
  %v728 = vpop.xlane.xlu0 %727
  %v729 = vsel %vm638, %v572, 0.0
  %730 = vadd.xlane.f32.xlu0 %v729
  %v731 = vpop.xlane.xlu0 %730
  %v732 = vsel %vm638, %v573, 0.0
  %733 = vadd.xlane.f32.xlu0 %v732
  %v734 = vpop.xlane.xlu0 %733
  %v735 = vsel %vm638, %v574, 0.0
  %736 = vadd.xlane.f32.xlu0 %v735
  %v737 = vpop.xlane.xlu0 %736
  %v738 = vsel %vm638, %v575, 0.0
  %739 = vadd.xlane.f32.xlu0 %v738
  %v740 = vpop.xlane.xlu0 %739
  %v741 = vsel %vm638, %v576, 0.0
  %742 = vadd.xlane.f32.xlu0 %v741
  %v743 = vpop.xlane.xlu0 %742
  %v744 = vsel %vm638, %v577, 0.0
  %745 = vadd.xlane.f32.xlu0 %v744
  %v746 = vpop.xlane.xlu0 %745
  %v747 = vsel %vm638, %v578, 0.0
  %748 = vadd.xlane.f32.xlu0 %v747
  %v749 = vpop.xlane.xlu0 %748
  %v750 = vsel %vm638, %v579, 0.0
  %751 = vadd.xlane.f32.xlu0 %v750
  %v752 = vpop.xlane.xlu0 %751
  %v753 = vsel %vm638, %v580, 0.0
  %754 = vadd.xlane.f32.xlu0 %v753
  %v755 = vpop.xlane.xlu0 %754
  %v756 = vsel %vm638, %v581, 0.0
  %757 = vadd.xlane.f32.xlu0 %v756
  %v758 = vpop.xlane.xlu0 %757
  %v759 = vsel %vm638, %v582, 0.0
  %760 = vadd.xlane.f32.xlu0 %v759
  %v761 = vpop.xlane.xlu0 %760
  %v762 = vsel %vm638, %v583, 0.0
  %763 = vadd.xlane.f32.xlu0 %v762
  %v764 = vpop.xlane.xlu0 %763
  %v765 = vsel %vm638, %v584, 0.0
  %766 = vadd.xlane.f32.xlu0 %v765
  %v767 = vpop.xlane.xlu0 %766
  %v768 = vsel %vm638, %v585, 0.0
  %769 = vadd.xlane.f32.xlu0 %v768
  %v770 = vpop.xlane.xlu0 %769
  %v771 = vsel %vm638, %v586, 0.0
  %772 = vadd.xlane.f32.xlu0 %v771
  %v773 = vpop.xlane.xlu0 %772
  %v774 = vsel %vm638, %v587, 0.0
  %775 = vadd.xlane.f32.xlu0 %v774
  %v776 = vpop.xlane.xlu0 %775
  %v777 = vsel %vm638, %v588, 0.0
  %778 = vadd.xlane.f32.xlu0 %v777
  %v779 = vpop.xlane.xlu0 %778
  %v780 = vsel %vm638, %v589, 0.0
  %781 = vadd.xlane.f32.xlu0 %v780
  %v782 = vpop.xlane.xlu0 %781
  %v783 = vsel %vm638, %v590, 0.0
  %784 = vadd.xlane.f32.xlu0 %v783
  %v785 = vpop.xlane.xlu0 %784
  %v786 = vsel %vm638, %v591, 0.0
  %787 = vadd.xlane.f32.xlu0 %v786
  %v788 = vpop.xlane.xlu0 %787
  %v789 = vsel %vm638, %v592, 0.0
  %790 = vadd.xlane.f32.xlu0 %v789
  %v791 = vpop.xlane.xlu0 %790
  %v792 = vsel %vm638, %v593, 0.0
  %793 = vadd.xlane.f32.xlu0 %v792
  %v794 = vpop.xlane.xlu0 %793
  %v795 = vsel %vm638, %v594, 0.0
  %796 = vadd.xlane.f32.xlu0 %v795
  %v797 = vpop.xlane.xlu0 %796
  %v798 = vsel %vm638, %v595, 0.0
  %799 = vadd.xlane.f32.xlu0 %v798
  %v800 = vpop.xlane.xlu0 %799
  %v801 = vsel %vm638, %v596, 0.0
  %802 = vadd.xlane.f32.xlu0 %v801
  %v803 = vpop.xlane.xlu0 %802
  %v804 = vsel %vm638, %v597, 0.0
  %805 = vadd.xlane.f32.xlu0 %v804
  %v806 = vpop.xlane.xlu0 %805
  %v807 = vsel %vm638, %v598, 0.0
  %808 = vadd.xlane.f32.xlu0 %v807
  %v809 = vpop.xlane.xlu0 %808
  %v810 = vsel %vm638, %v599, 0.0
  %811 = vadd.xlane.f32.xlu0 %v810
  %v812 = vpop.xlane.xlu0 %811
  %v813 = vsel %vm638, %v600, 0.0
  %814 = vadd.xlane.f32.xlu0 %v813
  %v815 = vpop.xlane.xlu0 %814
  %v816 = vsel %vm638, %v601, 0.0
  %817 = vadd.xlane.f32.xlu0 %v816
  %v818 = vpop.xlane.xlu0 %817
  %v819 = vsel %vm638, %v602, 0.0
  %820 = vadd.xlane.f32.xlu0 %v819
  %v821 = vpop.xlane.xlu0 %820
  %v822 = vsel %vm638, %v603, 0.0
  %823 = vadd.xlane.f32.xlu0 %v822
  %v824 = vpop.xlane.xlu0 %823
  %v825 = vsel %vm638, %v604, 0.0
  %826 = vadd.xlane.f32.xlu0 %v825
  %v827 = vpop.xlane.xlu0 %826
  %v828 = vsel %vm638, %v605, 0.0
  %829 = vadd.xlane.f32.xlu0 %v828
  %v830 = vpop.xlane.xlu0 %829
  %v831 = vsel %vm638, %v606, 0.0
  %832 = vadd.xlane.f32.xlu0 %v831
  %v833 = vpop.xlane.xlu0 %832
  %v834 = vsel %vm638, %v607, 0.0
  %835 = vadd.xlane.f32.xlu0 %v834
  %v836 = vpop.xlane.xlu0 %835
  %v837 = vsel %vm638, %v608, 0.0
  %838 = vadd.xlane.f32.xlu0 %v837
  %v839 = vpop.xlane.xlu0 %838
  %v840 = vsel %vm638, %v609, 0.0
  %841 = vadd.xlane.f32.xlu0 %v840
  %v842 = vpop.xlane.xlu0 %841
  %v843 = vsel %vm638, %v610, 0.0
  %844 = vadd.xlane.f32.xlu0 %v843
  %v845 = vpop.xlane.xlu0 %844
  %v846 = vsel %vm638, %v611, 0.0
  %847 = vadd.xlane.f32.xlu0 %v846
  %v848 = vpop.xlane.xlu0 %847
  %v849 = vsel %vm638, %v612, 0.0
  %850 = vadd.xlane.f32.xlu0 %v849
  %v851 = vpop.xlane.xlu0 %850
  %v852 = vsel %vm638, %v613, 0.0
  %853 = vadd.xlane.f32.xlu0 %v852
  %v854 = vpop.xlane.xlu0 %853
  %v855 = vsel %vm638, %v614, 0.0
  %856 = vadd.xlane.f32.xlu0 %v855
  %v857 = vpop.xlane.xlu0 %856
  %v858 = vsel %vm638, %v615, 0.0
  %859 = vadd.xlane.f32.xlu0 %v858
  %v860 = vpop.xlane.xlu0 %859
  %v861 = vsel %vm638, %v616, 0.0
  %862 = vadd.xlane.f32.xlu0 %v861
  %v863 = vpop.xlane.xlu0 %862
  %v864 = vsel %vm638, %v617, 0.0
  %865 = vadd.xlane.f32.xlu0 %v864
  %v866 = vpop.xlane.xlu0 %865
  %v867 = vsel %vm638, %v618, 0.0
  %868 = vadd.xlane.f32.xlu0 %v867
  %v869 = vpop.xlane.xlu0 %868
  %v870 = vsel %vm638, %v619, 0.0
  %871 = vadd.xlane.f32.xlu0 %v870
  %v872 = vpop.xlane.xlu0 %871
  %v873 = vsel %vm638, %v620, 0.0
  %874 = vadd.xlane.f32.xlu0 %v873
  %v875 = vpop.xlane.xlu0 %874
  %v876 = vsel %vm638, %v621, 0.0
  %877 = vadd.xlane.f32.xlu0 %v876
  %v878 = vpop.xlane.xlu0 %877
  %v879 = vsel %vm638, %v622, 0.0
  %880 = vadd.xlane.f32.xlu0 %v879
  %v881 = vpop.xlane.xlu0 %880
  %v882 = vsel %vm638, %v623, 0.0
  %883 = vadd.xlane.f32.xlu0 %v882
  %v884 = vpop.xlane.xlu0 %883
  %v885 = vsel %vm638, %v624, 0.0
  %886 = vadd.xlane.f32.xlu0 %v885
  %v887 = vpop.xlane.xlu0 %886
  %v888 = vsel %vm638, %v625, 0.0
  %889 = vadd.xlane.f32.xlu0 %v888
  %v890 = vpop.xlane.xlu0 %889
  %v891 = vsel %vm638, %v626, 0.0
  %892 = vadd.xlane.f32.xlu0 %v891
  %v893 = vpop.xlane.xlu0 %892
  %v894 = vsel %vm638, %v627, 0.0
  %895 = vadd.xlane.f32.xlu0 %v894
  %v896 = vpop.xlane.xlu0 %895
  %v897 = vsel %vm638, %v628, 0.0
  %898 = vadd.xlane.f32.xlu0 %v897
  %v899 = vpop.xlane.xlu0 %898
  %v900 = vsel %vm638, %v629, 0.0
  %901 = vadd.xlane.f32.xlu0 %v900
  %v902 = vpop.xlane.xlu0 %901
  %v903 = vsel %vm638, %v630, 0.0
  %904 = vadd.xlane.f32.xlu0 %v903
  %v905 = vpop.xlane.xlu0 %904
  %v906 = vsel %vm638, %v631, 0.0
  %907 = vadd.xlane.f32.xlu0 %v906
  %v908 = vpop.xlane.xlu0 %907
  %v909 = vsel %vm638, %v632, 0.0
  %910 = vadd.xlane.f32.xlu0 %v909
  %v911 = vpop.xlane.xlu0 %910
  %v912 = vsel %vm638, %v633, 0.0
  %913 = vadd.xlane.f32.xlu0 %v912
  %v914 = vpop.xlane.xlu0 %913
  %v915 = vsel %vm638, %v634, 0.0
  %916 = vadd.xlane.f32.xlu0 %v915
  %v917 = vpop.xlane.xlu0 %916
  %v918 = vsel %vm638, %v635, 0.0
  %919 = vadd.xlane.f32.xlu0 %v918
  %v920 = vpop.xlane.xlu0 %919
  %v921 = vsel %vm638, %v636, 0.0
  %922 = vadd.xlane.f32.xlu0 %v921
  %v923 = vpop.xlane.xlu0 %922
  %v924 = vsel %vm638, %v637, 0.0
  %925 = vadd.xlane.f32.xlu0 %v924
  %v926 = vpop.xlane.xlu0 %925
  %v928 = vlaneseq
  %v929 = vshrl.u32 %v928, 7
  %v930 = vsub.s32 0, %v929
  %v931 = vrot.slane %v165, %v930
  %v1029 = vlaneseq
  %v1030 = vand.u32 %v1029, 127
  %v1031 = vlaneseq
  %v1032 = vshrl.u32 %v1031, 7
  %v1033 = vsub.s32 %v1030, %v1032
  %v1034 = vrot.slane %v641, %v1033
  %v1035 = vadd.s32 %v1030, 4294967288
  %v1036 = vlaneseq
  %v1037 = vshrl.u32 %v1036, 7
  %v1038 = vsub.s32 %v1035, %v1037
  %v1039 = vrot.slane %v644, %v1038
  %vm1040 = vcmask 130112
  %v1041 = vsel %vm1040, %v1039, %v1034
  %v1042 = vadd.s32 %v1030, 4294967280
  %v1043 = vlaneseq
  %v1044 = vshrl.u32 %v1043, 7
  %v1045 = vsub.s32 %v1042, %v1044
  %v1046 = vrot.slane %v647, %v1045
  %vm1047 = vcmask 195712
  %v1048 = vsel %vm1047, %v1046, %v1041
  %v1049 = vadd.s32 %v1030, 4294967272
  %v1050 = vlaneseq
  %v1051 = vshrl.u32 %v1050, 7
  %v1052 = vsub.s32 %v1049, %v1051
  %v1053 = vrot.slane %v650, %v1052
  %vm1054 = vcmask 261312
  %v1055 = vsel %vm1054, %v1053, %v1048
  %v1056 = vlaneseq
  %v1057 = vshrl.u32 %v1056, 7
  %v1058 = vsub.s32 %v1030, %v1057
  %v1059 = vrot.slane %v653, %v1058
  %v1060 = vlaneseq
  %v1061 = vshrl.u32 %v1060, 7
  %v1062 = vsub.s32 %v1035, %v1061
  %v1063 = vrot.slane %v656, %v1062
  %v1064 = vsel %vm1040, %v1063, %v1059
  %v1065 = vlaneseq
  %v1066 = vshrl.u32 %v1065, 7
  %v1067 = vsub.s32 %v1042, %v1066
  %v1068 = vrot.slane %v659, %v1067
  %v1069 = vsel %vm1047, %v1068, %v1064
  %v1070 = vlaneseq
  %v1071 = vshrl.u32 %v1070, 7
  %v1072 = vsub.s32 %v1049, %v1071
  %v1073 = vrot.slane %v662, %v1072
  %v1074 = vsel %vm1054, %v1073, %v1069
  %v1075 = vlaneseq
  %v1076 = vshrl.u32 %v1075, 7
  %v1077 = vsub.s32 %v1030, %v1076
  %v1078 = vrot.slane %v665, %v1077
  %v1079 = vlaneseq
  %v1080 = vshrl.u32 %v1079, 7
  %v1081 = vsub.s32 %v1035, %v1080
  %v1082 = vrot.slane %v668, %v1081
  %v1083 = vsel %vm1040, %v1082, %v1078
  %v1084 = vlaneseq
  %v1085 = vshrl.u32 %v1084, 7
  %v1086 = vsub.s32 %v1042, %v1085
  %v1087 = vrot.slane %v671, %v1086
  %v1088 = vsel %vm1047, %v1087, %v1083
  %v1089 = vlaneseq
  %v1090 = vshrl.u32 %v1089, 7
  %v1091 = vsub.s32 %v1049, %v1090
  %v1092 = vrot.slane %v674, %v1091
  %v1093 = vsel %vm1054, %v1092, %v1088
  %v1094 = vlaneseq
  %v1095 = vshrl.u32 %v1094, 7
  %v1096 = vsub.s32 %v1030, %v1095
  %v1097 = vrot.slane %v677, %v1096
  %v1098 = vlaneseq
  %v1099 = vshrl.u32 %v1098, 7
  %v1100 = vsub.s32 %v1035, %v1099
  %v1101 = vrot.slane %v680, %v1100
  %v1102 = vsel %vm1040, %v1101, %v1097
  %v1103 = vlaneseq
  %v1104 = vshrl.u32 %v1103, 7
  %v1105 = vsub.s32 %v1042, %v1104
  %v1106 = vrot.slane %v683, %v1105
  %v1107 = vsel %vm1047, %v1106, %v1102
  %v1108 = vlaneseq
  %v1109 = vshrl.u32 %v1108, 7
  %v1110 = vsub.s32 %v1049, %v1109
  %v1111 = vrot.slane %v686, %v1110
  %v1112 = vsel %vm1054, %v1111, %v1107
  %v1113 = vlaneseq
  %v1114 = vshrl.u32 %v1113, 7
  %v1115 = vsub.s32 %v1030, %v1114
  %v1116 = vrot.slane %v689, %v1115
  %v1117 = vlaneseq
  %v1118 = vshrl.u32 %v1117, 7
  %v1119 = vsub.s32 %v1035, %v1118
  %v1120 = vrot.slane %v692, %v1119
  %v1121 = vsel %vm1040, %v1120, %v1116
  %v1122 = vlaneseq
  %v1123 = vshrl.u32 %v1122, 7
  %v1124 = vsub.s32 %v1042, %v1123
  %v1125 = vrot.slane %v695, %v1124
  %v1126 = vsel %vm1047, %v1125, %v1121
  %v1127 = vlaneseq
  %v1128 = vshrl.u32 %v1127, 7
  %v1129 = vsub.s32 %v1049, %v1128
  %v1130 = vrot.slane %v698, %v1129
  %v1131 = vsel %vm1054, %v1130, %v1126
  %v1132 = vlaneseq
  %v1133 = vshrl.u32 %v1132, 7
  %v1134 = vsub.s32 %v1030, %v1133
  %v1135 = vrot.slane %v701, %v1134
  %v1136 = vlaneseq
  %v1137 = vshrl.u32 %v1136, 7
  %v1138 = vsub.s32 %v1035, %v1137
  %v1139 = vrot.slane %v704, %v1138
  %v1140 = vsel %vm1040, %v1139, %v1135
  %v1141 = vlaneseq
  %v1142 = vshrl.u32 %v1141, 7
  %v1143 = vsub.s32 %v1042, %v1142
  %v1144 = vrot.slane %v707, %v1143
  %v1145 = vsel %vm1047, %v1144, %v1140
  %v1146 = vlaneseq
  %v1147 = vshrl.u32 %v1146, 7
  %v1148 = vsub.s32 %v1049, %v1147
  %v1149 = vrot.slane %v710, %v1148
  %v1150 = vsel %vm1054, %v1149, %v1145
  %v1151 = vlaneseq
  %v1152 = vshrl.u32 %v1151, 7
  %v1153 = vsub.s32 %v1030, %v1152
  %v1154 = vrot.slane %v713, %v1153
  %v1155 = vlaneseq
  %v1156 = vshrl.u32 %v1155, 7
  %v1157 = vsub.s32 %v1035, %v1156
  %v1158 = vrot.slane %v716, %v1157
  %v1159 = vsel %vm1040, %v1158, %v1154
  %v1160 = vlaneseq
  %v1161 = vshrl.u32 %v1160, 7
  %v1162 = vsub.s32 %v1042, %v1161
  %v1163 = vrot.slane %v719, %v1162
  %v1164 = vsel %vm1047, %v1163, %v1159
  %v1165 = vlaneseq
  %v1166 = vshrl.u32 %v1165, 7
  %v1167 = vsub.s32 %v1049, %v1166
  %v1168 = vrot.slane %v722, %v1167
  %v1169 = vsel %vm1054, %v1168, %v1164
  %v1170 = vlaneseq
  %v1171 = vshrl.u32 %v1170, 7
  %v1172 = vsub.s32 %v1030, %v1171
  %v1173 = vrot.slane %v725, %v1172
  %v1174 = vlaneseq
  %v1175 = vshrl.u32 %v1174, 7
  %v1176 = vsub.s32 %v1035, %v1175
  %v1177 = vrot.slane %v728, %v1176
  %v1178 = vsel %vm1040, %v1177, %v1173
  %v1179 = vlaneseq
  %v1180 = vshrl.u32 %v1179, 7
  %v1181 = vsub.s32 %v1042, %v1180
  %v1182 = vrot.slane %v731, %v1181
  %v1183 = vsel %vm1047, %v1182, %v1178
  %v1184 = vlaneseq
  %v1185 = vshrl.u32 %v1184, 7
  %v1186 = vsub.s32 %v1049, %v1185
  %v1187 = vrot.slane %v734, %v1186
  %v1188 = vsel %vm1054, %v1187, %v1183
  %v1189 = vlaneseq
  %v1190 = vshrl.u32 %v1189, 7
  %v1191 = vsub.s32 %v1030, %v1190
  %v1192 = vrot.slane %v737, %v1191
  %v1193 = vlaneseq
  %v1194 = vshrl.u32 %v1193, 7
  %v1195 = vsub.s32 %v1035, %v1194
  %v1196 = vrot.slane %v740, %v1195
  %v1197 = vsel %vm1040, %v1196, %v1192
  %v1198 = vlaneseq
  %v1199 = vshrl.u32 %v1198, 7
  %v1200 = vsub.s32 %v1042, %v1199
  %v1201 = vrot.slane %v743, %v1200
  %v1202 = vsel %vm1047, %v1201, %v1197
  %v1203 = vlaneseq
  %v1204 = vshrl.u32 %v1203, 7
  %v1205 = vsub.s32 %v1049, %v1204
  %v1206 = vrot.slane %v746, %v1205
  %v1207 = vsel %vm1054, %v1206, %v1202
  %v1208 = vlaneseq
  %v1209 = vshrl.u32 %v1208, 7
  %v1210 = vsub.s32 %v1030, %v1209
  %v1211 = vrot.slane %v749, %v1210
  %v1212 = vlaneseq
  %v1213 = vshrl.u32 %v1212, 7
  %v1214 = vsub.s32 %v1035, %v1213
  %v1215 = vrot.slane %v752, %v1214
  %v1216 = vsel %vm1040, %v1215, %v1211
  %v1217 = vlaneseq
  %v1218 = vshrl.u32 %v1217, 7
  %v1219 = vsub.s32 %v1042, %v1218
  %v1220 = vrot.slane %v755, %v1219
  %v1221 = vsel %vm1047, %v1220, %v1216
  %v1222 = vlaneseq
  %v1223 = vshrl.u32 %v1222, 7
  %v1224 = vsub.s32 %v1049, %v1223
  %v1225 = vrot.slane %v758, %v1224
  %v1226 = vsel %vm1054, %v1225, %v1221
  %v1227 = vlaneseq
  %v1228 = vshrl.u32 %v1227, 7
  %v1229 = vsub.s32 %v1030, %v1228
  %v1230 = vrot.slane %v761, %v1229
  %v1231 = vlaneseq
  %v1232 = vshrl.u32 %v1231, 7
  %v1233 = vsub.s32 %v1035, %v1232
  %v1234 = vrot.slane %v764, %v1233
  %v1235 = vsel %vm1040, %v1234, %v1230
  %v1236 = vlaneseq
  %v1237 = vshrl.u32 %v1236, 7
  %v1238 = vsub.s32 %v1042, %v1237
  %v1239 = vrot.slane %v767, %v1238
  %v1240 = vsel %vm1047, %v1239, %v1235
  %v1241 = vlaneseq
  %v1242 = vshrl.u32 %v1241, 7
  %v1243 = vsub.s32 %v1049, %v1242
  %v1244 = vrot.slane %v770, %v1243
  %v1245 = vsel %vm1054, %v1244, %v1240
  %v1246 = vlaneseq
  %v1247 = vshrl.u32 %v1246, 7
  %v1248 = vsub.s32 %v1030, %v1247
  %v1249 = vrot.slane %v773, %v1248
  %v1250 = vlaneseq
  %v1251 = vshrl.u32 %v1250, 7
  %v1252 = vsub.s32 %v1035, %v1251
  %v1253 = vrot.slane %v776, %v1252
  %v1254 = vsel %vm1040, %v1253, %v1249
  %v1255 = vlaneseq
  %v1256 = vshrl.u32 %v1255, 7
  %v1257 = vsub.s32 %v1042, %v1256
  %v1258 = vrot.slane %v779, %v1257
  %v1259 = vsel %vm1047, %v1258, %v1254
  %v1260 = vlaneseq
  %v1261 = vshrl.u32 %v1260, 7
  %v1262 = vsub.s32 %v1049, %v1261
  %v1263 = vrot.slane %v782, %v1262
  %v1264 = vsel %vm1054, %v1263, %v1259
  %v1265 = vlaneseq
  %v1266 = vshrl.u32 %v1265, 7
  %v1267 = vsub.s32 %v1030, %v1266
  %v1268 = vrot.slane %v785, %v1267
  %v1269 = vlaneseq
  %v1270 = vshrl.u32 %v1269, 7
  %v1271 = vsub.s32 %v1035, %v1270
  %v1272 = vrot.slane %v788, %v1271
  %v1273 = vsel %vm1040, %v1272, %v1268
  %v1274 = vlaneseq
  %v1275 = vshrl.u32 %v1274, 7
  %v1276 = vsub.s32 %v1042, %v1275
  %v1277 = vrot.slane %v791, %v1276
  %v1278 = vsel %vm1047, %v1277, %v1273
  %v1279 = vlaneseq
  %v1280 = vshrl.u32 %v1279, 7
  %v1281 = vsub.s32 %v1049, %v1280
  %v1282 = vrot.slane %v794, %v1281
  %v1283 = vsel %vm1054, %v1282, %v1278
  %v1284 = vlaneseq
  %v1285 = vshrl.u32 %v1284, 7
  %v1286 = vsub.s32 %v1030, %v1285
  %v1287 = vrot.slane %v797, %v1286
  %v1288 = vlaneseq
  %v1289 = vshrl.u32 %v1288, 7
  %v1290 = vsub.s32 %v1035, %v1289
  %v1291 = vrot.slane %v800, %v1290
  %v1292 = vsel %vm1040, %v1291, %v1287
  %v1293 = vlaneseq
  %v1294 = vshrl.u32 %v1293, 7
  %v1295 = vsub.s32 %v1042, %v1294
  %v1296 = vrot.slane %v803, %v1295
  %v1297 = vsel %vm1047, %v1296, %v1292
  %v1298 = vlaneseq
  %v1299 = vshrl.u32 %v1298, 7
  %v1300 = vsub.s32 %v1049, %v1299
  %v1301 = vrot.slane %v806, %v1300
  %v1302 = vsel %vm1054, %v1301, %v1297
  %v1303 = vlaneseq
  %v1304 = vshrl.u32 %v1303, 7
  %v1305 = vsub.s32 %v1030, %v1304
  %v1306 = vrot.slane %v809, %v1305
  %v1307 = vlaneseq
  %v1308 = vshrl.u32 %v1307, 7
  %v1309 = vsub.s32 %v1035, %v1308
  %v1310 = vrot.slane %v812, %v1309
  %v1311 = vsel %vm1040, %v1310, %v1306
  %v1312 = vlaneseq
  %v1313 = vshrl.u32 %v1312, 7
  %v1314 = vsub.s32 %v1042, %v1313
  %v1315 = vrot.slane %v815, %v1314
  %v1316 = vsel %vm1047, %v1315, %v1311
  %v1317 = vlaneseq
  %v1318 = vshrl.u32 %v1317, 7
  %v1319 = vsub.s32 %v1049, %v1318
  %v1320 = vrot.slane %v818, %v1319
  %v1321 = vsel %vm1054, %v1320, %v1316
  %v1322 = vlaneseq
  %v1323 = vshrl.u32 %v1322, 7
  %v1324 = vsub.s32 %v1030, %v1323
  %v1325 = vrot.slane %v821, %v1324
  %v1326 = vlaneseq
  %v1327 = vshrl.u32 %v1326, 7
  %v1328 = vsub.s32 %v1035, %v1327
  %v1329 = vrot.slane %v824, %v1328
  %v1330 = vsel %vm1040, %v1329, %v1325
  %v1331 = vlaneseq
  %v1332 = vshrl.u32 %v1331, 7
  %v1333 = vsub.s32 %v1042, %v1332
  %v1334 = vrot.slane %v827, %v1333
  %v1335 = vsel %vm1047, %v1334, %v1330
  %v1336 = vlaneseq
  %v1337 = vshrl.u32 %v1336, 7
  %v1338 = vsub.s32 %v1049, %v1337
  %v1339 = vrot.slane %v830, %v1338
  %v1340 = vsel %vm1054, %v1339, %v1335
  %v1341 = vlaneseq
  %v1342 = vshrl.u32 %v1341, 7
  %v1343 = vsub.s32 %v1030, %v1342
  %v1344 = vrot.slane %v833, %v1343
  %v1345 = vlaneseq
  %v1346 = vshrl.u32 %v1345, 7
  %v1347 = vsub.s32 %v1035, %v1346
  %v1348 = vrot.slane %v836, %v1347
  %v1349 = vsel %vm1040, %v1348, %v1344
  %v1350 = vlaneseq
  %v1351 = vshrl.u32 %v1350, 7
  %v1352 = vsub.s32 %v1042, %v1351
  %v1353 = vrot.slane %v839, %v1352
  %v1354 = vsel %vm1047, %v1353, %v1349
  %v1355 = vlaneseq
  %v1356 = vshrl.u32 %v1355, 7
  %v1357 = vsub.s32 %v1049, %v1356
  %v1358 = vrot.slane %v842, %v1357
  %v1359 = vsel %vm1054, %v1358, %v1354
  %v1360 = vlaneseq
  %v1361 = vshrl.u32 %v1360, 7
  %v1362 = vsub.s32 %v1030, %v1361
  %v1363 = vrot.slane %v845, %v1362
  %v1364 = vlaneseq
  %v1365 = vshrl.u32 %v1364, 7
  %v1366 = vsub.s32 %v1035, %v1365
  %v1367 = vrot.slane %v848, %v1366
  %v1368 = vsel %vm1040, %v1367, %v1363
  %v1369 = vlaneseq
  %v1370 = vshrl.u32 %v1369, 7
  %v1371 = vsub.s32 %v1042, %v1370
  %v1372 = vrot.slane %v851, %v1371
  %v1373 = vsel %vm1047, %v1372, %v1368
  %v1374 = vlaneseq
  %v1375 = vshrl.u32 %v1374, 7
  %v1376 = vsub.s32 %v1049, %v1375
  %v1377 = vrot.slane %v854, %v1376
  %v1378 = vsel %vm1054, %v1377, %v1373
  %v1379 = vlaneseq
  %v1380 = vshrl.u32 %v1379, 7
  %v1381 = vsub.s32 %v1030, %v1380
  %v1382 = vrot.slane %v857, %v1381
  %v1383 = vlaneseq
  %v1384 = vshrl.u32 %v1383, 7
  %v1385 = vsub.s32 %v1035, %v1384
  %v1386 = vrot.slane %v860, %v1385
  %v1387 = vsel %vm1040, %v1386, %v1382
  %v1388 = vlaneseq
  %v1389 = vshrl.u32 %v1388, 7
  %v1390 = vsub.s32 %v1042, %v1389
  %v1391 = vrot.slane %v863, %v1390
  %v1392 = vsel %vm1047, %v1391, %v1387
  %v1393 = vlaneseq
  %v1394 = vshrl.u32 %v1393, 7
  %v1395 = vsub.s32 %v1049, %v1394
  %v1396 = vrot.slane %v866, %v1395
  %v1397 = vsel %vm1054, %v1396, %v1392
  %v1398 = vlaneseq
  %v1399 = vshrl.u32 %v1398, 7
  %v1400 = vsub.s32 %v1030, %v1399
  %v1401 = vrot.slane %v869, %v1400
  %v1402 = vlaneseq
  %v1403 = vshrl.u32 %v1402, 7
  %v1404 = vsub.s32 %v1035, %v1403
  %v1405 = vrot.slane %v872, %v1404
  %v1406 = vsel %vm1040, %v1405, %v1401
  %v1407 = vlaneseq
  %v1408 = vshrl.u32 %v1407, 7
  %v1409 = vsub.s32 %v1042, %v1408
  %v1410 = vrot.slane %v875, %v1409
  %v1411 = vsel %vm1047, %v1410, %v1406
  %v1412 = vlaneseq
  %v1413 = vshrl.u32 %v1412, 7
  %v1414 = vsub.s32 %v1049, %v1413
  %v1415 = vrot.slane %v878, %v1414
  %v1416 = vsel %vm1054, %v1415, %v1411
  %v1417 = vlaneseq
  %v1418 = vshrl.u32 %v1417, 7
  %v1419 = vsub.s32 %v1030, %v1418
  %v1420 = vrot.slane %v881, %v1419
  %v1421 = vlaneseq
  %v1422 = vshrl.u32 %v1421, 7
  %v1423 = vsub.s32 %v1035, %v1422
  %v1424 = vrot.slane %v884, %v1423
  %v1425 = vsel %vm1040, %v1424, %v1420
  %v1426 = vlaneseq
  %v1427 = vshrl.u32 %v1426, 7
  %v1428 = vsub.s32 %v1042, %v1427
  %v1429 = vrot.slane %v887, %v1428
  %v1430 = vsel %vm1047, %v1429, %v1425
  %v1431 = vlaneseq
  %v1432 = vshrl.u32 %v1431, 7
  %v1433 = vsub.s32 %v1049, %v1432
  %v1434 = vrot.slane %v890, %v1433
  %v1435 = vsel %vm1054, %v1434, %v1430
  %v1436 = vlaneseq
  %v1437 = vshrl.u32 %v1436, 7
  %v1438 = vsub.s32 %v1030, %v1437
  %v1439 = vrot.slane %v893, %v1438
  %v1440 = vlaneseq
  %v1441 = vshrl.u32 %v1440, 7
  %v1442 = vsub.s32 %v1035, %v1441
  %v1443 = vrot.slane %v896, %v1442
  %v1444 = vsel %vm1040, %v1443, %v1439
  %v1445 = vlaneseq
  %v1446 = vshrl.u32 %v1445, 7
  %v1447 = vsub.s32 %v1042, %v1446
  %v1448 = vrot.slane %v899, %v1447
  %v1449 = vsel %vm1047, %v1448, %v1444
  %v1450 = vlaneseq
  %v1451 = vshrl.u32 %v1450, 7
  %v1452 = vsub.s32 %v1049, %v1451
  %v1453 = vrot.slane %v902, %v1452
  %v1454 = vsel %vm1054, %v1453, %v1449
  %v1455 = vlaneseq
  %v1456 = vshrl.u32 %v1455, 7
  %v1457 = vsub.s32 %v1030, %v1456
  %v1458 = vrot.slane %v905, %v1457
  %v1459 = vlaneseq
  %v1460 = vshrl.u32 %v1459, 7
  %v1461 = vsub.s32 %v1035, %v1460
  %v1462 = vrot.slane %v908, %v1461
  %v1463 = vsel %vm1040, %v1462, %v1458
  %v1464 = vlaneseq
  %v1465 = vshrl.u32 %v1464, 7
  %v1466 = vsub.s32 %v1042, %v1465
  %v1467 = vrot.slane %v911, %v1466
  %v1468 = vsel %vm1047, %v1467, %v1463
  %v1469 = vlaneseq
  %v1470 = vshrl.u32 %v1469, 7
  %v1471 = vsub.s32 %v1049, %v1470
  %v1472 = vrot.slane %v914, %v1471
  %v1473 = vsel %vm1054, %v1472, %v1468
  %v1474 = vlaneseq
  %v1475 = vshrl.u32 %v1474, 7
  %v1476 = vsub.s32 %v1030, %v1475
  %v1477 = vrot.slane %v917, %v1476
  %v1478 = vlaneseq
  %v1479 = vshrl.u32 %v1478, 7
  %v1480 = vsub.s32 %v1035, %v1479
  %v1481 = vrot.slane %v920, %v1480
  %v1482 = vsel %vm1040, %v1481, %v1477
  %v1483 = vlaneseq
  %v1484 = vshrl.u32 %v1483, 7
  %v1485 = vsub.s32 %v1042, %v1484
  %v1486 = vrot.slane %v923, %v1485
  %v1487 = vsel %vm1047, %v1486, %v1482
  %v1488 = vlaneseq
  %v1489 = vshrl.u32 %v1488, 7
  %v1490 = vsub.s32 %v1049, %v1489
  %v1491 = vrot.slane %v926, %v1490
  %v1492 = vsel %vm1054, %v1491, %v1487
  %vm1493 = vcmask 1041409
  %v1494 = vsel %vm1493, %v1074, %v1055
  %vm1495 = vcmask 1042434
  %v1496 = vsel %vm1495, %v1093, %v1494
  %vm1497 = vcmask 1043459
  %v1498 = vsel %vm1497, %v1112, %v1496
  %vm1499 = vcmask 1044484
  %v1500 = vsel %vm1499, %v1131, %v1498
  %vm1501 = vcmask 1045509
  %v1502 = vsel %vm1501, %v1150, %v1500
  %vm1503 = vcmask 1046534
  %v1504 = vsel %vm1503, %v1169, %v1502
  %vm1505 = vcmask 1047559
  %v1506 = vsel %vm1505, %v1188, %v1504
  %v1507 = vsel %vm1493, %v1226, %v1207
  %v1508 = vsel %vm1495, %v1245, %v1507
  %v1509 = vsel %vm1497, %v1264, %v1508
  %v1510 = vsel %vm1499, %v1283, %v1509
  %v1511 = vsel %vm1501, %v1302, %v1510
  %v1512 = vsel %vm1503, %v1321, %v1511
  %v1513 = vsel %vm1505, %v1340, %v1512
  %v1514 = vsel %vm1493, %v1378, %v1359
  %v1515 = vsel %vm1495, %v1397, %v1514
  %v1516 = vsel %vm1497, %v1416, %v1515
  %v1517 = vsel %vm1499, %v1435, %v1516
  %v1518 = vsel %vm1501, %v1454, %v1517
  %v1519 = vsel %vm1503, %v1473, %v1518
  %v1520 = vsel %vm1505, %v1492, %v1519
  %vm1524 = vcmask 195584
  %v1526 = vsel %vm1524, %v163, 0
  %v1529 = vsel %vm1524, %v164, 0
  %1531 = vmatprep.subr.mxu0 0.0
  %1532 = vmatpush1.msra.mxu0 %v1506
  %1533 = vmatprep.subr.mxu0 0.0
  %1534 = vmatpush1.msra.mxu0 %v1513
  %1535 = vmatprep.subr.mxu0 0.0
  %1536 = vmatpush1.msra.mxu0 %v1520
  %1537 = vmatprep.subr.mxu0 0.0
  %1538 = vmatpush1.msra.mxu0 0.0
  %1539 = vmatprep.subr.mxu0 0.0
  %1540 = vmatpush1.msra.mxu0 0.0
  %1541 = vmatprep.subr.mxu0 0.0
  %1542 = vmatpush1.msra.mxu0 0.0
  %1543 = vmatprep.subr.mxu0 0.0
  %1544 = vmatpush1.msra.mxu0 0.0
  %1545 = vmatprep.subr.mxu0 0.0
  %1546 = vmatpush1.msra.mxu0 0.0
  %1547 = vmatprep.subr.mxu0 0.0
  %1548 = vmatpush1.msra.mxu0 0.0
  %1549 = vmatprep.subr.mxu0 0.0
  %1550 = vmatpush1.msra.mxu0 0.0
  %1551 = vmatprep.subr.mxu0 0.0
  %1552 = vmatpush1.msra.mxu0 0.0
  %1553 = vmatprep.subr.mxu0 0.0
  %1554 = vmatpush1.msra.mxu0 0.0
  %1555 = vmatprep.subr.mxu0 0.0
  %1556 = vmatpush1.msra.mxu0 0.0
  %1557 = vmatprep.subr.mxu0 0.0
  %1558 = vmatpush1.msra.mxu0 0.0
  %1559 = vmatprep.subr.mxu0 0.0
  %1560 = vmatpush1.msra.mxu0 0.0
  %1561 = vmatprep.subr.mxu0 0.0
  %1562 = vmatpush1.msra.mxu0 0.0
  %1563 = vmatprep.subr.mxu0 0.0
  %1564 = vmatpush1.msra.mxu0 0.0
  %1565 = vmatprep.subr.mxu0 0.0
  %1566 = vmatpush1.msra.mxu0 0.0
  %1567 = vmatprep.subr.mxu0 0.0
  %1568 = vmatpush1.msra.mxu0 0.0
  %1569 = vmatprep.subr.mxu0 0.0
  %1570 = vmatpush1.msra.mxu0 0.0
  %1571 = vmatprep.subr.mxu0 0.0
  %1572 = vmatpush1.msra.mxu0 0.0
  %1573 = vmatprep.subr.mxu0 0.0
  %1574 = vmatpush1.msra.mxu0 0.0
  %1575 = vmatprep.subr.mxu0 0.0
  %1576 = vmatpush1.msra.mxu0 0.0
  %1577 = vmatprep.subr.mxu0 0.0
  %1578 = vmatpush1.msra.mxu0 0.0
  %1579 = vmatprep.subr.mxu0 0.0
  %1580 = vmatpush1.msra.mxu0 0.0
  %1581 = vmatprep.subr.mxu0 0.0
  %1582 = vmatpush1.msra.mxu0 0.0
  %1583 = vmatprep.subr.mxu0 0.0
  %1584 = vmatpush1.msra.mxu0 0.0
  %1585 = vmatprep.subr.mxu0 0.0
  %1586 = vmatpush1.msra.mxu0 0.0
  %1587 = vmatprep.subr.mxu0 0.0
  %1588 = vmatpush1.msra.mxu0 0.0
  %1589 = vmatprep.subr.mxu0 0.0
  %1590 = vmatpush1.msra.mxu0 0.0
  %1591 = vmatprep.subr.mxu0 0.0
  %1592 = vmatpush1.msra.mxu0 0.0
  %1593 = vmatprep.subr.mxu0 0.0
  %1594 = vmatpush1.msra.mxu0 0.0
  %1595 = vmatprep.mubr.f32.mxu0 0.0
  %1596 = vmatmul.mubr.f32.gmra.mrb[0].mxu0 %v1526
  %v1597 = vpop.f32.mrb[0].mxu0
  %v1598 = vadd.f32 %v931, %v1597
  %v1599 = vpop.f32.mrb[0].mxu0
  %1600 = vmatprep.mubr.f32.mxu0 0.0
  %1601 = vmatmul.mubr.f32.gmra.mrb[0].mxu0 %v1529
  %v1602 = vpop.f32.mrb[0].mxu0
  %v1603 = vadd.f32 %v931, %v1602
  %v1604 = vpop.f32.mrb[0].mxu0
  %1605 = vdwg.mxu0
  %v1606 = vmax.f32 %v1598, 0.0
  %v1607 = vmax.f32 %v1603, 0.0
  %v1609 = vlaneseq
  %v1610 = vshrl.u32 %v1609, 7
  %v1611 = vsub.s32 0, %v1610
  %v1612 = vrot.slane %v174, %v1611
  %v1615 = vsel %vm638, %v1606, 0
  %v1618 = vsel %vm638, %v1607, 0
  %1620 = vmatprep.subr.mxu0 0.0
  %1621 = vmatpush1.msra.mxu0 %v166
  %1622 = vmatprep.subr.mxu0 0.0
  %1623 = vmatpush1.msra.mxu0 %v167
  %1624 = vmatprep.subr.mxu0 0.0
  %1625 = vmatpush1.msra.mxu0 %v168
  %1626 = vmatprep.subr.mxu0 0.0
  %1627 = vmatpush1.msra.mxu0 %v169
  %1628 = vmatprep.subr.mxu0 0.0
  %1629 = vmatpush1.msra.mxu0 0.0
  %1630 = vmatprep.subr.mxu0 0.0
  %1631 = vmatpush1.msra.mxu0 0.0
  %1632 = vmatprep.subr.mxu0 0.0
  %1633 = vmatpush1.msra.mxu0 0.0
  %1634 = vmatprep.subr.mxu0 0.0
  %1635 = vmatpush1.msra.mxu0 0.0
  %1636 = vmatprep.subr.mxu0 0.0
  %1637 = vmatpush1.msra.mxu0 0.0
  %1638 = vmatprep.subr.mxu0 0.0
  %1639 = vmatpush1.msra.mxu0 0.0
  %1640 = vmatprep.subr.mxu0 0.0
  %1641 = vmatpush1.msra.mxu0 0.0
  %1642 = vmatprep.subr.mxu0 0.0
  %1643 = vmatpush1.msra.mxu0 0.0
  %1644 = vmatprep.subr.mxu0 0.0
  %1645 = vmatpush1.msra.mxu0 0.0
  %1646 = vmatprep.subr.mxu0 0.0
  %1647 = vmatpush1.msra.mxu0 0.0
  %1648 = vmatprep.subr.mxu0 0.0
  %1649 = vmatpush1.msra.mxu0 0.0
  %1650 = vmatprep.subr.mxu0 0.0
  %1651 = vmatpush1.msra.mxu0 0.0
  %1652 = vmatprep.subr.mxu0 0.0
  %1653 = vmatpush1.msra.mxu0 0.0
  %1654 = vmatprep.subr.mxu0 0.0
  %1655 = vmatpush1.msra.mxu0 0.0
  %1656 = vmatprep.subr.mxu0 0.0
  %1657 = vmatpush1.msra.mxu0 0.0
  %1658 = vmatprep.subr.mxu0 0.0
  %1659 = vmatpush1.msra.mxu0 0.0
  %1660 = vmatprep.subr.mxu0 0.0
  %1661 = vmatpush1.msra.mxu0 0.0
  %1662 = vmatprep.subr.mxu0 0.0
  %1663 = vmatpush1.msra.mxu0 0.0
  %1664 = vmatprep.subr.mxu0 0.0
  %1665 = vmatpush1.msra.mxu0 0.0
  %1666 = vmatprep.subr.mxu0 0.0
  %1667 = vmatpush1.msra.mxu0 0.0
  %1668 = vmatprep.subr.mxu0 0.0
  %1669 = vmatpush1.msra.mxu0 0.0
  %1670 = vmatprep.subr.mxu0 0.0
  %1671 = vmatpush1.msra.mxu0 0.0
  %1672 = vmatprep.subr.mxu0 0.0
  %1673 = vmatpush1.msra.mxu0 0.0
  %1674 = vmatprep.subr.mxu0 0.0
  %1675 = vmatpush1.msra.mxu0 0.0
  %1676 = vmatprep.subr.mxu0 0.0
  %1677 = vmatpush1.msra.mxu0 0.0
  %1678 = vmatprep.subr.mxu0 0.0
  %1679 = vmatpush1.msra.mxu0 0.0
  %1680 = vmatprep.subr.mxu0 0.0
  %1681 = vmatpush1.msra.mxu0 0.0
  %1682 = vmatprep.subr.mxu0 0.0
  %1683 = vmatpush1.msra.mxu0 0.0
  %1684 = vmatprep.mubr.f32.mxu0 0.0
  %1685 = vmatmul.mubr.f32.gmra.mrb[0].mxu0 %v1615
  %v1686 = vpop.f32.mrb[0].mxu0
  %v1687 = vadd.f32 %v1612, %v1686
  %v1688 = vpop.f32.mrb[0].mxu0
  %1689 = vmatprep.mubr.f32.mxu0 0.0
  %1690 = vmatmul.mubr.f32.gmra.mrb[0].mxu0 %v1618
  %v1691 = vpop.f32.mrb[0].mxu0
  %v1692 = vadd.f32 %v1612, %v1691
  %v1693 = vpop.f32.mrb[0].mxu0
  %1694 = vdwg.mxu0
  %v1696 = vlaneseq
  %v1697 = vshrl.u32 %v1696, 7
  %v1698 = vsub.s32 0, %v1697
  %v1699 = vrot.slane %v175, %v1698
  %v1702 = vsel %vm638, %v176, 0
  %v1704 = vsel %vm638, %v177, 0
  %1706 = vmatprep.subr.mxu0 0.0
  %1707 = vmatpush1.msra.mxu0 %v170
  %1708 = vmatprep.subr.mxu0 0.0
  %1709 = vmatpush1.msra.mxu0 %v171
  %1710 = vmatprep.subr.mxu0 0.0
  %1711 = vmatpush1.msra.mxu0 %v172
  %1712 = vmatprep.subr.mxu0 0.0
  %1713 = vmatpush1.msra.mxu0 %v173
  %1714 = vmatprep.subr.mxu0 0.0
  %1715 = vmatpush1.msra.mxu0 0.0
  %1716 = vmatprep.subr.mxu0 0.0
  %1717 = vmatpush1.msra.mxu0 0.0
  %1718 = vmatprep.subr.mxu0 0.0
  %1719 = vmatpush1.msra.mxu0 0.0
  %1720 = vmatprep.subr.mxu0 0.0
  %1721 = vmatpush1.msra.mxu0 0.0
  %1722 = vmatprep.subr.mxu0 0.0
  %1723 = vmatpush1.msra.mxu0 0.0
  %1724 = vmatprep.subr.mxu0 0.0
  %1725 = vmatpush1.msra.mxu0 0.0
  %1726 = vmatprep.subr.mxu0 0.0
  %1727 = vmatpush1.msra.mxu0 0.0
  %1728 = vmatprep.subr.mxu0 0.0
  %1729 = vmatpush1.msra.mxu0 0.0
  %1730 = vmatprep.subr.mxu0 0.0
  %1731 = vmatpush1.msra.mxu0 0.0
  %1732 = vmatprep.subr.mxu0 0.0
  %1733 = vmatpush1.msra.mxu0 0.0
  %1734 = vmatprep.subr.mxu0 0.0
  %1735 = vmatpush1.msra.mxu0 0.0
  %1736 = vmatprep.subr.mxu0 0.0
  %1737 = vmatpush1.msra.mxu0 0.0
  %1738 = vmatprep.subr.mxu0 0.0
  %1739 = vmatpush1.msra.mxu0 0.0
  %1740 = vmatprep.subr.mxu0 0.0
  %1741 = vmatpush1.msra.mxu0 0.0
  %1742 = vmatprep.subr.mxu0 0.0
  %1743 = vmatpush1.msra.mxu0 0.0
  %1744 = vmatprep.subr.mxu0 0.0
  %1745 = vmatpush1.msra.mxu0 0.0
  %1746 = vmatprep.subr.mxu0 0.0
  %1747 = vmatpush1.msra.mxu0 0.0
  %1748 = vmatprep.subr.mxu0 0.0
  %1749 = vmatpush1.msra.mxu0 0.0
  %1750 = vmatprep.subr.mxu0 0.0
  %1751 = vmatpush1.msra.mxu0 0.0
  %1752 = vmatprep.subr.mxu0 0.0
  %1753 = vmatpush1.msra.mxu0 0.0
  %1754 = vmatprep.subr.mxu0 0.0
  %1755 = vmatpush1.msra.mxu0 0.0
  %1756 = vmatprep.subr.mxu0 0.0
  %1757 = vmatpush1.msra.mxu0 0.0
  %1758 = vmatprep.subr.mxu0 0.0
  %1759 = vmatpush1.msra.mxu0 0.0
  %1760 = vmatprep.subr.mxu0 0.0
  %1761 = vmatpush1.msra.mxu0 0.0
  %1762 = vmatprep.subr.mxu0 0.0
  %1763 = vmatpush1.msra.mxu0 0.0
  %1764 = vmatprep.subr.mxu0 0.0
  %1765 = vmatpush1.msra.mxu0 0.0
  %1766 = vmatprep.subr.mxu0 0.0
  %1767 = vmatpush1.msra.mxu0 0.0
  %1768 = vmatprep.subr.mxu0 0.0
  %1769 = vmatpush1.msra.mxu0 0.0
  %1770 = vmatprep.mubr.f32.mxu0 0.0
  %1771 = vmatmul.mubr.f32.gmra.mrb[0].mxu0 %v1702
  %v1772 = vpop.f32.mrb[0].mxu0
  %v1773 = vadd.f32 %v1699, %v1772
  %v1774 = vpop.f32.mrb[0].mxu0
  %1775 = vmatprep.mubr.f32.mxu0 0.0
  %1776 = vmatmul.mubr.f32.gmra.mrb[0].mxu0 %v1704
  %v1777 = vpop.f32.mrb[0].mxu0
  %v1778 = vadd.f32 %v1699, %v1777
  %v1779 = vpop.f32.mrb[0].mxu0
  %1780 = vdwg.mxu0
  %v1781 = vadd.f32 %v1687, %v1773
  %v1782 = vadd.f32 %v1692, %v1778
  %v1783 = vxor.u32 %v1781, 2147483648
  %v1784 = vxor.u32 %v1782, 2147483648
  %v1785 = vmul.f32 %v1783, 1.442695
  %v1786 = vpow.pop %v1785
  %v1787 = vmul.f32 %v1784, 1.442695
  %v1788 = vpow.pop %v1787
  %v1789 = vadd.f32 %v1786, 1.0
  %v1790 = vadd.f32 %v1788, 1.0
  %v1791 = vrcp.pop %v1789
  %v1792 = vmul.f32 1.0, %v1791
  %v1793 = vrcp.pop %v1790
  %v1794 = vmul.f32 1.0, %v1793
  %1797 = vrot.lane.b32.xlu0 %v1773, 64
  %v1798 = vpop.permute.xlu0 %1797
  %1799 = vrot.lane.b32.xlu0 %v1778, 64
  %v1800 = vpop.permute.xlu0 %1799
  %v1803 = vmul.f32 %v1792, %v1798
  %v1804 = vmul.f32 %v1794, %v1800
  %1807 = vrot.lane.b32.xlu0 %v1803, 64
  %v1808 = vpop.permute.xlu0 %1807
  %1809 = vrot.lane.b32.xlu0 %v1804, 64
  %v1810 = vpop.permute.xlu0 %1809
  %v1813 = vadd.f32 %v1687, %v1808
  %v1814 = vadd.f32 %v1692, %v1810
  %v1815 = vtanh.pop %v1813
  %v1816 = vtanh.pop %v1814
  %v1817 = vsub.f32 1.0, %v1792
  %v1818 = vsub.f32 1.0, %v1794
  %1821 = vrot.lane.b32.xlu0 %v1815, 96
  %v1822 = vpop.permute.xlu0 %1821
  %1823 = vrot.lane.b32.xlu0 %v1816, 96
  %v1824 = vpop.permute.xlu0 %1823
  %v1827 = vmul.f32 %v1817, %v1822
  %v1828 = vmul.f32 %v1818, %v1824
  %1829 = vrot.lane.b32.xlu0 %v176, 32
  %v1830 = vpop.permute.xlu0 %1829
  %1831 = vrot.lane.b32.xlu0 %v177, 32
  %v1832 = vpop.permute.xlu0 %1831
  %v1835 = vmul.f32 %v1792, %v1830
  %v1836 = vmul.f32 %v1794, %v1832
  %v1837 = vadd.f32 %v1827, %v1835
  %v1838 = vadd.f32 %v1828, %v1836
  %1841 = vrot.lane.b32.xlu0 %v1837, 96
  %v1842 = vpop.permute.xlu0 %1841
  %1843 = vrot.lane.b32.xlu0 %v1838, 96
  %v1844 = vpop.permute.xlu0 %1843
  %v1846 = vsel %vm188, %v1844, 0
  %1848 = vmatprep.subr.mxu0 0.0
  %1849 = vmatpush1.msra.mxu0 %v1842
  %1850 = vmatprep.subr.mxu0 0.0
  %1851 = vmatpush1.msra.mxu0 %v1846
  %1852 = vmatprep.subr.mxu0 0.0
  %1853 = vmatpush1.msra.mxu0 0.0
  %1854 = vmatprep.subr.mxu0 0.0
  %1855 = vmatpush1.msra.mxu0 0.0
  %1856 = vmatprep.subr.mxu0 0.0
  %1857 = vmatpush1.msra.mxu0 0.0
  %1858 = vmatprep.subr.mxu0 0.0
  %1859 = vmatpush1.msra.mxu0 0.0
  %1860 = vmatprep.subr.mxu0 0.0
  %1861 = vmatpush1.msra.mxu0 0.0
  %1862 = vmatprep.subr.mxu0 0.0
  %1863 = vmatpush1.msra.mxu0 0.0
  %1864 = vmatprep.subr.mxu0 0.0
  %1865 = vmatpush1.msra.mxu0 0.0
  %1866 = vmatprep.subr.mxu0 0.0
  %1867 = vmatpush1.msra.mxu0 0.0
  %1868 = vmatprep.subr.mxu0 0.0
  %1869 = vmatpush1.msra.mxu0 0.0
  %1870 = vmatprep.subr.mxu0 0.0
  %1871 = vmatpush1.msra.mxu0 0.0
  %1872 = vmatprep.subr.mxu0 0.0
  %1873 = vmatpush1.msra.mxu0 0.0
  %1874 = vmatprep.subr.mxu0 0.0
  %1875 = vmatpush1.msra.mxu0 0.0
  %1876 = vmatprep.subr.mxu0 0.0
  %1877 = vmatpush1.msra.mxu0 0.0
  %1878 = vmatprep.subr.mxu0 0.0
  %1879 = vmatpush1.msra.mxu0 0.0
  %1880 = vmatprep.subr.mxu0 0.0
  %1881 = vmatpush1.msra.mxu0 0.0
  %1882 = vmatprep.subr.mxu0 0.0
  %1883 = vmatpush1.msra.mxu0 0.0
  %1884 = vmatprep.subr.mxu0 0.0
  %1885 = vmatpush1.msra.mxu0 0.0
  %1886 = vmatprep.subr.mxu0 0.0
  %1887 = vmatpush1.msra.mxu0 0.0
  %1888 = vmatprep.subr.mxu0 0.0
  %1889 = vmatpush1.msra.mxu0 0.0
  %1890 = vmatprep.subr.mxu0 0.0
  %1891 = vmatpush1.msra.mxu0 0.0
  %1892 = vmatprep.subr.mxu0 0.0
  %1893 = vmatpush1.msra.mxu0 0.0
  %1894 = vmatprep.subr.mxu0 0.0
  %1895 = vmatpush1.msra.mxu0 0.0
  %1896 = vmatprep.subr.mxu0 0.0
  %1897 = vmatpush1.msra.mxu0 0.0
  %1898 = vmatprep.subr.mxu0 0.0
  %1899 = vmatpush1.msra.mxu0 0.0
  %1900 = vmatprep.subr.mxu0 0.0
  %1901 = vmatpush1.msra.mxu0 0.0
  %1902 = vmatprep.subr.mxu0 0.0
  %1903 = vmatpush1.msra.mxu0 0.0
  %1904 = vmatprep.subr.mxu0 0.0
  %1905 = vmatpush1.msra.mxu0 0.0
  %1906 = vmatprep.subr.mxu0 0.0
  %1907 = vmatpush1.msra.mxu0 0.0
  %1908 = vmatprep.subr.mxu0 0.0
  %1909 = vmatpush1.msra.mxu0 0.0
  %1910 = vmatprep.subr.mxu0 0.0
  %1911 = vmatpush1.msra.mxu0 0.0
  %1912 = vmatprep.mubr.f32.mxu0 0.0
  %1913 = vmatmul.mubr.f32.gmra.mrb[0].mxu0 %v180
  %v1914 = vpop.f32.mrb[0].mxu0
  %v1915 = vadd.f32 0.0, %v1914
  %v1916 = vpop.f32.mrb[0].mxu0
  %1917 = vmatprep.mubr.f32.mxu0 0.0
  %1918 = vmatmul.mubr.f32.gmra.mrb[0].mxu0 %v183
  %v1919 = vpop.f32.mrb[0].mxu0
  %v1920 = vadd.f32 0.0, %v1919
  %v1921 = vpop.f32.mrb[0].mxu0
  %1922 = vmatprep.mubr.f32.mxu0 0.0
  %1923 = vmatmul.mubr.f32.gmra.mrb[0].mxu0 %v186
  %v1924 = vpop.f32.mrb[0].mxu0
  %v1925 = vadd.f32 0.0, %v1924
  %v1926 = vpop.f32.mrb[0].mxu0
  %1927 = vdwg.mxu0
  %v1931 = vcombine.high %v1915, %v1915
  %v1933 = vunpack.c.l.s4 1966171168
  %v1934 = vunpack.c.0.s8 %v1933
  %v1935 = vlaneseq
  %v1936 = vshrl.u32 %v1935, 7
  %v1937 = vsub.s32 %v1934, %v1936
  %v1938 = vrot.slane %v1915, %v1937
  %v1940 = vunpack.c.l.s4 1966171168
  %v1941 = vunpack.c.0.s8 %v1940
  %v1942 = vlaneseq
  %v1943 = vshrl.u32 %v1942, 7
  %v1944 = vsub.s32 %v1941, %v1943
  %v1945 = vrot.slane %v1931, %v1944
  %v1946 = vcombine.high %v1938, %v1938
  %v1947 = vcombine.high %v1945, %v1945
  %v1949 = vunpack.c.l.s4 1966171168
  %v1950 = vunpack.c.0.s8 %v1949
  %v1951 = vlaneseq
  %v1952 = vshrl.u32 %v1951, 7
  %v1953 = vsub.s32 %v1950, %v1952
  %v1954 = vrot.slane %v1938, %v1953
  %v1956 = vunpack.c.l.s4 1966171168
  %v1957 = vunpack.c.0.s8 %v1956
  %v1958 = vlaneseq
  %v1959 = vshrl.u32 %v1958, 7
  %v1960 = vsub.s32 %v1957, %v1959
  %v1961 = vrot.slane %v1945, %v1960
  %v1963 = vunpack.c.l.s4 1966171168
  %v1964 = vunpack.c.0.s8 %v1963
  %v1965 = vlaneseq
  %v1966 = vshrl.u32 %v1965, 7
  %v1967 = vsub.s32 %v1964, %v1966
  %v1968 = vrot.slane %v1946, %v1967
  %v1970 = vunpack.c.l.s4 1966171168
  %v1971 = vunpack.c.0.s8 %v1970
  %v1972 = vlaneseq
  %v1973 = vshrl.u32 %v1972, 7
  %v1974 = vsub.s32 %v1971, %v1973
  %v1975 = vrot.slane %v1947, %v1974
  %v1976 = vcombine.high %v1954, %v1954
  %v1977 = vcombine.high %v1961, %v1961
  %v1978 = vcombine.high %v1968, %v1968
  %v1979 = vcombine.high %v1975, %v1975
  %v1980 = vcombine.high %v1920, %v1920
  %v1982 = vunpack.c.l.s4 1966171168
  %v1983 = vunpack.c.0.s8 %v1982
  %v1984 = vlaneseq
  %v1985 = vshrl.u32 %v1984, 7
  %v1986 = vsub.s32 %v1983, %v1985
  %v1987 = vrot.slane %v1920, %v1986
  %v1989 = vunpack.c.l.s4 1966171168
  %v1990 = vunpack.c.0.s8 %v1989
  %v1991 = vlaneseq
  %v1992 = vshrl.u32 %v1991, 7
  %v1993 = vsub.s32 %v1990, %v1992
  %v1994 = vrot.slane %v1980, %v1993
  %v1995 = vcombine.high %v1987, %v1987
  %v1996 = vcombine.high %v1994, %v1994
  %v1998 = vunpack.c.l.s4 1966171168
  %v1999 = vunpack.c.0.s8 %v1998
  %v2000 = vlaneseq
  %v2001 = vshrl.u32 %v2000, 7
  %v2002 = vsub.s32 %v1999, %v2001
  %v2003 = vrot.slane %v1987, %v2002
  %v2005 = vunpack.c.l.s4 1966171168
  %v2006 = vunpack.c.0.s8 %v2005
  %v2007 = vlaneseq
  %v2008 = vshrl.u32 %v2007, 7
  %v2009 = vsub.s32 %v2006, %v2008
  %v2010 = vrot.slane %v1994, %v2009
  %v2012 = vunpack.c.l.s4 1966171168
  %v2013 = vunpack.c.0.s8 %v2012
  %v2014 = vlaneseq
  %v2015 = vshrl.u32 %v2014, 7
  %v2016 = vsub.s32 %v2013, %v2015
  %v2017 = vrot.slane %v1995, %v2016
  %v2019 = vunpack.c.l.s4 1966171168
  %v2020 = vunpack.c.0.s8 %v2019
  %v2021 = vlaneseq
  %v2022 = vshrl.u32 %v2021, 7
  %v2023 = vsub.s32 %v2020, %v2022
  %v2024 = vrot.slane %v1996, %v2023
  %v2025 = vcombine.high %v2003, %v2003
  %v2026 = vcombine.high %v2010, %v2010
  %v2027 = vcombine.high %v2017, %v2017
  %v2028 = vcombine.high %v2024, %v2024
  %v2029 = vcombine.high %v1925, %v1925
  %v2031 = vunpack.c.l.s4 1966171168
  %v2032 = vunpack.c.0.s8 %v2031
  %v2033 = vlaneseq
  %v2034 = vshrl.u32 %v2033, 7
  %v2035 = vsub.s32 %v2032, %v2034
  %v2036 = vrot.slane %v1925, %v2035
  %v2038 = vunpack.c.l.s4 1966171168
  %v2039 = vunpack.c.0.s8 %v2038
  %v2040 = vlaneseq
  %v2041 = vshrl.u32 %v2040, 7
  %v2042 = vsub.s32 %v2039, %v2041
  %v2043 = vrot.slane %v2029, %v2042
  %v2044 = vcombine.high %v2036, %v2036
  %v2045 = vcombine.high %v2043, %v2043
  %v2047 = vunpack.c.l.s4 1966171168
  %v2048 = vunpack.c.0.s8 %v2047
  %v2049 = vlaneseq
  %v2050 = vshrl.u32 %v2049, 7
  %v2051 = vsub.s32 %v2048, %v2050
  %v2052 = vrot.slane %v2036, %v2051
  %v2054 = vunpack.c.l.s4 1966171168
  %v2055 = vunpack.c.0.s8 %v2054
  %v2056 = vlaneseq
  %v2057 = vshrl.u32 %v2056, 7
  %v2058 = vsub.s32 %v2055, %v2057
  %v2059 = vrot.slane %v2043, %v2058
  %v2061 = vunpack.c.l.s4 1966171168
  %v2062 = vunpack.c.0.s8 %v2061
  %v2063 = vlaneseq
  %v2064 = vshrl.u32 %v2063, 7
  %v2065 = vsub.s32 %v2062, %v2064
  %v2066 = vrot.slane %v2044, %v2065
  %v2068 = vunpack.c.l.s4 1966171168
  %v2069 = vunpack.c.0.s8 %v2068
  %v2070 = vlaneseq
  %v2071 = vshrl.u32 %v2070, 7
  %v2072 = vsub.s32 %v2069, %v2071
  %v2073 = vrot.slane %v2045, %v2072
  %v2074 = vcombine.high %v2052, %v2052
  %v2075 = vcombine.high %v2059, %v2059
  %v2076 = vcombine.high %v2066, %v2066
  %v2077 = vcombine.high %v2073, %v2073
  %v2078 = vlaneseq
  %v2079 = vshrl.u32 %v2078, 7
  %v2080 = vsub.s32 0, %v2079
  %v2081 = vrot.slane %v1954, %v2080
  %v2082 = vlaneseq
  %v2083 = vshrl.u32 %v2082, 7
  %v2084 = vsub.s32 0, %v2083
  %v2085 = vrot.slane %v1968, %v2084
  %v2086 = vlaneseq
  %v2087 = vshrl.u32 %v2086, 7
  %v2088 = vsub.s32 0, %v2087
  %v2089 = vrot.slane %v1976, %v2088
  %v2090 = vlaneseq
  %v2091 = vshrl.u32 %v2090, 7
  %v2092 = vsub.s32 0, %v2091
  %v2093 = vrot.slane %v1978, %v2092
  %v2094 = vlaneseq
  %v2095 = vshrl.u32 %v2094, 7
  %v2096 = vsub.s32 0, %v2095
  %v2097 = vrot.slane %v1961, %v2096
  %v2098 = vlaneseq
  %v2099 = vshrl.u32 %v2098, 7
  %v2100 = vsub.s32 0, %v2099
  %v2101 = vrot.slane %v1975, %v2100
  %v2102 = vlaneseq
  %v2103 = vshrl.u32 %v2102, 7
  %v2104 = vsub.s32 0, %v2103
  %v2105 = vrot.slane %v1977, %v2104
  %v2106 = vlaneseq
  %v2107 = vshrl.u32 %v2106, 7
  %v2108 = vsub.s32 0, %v2107
  %v2109 = vrot.slane %v1979, %v2108
  %v2110 = vlaneseq
  %v2111 = vshrl.u32 %v2110, 7
  %v2112 = vsub.s32 0, %v2111
  %v2113 = vrot.slane %v2003, %v2112
  %v2114 = vlaneseq
  %v2115 = vshrl.u32 %v2114, 7
  %v2116 = vsub.s32 0, %v2115
  %v2117 = vrot.slane %v2017, %v2116
  %v2118 = vlaneseq
  %v2119 = vshrl.u32 %v2118, 7
  %v2120 = vsub.s32 0, %v2119
  %v2121 = vrot.slane %v2025, %v2120
  %v2122 = vlaneseq
  %v2123 = vshrl.u32 %v2122, 7
  %v2124 = vsub.s32 0, %v2123
  %v2125 = vrot.slane %v2027, %v2124
  %v2126 = vlaneseq
  %v2127 = vshrl.u32 %v2126, 7
  %v2128 = vsub.s32 0, %v2127
  %v2129 = vrot.slane %v2010, %v2128
  %v2130 = vlaneseq
  %v2131 = vshrl.u32 %v2130, 7
  %v2132 = vsub.s32 0, %v2131
  %v2133 = vrot.slane %v2024, %v2132
  %v2134 = vlaneseq
  %v2135 = vshrl.u32 %v2134, 7
  %v2136 = vsub.s32 0, %v2135
  %v2137 = vrot.slane %v2026, %v2136
  %v2138 = vlaneseq
  %v2139 = vshrl.u32 %v2138, 7
  %v2140 = vsub.s32 0, %v2139
  %v2141 = vrot.slane %v2028, %v2140
  %v2142 = vlaneseq
  %v2143 = vshrl.u32 %v2142, 7
  %v2144 = vsub.s32 0, %v2143
  %v2145 = vrot.slane %v2052, %v2144
  %v2146 = vlaneseq
  %v2147 = vshrl.u32 %v2146, 7
  %v2148 = vsub.s32 0, %v2147
  %v2149 = vrot.slane %v2066, %v2148
  %v2150 = vlaneseq
  %v2151 = vshrl.u32 %v2150, 7
  %v2152 = vsub.s32 0, %v2151
  %v2153 = vrot.slane %v2074, %v2152
  %v2154 = vlaneseq
  %v2155 = vshrl.u32 %v2154, 7
  %v2156 = vsub.s32 0, %v2155
  %v2157 = vrot.slane %v2076, %v2156
  %v2158 = vlaneseq
  %v2159 = vshrl.u32 %v2158, 7
  %v2160 = vsub.s32 0, %v2159
  %v2161 = vrot.slane %v2059, %v2160
  %v2162 = vlaneseq
  %v2163 = vshrl.u32 %v2162, 7
  %v2164 = vsub.s32 0, %v2163
  %v2165 = vrot.slane %v2073, %v2164
  %v2166 = vlaneseq
  %v2167 = vshrl.u32 %v2166, 7
  %v2168 = vsub.s32 0, %v2167
  %v2169 = vrot.slane %v2075, %v2168
  %v2170 = vlaneseq
  %v2171 = vshrl.u32 %v2170, 7
  %v2172 = vsub.s32 0, %v2171
  %v2173 = vrot.slane %v2077, %v2172
  %v2198 = vmul.f32 %v2081, %v64
  %v2199 = vmul.f32 %v2081, %v65
  %v2200 = vmul.f32 %v2081, %v66
  %v2201 = vmul.f32 %v2081, %v67
  %v2202 = vmul.f32 %v2085, %v68
  %v2203 = vmul.f32 %v2085, %v69
  %v2204 = vmul.f32 %v2085, %v70
  %v2205 = vmul.f32 %v2085, %v71
  %v2206 = vmul.f32 %v2089, %v72
  %v2207 = vmul.f32 %v2089, %v73
  %v2208 = vmul.f32 %v2089, %v74
  %v2209 = vmul.f32 %v2089, %v75
  %v2210 = vmul.f32 %v2093, %v76
  %v2211 = vmul.f32 %v2093, %v77
  %v2212 = vmul.f32 %v2093, %v78
  %v2213 = vmul.f32 %v2093, %v79
  %v2214 = vmul.f32 %v2097, %v80
  %v2215 = vmul.f32 %v2097, %v81
  %v2216 = vmul.f32 %v2097, %v82
  %v2217 = vmul.f32 %v2097, %v83
  %v2218 = vmul.f32 %v2101, %v84
  %v2219 = vmul.f32 %v2101, %v85
  %v2220 = vmul.f32 %v2101, %v86
  %v2221 = vmul.f32 %v2101, %v87
  %v2222 = vmul.f32 %v2105, %v88
  %v2223 = vmul.f32 %v2105, %v89
  %v2224 = vmul.f32 %v2105, %v90
  %v2225 = vmul.f32 %v2105, %v91
  %v2226 = vmul.f32 %v2109, %v92
  %v2227 = vmul.f32 %v2109, %v93
  %v2228 = vmul.f32 %v2109, %v94
  %v2229 = vmul.f32 %v2109, %v95
  %v2230 = vmul.f32 %v2113, %v96
  %v2231 = vmul.f32 %v2113, %v97
  %v2232 = vmul.f32 %v2113, %v98
  %v2233 = vmul.f32 %v2113, %v99
  %v2234 = vmul.f32 %v2117, %v100
  %v2235 = vmul.f32 %v2117, %v101
  %v2236 = vmul.f32 %v2117, %v102
  %v2237 = vmul.f32 %v2117, %v103
  %v2238 = vmul.f32 %v2121, %v104
  %v2239 = vmul.f32 %v2121, %v105
  %v2240 = vmul.f32 %v2121, %v106
  %v2241 = vmul.f32 %v2121, %v107
  %v2242 = vmul.f32 %v2125, %v108
  %v2243 = vmul.f32 %v2125, %v109
  %v2244 = vmul.f32 %v2125, %v110
  %v2245 = vmul.f32 %v2125, %v111
  %v2246 = vmul.f32 %v2129, %v112
  %v2247 = vmul.f32 %v2129, %v113
  %v2248 = vmul.f32 %v2129, %v114
  %v2249 = vmul.f32 %v2129, %v115
  %v2250 = vmul.f32 %v2133, %v116
  %v2251 = vmul.f32 %v2133, %v117
  %v2252 = vmul.f32 %v2133, %v118
  %v2253 = vmul.f32 %v2133, %v119
  %v2254 = vmul.f32 %v2137, %v120
  %v2255 = vmul.f32 %v2137, %v121
  %v2256 = vmul.f32 %v2137, %v122
  %v2257 = vmul.f32 %v2137, %v123
  %v2258 = vmul.f32 %v2141, %v124
  %v2259 = vmul.f32 %v2141, %v125
  %v2260 = vmul.f32 %v2141, %v126
  %v2261 = vmul.f32 %v2141, %v127
  %v2262 = vmul.f32 %v2145, %v128
  %v2263 = vmul.f32 %v2145, %v129
  %v2264 = vmul.f32 %v2145, %v130
  %v2265 = vmul.f32 %v2145, %v131
  %v2266 = vmul.f32 %v2149, %v132
  %v2267 = vmul.f32 %v2149, %v133
  %v2268 = vmul.f32 %v2149, %v134
  %v2269 = vmul.f32 %v2149, %v135
  %v2270 = vmul.f32 %v2153, %v136
  %v2271 = vmul.f32 %v2153, %v137
  %v2272 = vmul.f32 %v2153, %v138
  %v2273 = vmul.f32 %v2153, %v139
  %v2274 = vmul.f32 %v2157, %v140
  %v2275 = vmul.f32 %v2157, %v141
  %v2276 = vmul.f32 %v2157, %v142
  %v2277 = vmul.f32 %v2157, %v143
  %v2278 = vmul.f32 %v2161, %v144
  %v2279 = vmul.f32 %v2161, %v145
  %v2280 = vmul.f32 %v2161, %v146
  %v2281 = vmul.f32 %v2161, %v147
  %v2282 = vmul.f32 %v2165, %v148
  %v2283 = vmul.f32 %v2165, %v149
  %v2284 = vmul.f32 %v2165, %v150
  %v2285 = vmul.f32 %v2165, %v151
  %v2286 = vmul.f32 %v2169, %v152
  %v2287 = vmul.f32 %v2169, %v153
  %v2288 = vmul.f32 %v2169, %v154
  %v2289 = vmul.f32 %v2169, %v155
  %v2290 = vmul.f32 %v2173, %v156
  %v2291 = vmul.f32 %v2173, %v157
  %v2292 = vmul.f32 %v2173, %v158
  %v2293 = vmul.f32 %v2173, %v159
  %v2294 = vsel %vm638, %v2198, 0.0
  %2295 = vadd.xlane.f32.xlu0 %v2294
  %v2296 = vpop.xlane.xlu0 %2295
  %v2297 = vsel %vm638, %v2199, 0.0
  %2298 = vadd.xlane.f32.xlu0 %v2297
  %v2299 = vpop.xlane.xlu0 %2298
  %v2300 = vsel %vm638, %v2200, 0.0
  %2301 = vadd.xlane.f32.xlu0 %v2300
  %v2302 = vpop.xlane.xlu0 %2301
  %v2303 = vsel %vm638, %v2201, 0.0
  %2304 = vadd.xlane.f32.xlu0 %v2303
  %v2305 = vpop.xlane.xlu0 %2304
  %v2306 = vsel %vm638, %v2202, 0.0
  %2307 = vadd.xlane.f32.xlu0 %v2306
  %v2308 = vpop.xlane.xlu0 %2307
  %v2309 = vsel %vm638, %v2203, 0.0
  %2310 = vadd.xlane.f32.xlu0 %v2309
  %v2311 = vpop.xlane.xlu0 %2310
  %v2312 = vsel %vm638, %v2204, 0.0
  %2313 = vadd.xlane.f32.xlu0 %v2312
  %v2314 = vpop.xlane.xlu0 %2313
  %v2315 = vsel %vm638, %v2205, 0.0
  %2316 = vadd.xlane.f32.xlu0 %v2315
  %v2317 = vpop.xlane.xlu0 %2316
  %v2318 = vsel %vm638, %v2206, 0.0
  %2319 = vadd.xlane.f32.xlu0 %v2318
  %v2320 = vpop.xlane.xlu0 %2319
  %v2321 = vsel %vm638, %v2207, 0.0
  %2322 = vadd.xlane.f32.xlu0 %v2321
  %v2323 = vpop.xlane.xlu0 %2322
  %v2324 = vsel %vm638, %v2208, 0.0
  %2325 = vadd.xlane.f32.xlu0 %v2324
  %v2326 = vpop.xlane.xlu0 %2325
  %v2327 = vsel %vm638, %v2209, 0.0
  %2328 = vadd.xlane.f32.xlu0 %v2327
  %v2329 = vpop.xlane.xlu0 %2328
  %v2330 = vsel %vm638, %v2210, 0.0
  %2331 = vadd.xlane.f32.xlu0 %v2330
  %v2332 = vpop.xlane.xlu0 %2331
  %v2333 = vsel %vm638, %v2211, 0.0
  %2334 = vadd.xlane.f32.xlu0 %v2333
  %v2335 = vpop.xlane.xlu0 %2334
  %v2336 = vsel %vm638, %v2212, 0.0
  %2337 = vadd.xlane.f32.xlu0 %v2336
  %v2338 = vpop.xlane.xlu0 %2337
  %v2339 = vsel %vm638, %v2213, 0.0
  %2340 = vadd.xlane.f32.xlu0 %v2339
  %v2341 = vpop.xlane.xlu0 %2340
  %v2342 = vsel %vm638, %v2214, 0.0
  %2343 = vadd.xlane.f32.xlu0 %v2342
  %v2344 = vpop.xlane.xlu0 %2343
  %v2345 = vsel %vm638, %v2215, 0.0
  %2346 = vadd.xlane.f32.xlu0 %v2345
  %v2347 = vpop.xlane.xlu0 %2346
  %v2348 = vsel %vm638, %v2216, 0.0
  %2349 = vadd.xlane.f32.xlu0 %v2348
  %v2350 = vpop.xlane.xlu0 %2349
  %v2351 = vsel %vm638, %v2217, 0.0
  %2352 = vadd.xlane.f32.xlu0 %v2351
  %v2353 = vpop.xlane.xlu0 %2352
  %v2354 = vsel %vm638, %v2218, 0.0
  %2355 = vadd.xlane.f32.xlu0 %v2354
  %v2356 = vpop.xlane.xlu0 %2355
  %v2357 = vsel %vm638, %v2219, 0.0
  %2358 = vadd.xlane.f32.xlu0 %v2357
  %v2359 = vpop.xlane.xlu0 %2358
  %v2360 = vsel %vm638, %v2220, 0.0
  %2361 = vadd.xlane.f32.xlu0 %v2360
  %v2362 = vpop.xlane.xlu0 %2361
  %v2363 = vsel %vm638, %v2221, 0.0
  %2364 = vadd.xlane.f32.xlu0 %v2363
  %v2365 = vpop.xlane.xlu0 %2364
  %v2366 = vsel %vm638, %v2222, 0.0
  %2367 = vadd.xlane.f32.xlu0 %v2366
  %v2368 = vpop.xlane.xlu0 %2367
  %v2369 = vsel %vm638, %v2223, 0.0
  %2370 = vadd.xlane.f32.xlu0 %v2369
  %v2371 = vpop.xlane.xlu0 %2370
  %v2372 = vsel %vm638, %v2224, 0.0
  %2373 = vadd.xlane.f32.xlu0 %v2372
  %v2374 = vpop.xlane.xlu0 %2373
  %v2375 = vsel %vm638, %v2225, 0.0
  %2376 = vadd.xlane.f32.xlu0 %v2375
  %v2377 = vpop.xlane.xlu0 %2376
  %v2378 = vsel %vm638, %v2226, 0.0
  %2379 = vadd.xlane.f32.xlu0 %v2378
  %v2380 = vpop.xlane.xlu0 %2379
  %v2381 = vsel %vm638, %v2227, 0.0
  %2382 = vadd.xlane.f32.xlu0 %v2381
  %v2383 = vpop.xlane.xlu0 %2382
  %v2384 = vsel %vm638, %v2228, 0.0
  %2385 = vadd.xlane.f32.xlu0 %v2384
  %v2386 = vpop.xlane.xlu0 %2385
  %v2387 = vsel %vm638, %v2229, 0.0
  %2388 = vadd.xlane.f32.xlu0 %v2387
  %v2389 = vpop.xlane.xlu0 %2388
  %v2390 = vsel %vm638, %v2230, 0.0
  %2391 = vadd.xlane.f32.xlu0 %v2390
  %v2392 = vpop.xlane.xlu0 %2391
  %v2393 = vsel %vm638, %v2231, 0.0
  %2394 = vadd.xlane.f32.xlu0 %v2393
  %v2395 = vpop.xlane.xlu0 %2394
  %v2396 = vsel %vm638, %v2232, 0.0
  %2397 = vadd.xlane.f32.xlu0 %v2396
  %v2398 = vpop.xlane.xlu0 %2397
  %v2399 = vsel %vm638, %v2233, 0.0
  %2400 = vadd.xlane.f32.xlu0 %v2399
  %v2401 = vpop.xlane.xlu0 %2400
  %v2402 = vsel %vm638, %v2234, 0.0
  %2403 = vadd.xlane.f32.xlu0 %v2402
  %v2404 = vpop.xlane.xlu0 %2403
  %v2405 = vsel %vm638, %v2235, 0.0
  %2406 = vadd.xlane.f32.xlu0 %v2405
  %v2407 = vpop.xlane.xlu0 %2406
  %v2408 = vsel %vm638, %v2236, 0.0
  %2409 = vadd.xlane.f32.xlu0 %v2408
  %v2410 = vpop.xlane.xlu0 %2409
  %v2411 = vsel %vm638, %v2237, 0.0
  %2412 = vadd.xlane.f32.xlu0 %v2411
  %v2413 = vpop.xlane.xlu0 %2412
  %v2414 = vsel %vm638, %v2238, 0.0
  %2415 = vadd.xlane.f32.xlu0 %v2414
  %v2416 = vpop.xlane.xlu0 %2415
  %v2417 = vsel %vm638, %v2239, 0.0
  %2418 = vadd.xlane.f32.xlu0 %v2417
  %v2419 = vpop.xlane.xlu0 %2418
  %v2420 = vsel %vm638, %v2240, 0.0
  %2421 = vadd.xlane.f32.xlu0 %v2420
  %v2422 = vpop.xlane.xlu0 %2421
  %v2423 = vsel %vm638, %v2241, 0.0
  %2424 = vadd.xlane.f32.xlu0 %v2423
  %v2425 = vpop.xlane.xlu0 %2424
  %v2426 = vsel %vm638, %v2242, 0.0
  %2427 = vadd.xlane.f32.xlu0 %v2426
  %v2428 = vpop.xlane.xlu0 %2427
  %v2429 = vsel %vm638, %v2243, 0.0
  %2430 = vadd.xlane.f32.xlu0 %v2429
  %v2431 = vpop.xlane.xlu0 %2430
  %v2432 = vsel %vm638, %v2244, 0.0
  %2433 = vadd.xlane.f32.xlu0 %v2432
  %v2434 = vpop.xlane.xlu0 %2433
  %v2435 = vsel %vm638, %v2245, 0.0
  %2436 = vadd.xlane.f32.xlu0 %v2435
  %v2437 = vpop.xlane.xlu0 %2436
  %v2438 = vsel %vm638, %v2246, 0.0
  %2439 = vadd.xlane.f32.xlu0 %v2438
  %v2440 = vpop.xlane.xlu0 %2439
  %v2441 = vsel %vm638, %v2247, 0.0
  %2442 = vadd.xlane.f32.xlu0 %v2441
  %v2443 = vpop.xlane.xlu0 %2442
  %v2444 = vsel %vm638, %v2248, 0.0
  %2445 = vadd.xlane.f32.xlu0 %v2444
  %v2446 = vpop.xlane.xlu0 %2445
  %v2447 = vsel %vm638, %v2249, 0.0
  %2448 = vadd.xlane.f32.xlu0 %v2447
  %v2449 = vpop.xlane.xlu0 %2448
  %v2450 = vsel %vm638, %v2250, 0.0
  %2451 = vadd.xlane.f32.xlu0 %v2450
  %v2452 = vpop.xlane.xlu0 %2451
  %v2453 = vsel %vm638, %v2251, 0.0
  %2454 = vadd.xlane.f32.xlu0 %v2453
  %v2455 = vpop.xlane.xlu0 %2454
  %v2456 = vsel %vm638, %v2252, 0.0
  %2457 = vadd.xlane.f32.xlu0 %v2456
  %v2458 = vpop.xlane.xlu0 %2457
  %v2459 = vsel %vm638, %v2253, 0.0
  %2460 = vadd.xlane.f32.xlu0 %v2459
  %v2461 = vpop.xlane.xlu0 %2460
  %v2462 = vsel %vm638, %v2254, 0.0
  %2463 = vadd.xlane.f32.xlu0 %v2462
  %v2464 = vpop.xlane.xlu0 %2463
  %v2465 = vsel %vm638, %v2255, 0.0
  %2466 = vadd.xlane.f32.xlu0 %v2465
  %v2467 = vpop.xlane.xlu0 %2466
  %v2468 = vsel %vm638, %v2256, 0.0
  %2469 = vadd.xlane.f32.xlu0 %v2468
  %v2470 = vpop.xlane.xlu0 %2469
  %v2471 = vsel %vm638, %v2257, 0.0
  %2472 = vadd.xlane.f32.xlu0 %v2471
  %v2473 = vpop.xlane.xlu0 %2472
  %v2474 = vsel %vm638, %v2258, 0.0
  %2475 = vadd.xlane.f32.xlu0 %v2474
  %v2476 = vpop.xlane.xlu0 %2475
  %v2477 = vsel %vm638, %v2259, 0.0
  %2478 = vadd.xlane.f32.xlu0 %v2477
  %v2479 = vpop.xlane.xlu0 %2478
  %v2480 = vsel %vm638, %v2260, 0.0
  %2481 = vadd.xlane.f32.xlu0 %v2480
  %v2482 = vpop.xlane.xlu0 %2481
  %v2483 = vsel %vm638, %v2261, 0.0
  %2484 = vadd.xlane.f32.xlu0 %v2483
  %v2485 = vpop.xlane.xlu0 %2484
  %v2486 = vsel %vm638, %v2262, 0.0
  %2487 = vadd.xlane.f32.xlu0 %v2486
  %v2488 = vpop.xlane.xlu0 %2487
  %v2489 = vsel %vm638, %v2263, 0.0
  %2490 = vadd.xlane.f32.xlu0 %v2489
  %v2491 = vpop.xlane.xlu0 %2490
  %v2492 = vsel %vm638, %v2264, 0.0
  %2493 = vadd.xlane.f32.xlu0 %v2492
  %v2494 = vpop.xlane.xlu0 %2493
  %v2495 = vsel %vm638, %v2265, 0.0
  %2496 = vadd.xlane.f32.xlu0 %v2495
  %v2497 = vpop.xlane.xlu0 %2496
  %v2498 = vsel %vm638, %v2266, 0.0
  %2499 = vadd.xlane.f32.xlu0 %v2498
  %v2500 = vpop.xlane.xlu0 %2499
  %v2501 = vsel %vm638, %v2267, 0.0
  %2502 = vadd.xlane.f32.xlu0 %v2501
  %v2503 = vpop.xlane.xlu0 %2502
  %v2504 = vsel %vm638, %v2268, 0.0
  %2505 = vadd.xlane.f32.xlu0 %v2504
  %v2506 = vpop.xlane.xlu0 %2505
  %v2507 = vsel %vm638, %v2269, 0.0
  %2508 = vadd.xlane.f32.xlu0 %v2507
  %v2509 = vpop.xlane.xlu0 %2508
  %v2510 = vsel %vm638, %v2270, 0.0
  %2511 = vadd.xlane.f32.xlu0 %v2510
  %v2512 = vpop.xlane.xlu0 %2511
  %v2513 = vsel %vm638, %v2271, 0.0
  %2514 = vadd.xlane.f32.xlu0 %v2513
  %v2515 = vpop.xlane.xlu0 %2514
  %v2516 = vsel %vm638, %v2272, 0.0
  %2517 = vadd.xlane.f32.xlu0 %v2516
  %v2518 = vpop.xlane.xlu0 %2517
  %v2519 = vsel %vm638, %v2273, 0.0
  %2520 = vadd.xlane.f32.xlu0 %v2519
  %v2521 = vpop.xlane.xlu0 %2520
  %v2522 = vsel %vm638, %v2274, 0.0
  %2523 = vadd.xlane.f32.xlu0 %v2522
  %v2524 = vpop.xlane.xlu0 %2523
  %v2525 = vsel %vm638, %v2275, 0.0
  %2526 = vadd.xlane.f32.xlu0 %v2525
  %v2527 = vpop.xlane.xlu0 %2526
  %v2528 = vsel %vm638, %v2276, 0.0
  %2529 = vadd.xlane.f32.xlu0 %v2528
  %v2530 = vpop.xlane.xlu0 %2529
  %v2531 = vsel %vm638, %v2277, 0.0
  %2532 = vadd.xlane.f32.xlu0 %v2531
  %v2533 = vpop.xlane.xlu0 %2532
  %v2534 = vsel %vm638, %v2278, 0.0
  %2535 = vadd.xlane.f32.xlu0 %v2534
  %v2536 = vpop.xlane.xlu0 %2535
  %v2537 = vsel %vm638, %v2279, 0.0
  %2538 = vadd.xlane.f32.xlu0 %v2537
  %v2539 = vpop.xlane.xlu0 %2538
  %v2540 = vsel %vm638, %v2280, 0.0
  %2541 = vadd.xlane.f32.xlu0 %v2540
  %v2542 = vpop.xlane.xlu0 %2541
  %v2543 = vsel %vm638, %v2281, 0.0
  %2544 = vadd.xlane.f32.xlu0 %v2543
  %v2545 = vpop.xlane.xlu0 %2544
  %v2546 = vsel %vm638, %v2282, 0.0
  %2547 = vadd.xlane.f32.xlu0 %v2546
  %v2548 = vpop.xlane.xlu0 %2547
  %v2549 = vsel %vm638, %v2283, 0.0
  %2550 = vadd.xlane.f32.xlu0 %v2549
  %v2551 = vpop.xlane.xlu0 %2550
  %v2552 = vsel %vm638, %v2284, 0.0
  %2553 = vadd.xlane.f32.xlu0 %v2552
  %v2554 = vpop.xlane.xlu0 %2553
  %v2555 = vsel %vm638, %v2285, 0.0
  %2556 = vadd.xlane.f32.xlu0 %v2555
  %v2557 = vpop.xlane.xlu0 %2556
  %v2558 = vsel %vm638, %v2286, 0.0
  %2559 = vadd.xlane.f32.xlu0 %v2558
  %v2560 = vpop.xlane.xlu0 %2559
  %v2561 = vsel %vm638, %v2287, 0.0
  %2562 = vadd.xlane.f32.xlu0 %v2561
  %v2563 = vpop.xlane.xlu0 %2562
  %v2564 = vsel %vm638, %v2288, 0.0
  %2565 = vadd.xlane.f32.xlu0 %v2564
  %v2566 = vpop.xlane.xlu0 %2565
  %v2567 = vsel %vm638, %v2289, 0.0
  %2568 = vadd.xlane.f32.xlu0 %v2567
  %v2569 = vpop.xlane.xlu0 %2568
  %v2570 = vsel %vm638, %v2290, 0.0
  %2571 = vadd.xlane.f32.xlu0 %v2570
  %v2572 = vpop.xlane.xlu0 %2571
  %v2573 = vsel %vm638, %v2291, 0.0
  %2574 = vadd.xlane.f32.xlu0 %v2573
  %v2575 = vpop.xlane.xlu0 %2574
  %v2576 = vsel %vm638, %v2292, 0.0
  %2577 = vadd.xlane.f32.xlu0 %v2576
  %v2578 = vpop.xlane.xlu0 %2577
  %v2579 = vsel %vm638, %v2293, 0.0
  %2580 = vadd.xlane.f32.xlu0 %v2579
  %v2581 = vpop.xlane.xlu0 %2580
  %v2678 = vlaneseq
  %v2679 = vshrl.u32 %v2678, 7
  %v2680 = vsub.s32 %v1030, %v2679
  %v2681 = vrot.slane %v2296, %v2680
  %v2682 = vlaneseq
  %v2683 = vshrl.u32 %v2682, 7
  %v2684 = vsub.s32 %v1035, %v2683
  %v2685 = vrot.slane %v2299, %v2684
  %v2686 = vsel %vm1040, %v2685, %v2681
  %v2687 = vlaneseq
  %v2688 = vshrl.u32 %v2687, 7
  %v2689 = vsub.s32 %v1042, %v2688
  %v2690 = vrot.slane %v2302, %v2689
  %v2691 = vsel %vm1047, %v2690, %v2686
  %v2692 = vlaneseq
  %v2693 = vshrl.u32 %v2692, 7
  %v2694 = vsub.s32 %v1049, %v2693
  %v2695 = vrot.slane %v2305, %v2694
  %v2696 = vsel %vm1054, %v2695, %v2691
  %v2697 = vlaneseq
  %v2698 = vshrl.u32 %v2697, 7
  %v2699 = vsub.s32 %v1030, %v2698
  %v2700 = vrot.slane %v2308, %v2699
  %v2701 = vlaneseq
  %v2702 = vshrl.u32 %v2701, 7
  %v2703 = vsub.s32 %v1035, %v2702
  %v2704 = vrot.slane %v2311, %v2703
  %v2705 = vsel %vm1040, %v2704, %v2700
  %v2706 = vlaneseq
  %v2707 = vshrl.u32 %v2706, 7
  %v2708 = vsub.s32 %v1042, %v2707
  %v2709 = vrot.slane %v2314, %v2708
  %v2710 = vsel %vm1047, %v2709, %v2705
  %v2711 = vlaneseq
  %v2712 = vshrl.u32 %v2711, 7
  %v2713 = vsub.s32 %v1049, %v2712
  %v2714 = vrot.slane %v2317, %v2713
  %v2715 = vsel %vm1054, %v2714, %v2710
  %v2716 = vlaneseq
  %v2717 = vshrl.u32 %v2716, 7
  %v2718 = vsub.s32 %v1030, %v2717
  %v2719 = vrot.slane %v2320, %v2718
  %v2720 = vlaneseq
  %v2721 = vshrl.u32 %v2720, 7
  %v2722 = vsub.s32 %v1035, %v2721
  %v2723 = vrot.slane %v2323, %v2722
  %v2724 = vsel %vm1040, %v2723, %v2719
  %v2725 = vlaneseq
  %v2726 = vshrl.u32 %v2725, 7
  %v2727 = vsub.s32 %v1042, %v2726
  %v2728 = vrot.slane %v2326, %v2727
  %v2729 = vsel %vm1047, %v2728, %v2724
  %v2730 = vlaneseq
  %v2731 = vshrl.u32 %v2730, 7
  %v2732 = vsub.s32 %v1049, %v2731
  %v2733 = vrot.slane %v2329, %v2732
  %v2734 = vsel %vm1054, %v2733, %v2729
  %v2735 = vlaneseq
  %v2736 = vshrl.u32 %v2735, 7
  %v2737 = vsub.s32 %v1030, %v2736
  %v2738 = vrot.slane %v2332, %v2737
  %v2739 = vlaneseq
  %v2740 = vshrl.u32 %v2739, 7
  %v2741 = vsub.s32 %v1035, %v2740
  %v2742 = vrot.slane %v2335, %v2741
  %v2743 = vsel %vm1040, %v2742, %v2738
  %v2744 = vlaneseq
  %v2745 = vshrl.u32 %v2744, 7
  %v2746 = vsub.s32 %v1042, %v2745
  %v2747 = vrot.slane %v2338, %v2746
  %v2748 = vsel %vm1047, %v2747, %v2743
  %v2749 = vlaneseq
  %v2750 = vshrl.u32 %v2749, 7
  %v2751 = vsub.s32 %v1049, %v2750
  %v2752 = vrot.slane %v2341, %v2751
  %v2753 = vsel %vm1054, %v2752, %v2748
  %v2754 = vlaneseq
  %v2755 = vshrl.u32 %v2754, 7
  %v2756 = vsub.s32 %v1030, %v2755
  %v2757 = vrot.slane %v2344, %v2756
  %v2758 = vlaneseq
  %v2759 = vshrl.u32 %v2758, 7
  %v2760 = vsub.s32 %v1035, %v2759
  %v2761 = vrot.slane %v2347, %v2760
  %v2762 = vsel %vm1040, %v2761, %v2757
  %v2763 = vlaneseq
  %v2764 = vshrl.u32 %v2763, 7
  %v2765 = vsub.s32 %v1042, %v2764
  %v2766 = vrot.slane %v2350, %v2765
  %v2767 = vsel %vm1047, %v2766, %v2762
  %v2768 = vlaneseq
  %v2769 = vshrl.u32 %v2768, 7
  %v2770 = vsub.s32 %v1049, %v2769
  %v2771 = vrot.slane %v2353, %v2770
  %v2772 = vsel %vm1054, %v2771, %v2767
  %v2773 = vlaneseq
  %v2774 = vshrl.u32 %v2773, 7
  %v2775 = vsub.s32 %v1030, %v2774
  %v2776 = vrot.slane %v2356, %v2775
  %v2777 = vlaneseq
  %v2778 = vshrl.u32 %v2777, 7
  %v2779 = vsub.s32 %v1035, %v2778
  %v2780 = vrot.slane %v2359, %v2779
  %v2781 = vsel %vm1040, %v2780, %v2776
  %v2782 = vlaneseq
  %v2783 = vshrl.u32 %v2782, 7
  %v2784 = vsub.s32 %v1042, %v2783
  %v2785 = vrot.slane %v2362, %v2784
  %v2786 = vsel %vm1047, %v2785, %v2781
  %v2787 = vlaneseq
  %v2788 = vshrl.u32 %v2787, 7
  %v2789 = vsub.s32 %v1049, %v2788
  %v2790 = vrot.slane %v2365, %v2789
  %v2791 = vsel %vm1054, %v2790, %v2786
  %v2792 = vlaneseq
  %v2793 = vshrl.u32 %v2792, 7
  %v2794 = vsub.s32 %v1030, %v2793
  %v2795 = vrot.slane %v2368, %v2794
  %v2796 = vlaneseq
  %v2797 = vshrl.u32 %v2796, 7
  %v2798 = vsub.s32 %v1035, %v2797
  %v2799 = vrot.slane %v2371, %v2798
  %v2800 = vsel %vm1040, %v2799, %v2795
  %v2801 = vlaneseq
  %v2802 = vshrl.u32 %v2801, 7
  %v2803 = vsub.s32 %v1042, %v2802
  %v2804 = vrot.slane %v2374, %v2803
  %v2805 = vsel %vm1047, %v2804, %v2800
  %v2806 = vlaneseq
  %v2807 = vshrl.u32 %v2806, 7
  %v2808 = vsub.s32 %v1049, %v2807
  %v2809 = vrot.slane %v2377, %v2808
  %v2810 = vsel %vm1054, %v2809, %v2805
  %v2811 = vlaneseq
  %v2812 = vshrl.u32 %v2811, 7
  %v2813 = vsub.s32 %v1030, %v2812
  %v2814 = vrot.slane %v2380, %v2813
  %v2815 = vlaneseq
  %v2816 = vshrl.u32 %v2815, 7
  %v2817 = vsub.s32 %v1035, %v2816
  %v2818 = vrot.slane %v2383, %v2817
  %v2819 = vsel %vm1040, %v2818, %v2814
  %v2820 = vlaneseq
  %v2821 = vshrl.u32 %v2820, 7
  %v2822 = vsub.s32 %v1042, %v2821
  %v2823 = vrot.slane %v2386, %v2822
  %v2824 = vsel %vm1047, %v2823, %v2819
  %v2825 = vlaneseq
  %v2826 = vshrl.u32 %v2825, 7
  %v2827 = vsub.s32 %v1049, %v2826
  %v2828 = vrot.slane %v2389, %v2827
  %v2829 = vsel %vm1054, %v2828, %v2824
  %v2830 = vlaneseq
  %v2831 = vshrl.u32 %v2830, 7
  %v2832 = vsub.s32 %v1030, %v2831
  %v2833 = vrot.slane %v2392, %v2832
  %v2834 = vlaneseq
  %v2835 = vshrl.u32 %v2834, 7
  %v2836 = vsub.s32 %v1035, %v2835
  %v2837 = vrot.slane %v2395, %v2836
  %v2838 = vsel %vm1040, %v2837, %v2833
  %v2839 = vlaneseq
  %v2840 = vshrl.u32 %v2839, 7
  %v2841 = vsub.s32 %v1042, %v2840
  %v2842 = vrot.slane %v2398, %v2841
  %v2843 = vsel %vm1047, %v2842, %v2838
  %v2844 = vlaneseq
  %v2845 = vshrl.u32 %v2844, 7
  %v2846 = vsub.s32 %v1049, %v2845
  %v2847 = vrot.slane %v2401, %v2846
  %v2848 = vsel %vm1054, %v2847, %v2843
  %v2849 = vlaneseq
  %v2850 = vshrl.u32 %v2849, 7
  %v2851 = vsub.s32 %v1030, %v2850
  %v2852 = vrot.slane %v2404, %v2851
  %v2853 = vlaneseq
  %v2854 = vshrl.u32 %v2853, 7
  %v2855 = vsub.s32 %v1035, %v2854
  %v2856 = vrot.slane %v2407, %v2855
  %v2857 = vsel %vm1040, %v2856, %v2852
  %v2858 = vlaneseq
  %v2859 = vshrl.u32 %v2858, 7
  %v2860 = vsub.s32 %v1042, %v2859
  %v2861 = vrot.slane %v2410, %v2860
  %v2862 = vsel %vm1047, %v2861, %v2857
  %v2863 = vlaneseq
  %v2864 = vshrl.u32 %v2863, 7
  %v2865 = vsub.s32 %v1049, %v2864
  %v2866 = vrot.slane %v2413, %v2865
  %v2867 = vsel %vm1054, %v2866, %v2862
  %v2868 = vlaneseq
  %v2869 = vshrl.u32 %v2868, 7
  %v2870 = vsub.s32 %v1030, %v2869
  %v2871 = vrot.slane %v2416, %v2870
  %v2872 = vlaneseq
  %v2873 = vshrl.u32 %v2872, 7
  %v2874 = vsub.s32 %v1035, %v2873
  %v2875 = vrot.slane %v2419, %v2874
  %v2876 = vsel %vm1040, %v2875, %v2871
  %v2877 = vlaneseq
  %v2878 = vshrl.u32 %v2877, 7
  %v2879 = vsub.s32 %v1042, %v2878
  %v2880 = vrot.slane %v2422, %v2879
  %v2881 = vsel %vm1047, %v2880, %v2876
  %v2882 = vlaneseq
  %v2883 = vshrl.u32 %v2882, 7
  %v2884 = vsub.s32 %v1049, %v2883
  %v2885 = vrot.slane %v2425, %v2884
  %v2886 = vsel %vm1054, %v2885, %v2881
  %v2887 = vlaneseq
  %v2888 = vshrl.u32 %v2887, 7
  %v2889 = vsub.s32 %v1030, %v2888
  %v2890 = vrot.slane %v2428, %v2889
  %v2891 = vlaneseq
  %v2892 = vshrl.u32 %v2891, 7
  %v2893 = vsub.s32 %v1035, %v2892
  %v2894 = vrot.slane %v2431, %v2893
  %v2895 = vsel %vm1040, %v2894, %v2890
  %v2896 = vlaneseq
  %v2897 = vshrl.u32 %v2896, 7
  %v2898 = vsub.s32 %v1042, %v2897
  %v2899 = vrot.slane %v2434, %v2898
  %v2900 = vsel %vm1047, %v2899, %v2895
  %v2901 = vlaneseq
  %v2902 = vshrl.u32 %v2901, 7
  %v2903 = vsub.s32 %v1049, %v2902
  %v2904 = vrot.slane %v2437, %v2903
  %v2905 = vsel %vm1054, %v2904, %v2900
  %v2906 = vlaneseq
  %v2907 = vshrl.u32 %v2906, 7
  %v2908 = vsub.s32 %v1030, %v2907
  %v2909 = vrot.slane %v2440, %v2908
  %v2910 = vlaneseq
  %v2911 = vshrl.u32 %v2910, 7
  %v2912 = vsub.s32 %v1035, %v2911
  %v2913 = vrot.slane %v2443, %v2912
  %v2914 = vsel %vm1040, %v2913, %v2909
  %v2915 = vlaneseq
  %v2916 = vshrl.u32 %v2915, 7
  %v2917 = vsub.s32 %v1042, %v2916
  %v2918 = vrot.slane %v2446, %v2917
  %v2919 = vsel %vm1047, %v2918, %v2914
  %v2920 = vlaneseq
  %v2921 = vshrl.u32 %v2920, 7
  %v2922 = vsub.s32 %v1049, %v2921
  %v2923 = vrot.slane %v2449, %v2922
  %v2924 = vsel %vm1054, %v2923, %v2919
  %v2925 = vlaneseq
  %v2926 = vshrl.u32 %v2925, 7
  %v2927 = vsub.s32 %v1030, %v2926
  %v2928 = vrot.slane %v2452, %v2927
  %v2929 = vlaneseq
  %v2930 = vshrl.u32 %v2929, 7
  %v2931 = vsub.s32 %v1035, %v2930
  %v2932 = vrot.slane %v2455, %v2931
  %v2933 = vsel %vm1040, %v2932, %v2928
  %v2934 = vlaneseq
  %v2935 = vshrl.u32 %v2934, 7
  %v2936 = vsub.s32 %v1042, %v2935
  %v2937 = vrot.slane %v2458, %v2936
  %v2938 = vsel %vm1047, %v2937, %v2933
  %v2939 = vlaneseq
  %v2940 = vshrl.u32 %v2939, 7
  %v2941 = vsub.s32 %v1049, %v2940
  %v2942 = vrot.slane %v2461, %v2941
  %v2943 = vsel %vm1054, %v2942, %v2938
  %v2944 = vlaneseq
  %v2945 = vshrl.u32 %v2944, 7
  %v2946 = vsub.s32 %v1030, %v2945
  %v2947 = vrot.slane %v2464, %v2946
  %v2948 = vlaneseq
  %v2949 = vshrl.u32 %v2948, 7
  %v2950 = vsub.s32 %v1035, %v2949
  %v2951 = vrot.slane %v2467, %v2950
  %v2952 = vsel %vm1040, %v2951, %v2947
  %v2953 = vlaneseq
  %v2954 = vshrl.u32 %v2953, 7
  %v2955 = vsub.s32 %v1042, %v2954
  %v2956 = vrot.slane %v2470, %v2955
  %v2957 = vsel %vm1047, %v2956, %v2952
  %v2958 = vlaneseq
  %v2959 = vshrl.u32 %v2958, 7
  %v2960 = vsub.s32 %v1049, %v2959
  %v2961 = vrot.slane %v2473, %v2960
  %v2962 = vsel %vm1054, %v2961, %v2957
  %v2963 = vlaneseq
  %v2964 = vshrl.u32 %v2963, 7
  %v2965 = vsub.s32 %v1030, %v2964
  %v2966 = vrot.slane %v2476, %v2965
  %v2967 = vlaneseq
  %v2968 = vshrl.u32 %v2967, 7
  %v2969 = vsub.s32 %v1035, %v2968
  %v2970 = vrot.slane %v2479, %v2969
  %v2971 = vsel %vm1040, %v2970, %v2966
  %v2972 = vlaneseq
  %v2973 = vshrl.u32 %v2972, 7
  %v2974 = vsub.s32 %v1042, %v2973
  %v2975 = vrot.slane %v2482, %v2974
  %v2976 = vsel %vm1047, %v2975, %v2971
  %v2977 = vlaneseq
  %v2978 = vshrl.u32 %v2977, 7
  %v2979 = vsub.s32 %v1049, %v2978
  %v2980 = vrot.slane %v2485, %v2979
  %v2981 = vsel %vm1054, %v2980, %v2976
  %v2982 = vlaneseq
  %v2983 = vshrl.u32 %v2982, 7
  %v2984 = vsub.s32 %v1030, %v2983
  %v2985 = vrot.slane %v2488, %v2984
  %v2986 = vlaneseq
  %v2987 = vshrl.u32 %v2986, 7
  %v2988 = vsub.s32 %v1035, %v2987
  %v2989 = vrot.slane %v2491, %v2988
  %v2990 = vsel %vm1040, %v2989, %v2985
  %v2991 = vlaneseq
  %v2992 = vshrl.u32 %v2991, 7
  %v2993 = vsub.s32 %v1042, %v2992
  %v2994 = vrot.slane %v2494, %v2993
  %v2995 = vsel %vm1047, %v2994, %v2990
  %v2996 = vlaneseq
  %v2997 = vshrl.u32 %v2996, 7
  %v2998 = vsub.s32 %v1049, %v2997
  %v2999 = vrot.slane %v2497, %v2998
  %v3000 = vsel %vm1054, %v2999, %v2995
  %v3001 = vlaneseq
  %v3002 = vshrl.u32 %v3001, 7
  %v3003 = vsub.s32 %v1030, %v3002
  %v3004 = vrot.slane %v2500, %v3003
  %v3005 = vlaneseq
  %v3006 = vshrl.u32 %v3005, 7
  %v3007 = vsub.s32 %v1035, %v3006
  %v3008 = vrot.slane %v2503, %v3007
  %v3009 = vsel %vm1040, %v3008, %v3004
  %v3010 = vlaneseq
  %v3011 = vshrl.u32 %v3010, 7
  %v3012 = vsub.s32 %v1042, %v3011
  %v3013 = vrot.slane %v2506, %v3012
  %v3014 = vsel %vm1047, %v3013, %v3009
  %v3015 = vlaneseq
  %v3016 = vshrl.u32 %v3015, 7
  %v3017 = vsub.s32 %v1049, %v3016
  %v3018 = vrot.slane %v2509, %v3017
  %v3019 = vsel %vm1054, %v3018, %v3014
  %v3020 = vlaneseq
  %v3021 = vshrl.u32 %v3020, 7
  %v3022 = vsub.s32 %v1030, %v3021
  %v3023 = vrot.slane %v2512, %v3022
  %v3024 = vlaneseq
  %v3025 = vshrl.u32 %v3024, 7
  %v3026 = vsub.s32 %v1035, %v3025
  %v3027 = vrot.slane %v2515, %v3026
  %v3028 = vsel %vm1040, %v3027, %v3023
  %v3029 = vlaneseq
  %v3030 = vshrl.u32 %v3029, 7
  %v3031 = vsub.s32 %v1042, %v3030
  %v3032 = vrot.slane %v2518, %v3031
  %v3033 = vsel %vm1047, %v3032, %v3028
  %v3034 = vlaneseq
  %v3035 = vshrl.u32 %v3034, 7
  %v3036 = vsub.s32 %v1049, %v3035
  %v3037 = vrot.slane %v2521, %v3036
  %v3038 = vsel %vm1054, %v3037, %v3033
  %v3039 = vlaneseq
  %v3040 = vshrl.u32 %v3039, 7
  %v3041 = vsub.s32 %v1030, %v3040
  %v3042 = vrot.slane %v2524, %v3041
  %v3043 = vlaneseq
  %v3044 = vshrl.u32 %v3043, 7
  %v3045 = vsub.s32 %v1035, %v3044
  %v3046 = vrot.slane %v2527, %v3045
  %v3047 = vsel %vm1040, %v3046, %v3042
  %v3048 = vlaneseq
  %v3049 = vshrl.u32 %v3048, 7
  %v3050 = vsub.s32 %v1042, %v3049
  %v3051 = vrot.slane %v2530, %v3050
  %v3052 = vsel %vm1047, %v3051, %v3047
  %v3053 = vlaneseq
  %v3054 = vshrl.u32 %v3053, 7
  %v3055 = vsub.s32 %v1049, %v3054
  %v3056 = vrot.slane %v2533, %v3055
  %v3057 = vsel %vm1054, %v3056, %v3052
  %v3058 = vlaneseq
  %v3059 = vshrl.u32 %v3058, 7
  %v3060 = vsub.s32 %v1030, %v3059
  %v3061 = vrot.slane %v2536, %v3060
  %v3062 = vlaneseq
  %v3063 = vshrl.u32 %v3062, 7
  %v3064 = vsub.s32 %v1035, %v3063
  %v3065 = vrot.slane %v2539, %v3064
  %v3066 = vsel %vm1040, %v3065, %v3061
  %v3067 = vlaneseq
  %v3068 = vshrl.u32 %v3067, 7
  %v3069 = vsub.s32 %v1042, %v3068
  %v3070 = vrot.slane %v2542, %v3069
  %v3071 = vsel %vm1047, %v3070, %v3066
  %v3072 = vlaneseq
  %v3073 = vshrl.u32 %v3072, 7
  %v3074 = vsub.s32 %v1049, %v3073
  %v3075 = vrot.slane %v2545, %v3074
  %v3076 = vsel %vm1054, %v3075, %v3071
  %v3077 = vlaneseq
  %v3078 = vshrl.u32 %v3077, 7
  %v3079 = vsub.s32 %v1030, %v3078
  %v3080 = vrot.slane %v2548, %v3079
  %v3081 = vlaneseq
  %v3082 = vshrl.u32 %v3081, 7
  %v3083 = vsub.s32 %v1035, %v3082
  %v3084 = vrot.slane %v2551, %v3083
  %v3085 = vsel %vm1040, %v3084, %v3080
  %v3086 = vlaneseq
  %v3087 = vshrl.u32 %v3086, 7
  %v3088 = vsub.s32 %v1042, %v3087
  %v3089 = vrot.slane %v2554, %v3088
  %v3090 = vsel %vm1047, %v3089, %v3085
  %v3091 = vlaneseq
  %v3092 = vshrl.u32 %v3091, 7
  %v3093 = vsub.s32 %v1049, %v3092
  %v3094 = vrot.slane %v2557, %v3093
  %v3095 = vsel %vm1054, %v3094, %v3090
  %v3096 = vlaneseq
  %v3097 = vshrl.u32 %v3096, 7
  %v3098 = vsub.s32 %v1030, %v3097
  %v3099 = vrot.slane %v2560, %v3098
  %v3100 = vlaneseq
  %v3101 = vshrl.u32 %v3100, 7
  %v3102 = vsub.s32 %v1035, %v3101
  %v3103 = vrot.slane %v2563, %v3102
  %v3104 = vsel %vm1040, %v3103, %v3099
  %v3105 = vlaneseq
  %v3106 = vshrl.u32 %v3105, 7
  %v3107 = vsub.s32 %v1042, %v3106
  %v3108 = vrot.slane %v2566, %v3107
  %v3109 = vsel %vm1047, %v3108, %v3104
  %v3110 = vlaneseq
  %v3111 = vshrl.u32 %v3110, 7
  %v3112 = vsub.s32 %v1049, %v3111
  %v3113 = vrot.slane %v2569, %v3112
  %v3114 = vsel %vm1054, %v3113, %v3109
  %v3115 = vlaneseq
  %v3116 = vshrl.u32 %v3115, 7
  %v3117 = vsub.s32 %v1030, %v3116
  %v3118 = vrot.slane %v2572, %v3117
  %v3119 = vlaneseq
  %v3120 = vshrl.u32 %v3119, 7
  %v3121 = vsub.s32 %v1035, %v3120
  %v3122 = vrot.slane %v2575, %v3121
  %v3123 = vsel %vm1040, %v3122, %v3118
  %v3124 = vlaneseq
  %v3125 = vshrl.u32 %v3124, 7
  %v3126 = vsub.s32 %v1042, %v3125
  %v3127 = vrot.slane %v2578, %v3126
  %v3128 = vsel %vm1047, %v3127, %v3123
  %v3129 = vlaneseq
  %v3130 = vshrl.u32 %v3129, 7
  %v3131 = vsub.s32 %v1049, %v3130
  %v3132 = vrot.slane %v2581, %v3131
  %v3133 = vsel %vm1054, %v3132, %v3128
  %v3134 = vsel %vm1493, %v2715, %v2696
  %v3135 = vsel %vm1495, %v2734, %v3134
  %v3136 = vsel %vm1497, %v2753, %v3135
  %v3137 = vsel %vm1499, %v2772, %v3136
  %v3138 = vsel %vm1501, %v2791, %v3137
  %v3139 = vsel %vm1503, %v2810, %v3138
  %v3140 = vsel %vm1505, %v2829, %v3139
  %v3141 = vsel %vm1493, %v2867, %v2848
  %v3142 = vsel %vm1495, %v2886, %v3141
  %v3143 = vsel %vm1497, %v2905, %v3142
  %v3144 = vsel %vm1499, %v2924, %v3143
  %v3145 = vsel %vm1501, %v2943, %v3144
  %v3146 = vsel %vm1503, %v2962, %v3145
  %v3147 = vsel %vm1505, %v2981, %v3146
  %v3148 = vsel %vm1493, %v3019, %v3000
  %v3149 = vsel %vm1495, %v3038, %v3148
  %v3150 = vsel %vm1497, %v3057, %v3149
  %v3151 = vsel %vm1499, %v3076, %v3150
  %v3152 = vsel %vm1501, %v3095, %v3151
  %v3153 = vsel %vm1503, %v3114, %v3152
  %v3154 = vsel %vm1505, %v3133, %v3153
  %3158 = vmatprep.subr.mxu0 0.0
  %3159 = vmatpush1.msra.mxu0 %v3140
  %3160 = vmatprep.subr.mxu0 0.0
  %3161 = vmatpush1.msra.mxu0 %v3147
  %3162 = vmatprep.subr.mxu0 0.0
  %3163 = vmatpush1.msra.mxu0 %v3154
  %3164 = vmatprep.subr.mxu0 0.0
  %3165 = vmatpush1.msra.mxu0 0.0
  %3166 = vmatprep.subr.mxu0 0.0
  %3167 = vmatpush1.msra.mxu0 0.0
  %3168 = vmatprep.subr.mxu0 0.0
  %3169 = vmatpush1.msra.mxu0 0.0
  %3170 = vmatprep.subr.mxu0 0.0
  %3171 = vmatpush1.msra.mxu0 0.0
  %3172 = vmatprep.subr.mxu0 0.0
  %3173 = vmatpush1.msra.mxu0 0.0
  %3174 = vmatprep.subr.mxu0 0.0
  %3175 = vmatpush1.msra.mxu0 0.0
  %3176 = vmatprep.subr.mxu0 0.0
  %3177 = vmatpush1.msra.mxu0 0.0
  %3178 = vmatprep.subr.mxu0 0.0
  %3179 = vmatpush1.msra.mxu0 0.0
  %3180 = vmatprep.subr.mxu0 0.0
  %3181 = vmatpush1.msra.mxu0 0.0
  %3182 = vmatprep.subr.mxu0 0.0
  %3183 = vmatpush1.msra.mxu0 0.0
  %3184 = vmatprep.subr.mxu0 0.0
  %3185 = vmatpush1.msra.mxu0 0.0
  %3186 = vmatprep.subr.mxu0 0.0
  %3187 = vmatpush1.msra.mxu0 0.0
  %3188 = vmatprep.subr.mxu0 0.0
  %3189 = vmatpush1.msra.mxu0 0.0
  %3190 = vmatprep.subr.mxu0 0.0
  %3191 = vmatpush1.msra.mxu0 0.0
  %3192 = vmatprep.subr.mxu0 0.0
  %3193 = vmatpush1.msra.mxu0 0.0
  %3194 = vmatprep.subr.mxu0 0.0
  %3195 = vmatpush1.msra.mxu0 0.0
  %3196 = vmatprep.subr.mxu0 0.0
  %3197 = vmatpush1.msra.mxu0 0.0
  %3198 = vmatprep.subr.mxu0 0.0
  %3199 = vmatpush1.msra.mxu0 0.0
  %3200 = vmatprep.subr.mxu0 0.0
  %3201 = vmatpush1.msra.mxu0 0.0
  %3202 = vmatprep.subr.mxu0 0.0
  %3203 = vmatpush1.msra.mxu0 0.0
  %3204 = vmatprep.subr.mxu0 0.0
  %3205 = vmatpush1.msra.mxu0 0.0
  %3206 = vmatprep.subr.mxu0 0.0
  %3207 = vmatpush1.msra.mxu0 0.0
  %3208 = vmatprep.subr.mxu0 0.0
  %3209 = vmatpush1.msra.mxu0 0.0
  %3210 = vmatprep.subr.mxu0 0.0
  %3211 = vmatpush1.msra.mxu0 0.0
  %3212 = vmatprep.subr.mxu0 0.0
  %3213 = vmatpush1.msra.mxu0 0.0
  %3214 = vmatprep.subr.mxu0 0.0
  %3215 = vmatpush1.msra.mxu0 0.0
  %3216 = vmatprep.subr.mxu0 0.0
  %3217 = vmatpush1.msra.mxu0 0.0
  %3218 = vmatprep.subr.mxu0 0.0
  %3219 = vmatpush1.msra.mxu0 0.0
  %3220 = vmatprep.subr.mxu0 0.0
  %3221 = vmatpush1.msra.mxu0 0.0
  %3222 = vmatprep.mubr.f32.mxu0 0.0
  %3223 = vmatmul.mubr.f32.gmra.mrb[0].mxu0 %v1526
  %v3224 = vpop.f32.mrb[0].mxu0
  %v3225 = vadd.f32 %v931, %v3224
  %v3226 = vpop.f32.mrb[0].mxu0
  %3227 = vmatprep.mubr.f32.mxu0 0.0
  %3228 = vmatmul.mubr.f32.gmra.mrb[0].mxu0 %v1529
  %v3229 = vpop.f32.mrb[0].mxu0
  %v3230 = vadd.f32 %v931, %v3229
  %v3231 = vpop.f32.mrb[0].mxu0
  %3232 = vdwg.mxu0
  %v3233 = vmax.f32 %v3225, 0.0
  %v3234 = vmax.f32 %v3230, 0.0
  %v3236 = vsel %vm638, %v3233, 0
  %v3239 = vsel %vm638, %v3234, 0
  %3241 = vmatprep.subr.mxu0 0.0
  %3242 = vmatpush1.msra.mxu0 %v166
  %3243 = vmatprep.subr.mxu0 0.0
  %3244 = vmatpush1.msra.mxu0 %v167
  %3245 = vmatprep.subr.mxu0 0.0
  %3246 = vmatpush1.msra.mxu0 %v168
  %3247 = vmatprep.subr.mxu0 0.0
  %3248 = vmatpush1.msra.mxu0 %v169
  %3249 = vmatprep.subr.mxu0 0.0
  %3250 = vmatpush1.msra.mxu0 0.0
  %3251 = vmatprep.subr.mxu0 0.0
  %3252 = vmatpush1.msra.mxu0 0.0
  %3253 = vmatprep.subr.mxu0 0.0
  %3254 = vmatpush1.msra.mxu0 0.0
  %3255 = vmatprep.subr.mxu0 0.0
  %3256 = vmatpush1.msra.mxu0 0.0
  %3257 = vmatprep.subr.mxu0 0.0
  %3258 = vmatpush1.msra.mxu0 0.0
  %3259 = vmatprep.subr.mxu0 0.0
  %3260 = vmatpush1.msra.mxu0 0.0
  %3261 = vmatprep.subr.mxu0 0.0
  %3262 = vmatpush1.msra.mxu0 0.0
  %3263 = vmatprep.subr.mxu0 0.0
  %3264 = vmatpush1.msra.mxu0 0.0
  %3265 = vmatprep.subr.mxu0 0.0
  %3266 = vmatpush1.msra.mxu0 0.0
  %3267 = vmatprep.subr.mxu0 0.0
  %3268 = vmatpush1.msra.mxu0 0.0
  %3269 = vmatprep.subr.mxu0 0.0
  %3270 = vmatpush1.msra.mxu0 0.0
  %3271 = vmatprep.subr.mxu0 0.0
  %3272 = vmatpush1.msra.mxu0 0.0
  %3273 = vmatprep.subr.mxu0 0.0
  %3274 = vmatpush1.msra.mxu0 0.0
  %3275 = vmatprep.subr.mxu0 0.0
  %3276 = vmatpush1.msra.mxu0 0.0
  %3277 = vmatprep.subr.mxu0 0.0
  %3278 = vmatpush1.msra.mxu0 0.0
  %3279 = vmatprep.subr.mxu0 0.0
  %3280 = vmatpush1.msra.mxu0 0.0
  %3281 = vmatprep.subr.mxu0 0.0
  %3282 = vmatpush1.msra.mxu0 0.0
  %3283 = vmatprep.subr.mxu0 0.0
  %3284 = vmatpush1.msra.mxu0 0.0
  %3285 = vmatprep.subr.mxu0 0.0
  %3286 = vmatpush1.msra.mxu0 0.0
  %3287 = vmatprep.subr.mxu0 0.0
  %3288 = vmatpush1.msra.mxu0 0.0
  %3289 = vmatprep.subr.mxu0 0.0
  %3290 = vmatpush1.msra.mxu0 0.0
  %3291 = vmatprep.subr.mxu0 0.0
  %3292 = vmatpush1.msra.mxu0 0.0
  %3293 = vmatprep.subr.mxu0 0.0
  %3294 = vmatpush1.msra.mxu0 0.0
  %3295 = vmatprep.subr.mxu0 0.0
  %3296 = vmatpush1.msra.mxu0 0.0
  %3297 = vmatprep.subr.mxu0 0.0
  %3298 = vmatpush1.msra.mxu0 0.0
  %3299 = vmatprep.subr.mxu0 0.0
  %3300 = vmatpush1.msra.mxu0 0.0
  %3301 = vmatprep.subr.mxu0 0.0
  %3302 = vmatpush1.msra.mxu0 0.0
  %3303 = vmatprep.subr.mxu0 0.0
  %3304 = vmatpush1.msra.mxu0 0.0
  %3305 = vmatprep.mubr.f32.mxu0 0.0
  %3306 = vmatmul.mubr.f32.gmra.mrb[0].mxu0 %v3236
  %v3307 = vpop.f32.mrb[0].mxu0
  %v3308 = vadd.f32 %v1612, %v3307
  %v3309 = vpop.f32.mrb[0].mxu0
  %3310 = vmatprep.mubr.f32.mxu0 0.0
  %3311 = vmatmul.mubr.f32.gmra.mrb[0].mxu0 %v3239
  %v3312 = vpop.f32.mrb[0].mxu0
  %v3313 = vadd.f32 %v1612, %v3312
  %v3314 = vpop.f32.mrb[0].mxu0
  %3315 = vdwg.mxu0
  %v3316 = vsel %vm638, %v1842, 0
  %v3318 = vsel %vm638, %v1844, 0
  %3320 = vmatprep.subr.mxu0 0.0
  %3321 = vmatpush1.msra.mxu0 %v170
  %3322 = vmatprep.subr.mxu0 0.0
  %3323 = vmatpush1.msra.mxu0 %v171
  %3324 = vmatprep.subr.mxu0 0.0
  %3325 = vmatpush1.msra.mxu0 %v172
  %3326 = vmatprep.subr.mxu0 0.0
  %3327 = vmatpush1.msra.mxu0 %v173
  %3328 = vmatprep.subr.mxu0 0.0
  %3329 = vmatpush1.msra.mxu0 0.0
  %3330 = vmatprep.subr.mxu0 0.0
  %3331 = vmatpush1.msra.mxu0 0.0
  %3332 = vmatprep.subr.mxu0 0.0
  %3333 = vmatpush1.msra.mxu0 0.0
  %3334 = vmatprep.subr.mxu0 0.0
  %3335 = vmatpush1.msra.mxu0 0.0
  %3336 = vmatprep.subr.mxu0 0.0
  %3337 = vmatpush1.msra.mxu0 0.0
  %3338 = vmatprep.subr.mxu0 0.0
  %3339 = vmatpush1.msra.mxu0 0.0
  %3340 = vmatprep.subr.mxu0 0.0
  %3341 = vmatpush1.msra.mxu0 0.0
  %3342 = vmatprep.subr.mxu0 0.0
  %3343 = vmatpush1.msra.mxu0 0.0
  %3344 = vmatprep.subr.mxu0 0.0
  %3345 = vmatpush1.msra.mxu0 0.0
  %3346 = vmatprep.subr.mxu0 0.0
  %3347 = vmatpush1.msra.mxu0 0.0
  %3348 = vmatprep.subr.mxu0 0.0
  %3349 = vmatpush1.msra.mxu0 0.0
  %3350 = vmatprep.subr.mxu0 0.0
  %3351 = vmatpush1.msra.mxu0 0.0
  %3352 = vmatprep.subr.mxu0 0.0
  %3353 = vmatpush1.msra.mxu0 0.0
  %3354 = vmatprep.subr.mxu0 0.0
  %3355 = vmatpush1.msra.mxu0 0.0
  %3356 = vmatprep.subr.mxu0 0.0
  %3357 = vmatpush1.msra.mxu0 0.0
  %3358 = vmatprep.subr.mxu0 0.0
  %3359 = vmatpush1.msra.mxu0 0.0
  %3360 = vmatprep.subr.mxu0 0.0
  %3361 = vmatpush1.msra.mxu0 0.0
  %3362 = vmatprep.subr.mxu0 0.0
  %3363 = vmatpush1.msra.mxu0 0.0
  %3364 = vmatprep.subr.mxu0 0.0
  %3365 = vmatpush1.msra.mxu0 0.0
  %3366 = vmatprep.subr.mxu0 0.0
  %3367 = vmatpush1.msra.mxu0 0.0
  %3368 = vmatprep.subr.mxu0 0.0
  %3369 = vmatpush1.msra.mxu0 0.0
  %3370 = vmatprep.subr.mxu0 0.0
  %3371 = vmatpush1.msra.mxu0 0.0
  %3372 = vmatprep.subr.mxu0 0.0
  %3373 = vmatpush1.msra.mxu0 0.0
  %3374 = vmatprep.subr.mxu0 0.0
  %3375 = vmatpush1.msra.mxu0 0.0
  %3376 = vmatprep.subr.mxu0 0.0
  %3377 = vmatpush1.msra.mxu0 0.0
  %3378 = vmatprep.subr.mxu0 0.0
  %3379 = vmatpush1.msra.mxu0 0.0
  %3380 = vmatprep.subr.mxu0 0.0
  %3381 = vmatpush1.msra.mxu0 0.0
  %3382 = vmatprep.subr.mxu0 0.0
  %3383 = vmatpush1.msra.mxu0 0.0
  %3384 = vmatprep.mubr.f32.mxu0 0.0
  %3385 = vmatmul.mubr.f32.gmra.mrb[0].mxu0 %v3316
  %v3386 = vpop.f32.mrb[0].mxu0
  %v3387 = vadd.f32 %v1699, %v3386
  %v3388 = vpop.f32.mrb[0].mxu0
  %3389 = vmatprep.mubr.f32.mxu0 0.0
  %3390 = vmatmul.mubr.f32.gmra.mrb[0].mxu0 %v3318
  %v3391 = vpop.f32.mrb[0].mxu0
  %v3392 = vadd.f32 %v1699, %v3391
  %v3393 = vpop.f32.mrb[0].mxu0
  %3394 = vdwg.mxu0
  %v3395 = vadd.f32 %v3308, %v3387
  %v3396 = vadd.f32 %v3313, %v3392
  %v3397 = vxor.u32 %v3395, 2147483648
  %v3398 = vxor.u32 %v3396, 2147483648
  %v3399 = vmul.f32 %v3397, 1.442695
  %v3400 = vpow.pop %v3399
  %v3401 = vmul.f32 %v3398, 1.442695
  %v3402 = vpow.pop %v3401
  %v3403 = vadd.f32 %v3400, 1.0
  %v3404 = vadd.f32 %v3402, 1.0
  %v3405 = vrcp.pop %v3403
  %v3406 = vmul.f32 1.0, %v3405
  %v3407 = vrcp.pop %v3404
  %v3408 = vmul.f32 1.0, %v3407
  %3411 = vrot.lane.b32.xlu0 %v3387, 64
  %v3412 = vpop.permute.xlu0 %3411
  %3413 = vrot.lane.b32.xlu0 %v3392, 64
  %v3414 = vpop.permute.xlu0 %3413
  %v3417 = vmul.f32 %v3406, %v3412
  %v3418 = vmul.f32 %v3408, %v3414
  %3421 = vrot.lane.b32.xlu0 %v3417, 64
  %v3422 = vpop.permute.xlu0 %3421
  %3423 = vrot.lane.b32.xlu0 %v3418, 64
  %v3424 = vpop.permute.xlu0 %3423
  %v3427 = vadd.f32 %v3308, %v3422
  %v3428 = vadd.f32 %v3313, %v3424
  %v3429 = vtanh.pop %v3427
  %v3430 = vtanh.pop %v3428
  %v3431 = vsub.f32 1.0, %v3406
  %v3432 = vsub.f32 1.0, %v3408
  %3435 = vrot.lane.b32.xlu0 %v3429, 96
  %v3436 = vpop.permute.xlu0 %3435
  %3437 = vrot.lane.b32.xlu0 %v3430, 96
  %v3438 = vpop.permute.xlu0 %3437
  %v3441 = vmul.f32 %v3431, %v3436
  %v3442 = vmul.f32 %v3432, %v3438
  %v3443 = vmul.f32 %v3406, %v1837
  %v3444 = vmul.f32 %v3408, %v1838
  %v3445 = vadd.f32 %v3441, %v3443
  %v3446 = vadd.f32 %v3442, %v3444
  %3449 = vrot.lane.b32.xlu0 %v3445, 96
  %v3450 = vpop.permute.xlu0 %3449
  %3451 = vrot.lane.b32.xlu0 %v3446, 96
  %v3452 = vpop.permute.xlu0 %3451
  %v3454 = vsel %vm188, %v3452, 0
  %3456 = vmatprep.subr.mxu0 0.0
  %3457 = vmatpush1.msra.mxu0 %v3450
  %3458 = vmatprep.subr.mxu0 0.0
  %3459 = vmatpush1.msra.mxu0 %v3454
  %3460 = vmatprep.subr.mxu0 0.0
  %3461 = vmatpush1.msra.mxu0 0.0
  %3462 = vmatprep.subr.mxu0 0.0
  %3463 = vmatpush1.msra.mxu0 0.0
  %3464 = vmatprep.subr.mxu0 0.0
  %3465 = vmatpush1.msra.mxu0 0.0
  %3466 = vmatprep.subr.mxu0 0.0
  %3467 = vmatpush1.msra.mxu0 0.0
  %3468 = vmatprep.subr.mxu0 0.0
  %3469 = vmatpush1.msra.mxu0 0.0
  %3470 = vmatprep.subr.mxu0 0.0
  %3471 = vmatpush1.msra.mxu0 0.0
  %3472 = vmatprep.subr.mxu0 0.0
  %3473 = vmatpush1.msra.mxu0 0.0
  %3474 = vmatprep.subr.mxu0 0.0
  %3475 = vmatpush1.msra.mxu0 0.0
  %3476 = vmatprep.subr.mxu0 0.0
  %3477 = vmatpush1.msra.mxu0 0.0
  %3478 = vmatprep.subr.mxu0 0.0
  %3479 = vmatpush1.msra.mxu0 0.0
  %3480 = vmatprep.subr.mxu0 0.0
  %3481 = vmatpush1.msra.mxu0 0.0
  %3482 = vmatprep.subr.mxu0 0.0
  %3483 = vmatpush1.msra.mxu0 0.0
  %3484 = vmatprep.subr.mxu0 0.0
  %3485 = vmatpush1.msra.mxu0 0.0
  %3486 = vmatprep.subr.mxu0 0.0
  %3487 = vmatpush1.msra.mxu0 0.0
  %3488 = vmatprep.subr.mxu0 0.0
  %3489 = vmatpush1.msra.mxu0 0.0
  %3490 = vmatprep.subr.mxu0 0.0
  %3491 = vmatpush1.msra.mxu0 0.0
  %3492 = vmatprep.subr.mxu0 0.0
  %3493 = vmatpush1.msra.mxu0 0.0
  %3494 = vmatprep.subr.mxu0 0.0
  %3495 = vmatpush1.msra.mxu0 0.0
  %3496 = vmatprep.subr.mxu0 0.0
  %3497 = vmatpush1.msra.mxu0 0.0
  %3498 = vmatprep.subr.mxu0 0.0
  %3499 = vmatpush1.msra.mxu0 0.0
  %3500 = vmatprep.subr.mxu0 0.0
  %3501 = vmatpush1.msra.mxu0 0.0
  %3502 = vmatprep.subr.mxu0 0.0
  %3503 = vmatpush1.msra.mxu0 0.0
  %3504 = vmatprep.subr.mxu0 0.0
  %3505 = vmatpush1.msra.mxu0 0.0
  %3506 = vmatprep.subr.mxu0 0.0
  %3507 = vmatpush1.msra.mxu0 0.0
  %3508 = vmatprep.subr.mxu0 0.0
  %3509 = vmatpush1.msra.mxu0 0.0
  %3510 = vmatprep.subr.mxu0 0.0
  %3511 = vmatpush1.msra.mxu0 0.0
  %3512 = vmatprep.subr.mxu0 0.0
  %3513 = vmatpush1.msra.mxu0 0.0
  %3514 = vmatprep.subr.mxu0 0.0
  %3515 = vmatpush1.msra.mxu0 0.0
  %3516 = vmatprep.subr.mxu0 0.0
  %3517 = vmatpush1.msra.mxu0 0.0
  %3518 = vmatprep.subr.mxu0 0.0
  %3519 = vmatpush1.msra.mxu0 0.0
  %3520 = vmatprep.mubr.f32.mxu0 0.0
  %3521 = vmatmul.mubr.f32.gmra.mrb[0].mxu0 %v180
  %v3522 = vpop.f32.mrb[0].mxu0
  %v3523 = vadd.f32 0.0, %v3522
  %v3524 = vpop.f32.mrb[0].mxu0
  %3525 = vmatprep.mubr.f32.mxu0 0.0
  %3526 = vmatmul.mubr.f32.gmra.mrb[0].mxu0 %v183
  %v3527 = vpop.f32.mrb[0].mxu0
  %v3528 = vadd.f32 0.0, %v3527
  %v3529 = vpop.f32.mrb[0].mxu0
  %3530 = vmatprep.mubr.f32.mxu0 0.0
  %3531 = vmatmul.mubr.f32.gmra.mrb[0].mxu0 %v186
  %v3532 = vpop.f32.mrb[0].mxu0
  %v3533 = vadd.f32 0.0, %v3532
  %v3534 = vpop.f32.mrb[0].mxu0
  %3535 = vdwg.mxu0
  %v3539 = vcombine.high %v3523, %v3523
  %v3541 = vunpack.c.l.s4 1966171168
  %v3542 = vunpack.c.0.s8 %v3541
  %v3543 = vlaneseq
  %v3544 = vshrl.u32 %v3543, 7
  %v3545 = vsub.s32 %v3542, %v3544
  %v3546 = vrot.slane %v3523, %v3545
  %v3548 = vunpack.c.l.s4 1966171168
  %v3549 = vunpack.c.0.s8 %v3548
  %v3550 = vlaneseq
  %v3551 = vshrl.u32 %v3550, 7
  %v3552 = vsub.s32 %v3549, %v3551
  %v3553 = vrot.slane %v3539, %v3552
  %v3554 = vcombine.high %v3546, %v3546
  %v3555 = vcombine.high %v3553, %v3553
  %v3557 = vunpack.c.l.s4 1966171168
  %v3558 = vunpack.c.0.s8 %v3557
  %v3559 = vlaneseq
  %v3560 = vshrl.u32 %v3559, 7
  %v3561 = vsub.s32 %v3558, %v3560
  %v3562 = vrot.slane %v3546, %v3561
  %v3564 = vunpack.c.l.s4 1966171168
  %v3565 = vunpack.c.0.s8 %v3564
  %v3566 = vlaneseq
  %v3567 = vshrl.u32 %v3566, 7
  %v3568 = vsub.s32 %v3565, %v3567
  %v3569 = vrot.slane %v3553, %v3568
  %v3571 = vunpack.c.l.s4 1966171168
  %v3572 = vunpack.c.0.s8 %v3571
  %v3573 = vlaneseq
  %v3574 = vshrl.u32 %v3573, 7
  %v3575 = vsub.s32 %v3572, %v3574
  %v3576 = vrot.slane %v3554, %v3575
  %v3578 = vunpack.c.l.s4 1966171168
  %v3579 = vunpack.c.0.s8 %v3578
  %v3580 = vlaneseq
  %v3581 = vshrl.u32 %v3580, 7
  %v3582 = vsub.s32 %v3579, %v3581
  %v3583 = vrot.slane %v3555, %v3582
  %v3584 = vcombine.high %v3562, %v3562
  %v3585 = vcombine.high %v3569, %v3569
  %v3586 = vcombine.high %v3576, %v3576
  %v3587 = vcombine.high %v3583, %v3583
  %v3588 = vcombine.high %v3528, %v3528
  %v3590 = vunpack.c.l.s4 1966171168
  %v3591 = vunpack.c.0.s8 %v3590
  %v3592 = vlaneseq
  %v3593 = vshrl.u32 %v3592, 7
  %v3594 = vsub.s32 %v3591, %v3593
  %v3595 = vrot.slane %v3528, %v3594
  %v3597 = vunpack.c.l.s4 1966171168
  %v3598 = vunpack.c.0.s8 %v3597
  %v3599 = vlaneseq
  %v3600 = vshrl.u32 %v3599, 7
  %v3601 = vsub.s32 %v3598, %v3600
  %v3602 = vrot.slane %v3588, %v3601
  %v3603 = vcombine.high %v3595, %v3595
  %v3604 = vcombine.high %v3602, %v3602
  %v3606 = vunpack.c.l.s4 1966171168
  %v3607 = vunpack.c.0.s8 %v3606
  %v3608 = vlaneseq
  %v3609 = vshrl.u32 %v3608, 7
  %v3610 = vsub.s32 %v3607, %v3609
  %v3611 = vrot.slane %v3595, %v3610
  %v3613 = vunpack.c.l.s4 1966171168
  %v3614 = vunpack.c.0.s8 %v3613
  %v3615 = vlaneseq
  %v3616 = vshrl.u32 %v3615, 7
  %v3617 = vsub.s32 %v3614, %v3616
  %v3618 = vrot.slane %v3602, %v3617
  %v3620 = vunpack.c.l.s4 1966171168
  %v3621 = vunpack.c.0.s8 %v3620
  %v3622 = vlaneseq
  %v3623 = vshrl.u32 %v3622, 7
  %v3624 = vsub.s32 %v3621, %v3623
  %v3625 = vrot.slane %v3603, %v3624
  %v3627 = vunpack.c.l.s4 1966171168
  %v3628 = vunpack.c.0.s8 %v3627
  %v3629 = vlaneseq
  %v3630 = vshrl.u32 %v3629, 7
  %v3631 = vsub.s32 %v3628, %v3630
  %v3632 = vrot.slane %v3604, %v3631
  %v3633 = vcombine.high %v3611, %v3611
  %v3634 = vcombine.high %v3618, %v3618
  %v3635 = vcombine.high %v3625, %v3625
  %v3636 = vcombine.high %v3632, %v3632
  %v3637 = vcombine.high %v3533, %v3533
  %v3639 = vunpack.c.l.s4 1966171168
  %v3640 = vunpack.c.0.s8 %v3639
  %v3641 = vlaneseq
  %v3642 = vshrl.u32 %v3641, 7
  %v3643 = vsub.s32 %v3640, %v3642
  %v3644 = vrot.slane %v3533, %v3643
  %v3646 = vunpack.c.l.s4 1966171168
  %v3647 = vunpack.c.0.s8 %v3646
  %v3648 = vlaneseq
  %v3649 = vshrl.u32 %v3648, 7
  %v3650 = vsub.s32 %v3647, %v3649
  %v3651 = vrot.slane %v3637, %v3650
  %v3652 = vcombine.high %v3644, %v3644
  %v3653 = vcombine.high %v3651, %v3651
  %v3655 = vunpack.c.l.s4 1966171168
  %v3656 = vunpack.c.0.s8 %v3655
  %v3657 = vlaneseq
  %v3658 = vshrl.u32 %v3657, 7
  %v3659 = vsub.s32 %v3656, %v3658
  %v3660 = vrot.slane %v3644, %v3659
  %v3662 = vunpack.c.l.s4 1966171168
  %v3663 = vunpack.c.0.s8 %v3662
  %v3664 = vlaneseq
  %v3665 = vshrl.u32 %v3664, 7
  %v3666 = vsub.s32 %v3663, %v3665
  %v3667 = vrot.slane %v3651, %v3666
  %v3669 = vunpack.c.l.s4 1966171168
  %v3670 = vunpack.c.0.s8 %v3669
  %v3671 = vlaneseq
  %v3672 = vshrl.u32 %v3671, 7
  %v3673 = vsub.s32 %v3670, %v3672
  %v3674 = vrot.slane %v3652, %v3673
  %v3676 = vunpack.c.l.s4 1966171168
  %v3677 = vunpack.c.0.s8 %v3676
  %v3678 = vlaneseq
  %v3679 = vshrl.u32 %v3678, 7
  %v3680 = vsub.s32 %v3677, %v3679
  %v3681 = vrot.slane %v3653, %v3680
  %v3682 = vcombine.high %v3660, %v3660
  %v3683 = vcombine.high %v3667, %v3667
  %v3684 = vcombine.high %v3674, %v3674
  %v3685 = vcombine.high %v3681, %v3681
  %v3686 = vlaneseq
  %v3687 = vshrl.u32 %v3686, 7
  %v3688 = vsub.s32 0, %v3687
  %v3689 = vrot.slane %v3562, %v3688
  %v3690 = vlaneseq
  %v3691 = vshrl.u32 %v3690, 7
  %v3692 = vsub.s32 0, %v3691
  %v3693 = vrot.slane %v3576, %v3692
  %v3694 = vlaneseq
  %v3695 = vshrl.u32 %v3694, 7
  %v3696 = vsub.s32 0, %v3695
  %v3697 = vrot.slane %v3584, %v3696
  %v3698 = vlaneseq
  %v3699 = vshrl.u32 %v3698, 7
  %v3700 = vsub.s32 0, %v3699
  %v3701 = vrot.slane %v3586, %v3700
  %v3702 = vlaneseq
  %v3703 = vshrl.u32 %v3702, 7
  %v3704 = vsub.s32 0, %v3703
  %v3705 = vrot.slane %v3569, %v3704
  %v3706 = vlaneseq
  %v3707 = vshrl.u32 %v3706, 7
  %v3708 = vsub.s32 0, %v3707
  %v3709 = vrot.slane %v3583, %v3708
  %v3710 = vlaneseq
  %v3711 = vshrl.u32 %v3710, 7
  %v3712 = vsub.s32 0, %v3711
  %v3713 = vrot.slane %v3585, %v3712
  %v3714 = vlaneseq
  %v3715 = vshrl.u32 %v3714, 7
  %v3716 = vsub.s32 0, %v3715
  %v3717 = vrot.slane %v3587, %v3716
  %v3718 = vlaneseq
  %v3719 = vshrl.u32 %v3718, 7
  %v3720 = vsub.s32 0, %v3719
  %v3721 = vrot.slane %v3611, %v3720
  %v3722 = vlaneseq
  %v3723 = vshrl.u32 %v3722, 7
  %v3724 = vsub.s32 0, %v3723
  %v3725 = vrot.slane %v3625, %v3724
  %v3726 = vlaneseq
  %v3727 = vshrl.u32 %v3726, 7
  %v3728 = vsub.s32 0, %v3727
  %v3729 = vrot.slane %v3633, %v3728
  %v3730 = vlaneseq
  %v3731 = vshrl.u32 %v3730, 7
  %v3732 = vsub.s32 0, %v3731
  %v3733 = vrot.slane %v3635, %v3732
  %v3734 = vlaneseq
  %v3735 = vshrl.u32 %v3734, 7
  %v3736 = vsub.s32 0, %v3735
  %v3737 = vrot.slane %v3618, %v3736
  %v3738 = vlaneseq
  %v3739 = vshrl.u32 %v3738, 7
  %v3740 = vsub.s32 0, %v3739
  %v3741 = vrot.slane %v3632, %v3740
  %v3742 = vlaneseq
  %v3743 = vshrl.u32 %v3742, 7
  %v3744 = vsub.s32 0, %v3743
  %v3745 = vrot.slane %v3634, %v3744
  %v3746 = vlaneseq
  %v3747 = vshrl.u32 %v3746, 7
  %v3748 = vsub.s32 0, %v3747
  %v3749 = vrot.slane %v3636, %v3748
  %v3750 = vlaneseq
  %v3751 = vshrl.u32 %v3750, 7
  %v3752 = vsub.s32 0, %v3751
  %v3753 = vrot.slane %v3660, %v3752
  %v3754 = vlaneseq
  %v3755 = vshrl.u32 %v3754, 7
  %v3756 = vsub.s32 0, %v3755
  %v3757 = vrot.slane %v3674, %v3756
  %v3758 = vlaneseq
  %v3759 = vshrl.u32 %v3758, 7
  %v3760 = vsub.s32 0, %v3759
  %v3761 = vrot.slane %v3682, %v3760
  %v3762 = vlaneseq
  %v3763 = vshrl.u32 %v3762, 7
  %v3764 = vsub.s32 0, %v3763
  %v3765 = vrot.slane %v3684, %v3764
  %v3766 = vlaneseq
  %v3767 = vshrl.u32 %v3766, 7
  %v3768 = vsub.s32 0, %v3767
  %v3769 = vrot.slane %v3667, %v3768
  %v3770 = vlaneseq
  %v3771 = vshrl.u32 %v3770, 7
  %v3772 = vsub.s32 0, %v3771
  %v3773 = vrot.slane %v3681, %v3772
  %v3774 = vlaneseq
  %v3775 = vshrl.u32 %v3774, 7
  %v3776 = vsub.s32 0, %v3775
  %v3777 = vrot.slane %v3683, %v3776
  %v3778 = vlaneseq
  %v3779 = vshrl.u32 %v3778, 7
  %v3780 = vsub.s32 0, %v3779
  %v3781 = vrot.slane %v3685, %v3780
  %v3806 = vmul.f32 %v3689, %v64
  %v3807 = vmul.f32 %v3689, %v65
  %v3808 = vmul.f32 %v3689, %v66
  %v3809 = vmul.f32 %v3689, %v67
  %v3810 = vmul.f32 %v3693, %v68
  %v3811 = vmul.f32 %v3693, %v69
  %v3812 = vmul.f32 %v3693, %v70
  %v3813 = vmul.f32 %v3693, %v71
  %v3814 = vmul.f32 %v3697, %v72
  %v3815 = vmul.f32 %v3697, %v73
  %v3816 = vmul.f32 %v3697, %v74
  %v3817 = vmul.f32 %v3697, %v75
  %v3818 = vmul.f32 %v3701, %v76
  %v3819 = vmul.f32 %v3701, %v77
  %v3820 = vmul.f32 %v3701, %v78
  %v3821 = vmul.f32 %v3701, %v79
  %v3822 = vmul.f32 %v3705, %v80
  %v3823 = vmul.f32 %v3705, %v81
  %v3824 = vmul.f32 %v3705, %v82
  %v3825 = vmul.f32 %v3705, %v83
  %v3826 = vmul.f32 %v3709, %v84
  %v3827 = vmul.f32 %v3709, %v85
  %v3828 = vmul.f32 %v3709, %v86
  %v3829 = vmul.f32 %v3709, %v87
  %v3830 = vmul.f32 %v3713, %v88
  %v3831 = vmul.f32 %v3713, %v89
  %v3832 = vmul.f32 %v3713, %v90
  %v3833 = vmul.f32 %v3713, %v91
  %v3834 = vmul.f32 %v3717, %v92
  %v3835 = vmul.f32 %v3717, %v93
  %v3836 = vmul.f32 %v3717, %v94
  %v3837 = vmul.f32 %v3717, %v95
  %v3838 = vmul.f32 %v3721, %v96
  %v3839 = vmul.f32 %v3721, %v97
  %v3840 = vmul.f32 %v3721, %v98
  %v3841 = vmul.f32 %v3721, %v99
  %v3842 = vmul.f32 %v3725, %v100
  %v3843 = vmul.f32 %v3725, %v101
  %v3844 = vmul.f32 %v3725, %v102
  %v3845 = vmul.f32 %v3725, %v103
  %v3846 = vmul.f32 %v3729, %v104
  %v3847 = vmul.f32 %v3729, %v105
  %v3848 = vmul.f32 %v3729, %v106
  %v3849 = vmul.f32 %v3729, %v107
  %v3850 = vmul.f32 %v3733, %v108
  %v3851 = vmul.f32 %v3733, %v109
  %v3852 = vmul.f32 %v3733, %v110
  %v3853 = vmul.f32 %v3733, %v111
  %v3854 = vmul.f32 %v3737, %v112
  %v3855 = vmul.f32 %v3737, %v113
  %v3856 = vmul.f32 %v3737, %v114
  %v3857 = vmul.f32 %v3737, %v115
  %v3858 = vmul.f32 %v3741, %v116
  %v3859 = vmul.f32 %v3741, %v117
  %v3860 = vmul.f32 %v3741, %v118
  %v3861 = vmul.f32 %v3741, %v119
  %v3862 = vmul.f32 %v3745, %v120
  %v3863 = vmul.f32 %v3745, %v121
  %v3864 = vmul.f32 %v3745, %v122
  %v3865 = vmul.f32 %v3745, %v123
  %v3866 = vmul.f32 %v3749, %v124
  %v3867 = vmul.f32 %v3749, %v125
  %v3868 = vmul.f32 %v3749, %v126
  %v3869 = vmul.f32 %v3749, %v127
  %v3870 = vmul.f32 %v3753, %v128
  %v3871 = vmul.f32 %v3753, %v129
  %v3872 = vmul.f32 %v3753, %v130
  %v3873 = vmul.f32 %v3753, %v131
  %v3874 = vmul.f32 %v3757, %v132
  %v3875 = vmul.f32 %v3757, %v133
  %v3876 = vmul.f32 %v3757, %v134
  %v3877 = vmul.f32 %v3757, %v135
  %v3878 = vmul.f32 %v3761, %v136
  %v3879 = vmul.f32 %v3761, %v137
  %v3880 = vmul.f32 %v3761, %v138
  %v3881 = vmul.f32 %v3761, %v139
  %v3882 = vmul.f32 %v3765, %v140
  %v3883 = vmul.f32 %v3765, %v141
  %v3884 = vmul.f32 %v3765, %v142
  %v3885 = vmul.f32 %v3765, %v143
  %v3886 = vmul.f32 %v3769, %v144
  %v3887 = vmul.f32 %v3769, %v145
  %v3888 = vmul.f32 %v3769, %v146
  %v3889 = vmul.f32 %v3769, %v147
  %v3890 = vmul.f32 %v3773, %v148
  %v3891 = vmul.f32 %v3773, %v149
  %v3892 = vmul.f32 %v3773, %v150
  %v3893 = vmul.f32 %v3773, %v151
  %v3894 = vmul.f32 %v3777, %v152
  %v3895 = vmul.f32 %v3777, %v153
  %v3896 = vmul.f32 %v3777, %v154
  %v3897 = vmul.f32 %v3777, %v155
  %v3898 = vmul.f32 %v3781, %v156
  %v3899 = vmul.f32 %v3781, %v157
  %v3900 = vmul.f32 %v3781, %v158
  %v3901 = vmul.f32 %v3781, %v159
  %v3902 = vsel %vm638, %v3806, 0.0
  %3903 = vadd.xlane.f32.xlu0 %v3902
  %v3904 = vpop.xlane.xlu0 %3903
  %v3905 = vsel %vm638, %v3807, 0.0
  %3906 = vadd.xlane.f32.xlu0 %v3905
  %v3907 = vpop.xlane.xlu0 %3906
  %v3908 = vsel %vm638, %v3808, 0.0
  %3909 = vadd.xlane.f32.xlu0 %v3908
  %v3910 = vpop.xlane.xlu0 %3909
  %v3911 = vsel %vm638, %v3809, 0.0
  %3912 = vadd.xlane.f32.xlu0 %v3911
  %v3913 = vpop.xlane.xlu0 %3912
  %v3914 = vsel %vm638, %v3810, 0.0
  %3915 = vadd.xlane.f32.xlu0 %v3914
  %v3916 = vpop.xlane.xlu0 %3915
  %v3917 = vsel %vm638, %v3811, 0.0
  %3918 = vadd.xlane.f32.xlu0 %v3917
  %v3919 = vpop.xlane.xlu0 %3918
  %v3920 = vsel %vm638, %v3812, 0.0
  %3921 = vadd.xlane.f32.xlu0 %v3920
  %v3922 = vpop.xlane.xlu0 %3921
  %v3923 = vsel %vm638, %v3813, 0.0
  %3924 = vadd.xlane.f32.xlu0 %v3923
  %v3925 = vpop.xlane.xlu0 %3924
  %v3926 = vsel %vm638, %v3814, 0.0
  %3927 = vadd.xlane.f32.xlu0 %v3926
  %v3928 = vpop.xlane.xlu0 %3927
  %v3929 = vsel %vm638, %v3815, 0.0
  %3930 = vadd.xlane.f32.xlu0 %v3929
  %v3931 = vpop.xlane.xlu0 %3930
  %v3932 = vsel %vm638, %v3816, 0.0
  %3933 = vadd.xlane.f32.xlu0 %v3932
  %v3934 = vpop.xlane.xlu0 %3933
  %v3935 = vsel %vm638, %v3817, 0.0
  %3936 = vadd.xlane.f32.xlu0 %v3935
  %v3937 = vpop.xlane.xlu0 %3936
  %v3938 = vsel %vm638, %v3818, 0.0
  %3939 = vadd.xlane.f32.xlu0 %v3938
  %v3940 = vpop.xlane.xlu0 %3939
  %v3941 = vsel %vm638, %v3819, 0.0
  %3942 = vadd.xlane.f32.xlu0 %v3941
  %v3943 = vpop.xlane.xlu0 %3942
  %v3944 = vsel %vm638, %v3820, 0.0
  %3945 = vadd.xlane.f32.xlu0 %v3944
  %v3946 = vpop.xlane.xlu0 %3945
  %v3947 = vsel %vm638, %v3821, 0.0
  %3948 = vadd.xlane.f32.xlu0 %v3947
  %v3949 = vpop.xlane.xlu0 %3948
  %v3950 = vsel %vm638, %v3822, 0.0
  %3951 = vadd.xlane.f32.xlu0 %v3950
  %v3952 = vpop.xlane.xlu0 %3951
  %v3953 = vsel %vm638, %v3823, 0.0
  %3954 = vadd.xlane.f32.xlu0 %v3953
  %v3955 = vpop.xlane.xlu0 %3954
  %v3956 = vsel %vm638, %v3824, 0.0
  %3957 = vadd.xlane.f32.xlu0 %v3956
  %v3958 = vpop.xlane.xlu0 %3957
  %v3959 = vsel %vm638, %v3825, 0.0
  %3960 = vadd.xlane.f32.xlu0 %v3959
  %v3961 = vpop.xlane.xlu0 %3960
  %v3962 = vsel %vm638, %v3826, 0.0
  %3963 = vadd.xlane.f32.xlu0 %v3962
  %v3964 = vpop.xlane.xlu0 %3963
  %v3965 = vsel %vm638, %v3827, 0.0
  %3966 = vadd.xlane.f32.xlu0 %v3965
  %v3967 = vpop.xlane.xlu0 %3966
  %v3968 = vsel %vm638, %v3828, 0.0
  %3969 = vadd.xlane.f32.xlu0 %v3968
  %v3970 = vpop.xlane.xlu0 %3969
  %v3971 = vsel %vm638, %v3829, 0.0
  %3972 = vadd.xlane.f32.xlu0 %v3971
  %v3973 = vpop.xlane.xlu0 %3972
  %v3974 = vsel %vm638, %v3830, 0.0
  %3975 = vadd.xlane.f32.xlu0 %v3974
  %v3976 = vpop.xlane.xlu0 %3975
  %v3977 = vsel %vm638, %v3831, 0.0
  %3978 = vadd.xlane.f32.xlu0 %v3977
  %v3979 = vpop.xlane.xlu0 %3978
  %v3980 = vsel %vm638, %v3832, 0.0
  %3981 = vadd.xlane.f32.xlu0 %v3980
  %v3982 = vpop.xlane.xlu0 %3981
  %v3983 = vsel %vm638, %v3833, 0.0
  %3984 = vadd.xlane.f32.xlu0 %v3983
  %v3985 = vpop.xlane.xlu0 %3984
  %v3986 = vsel %vm638, %v3834, 0.0
  %3987 = vadd.xlane.f32.xlu0 %v3986
  %v3988 = vpop.xlane.xlu0 %3987
  %v3989 = vsel %vm638, %v3835, 0.0
  %3990 = vadd.xlane.f32.xlu0 %v3989
  %v3991 = vpop.xlane.xlu0 %3990
  %v3992 = vsel %vm638, %v3836, 0.0
  %3993 = vadd.xlane.f32.xlu0 %v3992
  %v3994 = vpop.xlane.xlu0 %3993
  %v3995 = vsel %vm638, %v3837, 0.0
  %3996 = vadd.xlane.f32.xlu0 %v3995
  %v3997 = vpop.xlane.xlu0 %3996
  %v3998 = vsel %vm638, %v3838, 0.0
  %3999 = vadd.xlane.f32.xlu0 %v3998
  %v4000 = vpop.xlane.xlu0 %3999
  %v4001 = vsel %vm638, %v3839, 0.0
  %4002 = vadd.xlane.f32.xlu0 %v4001
  %v4003 = vpop.xlane.xlu0 %4002
  %v4004 = vsel %vm638, %v3840, 0.0
  %4005 = vadd.xlane.f32.xlu0 %v4004
  %v4006 = vpop.xlane.xlu0 %4005
  %v4007 = vsel %vm638, %v3841, 0.0
  %4008 = vadd.xlane.f32.xlu0 %v4007
  %v4009 = vpop.xlane.xlu0 %4008
  %v4010 = vsel %vm638, %v3842, 0.0
  %4011 = vadd.xlane.f32.xlu0 %v4010
  %v4012 = vpop.xlane.xlu0 %4011
  %v4013 = vsel %vm638, %v3843, 0.0
  %4014 = vadd.xlane.f32.xlu0 %v4013
  %v4015 = vpop.xlane.xlu0 %4014
  %v4016 = vsel %vm638, %v3844, 0.0
  %4017 = vadd.xlane.f32.xlu0 %v4016
  %v4018 = vpop.xlane.xlu0 %4017
  %v4019 = vsel %vm638, %v3845, 0.0
  %4020 = vadd.xlane.f32.xlu0 %v4019
  %v4021 = vpop.xlane.xlu0 %4020
  %v4022 = vsel %vm638, %v3846, 0.0
  %4023 = vadd.xlane.f32.xlu0 %v4022
  %v4024 = vpop.xlane.xlu0 %4023
  %v4025 = vsel %vm638, %v3847, 0.0
  %4026 = vadd.xlane.f32.xlu0 %v4025
  %v4027 = vpop.xlane.xlu0 %4026
  %v4028 = vsel %vm638, %v3848, 0.0
  %4029 = vadd.xlane.f32.xlu0 %v4028
  %v4030 = vpop.xlane.xlu0 %4029
  %v4031 = vsel %vm638, %v3849, 0.0
  %4032 = vadd.xlane.f32.xlu0 %v4031
  %v4033 = vpop.xlane.xlu0 %4032
  %v4034 = vsel %vm638, %v3850, 0.0
  %4035 = vadd.xlane.f32.xlu0 %v4034
  %v4036 = vpop.xlane.xlu0 %4035
  %v4037 = vsel %vm638, %v3851, 0.0
  %4038 = vadd.xlane.f32.xlu0 %v4037
  %v4039 = vpop.xlane.xlu0 %4038
  %v4040 = vsel %vm638, %v3852, 0.0
  %4041 = vadd.xlane.f32.xlu0 %v4040
  %v4042 = vpop.xlane.xlu0 %4041
  %v4043 = vsel %vm638, %v3853, 0.0
  %4044 = vadd.xlane.f32.xlu0 %v4043
  %v4045 = vpop.xlane.xlu0 %4044
  %v4046 = vsel %vm638, %v3854, 0.0
  %4047 = vadd.xlane.f32.xlu0 %v4046
  %v4048 = vpop.xlane.xlu0 %4047
  %v4049 = vsel %vm638, %v3855, 0.0
  %4050 = vadd.xlane.f32.xlu0 %v4049
  %v4051 = vpop.xlane.xlu0 %4050
  %v4052 = vsel %vm638, %v3856, 0.0
  %4053 = vadd.xlane.f32.xlu0 %v4052
  %v4054 = vpop.xlane.xlu0 %4053
  %v4055 = vsel %vm638, %v3857, 0.0
  %4056 = vadd.xlane.f32.xlu0 %v4055
  %v4057 = vpop.xlane.xlu0 %4056
  %v4058 = vsel %vm638, %v3858, 0.0
  %4059 = vadd.xlane.f32.xlu0 %v4058
  %v4060 = vpop.xlane.xlu0 %4059
  %v4061 = vsel %vm638, %v3859, 0.0
  %4062 = vadd.xlane.f32.xlu0 %v4061
  %v4063 = vpop.xlane.xlu0 %4062
  %v4064 = vsel %vm638, %v3860, 0.0
  %4065 = vadd.xlane.f32.xlu0 %v4064
  %v4066 = vpop.xlane.xlu0 %4065
  %v4067 = vsel %vm638, %v3861, 0.0
  %4068 = vadd.xlane.f32.xlu0 %v4067
  %v4069 = vpop.xlane.xlu0 %4068
  %v4070 = vsel %vm638, %v3862, 0.0
  %4071 = vadd.xlane.f32.xlu0 %v4070
  %v4072 = vpop.xlane.xlu0 %4071
  %v4073 = vsel %vm638, %v3863, 0.0
  %4074 = vadd.xlane.f32.xlu0 %v4073
  %v4075 = vpop.xlane.xlu0 %4074
  %v4076 = vsel %vm638, %v3864, 0.0
  %4077 = vadd.xlane.f32.xlu0 %v4076
  %v4078 = vpop.xlane.xlu0 %4077
  %v4079 = vsel %vm638, %v3865, 0.0
  %4080 = vadd.xlane.f32.xlu0 %v4079
  %v4081 = vpop.xlane.xlu0 %4080
  %v4082 = vsel %vm638, %v3866, 0.0
  %4083 = vadd.xlane.f32.xlu0 %v4082
  %v4084 = vpop.xlane.xlu0 %4083
  %v4085 = vsel %vm638, %v3867, 0.0
  %4086 = vadd.xlane.f32.xlu0 %v4085
  %v4087 = vpop.xlane.xlu0 %4086
  %v4088 = vsel %vm638, %v3868, 0.0
  %4089 = vadd.xlane.f32.xlu0 %v4088
  %v4090 = vpop.xlane.xlu0 %4089
  %v4091 = vsel %vm638, %v3869, 0.0
  %4092 = vadd.xlane.f32.xlu0 %v4091
  %v4093 = vpop.xlane.xlu0 %4092
  %v4094 = vsel %vm638, %v3870, 0.0
  %4095 = vadd.xlane.f32.xlu0 %v4094
  %v4096 = vpop.xlane.xlu0 %4095
  %v4097 = vsel %vm638, %v3871, 0.0
  %4098 = vadd.xlane.f32.xlu0 %v4097
  %v4099 = vpop.xlane.xlu0 %4098
  %v4100 = vsel %vm638, %v3872, 0.0
  %4101 = vadd.xlane.f32.xlu0 %v4100
  %v4102 = vpop.xlane.xlu0 %4101
  %v4103 = vsel %vm638, %v3873, 0.0
  %4104 = vadd.xlane.f32.xlu0 %v4103
  %v4105 = vpop.xlane.xlu0 %4104
  %v4106 = vsel %vm638, %v3874, 0.0
  %4107 = vadd.xlane.f32.xlu0 %v4106
  %v4108 = vpop.xlane.xlu0 %4107
  %v4109 = vsel %vm638, %v3875, 0.0
  %4110 = vadd.xlane.f32.xlu0 %v4109
  %v4111 = vpop.xlane.xlu0 %4110
  %v4112 = vsel %vm638, %v3876, 0.0
  %4113 = vadd.xlane.f32.xlu0 %v4112
  %v4114 = vpop.xlane.xlu0 %4113
  %v4115 = vsel %vm638, %v3877, 0.0
  %4116 = vadd.xlane.f32.xlu0 %v4115
  %v4117 = vpop.xlane.xlu0 %4116
  %v4118 = vsel %vm638, %v3878, 0.0
  %4119 = vadd.xlane.f32.xlu0 %v4118
  %v4120 = vpop.xlane.xlu0 %4119
  %v4121 = vsel %vm638, %v3879, 0.0
  %4122 = vadd.xlane.f32.xlu0 %v4121
  %v4123 = vpop.xlane.xlu0 %4122
  %v4124 = vsel %vm638, %v3880, 0.0
  %4125 = vadd.xlane.f32.xlu0 %v4124
  %v4126 = vpop.xlane.xlu0 %4125
  %v4127 = vsel %vm638, %v3881, 0.0
  %4128 = vadd.xlane.f32.xlu0 %v4127
  %v4129 = vpop.xlane.xlu0 %4128
  %v4130 = vsel %vm638, %v3882, 0.0
  %4131 = vadd.xlane.f32.xlu0 %v4130
  %v4132 = vpop.xlane.xlu0 %4131
  %v4133 = vsel %vm638, %v3883, 0.0
  %4134 = vadd.xlane.f32.xlu0 %v4133
  %v4135 = vpop.xlane.xlu0 %4134
  %v4136 = vsel %vm638, %v3884, 0.0
  %4137 = vadd.xlane.f32.xlu0 %v4136
  %v4138 = vpop.xlane.xlu0 %4137
  %v4139 = vsel %vm638, %v3885, 0.0
  %4140 = vadd.xlane.f32.xlu0 %v4139
  %v4141 = vpop.xlane.xlu0 %4140
  %v4142 = vsel %vm638, %v3886, 0.0
  %4143 = vadd.xlane.f32.xlu0 %v4142
  %v4144 = vpop.xlane.xlu0 %4143
  %v4145 = vsel %vm638, %v3887, 0.0
  %4146 = vadd.xlane.f32.xlu0 %v4145
  %v4147 = vpop.xlane.xlu0 %4146
  %v4148 = vsel %vm638, %v3888, 0.0
  %4149 = vadd.xlane.f32.xlu0 %v4148
  %v4150 = vpop.xlane.xlu0 %4149
  %v4151 = vsel %vm638, %v3889, 0.0
  %4152 = vadd.xlane.f32.xlu0 %v4151
  %v4153 = vpop.xlane.xlu0 %4152
  %v4154 = vsel %vm638, %v3890, 0.0
  %4155 = vadd.xlane.f32.xlu0 %v4154
  %v4156 = vpop.xlane.xlu0 %4155
  %v4157 = vsel %vm638, %v3891, 0.0
  %4158 = vadd.xlane.f32.xlu0 %v4157
  %v4159 = vpop.xlane.xlu0 %4158
  %v4160 = vsel %vm638, %v3892, 0.0
  %4161 = vadd.xlane.f32.xlu0 %v4160
  %v4162 = vpop.xlane.xlu0 %4161
  %v4163 = vsel %vm638, %v3893, 0.0
  %4164 = vadd.xlane.f32.xlu0 %v4163
  %v4165 = vpop.xlane.xlu0 %4164
  %v4166 = vsel %vm638, %v3894, 0.0
  %4167 = vadd.xlane.f32.xlu0 %v4166
  %v4168 = vpop.xlane.xlu0 %4167
  %v4169 = vsel %vm638, %v3895, 0.0
  %4170 = vadd.xlane.f32.xlu0 %v4169
  %v4171 = vpop.xlane.xlu0 %4170
  %v4172 = vsel %vm638, %v3896, 0.0
  %4173 = vadd.xlane.f32.xlu0 %v4172
  %v4174 = vpop.xlane.xlu0 %4173
  %v4175 = vsel %vm638, %v3897, 0.0
  %4176 = vadd.xlane.f32.xlu0 %v4175
  %v4177 = vpop.xlane.xlu0 %4176
  %v4178 = vsel %vm638, %v3898, 0.0
  %4179 = vadd.xlane.f32.xlu0 %v4178
  %v4180 = vpop.xlane.xlu0 %4179
  %v4181 = vsel %vm638, %v3899, 0.0
  %4182 = vadd.xlane.f32.xlu0 %v4181
  %v4183 = vpop.xlane.xlu0 %4182
  %v4184 = vsel %vm638, %v3900, 0.0
  %4185 = vadd.xlane.f32.xlu0 %v4184
  %v4186 = vpop.xlane.xlu0 %4185
  %v4187 = vsel %vm638, %v3901, 0.0
  %4188 = vadd.xlane.f32.xlu0 %v4187
  %v4189 = vpop.xlane.xlu0 %4188
  %v4286 = vlaneseq
  %v4287 = vshrl.u32 %v4286, 7
  %v4288 = vsub.s32 %v1030, %v4287
  %v4289 = vrot.slane %v3904, %v4288
  %v4290 = vlaneseq
  %v4291 = vshrl.u32 %v4290, 7
  %v4292 = vsub.s32 %v1035, %v4291
  %v4293 = vrot.slane %v3907, %v4292
  %v4294 = vsel %vm1040, %v4293, %v4289
  %v4295 = vlaneseq
  %v4296 = vshrl.u32 %v4295, 7
  %v4297 = vsub.s32 %v1042, %v4296
  %v4298 = vrot.slane %v3910, %v4297
  %v4299 = vsel %vm1047, %v4298, %v4294
  %v4300 = vlaneseq
  %v4301 = vshrl.u32 %v4300, 7
  %v4302 = vsub.s32 %v1049, %v4301
  %v4303 = vrot.slane %v3913, %v4302
  %v4304 = vsel %vm1054, %v4303, %v4299
  %v4305 = vlaneseq
  %v4306 = vshrl.u32 %v4305, 7
  %v4307 = vsub.s32 %v1030, %v4306
  %v4308 = vrot.slane %v3916, %v4307
  %v4309 = vlaneseq
  %v4310 = vshrl.u32 %v4309, 7
  %v4311 = vsub.s32 %v1035, %v4310
  %v4312 = vrot.slane %v3919, %v4311
  %v4313 = vsel %vm1040, %v4312, %v4308
  %v4314 = vlaneseq
  %v4315 = vshrl.u32 %v4314, 7
  %v4316 = vsub.s32 %v1042, %v4315
  %v4317 = vrot.slane %v3922, %v4316
  %v4318 = vsel %vm1047, %v4317, %v4313
  %v4319 = vlaneseq
  %v4320 = vshrl.u32 %v4319, 7
  %v4321 = vsub.s32 %v1049, %v4320
  %v4322 = vrot.slane %v3925, %v4321
  %v4323 = vsel %vm1054, %v4322, %v4318
  %v4324 = vlaneseq
  %v4325 = vshrl.u32 %v4324, 7
  %v4326 = vsub.s32 %v1030, %v4325
  %v4327 = vrot.slane %v3928, %v4326
  %v4328 = vlaneseq
  %v4329 = vshrl.u32 %v4328, 7
  %v4330 = vsub.s32 %v1035, %v4329
  %v4331 = vrot.slane %v3931, %v4330
  %v4332 = vsel %vm1040, %v4331, %v4327
  %v4333 = vlaneseq
  %v4334 = vshrl.u32 %v4333, 7
  %v4335 = vsub.s32 %v1042, %v4334
  %v4336 = vrot.slane %v3934, %v4335
  %v4337 = vsel %vm1047, %v4336, %v4332
  %v4338 = vlaneseq
  %v4339 = vshrl.u32 %v4338, 7
  %v4340 = vsub.s32 %v1049, %v4339
  %v4341 = vrot.slane %v3937, %v4340
  %v4342 = vsel %vm1054, %v4341, %v4337
  %v4343 = vlaneseq
  %v4344 = vshrl.u32 %v4343, 7
  %v4345 = vsub.s32 %v1030, %v4344
  %v4346 = vrot.slane %v3940, %v4345
  %v4347 = vlaneseq
  %v4348 = vshrl.u32 %v4347, 7
  %v4349 = vsub.s32 %v1035, %v4348
  %v4350 = vrot.slane %v3943, %v4349
  %v4351 = vsel %vm1040, %v4350, %v4346
  %v4352 = vlaneseq
  %v4353 = vshrl.u32 %v4352, 7
  %v4354 = vsub.s32 %v1042, %v4353
  %v4355 = vrot.slane %v3946, %v4354
  %v4356 = vsel %vm1047, %v4355, %v4351
  %v4357 = vlaneseq
  %v4358 = vshrl.u32 %v4357, 7
  %v4359 = vsub.s32 %v1049, %v4358
  %v4360 = vrot.slane %v3949, %v4359
  %v4361 = vsel %vm1054, %v4360, %v4356
  %v4362 = vlaneseq
  %v4363 = vshrl.u32 %v4362, 7
  %v4364 = vsub.s32 %v1030, %v4363
  %v4365 = vrot.slane %v3952, %v4364
  %v4366 = vlaneseq
  %v4367 = vshrl.u32 %v4366, 7
  %v4368 = vsub.s32 %v1035, %v4367
  %v4369 = vrot.slane %v3955, %v4368
  %v4370 = vsel %vm1040, %v4369, %v4365
  %v4371 = vlaneseq
  %v4372 = vshrl.u32 %v4371, 7
  %v4373 = vsub.s32 %v1042, %v4372
  %v4374 = vrot.slane %v3958, %v4373
  %v4375 = vsel %vm1047, %v4374, %v4370
  %v4376 = vlaneseq
  %v4377 = vshrl.u32 %v4376, 7
  %v4378 = vsub.s32 %v1049, %v4377
  %v4379 = vrot.slane %v3961, %v4378
  %v4380 = vsel %vm1054, %v4379, %v4375
  %v4381 = vlaneseq
  %v4382 = vshrl.u32 %v4381, 7
  %v4383 = vsub.s32 %v1030, %v4382
  %v4384 = vrot.slane %v3964, %v4383
  %v4385 = vlaneseq
  %v4386 = vshrl.u32 %v4385, 7
  %v4387 = vsub.s32 %v1035, %v4386
  %v4388 = vrot.slane %v3967, %v4387
  %v4389 = vsel %vm1040, %v4388, %v4384
  %v4390 = vlaneseq
  %v4391 = vshrl.u32 %v4390, 7
  %v4392 = vsub.s32 %v1042, %v4391
  %v4393 = vrot.slane %v3970, %v4392
  %v4394 = vsel %vm1047, %v4393, %v4389
  %v4395 = vlaneseq
  %v4396 = vshrl.u32 %v4395, 7
  %v4397 = vsub.s32 %v1049, %v4396
  %v4398 = vrot.slane %v3973, %v4397
  %v4399 = vsel %vm1054, %v4398, %v4394
  %v4400 = vlaneseq
  %v4401 = vshrl.u32 %v4400, 7
  %v4402 = vsub.s32 %v1030, %v4401
  %v4403 = vrot.slane %v3976, %v4402
  %v4404 = vlaneseq
  %v4405 = vshrl.u32 %v4404, 7
  %v4406 = vsub.s32 %v1035, %v4405
  %v4407 = vrot.slane %v3979, %v4406
  %v4408 = vsel %vm1040, %v4407, %v4403
  %v4409 = vlaneseq
  %v4410 = vshrl.u32 %v4409, 7
  %v4411 = vsub.s32 %v1042, %v4410
  %v4412 = vrot.slane %v3982, %v4411
  %v4413 = vsel %vm1047, %v4412, %v4408
  %v4414 = vlaneseq
  %v4415 = vshrl.u32 %v4414, 7
  %v4416 = vsub.s32 %v1049, %v4415
  %v4417 = vrot.slane %v3985, %v4416
  %v4418 = vsel %vm1054, %v4417, %v4413
  %v4419 = vlaneseq
  %v4420 = vshrl.u32 %v4419, 7
  %v4421 = vsub.s32 %v1030, %v4420
  %v4422 = vrot.slane %v3988, %v4421
  %v4423 = vlaneseq
  %v4424 = vshrl.u32 %v4423, 7
  %v4425 = vsub.s32 %v1035, %v4424
  %v4426 = vrot.slane %v3991, %v4425
  %v4427 = vsel %vm1040, %v4426, %v4422
  %v4428 = vlaneseq
  %v4429 = vshrl.u32 %v4428, 7
  %v4430 = vsub.s32 %v1042, %v4429
  %v4431 = vrot.slane %v3994, %v4430
  %v4432 = vsel %vm1047, %v4431, %v4427
  %v4433 = vlaneseq
  %v4434 = vshrl.u32 %v4433, 7
  %v4435 = vsub.s32 %v1049, %v4434
  %v4436 = vrot.slane %v3997, %v4435
  %v4437 = vsel %vm1054, %v4436, %v4432
  %v4438 = vlaneseq
  %v4439 = vshrl.u32 %v4438, 7
  %v4440 = vsub.s32 %v1030, %v4439
  %v4441 = vrot.slane %v4000, %v4440
  %v4442 = vlaneseq
  %v4443 = vshrl.u32 %v4442, 7
  %v4444 = vsub.s32 %v1035, %v4443
  %v4445 = vrot.slane %v4003, %v4444
  %v4446 = vsel %vm1040, %v4445, %v4441
  %v4447 = vlaneseq
  %v4448 = vshrl.u32 %v4447, 7
  %v4449 = vsub.s32 %v1042, %v4448
  %v4450 = vrot.slane %v4006, %v4449
  %v4451 = vsel %vm1047, %v4450, %v4446
  %v4452 = vlaneseq
  %v4453 = vshrl.u32 %v4452, 7
  %v4454 = vsub.s32 %v1049, %v4453
  %v4455 = vrot.slane %v4009, %v4454
  %v4456 = vsel %vm1054, %v4455, %v4451
  %v4457 = vlaneseq
  %v4458 = vshrl.u32 %v4457, 7
  %v4459 = vsub.s32 %v1030, %v4458
  %v4460 = vrot.slane %v4012, %v4459
  %v4461 = vlaneseq
  %v4462 = vshrl.u32 %v4461, 7
  %v4463 = vsub.s32 %v1035, %v4462
  %v4464 = vrot.slane %v4015, %v4463
  %v4465 = vsel %vm1040, %v4464, %v4460
  %v4466 = vlaneseq
  %v4467 = vshrl.u32 %v4466, 7
  %v4468 = vsub.s32 %v1042, %v4467
  %v4469 = vrot.slane %v4018, %v4468
  %v4470 = vsel %vm1047, %v4469, %v4465
  %v4471 = vlaneseq
  %v4472 = vshrl.u32 %v4471, 7
  %v4473 = vsub.s32 %v1049, %v4472
  %v4474 = vrot.slane %v4021, %v4473
  %v4475 = vsel %vm1054, %v4474, %v4470
  %v4476 = vlaneseq
  %v4477 = vshrl.u32 %v4476, 7
  %v4478 = vsub.s32 %v1030, %v4477
  %v4479 = vrot.slane %v4024, %v4478
  %v4480 = vlaneseq
  %v4481 = vshrl.u32 %v4480, 7
  %v4482 = vsub.s32 %v1035, %v4481
  %v4483 = vrot.slane %v4027, %v4482
  %v4484 = vsel %vm1040, %v4483, %v4479
  %v4485 = vlaneseq
  %v4486 = vshrl.u32 %v4485, 7
  %v4487 = vsub.s32 %v1042, %v4486
  %v4488 = vrot.slane %v4030, %v4487
  %v4489 = vsel %vm1047, %v4488, %v4484
  %v4490 = vlaneseq
  %v4491 = vshrl.u32 %v4490, 7
  %v4492 = vsub.s32 %v1049, %v4491
  %v4493 = vrot.slane %v4033, %v4492
  %v4494 = vsel %vm1054, %v4493, %v4489
  %v4495 = vlaneseq
  %v4496 = vshrl.u32 %v4495, 7
  %v4497 = vsub.s32 %v1030, %v4496
  %v4498 = vrot.slane %v4036, %v4497
  %v4499 = vlaneseq
  %v4500 = vshrl.u32 %v4499, 7
  %v4501 = vsub.s32 %v1035, %v4500
  %v4502 = vrot.slane %v4039, %v4501
  %v4503 = vsel %vm1040, %v4502, %v4498
  %v4504 = vlaneseq
  %v4505 = vshrl.u32 %v4504, 7
  %v4506 = vsub.s32 %v1042, %v4505
  %v4507 = vrot.slane %v4042, %v4506
  %v4508 = vsel %vm1047, %v4507, %v4503
  %v4509 = vlaneseq
  %v4510 = vshrl.u32 %v4509, 7
  %v4511 = vsub.s32 %v1049, %v4510
  %v4512 = vrot.slane %v4045, %v4511
  %v4513 = vsel %vm1054, %v4512, %v4508
  %v4514 = vlaneseq
  %v4515 = vshrl.u32 %v4514, 7
  %v4516 = vsub.s32 %v1030, %v4515
  %v4517 = vrot.slane %v4048, %v4516
  %v4518 = vlaneseq
  %v4519 = vshrl.u32 %v4518, 7
  %v4520 = vsub.s32 %v1035, %v4519
  %v4521 = vrot.slane %v4051, %v4520
  %v4522 = vsel %vm1040, %v4521, %v4517
  %v4523 = vlaneseq
  %v4524 = vshrl.u32 %v4523, 7
  %v4525 = vsub.s32 %v1042, %v4524
  %v4526 = vrot.slane %v4054, %v4525
  %v4527 = vsel %vm1047, %v4526, %v4522
  %v4528 = vlaneseq
  %v4529 = vshrl.u32 %v4528, 7
  %v4530 = vsub.s32 %v1049, %v4529
  %v4531 = vrot.slane %v4057, %v4530
  %v4532 = vsel %vm1054, %v4531, %v4527
  %v4533 = vlaneseq
  %v4534 = vshrl.u32 %v4533, 7
  %v4535 = vsub.s32 %v1030, %v4534
  %v4536 = vrot.slane %v4060, %v4535
  %v4537 = vlaneseq
  %v4538 = vshrl.u32 %v4537, 7
  %v4539 = vsub.s32 %v1035, %v4538
  %v4540 = vrot.slane %v4063, %v4539
  %v4541 = vsel %vm1040, %v4540, %v4536
  %v4542 = vlaneseq
  %v4543 = vshrl.u32 %v4542, 7
  %v4544 = vsub.s32 %v1042, %v4543
  %v4545 = vrot.slane %v4066, %v4544
  %v4546 = vsel %vm1047, %v4545, %v4541
  %v4547 = vlaneseq
  %v4548 = vshrl.u32 %v4547, 7
  %v4549 = vsub.s32 %v1049, %v4548
  %v4550 = vrot.slane %v4069, %v4549
  %v4551 = vsel %vm1054, %v4550, %v4546
  %v4552 = vlaneseq
  %v4553 = vshrl.u32 %v4552, 7
  %v4554 = vsub.s32 %v1030, %v4553
  %v4555 = vrot.slane %v4072, %v4554
  %v4556 = vlaneseq
  %v4557 = vshrl.u32 %v4556, 7
  %v4558 = vsub.s32 %v1035, %v4557
  %v4559 = vrot.slane %v4075, %v4558
  %v4560 = vsel %vm1040, %v4559, %v4555
  %v4561 = vlaneseq
  %v4562 = vshrl.u32 %v4561, 7
  %v4563 = vsub.s32 %v1042, %v4562
  %v4564 = vrot.slane %v4078, %v4563
  %v4565 = vsel %vm1047, %v4564, %v4560
  %v4566 = vlaneseq
  %v4567 = vshrl.u32 %v4566, 7
  %v4568 = vsub.s32 %v1049, %v4567
  %v4569 = vrot.slane %v4081, %v4568
  %v4570 = vsel %vm1054, %v4569, %v4565
  %v4571 = vlaneseq
  %v4572 = vshrl.u32 %v4571, 7
  %v4573 = vsub.s32 %v1030, %v4572
  %v4574 = vrot.slane %v4084, %v4573
  %v4575 = vlaneseq
  %v4576 = vshrl.u32 %v4575, 7
  %v4577 = vsub.s32 %v1035, %v4576
  %v4578 = vrot.slane %v4087, %v4577
  %v4579 = vsel %vm1040, %v4578, %v4574
  %v4580 = vlaneseq
  %v4581 = vshrl.u32 %v4580, 7
  %v4582 = vsub.s32 %v1042, %v4581
  %v4583 = vrot.slane %v4090, %v4582
  %v4584 = vsel %vm1047, %v4583, %v4579
  %v4585 = vlaneseq
  %v4586 = vshrl.u32 %v4585, 7
  %v4587 = vsub.s32 %v1049, %v4586
  %v4588 = vrot.slane %v4093, %v4587
  %v4589 = vsel %vm1054, %v4588, %v4584
  %v4590 = vlaneseq
  %v4591 = vshrl.u32 %v4590, 7
  %v4592 = vsub.s32 %v1030, %v4591
  %v4593 = vrot.slane %v4096, %v4592
  %v4594 = vlaneseq
  %v4595 = vshrl.u32 %v4594, 7
  %v4596 = vsub.s32 %v1035, %v4595
  %v4597 = vrot.slane %v4099, %v4596
  %v4598 = vsel %vm1040, %v4597, %v4593
  %v4599 = vlaneseq
  %v4600 = vshrl.u32 %v4599, 7
  %v4601 = vsub.s32 %v1042, %v4600
  %v4602 = vrot.slane %v4102, %v4601
  %v4603 = vsel %vm1047, %v4602, %v4598
  %v4604 = vlaneseq
  %v4605 = vshrl.u32 %v4604, 7
  %v4606 = vsub.s32 %v1049, %v4605
  %v4607 = vrot.slane %v4105, %v4606
  %v4608 = vsel %vm1054, %v4607, %v4603
  %v4609 = vlaneseq
  %v4610 = vshrl.u32 %v4609, 7
  %v4611 = vsub.s32 %v1030, %v4610
  %v4612 = vrot.slane %v4108, %v4611
  %v4613 = vlaneseq
  %v4614 = vshrl.u32 %v4613, 7
  %v4615 = vsub.s32 %v1035, %v4614
  %v4616 = vrot.slane %v4111, %v4615
  %v4617 = vsel %vm1040, %v4616, %v4612
  %v4618 = vlaneseq
  %v4619 = vshrl.u32 %v4618, 7
  %v4620 = vsub.s32 %v1042, %v4619
  %v4621 = vrot.slane %v4114, %v4620
  %v4622 = vsel %vm1047, %v4621, %v4617
  %v4623 = vlaneseq
  %v4624 = vshrl.u32 %v4623, 7
  %v4625 = vsub.s32 %v1049, %v4624
  %v4626 = vrot.slane %v4117, %v4625
  %v4627 = vsel %vm1054, %v4626, %v4622
  %v4628 = vlaneseq
  %v4629 = vshrl.u32 %v4628, 7
  %v4630 = vsub.s32 %v1030, %v4629
  %v4631 = vrot.slane %v4120, %v4630
  %v4632 = vlaneseq
  %v4633 = vshrl.u32 %v4632, 7
  %v4634 = vsub.s32 %v1035, %v4633
  %v4635 = vrot.slane %v4123, %v4634
  %v4636 = vsel %vm1040, %v4635, %v4631
  %v4637 = vlaneseq
  %v4638 = vshrl.u32 %v4637, 7
  %v4639 = vsub.s32 %v1042, %v4638
  %v4640 = vrot.slane %v4126, %v4639
  %v4641 = vsel %vm1047, %v4640, %v4636
  %v4642 = vlaneseq
  %v4643 = vshrl.u32 %v4642, 7
  %v4644 = vsub.s32 %v1049, %v4643
  %v4645 = vrot.slane %v4129, %v4644
  %v4646 = vsel %vm1054, %v4645, %v4641
  %v4647 = vlaneseq
  %v4648 = vshrl.u32 %v4647, 7
  %v4649 = vsub.s32 %v1030, %v4648
  %v4650 = vrot.slane %v4132, %v4649
  %v4651 = vlaneseq
  %v4652 = vshrl.u32 %v4651, 7
  %v4653 = vsub.s32 %v1035, %v4652
  %v4654 = vrot.slane %v4135, %v4653
  %v4655 = vsel %vm1040, %v4654, %v4650
  %v4656 = vlaneseq
  %v4657 = vshrl.u32 %v4656, 7
  %v4658 = vsub.s32 %v1042, %v4657
  %v4659 = vrot.slane %v4138, %v4658
  %v4660 = vsel %vm1047, %v4659, %v4655
  %v4661 = vlaneseq
  %v4662 = vshrl.u32 %v4661, 7
  %v4663 = vsub.s32 %v1049, %v4662
  %v4664 = vrot.slane %v4141, %v4663
  %v4665 = vsel %vm1054, %v4664, %v4660
  %v4666 = vlaneseq
  %v4667 = vshrl.u32 %v4666, 7
  %v4668 = vsub.s32 %v1030, %v4667
  %v4669 = vrot.slane %v4144, %v4668
  %v4670 = vlaneseq
  %v4671 = vshrl.u32 %v4670, 7
  %v4672 = vsub.s32 %v1035, %v4671
  %v4673 = vrot.slane %v4147, %v4672
  %v4674 = vsel %vm1040, %v4673, %v4669
  %v4675 = vlaneseq
  %v4676 = vshrl.u32 %v4675, 7
  %v4677 = vsub.s32 %v1042, %v4676
  %v4678 = vrot.slane %v4150, %v4677
  %v4679 = vsel %vm1047, %v4678, %v4674
  %v4680 = vlaneseq
  %v4681 = vshrl.u32 %v4680, 7
  %v4682 = vsub.s32 %v1049, %v4681
  %v4683 = vrot.slane %v4153, %v4682
  %v4684 = vsel %vm1054, %v4683, %v4679
  %v4685 = vlaneseq
  %v4686 = vshrl.u32 %v4685, 7
  %v4687 = vsub.s32 %v1030, %v4686
  %v4688 = vrot.slane %v4156, %v4687
  %v4689 = vlaneseq
  %v4690 = vshrl.u32 %v4689, 7
  %v4691 = vsub.s32 %v1035, %v4690
  %v4692 = vrot.slane %v4159, %v4691
  %v4693 = vsel %vm1040, %v4692, %v4688
  %v4694 = vlaneseq
  %v4695 = vshrl.u32 %v4694, 7
  %v4696 = vsub.s32 %v1042, %v4695
  %v4697 = vrot.slane %v4162, %v4696
  %v4698 = vsel %vm1047, %v4697, %v4693
  %v4699 = vlaneseq
  %v4700 = vshrl.u32 %v4699, 7
  %v4701 = vsub.s32 %v1049, %v4700
  %v4702 = vrot.slane %v4165, %v4701
  %v4703 = vsel %vm1054, %v4702, %v4698
  %v4704 = vlaneseq
  %v4705 = vshrl.u32 %v4704, 7
  %v4706 = vsub.s32 %v1030, %v4705
  %v4707 = vrot.slane %v4168, %v4706
  %v4708 = vlaneseq
  %v4709 = vshrl.u32 %v4708, 7
  %v4710 = vsub.s32 %v1035, %v4709
  %v4711 = vrot.slane %v4171, %v4710
  %v4712 = vsel %vm1040, %v4711, %v4707
  %v4713 = vlaneseq
  %v4714 = vshrl.u32 %v4713, 7
  %v4715 = vsub.s32 %v1042, %v4714
  %v4716 = vrot.slane %v4174, %v4715
  %v4717 = vsel %vm1047, %v4716, %v4712
  %v4718 = vlaneseq
  %v4719 = vshrl.u32 %v4718, 7
  %v4720 = vsub.s32 %v1049, %v4719
  %v4721 = vrot.slane %v4177, %v4720
  %v4722 = vsel %vm1054, %v4721, %v4717
  %v4723 = vlaneseq
  %v4724 = vshrl.u32 %v4723, 7
  %v4725 = vsub.s32 %v1030, %v4724
  %v4726 = vrot.slane %v4180, %v4725
  %v4727 = vlaneseq
  %v4728 = vshrl.u32 %v4727, 7
  %v4729 = vsub.s32 %v1035, %v4728
  %v4730 = vrot.slane %v4183, %v4729
  %v4731 = vsel %vm1040, %v4730, %v4726
  %v4732 = vlaneseq
  %v4733 = vshrl.u32 %v4732, 7
  %v4734 = vsub.s32 %v1042, %v4733
  %v4735 = vrot.slane %v4186, %v4734
  %v4736 = vsel %vm1047, %v4735, %v4731
  %v4737 = vlaneseq
  %v4738 = vshrl.u32 %v4737, 7
  %v4739 = vsub.s32 %v1049, %v4738
  %v4740 = vrot.slane %v4189, %v4739
  %v4741 = vsel %vm1054, %v4740, %v4736
  %v4742 = vsel %vm1493, %v4323, %v4304
  %v4743 = vsel %vm1495, %v4342, %v4742
  %v4744 = vsel %vm1497, %v4361, %v4743
  %v4745 = vsel %vm1499, %v4380, %v4744
  %v4746 = vsel %vm1501, %v4399, %v4745
  %v4747 = vsel %vm1503, %v4418, %v4746
  %v4748 = vsel %vm1505, %v4437, %v4747
  %v4749 = vsel %vm1493, %v4475, %v4456
  %v4750 = vsel %vm1495, %v4494, %v4749
  %v4751 = vsel %vm1497, %v4513, %v4750
  %v4752 = vsel %vm1499, %v4532, %v4751
  %v4753 = vsel %vm1501, %v4551, %v4752
  %v4754 = vsel %vm1503, %v4570, %v4753
  %v4755 = vsel %vm1505, %v4589, %v4754
  %v4756 = vsel %vm1493, %v4627, %v4608
  %v4757 = vsel %vm1495, %v4646, %v4756
  %v4758 = vsel %vm1497, %v4665, %v4757
  %v4759 = vsel %vm1499, %v4684, %v4758
  %v4760 = vsel %vm1501, %v4703, %v4759
  %v4761 = vsel %vm1503, %v4722, %v4760
  %v4762 = vsel %vm1505, %v4741, %v4761
  %4766 = vmatprep.subr.mxu0 0.0
  %4767 = vmatpush1.msra.mxu0 %v4748
  %4768 = vmatprep.subr.mxu0 0.0
  %4769 = vmatpush1.msra.mxu0 %v4755
  %4770 = vmatprep.subr.mxu0 0.0
  %4771 = vmatpush1.msra.mxu0 %v4762
  %4772 = vmatprep.subr.mxu0 0.0
  %4773 = vmatpush1.msra.mxu0 0.0
  %4774 = vmatprep.subr.mxu0 0.0
  %4775 = vmatpush1.msra.mxu0 0.0
  %4776 = vmatprep.subr.mxu0 0.0
  %4777 = vmatpush1.msra.mxu0 0.0
  %4778 = vmatprep.subr.mxu0 0.0
  %4779 = vmatpush1.msra.mxu0 0.0
  %4780 = vmatprep.subr.mxu0 0.0
  %4781 = vmatpush1.msra.mxu0 0.0
  %4782 = vmatprep.subr.mxu0 0.0
  %4783 = vmatpush1.msra.mxu0 0.0
  %4784 = vmatprep.subr.mxu0 0.0
  %4785 = vmatpush1.msra.mxu0 0.0
  %4786 = vmatprep.subr.mxu0 0.0
  %4787 = vmatpush1.msra.mxu0 0.0
  %4788 = vmatprep.subr.mxu0 0.0
  %4789 = vmatpush1.msra.mxu0 0.0
  %4790 = vmatprep.subr.mxu0 0.0
  %4791 = vmatpush1.msra.mxu0 0.0
  %4792 = vmatprep.subr.mxu0 0.0
  %4793 = vmatpush1.msra.mxu0 0.0
  %4794 = vmatprep.subr.mxu0 0.0
  %4795 = vmatpush1.msra.mxu0 0.0
  %4796 = vmatprep.subr.mxu0 0.0
  %4797 = vmatpush1.msra.mxu0 0.0
  %4798 = vmatprep.subr.mxu0 0.0
  %4799 = vmatpush1.msra.mxu0 0.0
  %4800 = vmatprep.subr.mxu0 0.0
  %4801 = vmatpush1.msra.mxu0 0.0
  %4802 = vmatprep.subr.mxu0 0.0
  %4803 = vmatpush1.msra.mxu0 0.0
  %4804 = vmatprep.subr.mxu0 0.0
  %4805 = vmatpush1.msra.mxu0 0.0
  %4806 = vmatprep.subr.mxu0 0.0
  %4807 = vmatpush1.msra.mxu0 0.0
  %4808 = vmatprep.subr.mxu0 0.0
  %4809 = vmatpush1.msra.mxu0 0.0
  %4810 = vmatprep.subr.mxu0 0.0
  %4811 = vmatpush1.msra.mxu0 0.0
  %4812 = vmatprep.subr.mxu0 0.0
  %4813 = vmatpush1.msra.mxu0 0.0
  %4814 = vmatprep.subr.mxu0 0.0
  %4815 = vmatpush1.msra.mxu0 0.0
  %4816 = vmatprep.subr.mxu0 0.0
  %4817 = vmatpush1.msra.mxu0 0.0
  %4818 = vmatprep.subr.mxu0 0.0
  %4819 = vmatpush1.msra.mxu0 0.0
  %4820 = vmatprep.subr.mxu0 0.0
  %4821 = vmatpush1.msra.mxu0 0.0
  %4822 = vmatprep.subr.mxu0 0.0
  %4823 = vmatpush1.msra.mxu0 0.0
  %4824 = vmatprep.subr.mxu0 0.0
  %4825 = vmatpush1.msra.mxu0 0.0
  %4826 = vmatprep.subr.mxu0 0.0
  %4827 = vmatpush1.msra.mxu0 0.0
  %4828 = vmatprep.subr.mxu0 0.0
  %4829 = vmatpush1.msra.mxu0 0.0
  %4830 = vmatprep.mubr.f32.mxu0 0.0
  %4831 = vmatmul.mubr.f32.gmra.mrb[0].mxu0 %v1526
  %v4832 = vpop.f32.mrb[0].mxu0
  %v4833 = vadd.f32 %v931, %v4832
  %v4834 = vpop.f32.mrb[0].mxu0
  %4835 = vmatprep.mubr.f32.mxu0 0.0
  %4836 = vmatmul.mubr.f32.gmra.mrb[0].mxu0 %v1529
  %v4837 = vpop.f32.mrb[0].mxu0
  %v4838 = vadd.f32 %v931, %v4837
  %v4839 = vpop.f32.mrb[0].mxu0
  %4840 = vdwg.mxu0
  %v4841 = vmax.f32 %v4833, 0.0
  %v4842 = vmax.f32 %v4838, 0.0
  %v4844 = vsel %vm638, %v4841, 0
  %v4847 = vsel %vm638, %v4842, 0
  %4849 = vmatprep.subr.mxu0 0.0
  %4850 = vmatpush1.msra.mxu0 %v166
  %4851 = vmatprep.subr.mxu0 0.0
  %4852 = vmatpush1.msra.mxu0 %v167
  %4853 = vmatprep.subr.mxu0 0.0
  %4854 = vmatpush1.msra.mxu0 %v168
  %4855 = vmatprep.subr.mxu0 0.0
  %4856 = vmatpush1.msra.mxu0 %v169
  %4857 = vmatprep.subr.mxu0 0.0
  %4858 = vmatpush1.msra.mxu0 0.0
  %4859 = vmatprep.subr.mxu0 0.0
  %4860 = vmatpush1.msra.mxu0 0.0
  %4861 = vmatprep.subr.mxu0 0.0
  %4862 = vmatpush1.msra.mxu0 0.0
  %4863 = vmatprep.subr.mxu0 0.0
  %4864 = vmatpush1.msra.mxu0 0.0
  %4865 = vmatprep.subr.mxu0 0.0
  %4866 = vmatpush1.msra.mxu0 0.0
  %4867 = vmatprep.subr.mxu0 0.0
  %4868 = vmatpush1.msra.mxu0 0.0
  %4869 = vmatprep.subr.mxu0 0.0
  %4870 = vmatpush1.msra.mxu0 0.0
  %4871 = vmatprep.subr.mxu0 0.0
  %4872 = vmatpush1.msra.mxu0 0.0
  %4873 = vmatprep.subr.mxu0 0.0
  %4874 = vmatpush1.msra.mxu0 0.0
  %4875 = vmatprep.subr.mxu0 0.0
  %4876 = vmatpush1.msra.mxu0 0.0
  %4877 = vmatprep.subr.mxu0 0.0
  %4878 = vmatpush1.msra.mxu0 0.0
  %4879 = vmatprep.subr.mxu0 0.0
  %4880 = vmatpush1.msra.mxu0 0.0
  %4881 = vmatprep.subr.mxu0 0.0
  %4882 = vmatpush1.msra.mxu0 0.0
  %4883 = vmatprep.subr.mxu0 0.0
  %4884 = vmatpush1.msra.mxu0 0.0
  %4885 = vmatprep.subr.mxu0 0.0
  %4886 = vmatpush1.msra.mxu0 0.0
  %4887 = vmatprep.subr.mxu0 0.0
  %4888 = vmatpush1.msra.mxu0 0.0
  %4889 = vmatprep.subr.mxu0 0.0
  %4890 = vmatpush1.msra.mxu0 0.0
  %4891 = vmatprep.subr.mxu0 0.0
  %4892 = vmatpush1.msra.mxu0 0.0
  %4893 = vmatprep.subr.mxu0 0.0
  %4894 = vmatpush1.msra.mxu0 0.0
  %4895 = vmatprep.subr.mxu0 0.0
  %4896 = vmatpush1.msra.mxu0 0.0
  %4897 = vmatprep.subr.mxu0 0.0
  %4898 = vmatpush1.msra.mxu0 0.0
  %4899 = vmatprep.subr.mxu0 0.0
  %4900 = vmatpush1.msra.mxu0 0.0
  %4901 = vmatprep.subr.mxu0 0.0
  %4902 = vmatpush1.msra.mxu0 0.0
  %4903 = vmatprep.subr.mxu0 0.0
  %4904 = vmatpush1.msra.mxu0 0.0
  %4905 = vmatprep.subr.mxu0 0.0
  %4906 = vmatpush1.msra.mxu0 0.0
  %4907 = vmatprep.subr.mxu0 0.0
  %4908 = vmatpush1.msra.mxu0 0.0
  %4909 = vmatprep.subr.mxu0 0.0
  %4910 = vmatpush1.msra.mxu0 0.0
  %4911 = vmatprep.subr.mxu0 0.0
  %4912 = vmatpush1.msra.mxu0 0.0
  %4913 = vmatprep.mubr.f32.mxu0 0.0
  %4914 = vmatmul.mubr.f32.gmra.mrb[0].mxu0 %v4844
  %v4915 = vpop.f32.mrb[0].mxu0
  %v4916 = vadd.f32 %v1612, %v4915
  %v4917 = vpop.f32.mrb[0].mxu0
  %4918 = vmatprep.mubr.f32.mxu0 0.0
  %4919 = vmatmul.mubr.f32.gmra.mrb[0].mxu0 %v4847
  %v4920 = vpop.f32.mrb[0].mxu0
  %v4921 = vadd.f32 %v1612, %v4920
  %v4922 = vpop.f32.mrb[0].mxu0
  %4923 = vdwg.mxu0
  %v4924 = vsel %vm638, %v3450, 0
  %v4926 = vsel %vm638, %v3452, 0
  %4928 = vmatprep.subr.mxu0 0.0
  %4929 = vmatpush1.msra.mxu0 %v170
  %4930 = vmatprep.subr.mxu0 0.0
  %4931 = vmatpush1.msra.mxu0 %v171
  %4932 = vmatprep.subr.mxu0 0.0
  %4933 = vmatpush1.msra.mxu0 %v172
  %4934 = vmatprep.subr.mxu0 0.0
  %4935 = vmatpush1.msra.mxu0 %v173
  %4936 = vmatprep.subr.mxu0 0.0
  %4937 = vmatpush1.msra.mxu0 0.0
  %4938 = vmatprep.subr.mxu0 0.0
  %4939 = vmatpush1.msra.mxu0 0.0
  %4940 = vmatprep.subr.mxu0 0.0
  %4941 = vmatpush1.msra.mxu0 0.0
  %4942 = vmatprep.subr.mxu0 0.0
  %4943 = vmatpush1.msra.mxu0 0.0
  %4944 = vmatprep.subr.mxu0 0.0
  %4945 = vmatpush1.msra.mxu0 0.0
  %4946 = vmatprep.subr.mxu0 0.0
  %4947 = vmatpush1.msra.mxu0 0.0
  %4948 = vmatprep.subr.mxu0 0.0
  %4949 = vmatpush1.msra.mxu0 0.0
  %4950 = vmatprep.subr.mxu0 0.0
  %4951 = vmatpush1.msra.mxu0 0.0
  %4952 = vmatprep.subr.mxu0 0.0
  %4953 = vmatpush1.msra.mxu0 0.0
  %4954 = vmatprep.subr.mxu0 0.0
  %4955 = vmatpush1.msra.mxu0 0.0
  %4956 = vmatprep.subr.mxu0 0.0
  %4957 = vmatpush1.msra.mxu0 0.0
  %4958 = vmatprep.subr.mxu0 0.0
  %4959 = vmatpush1.msra.mxu0 0.0
  %4960 = vmatprep.subr.mxu0 0.0
  %4961 = vmatpush1.msra.mxu0 0.0
  %4962 = vmatprep.subr.mxu0 0.0
  %4963 = vmatpush1.msra.mxu0 0.0
  %4964 = vmatprep.subr.mxu0 0.0
  %4965 = vmatpush1.msra.mxu0 0.0
  %4966 = vmatprep.subr.mxu0 0.0
  %4967 = vmatpush1.msra.mxu0 0.0
  %4968 = vmatprep.subr.mxu0 0.0
  %4969 = vmatpush1.msra.mxu0 0.0
  %4970 = vmatprep.subr.mxu0 0.0
  %4971 = vmatpush1.msra.mxu0 0.0
  %4972 = vmatprep.subr.mxu0 0.0
  %4973 = vmatpush1.msra.mxu0 0.0
  %4974 = vmatprep.subr.mxu0 0.0
  %4975 = vmatpush1.msra.mxu0 0.0
  %4976 = vmatprep.subr.mxu0 0.0
  %4977 = vmatpush1.msra.mxu0 0.0
  %4978 = vmatprep.subr.mxu0 0.0
  %4979 = vmatpush1.msra.mxu0 0.0
  %4980 = vmatprep.subr.mxu0 0.0
  %4981 = vmatpush1.msra.mxu0 0.0
  %4982 = vmatprep.subr.mxu0 0.0
  %4983 = vmatpush1.msra.mxu0 0.0
  %4984 = vmatprep.subr.mxu0 0.0
  %4985 = vmatpush1.msra.mxu0 0.0
  %4986 = vmatprep.subr.mxu0 0.0
  %4987 = vmatpush1.msra.mxu0 0.0
  %4988 = vmatprep.subr.mxu0 0.0
  %4989 = vmatpush1.msra.mxu0 0.0
  %4990 = vmatprep.subr.mxu0 0.0
  %4991 = vmatpush1.msra.mxu0 0.0
  %4992 = vmatprep.mubr.f32.mxu0 0.0
  %4993 = vmatmul.mubr.f32.gmra.mrb[0].mxu0 %v4924
  %v4994 = vpop.f32.mrb[0].mxu0
  %v4995 = vadd.f32 %v1699, %v4994
  %v4996 = vpop.f32.mrb[0].mxu0
  %4997 = vmatprep.mubr.f32.mxu0 0.0
  %4998 = vmatmul.mubr.f32.gmra.mrb[0].mxu0 %v4926
  %v4999 = vpop.f32.mrb[0].mxu0
  %v5000 = vadd.f32 %v1699, %v4999
  %v5001 = vpop.f32.mrb[0].mxu0
  %5002 = vdwg.mxu0
  %v5003 = vadd.f32 %v4916, %v4995
  %v5004 = vadd.f32 %v4921, %v5000
  %v5005 = vxor.u32 %v5003, 2147483648
  %v5006 = vxor.u32 %v5004, 2147483648
  %v5007 = vmul.f32 %v5005, 1.442695
  %v5008 = vpow.pop %v5007
  %v5009 = vmul.f32 %v5006, 1.442695
  %v5010 = vpow.pop %v5009
  %v5011 = vadd.f32 %v5008, 1.0
  %v5012 = vadd.f32 %v5010, 1.0
  %v5013 = vrcp.pop %v5011
  %v5014 = vmul.f32 1.0, %v5013
  %v5015 = vrcp.pop %v5012
  %v5016 = vmul.f32 1.0, %v5015
  %5019 = vrot.lane.b32.xlu0 %v4995, 64
  %v5020 = vpop.permute.xlu0 %5019
  %5021 = vrot.lane.b32.xlu0 %v5000, 64
  %v5022 = vpop.permute.xlu0 %5021
  %v5025 = vmul.f32 %v5014, %v5020
  %v5026 = vmul.f32 %v5016, %v5022
  %5029 = vrot.lane.b32.xlu0 %v5025, 64
  %v5030 = vpop.permute.xlu0 %5029
  %5031 = vrot.lane.b32.xlu0 %v5026, 64
  %v5032 = vpop.permute.xlu0 %5031
  %v5035 = vadd.f32 %v4916, %v5030
  %v5036 = vadd.f32 %v4921, %v5032
  %v5037 = vtanh.pop %v5035
  %v5038 = vtanh.pop %v5036
  %v5039 = vsub.f32 1.0, %v5014
  %v5040 = vsub.f32 1.0, %v5016
  %5043 = vrot.lane.b32.xlu0 %v5037, 96
  %v5044 = vpop.permute.xlu0 %5043
  %5045 = vrot.lane.b32.xlu0 %v5038, 96
  %v5046 = vpop.permute.xlu0 %5045
  %v5049 = vmul.f32 %v5039, %v5044
  %v5050 = vmul.f32 %v5040, %v5046
  %v5051 = vmul.f32 %v5014, %v3445
  %v5052 = vmul.f32 %v5016, %v3446
  %v5053 = vadd.f32 %v5049, %v5051
  %v5054 = vadd.f32 %v5050, %v5052
  %v5055 = vld [vmem:[%s9] sm:$0xff]
  %v5056 = vld [vmem:[%s9 + $0x8] sm:$0x3]
  %v5057 = vld [vmem:[%s10] sm:$0x3]
  %v5058 = vld [vmem:[%s11] sm:$0xff]
  %v5059 = vld [vmem:[%s11 + $0x8] sm:$0xff]
  %v5060 = vld [vmem:[%s11 + $0x10] sm:$0xff]
  %v5061 = vld [vmem:[%s11 + $0x18] sm:$0xff]
  %v5062 = vld [vmem:[%s11 + $0x20] sm:$0xff]
  %v5063 = vld [vmem:[%s11 + $0x28] sm:$0xff]
  %v5064 = vld [vmem:[%s11 + $0x30] sm:$0xff]
  %v5065 = vld [vmem:[%s11 + $0x38] sm:$0xff]
  %v5066 = vld [vmem:[%s12] sm:$0xff]
  %v5067 = vld [vmem:[%s12 + $0x8] sm:$0xff]
  %v5068 = vld [vmem:[%s12 + $0x10] sm:$0xff]
  %v5069 = vld [vmem:[%s12 + $0x18] sm:$0xff]
  %v5070 = vld [vmem:[%s13] sm:$0x1]
  %v5071 = vld [vmem:[%s14] sm:$0x1]
  %v5072 = vadd.f32 %v5070, %v5071
  %v5074 = vsel %vm638, 0.0, 0
  %5076 = vmatprep.subr.mxu0 0.0
  %5077 = vmatpush1.msra.mxu0 %v5062
  %5078 = vmatprep.subr.mxu0 0.0
  %5079 = vmatpush1.msra.mxu0 %v5063
  %5080 = vmatprep.subr.mxu0 0.0
  %5081 = vmatpush1.msra.mxu0 %v5064
  %5082 = vmatprep.subr.mxu0 0.0
  %5083 = vmatpush1.msra.mxu0 %v5065
  %5084 = vmatprep.subr.mxu0 0.0
  %5085 = vmatpush1.msra.mxu0 0.0
  %5086 = vmatprep.subr.mxu0 0.0
  %5087 = vmatpush1.msra.mxu0 0.0
  %5088 = vmatprep.subr.mxu0 0.0
  %5089 = vmatpush1.msra.mxu0 0.0
  %5090 = vmatprep.subr.mxu0 0.0
  %5091 = vmatpush1.msra.mxu0 0.0
  %5092 = vmatprep.subr.mxu0 0.0
  %5093 = vmatpush1.msra.mxu0 0.0
  %5094 = vmatprep.subr.mxu0 0.0
  %5095 = vmatpush1.msra.mxu0 0.0
  %5096 = vmatprep.subr.mxu0 0.0
  %5097 = vmatpush1.msra.mxu0 0.0
  %5098 = vmatprep.subr.mxu0 0.0
  %5099 = vmatpush1.msra.mxu0 0.0
  %5100 = vmatprep.subr.mxu0 0.0
  %5101 = vmatpush1.msra.mxu0 0.0
  %5102 = vmatprep.subr.mxu0 0.0
  %5103 = vmatpush1.msra.mxu0 0.0
  %5104 = vmatprep.subr.mxu0 0.0
  %5105 = vmatpush1.msra.mxu0 0.0
  %5106 = vmatprep.subr.mxu0 0.0
  %5107 = vmatpush1.msra.mxu0 0.0
  %5108 = vmatprep.subr.mxu0 0.0
  %5109 = vmatpush1.msra.mxu0 0.0
  %5110 = vmatprep.subr.mxu0 0.0
  %5111 = vmatpush1.msra.mxu0 0.0
  %5112 = vmatprep.subr.mxu0 0.0
  %5113 = vmatpush1.msra.mxu0 0.0
  %5114 = vmatprep.subr.mxu0 0.0
  %5115 = vmatpush1.msra.mxu0 0.0
  %5116 = vmatprep.subr.mxu0 0.0
  %5117 = vmatpush1.msra.mxu0 0.0
  %5118 = vmatprep.subr.mxu0 0.0
  %5119 = vmatpush1.msra.mxu0 0.0
  %5120 = vmatprep.subr.mxu0 0.0
  %5121 = vmatpush1.msra.mxu0 0.0
  %5122 = vmatprep.subr.mxu0 0.0
  %5123 = vmatpush1.msra.mxu0 0.0
  %5124 = vmatprep.subr.mxu0 0.0
  %5125 = vmatpush1.msra.mxu0 0.0
  %5126 = vmatprep.subr.mxu0 0.0
  %5127 = vmatpush1.msra.mxu0 0.0
  %5128 = vmatprep.subr.mxu0 0.0
  %5129 = vmatpush1.msra.mxu0 0.0
  %5130 = vmatprep.subr.mxu0 0.0
  %5131 = vmatpush1.msra.mxu0 0.0
  %5132 = vmatprep.subr.mxu0 0.0
  %5133 = vmatpush1.msra.mxu0 0.0
  %5134 = vmatprep.subr.mxu0 0.0
  %5135 = vmatpush1.msra.mxu0 0.0
  %5136 = vmatprep.subr.mxu0 0.0
  %5137 = vmatpush1.msra.mxu0 0.0
  %5138 = vmatprep.subr.mxu0 0.0
  %5139 = vmatpush1.msra.mxu0 0.0
  %5140 = vmatprep.mubr.f32.mxu0 0.0
  %5141 = vmatmul.mubr.f32.gmra.mrb[0].mxu0 %v5074
  %v5142 = vpop.f32.mrb[0].mxu0
  %v5143 = vadd.f32 0.0, %v5142
  %v5144 = vpop.f32.mrb[0].mxu0
  %5145 = vdwg.mxu0
  %5146 = vmatprep.subr.mxu0 0.0
  %5147 = vmatpush1.msra.mxu0 %v5058
  %5148 = vmatprep.subr.mxu0 0.0
  %5149 = vmatpush1.msra.mxu0 %v5059
  %5150 = vmatprep.subr.mxu0 0.0
  %5151 = vmatpush1.msra.mxu0 %v5060
  %5152 = vmatprep.subr.mxu0 0.0
  %5153 = vmatpush1.msra.mxu0 %v5061
  %5154 = vmatprep.subr.mxu0 0.0
  %5155 = vmatpush1.msra.mxu0 0.0
  %5156 = vmatprep.subr.mxu0 0.0
  %5157 = vmatpush1.msra.mxu0 0.0
  %5158 = vmatprep.subr.mxu0 0.0
  %5159 = vmatpush1.msra.mxu0 0.0
  %5160 = vmatprep.subr.mxu0 0.0
  %5161 = vmatpush1.msra.mxu0 0.0
  %5162 = vmatprep.subr.mxu0 0.0
  %5163 = vmatpush1.msra.mxu0 0.0
  %5164 = vmatprep.subr.mxu0 0.0
  %5165 = vmatpush1.msra.mxu0 0.0
  %5166 = vmatprep.subr.mxu0 0.0
  %5167 = vmatpush1.msra.mxu0 0.0
  %5168 = vmatprep.subr.mxu0 0.0
  %5169 = vmatpush1.msra.mxu0 0.0
  %5170 = vmatprep.subr.mxu0 0.0
  %5171 = vmatpush1.msra.mxu0 0.0
  %5172 = vmatprep.subr.mxu0 0.0
  %5173 = vmatpush1.msra.mxu0 0.0
  %5174 = vmatprep.subr.mxu0 0.0
  %5175 = vmatpush1.msra.mxu0 0.0
  %5176 = vmatprep.subr.mxu0 0.0
  %5177 = vmatpush1.msra.mxu0 0.0
  %5178 = vmatprep.subr.mxu0 0.0
  %5179 = vmatpush1.msra.mxu0 0.0
  %5180 = vmatprep.subr.mxu0 0.0
  %5181 = vmatpush1.msra.mxu0 0.0
  %5182 = vmatprep.subr.mxu0 0.0
  %5183 = vmatpush1.msra.mxu0 0.0
  %5184 = vmatprep.subr.mxu0 0.0
  %5185 = vmatpush1.msra.mxu0 0.0
  %5186 = vmatprep.subr.mxu0 0.0
  %5187 = vmatpush1.msra.mxu0 0.0
  %5188 = vmatprep.subr.mxu0 0.0
  %5189 = vmatpush1.msra.mxu0 0.0
  %5190 = vmatprep.subr.mxu0 0.0
  %5191 = vmatpush1.msra.mxu0 0.0
  %5192 = vmatprep.subr.mxu0 0.0
  %5193 = vmatpush1.msra.mxu0 0.0
  %5194 = vmatprep.subr.mxu0 0.0
  %5195 = vmatpush1.msra.mxu0 0.0
  %5196 = vmatprep.subr.mxu0 0.0
  %5197 = vmatpush1.msra.mxu0 0.0
  %5198 = vmatprep.subr.mxu0 0.0
  %5199 = vmatpush1.msra.mxu0 0.0
  %5200 = vmatprep.subr.mxu0 0.0
  %5201 = vmatpush1.msra.mxu0 0.0
  %5202 = vmatprep.subr.mxu0 0.0
  %5203 = vmatpush1.msra.mxu0 0.0
  %5204 = vmatprep.subr.mxu0 0.0
  %5205 = vmatpush1.msra.mxu0 0.0
  %5206 = vmatprep.subr.mxu0 0.0
  %5207 = vmatpush1.msra.mxu0 0.0
  %5208 = vmatprep.subr.mxu0 0.0
  %5209 = vmatpush1.msra.mxu0 0.0
  %5210 = vmatprep.mubr.f32.mxu0 0.0
  %5211 = vmatmul.mubr.f32.gmra.mrb[0].mxu0 %v5074
  %v5212 = vpop.f32.mrb[0].mxu0
  %v5213 = vadd.f32 %v5143, %v5212
  %v5214 = vpop.f32.mrb[0].mxu0
  %5215 = vdwg.mxu0
  %5216 = vmatprep.subr.mxu0 0.0
  %5217 = vmatpush1.msra.mxu0 %v5066
  %5218 = vmatprep.subr.mxu0 0.0
  %5219 = vmatpush1.msra.mxu0 %v5067
  %5220 = vmatprep.subr.mxu0 0.0
  %5221 = vmatpush1.msra.mxu0 %v5068
  %5222 = vmatprep.subr.mxu0 0.0
  %5223 = vmatpush1.msra.mxu0 %v5069
  %5224 = vmatprep.subr.mxu0 0.0
  %5225 = vmatpush1.msra.mxu0 0.0
  %5226 = vmatprep.subr.mxu0 0.0
  %5227 = vmatpush1.msra.mxu0 0.0
  %5228 = vmatprep.subr.mxu0 0.0
  %5229 = vmatpush1.msra.mxu0 0.0
  %5230 = vmatprep.subr.mxu0 0.0
  %5231 = vmatpush1.msra.mxu0 0.0
  %5232 = vmatprep.subr.mxu0 0.0
  %5233 = vmatpush1.msra.mxu0 0.0
  %5234 = vmatprep.subr.mxu0 0.0
  %5235 = vmatpush1.msra.mxu0 0.0
  %5236 = vmatprep.subr.mxu0 0.0
  %5237 = vmatpush1.msra.mxu0 0.0
  %5238 = vmatprep.subr.mxu0 0.0
  %5239 = vmatpush1.msra.mxu0 0.0
  %5240 = vmatprep.subr.mxu0 0.0
  %5241 = vmatpush1.msra.mxu0 0.0
  %5242 = vmatprep.subr.mxu0 0.0
  %5243 = vmatpush1.msra.mxu0 0.0
  %5244 = vmatprep.subr.mxu0 0.0
  %5245 = vmatpush1.msra.mxu0 0.0
  %5246 = vmatprep.subr.mxu0 0.0
  %5247 = vmatpush1.msra.mxu0 0.0
  %5248 = vmatprep.subr.mxu0 0.0
  %5249 = vmatpush1.msra.mxu0 0.0
  %5250 = vmatprep.subr.mxu0 0.0
  %5251 = vmatpush1.msra.mxu0 0.0
  %5252 = vmatprep.subr.mxu0 0.0
  %5253 = vmatpush1.msra.mxu0 0.0
  %5254 = vmatprep.subr.mxu0 0.0
  %5255 = vmatpush1.msra.mxu0 0.0
  %5256 = vmatprep.subr.mxu0 0.0
  %5257 = vmatpush1.msra.mxu0 0.0
  %5258 = vmatprep.subr.mxu0 0.0
  %5259 = vmatpush1.msra.mxu0 0.0
  %5260 = vmatprep.subr.mxu0 0.0
  %5261 = vmatpush1.msra.mxu0 0.0
  %5262 = vmatprep.subr.mxu0 0.0
  %5263 = vmatpush1.msra.mxu0 0.0
  %5264 = vmatprep.subr.mxu0 0.0
  %5265 = vmatpush1.msra.mxu0 0.0
  %5266 = vmatprep.subr.mxu0 0.0
  %5267 = vmatpush1.msra.mxu0 0.0
  %5268 = vmatprep.subr.mxu0 0.0
  %5269 = vmatpush1.msra.mxu0 0.0
  %5270 = vmatprep.subr.mxu0 0.0
  %5271 = vmatpush1.msra.mxu0 0.0
  %5272 = vmatprep.subr.mxu0 0.0
  %5273 = vmatpush1.msra.mxu0 0.0
  %5274 = vmatprep.subr.mxu0 0.0
  %5275 = vmatpush1.msra.mxu0 0.0
  %5276 = vmatprep.subr.mxu0 0.0
  %5277 = vmatpush1.msra.mxu0 0.0
  %5278 = vmatprep.subr.mxu0 0.0
  %5279 = vmatpush1.msra.mxu0 0.0
  %5280 = vmatprep.mubr.f32.mxu0 0.0
  %5281 = vmatmul.mubr.f32.gmra.mrb[0].mxu0 %v5074
  %v5282 = vpop.f32.mrb[0].mxu0
  %v5283 = vadd.f32 0.0, %v5282
  %v5284 = vpop.f32.mrb[0].mxu0
  %5285 = vdwg.mxu0
  %v5286 = vadd.f32 %v5213, %v5283
  %v5288 = vlaneseq
  %v5289 = vshrl.u32 %v5288, 7
  %v5290 = vsub.s32 0, %v5289
  %v5291 = vrot.slane %v5072, %v5290
  %v5293 = vadd.f32 %v5286, %v5291
  %v5294 = vxor.u32 %v5293, 2147483648
  %v5295 = vmul.f32 %v5294, 1.442695
  %v5296 = vpow.pop %v5295
  %v5297 = vadd.f32 %v5296, 1.0
  %v5298 = vrcp.pop %v5297
  %v5299 = vmul.f32 1.0, %v5298
  %v5300 = vtanh.pop %v5293
  %v5301 = vmul.f32 %v5299, 0.0
  %5303 = vrot.lane.b32.xlu0 %v5300, 64
  %v5304 = vpop.permute.xlu0 %5303
  %v5306 = vmul.f32 %v5299, %v5304
  %5308 = vrot.lane.b32.xlu0 %v5306, 32
  %v5309 = vpop.permute.xlu0 %5308
  %v5311 = vadd.f32 %v5301, %v5309
  %v5312 = vtanh.pop %v5311
  %5314 = vrot.lane.b32.xlu0 %v5312, 64
  %v5315 = vpop.permute.xlu0 %5314
  %v5317 = vmul.f32 %v5299, %v5315
  %5319 = vrot.lane.b32.xlu0 %v5317, 32
  %v5320 = vpop.permute.xlu0 %5319
  %vm5321 = vcmask 15360
  %v5323 = vsel %vm5321, %v5055, 0
  %v5326 = vsel %vm5321, %v5056, 0
  %v5328 = vsel %vm188, %v5320, 0
  %5330 = vmatprep.subr.mxu0 0.0
  %5331 = vmatpush1.msra.mxu0 %v5328
  %5332 = vmatprep.subr.mxu0 0.0
  %5333 = vmatpush1.msra.mxu0 0.0
  %5334 = vmatprep.subr.mxu0 0.0
  %5335 = vmatpush1.msra.mxu0 0.0
  %5336 = vmatprep.subr.mxu0 0.0
  %5337 = vmatpush1.msra.mxu0 0.0
  %5338 = vmatprep.subr.mxu0 0.0
  %5339 = vmatpush1.msra.mxu0 0.0
  %5340 = vmatprep.subr.mxu0 0.0
  %5341 = vmatpush1.msra.mxu0 0.0
  %5342 = vmatprep.subr.mxu0 0.0
  %5343 = vmatpush1.msra.mxu0 0.0
  %5344 = vmatprep.subr.mxu0 0.0
  %5345 = vmatpush1.msra.mxu0 0.0
  %5346 = vmatprep.subr.mxu0 0.0
  %5347 = vmatpush1.msra.mxu0 0.0
  %5348 = vmatprep.subr.mxu0 0.0
  %5349 = vmatpush1.msra.mxu0 0.0
  %5350 = vmatprep.subr.mxu0 0.0
  %5351 = vmatpush1.msra.mxu0 0.0
  %5352 = vmatprep.subr.mxu0 0.0
  %5353 = vmatpush1.msra.mxu0 0.0
  %5354 = vmatprep.subr.mxu0 0.0
  %5355 = vmatpush1.msra.mxu0 0.0
  %5356 = vmatprep.subr.mxu0 0.0
  %5357 = vmatpush1.msra.mxu0 0.0
  %5358 = vmatprep.subr.mxu0 0.0
  %5359 = vmatpush1.msra.mxu0 0.0
  %5360 = vmatprep.subr.mxu0 0.0
  %5361 = vmatpush1.msra.mxu0 0.0
  %5362 = vmatprep.subr.mxu0 0.0
  %5363 = vmatpush1.msra.mxu0 0.0
  %5364 = vmatprep.subr.mxu0 0.0
  %5365 = vmatpush1.msra.mxu0 0.0
  %5366 = vmatprep.subr.mxu0 0.0
  %5367 = vmatpush1.msra.mxu0 0.0
  %5368 = vmatprep.subr.mxu0 0.0
  %5369 = vmatpush1.msra.mxu0 0.0
  %5370 = vmatprep.subr.mxu0 0.0
  %5371 = vmatpush1.msra.mxu0 0.0
  %5372 = vmatprep.subr.mxu0 0.0
  %5373 = vmatpush1.msra.mxu0 0.0
  %5374 = vmatprep.subr.mxu0 0.0
  %5375 = vmatpush1.msra.mxu0 0.0
  %5376 = vmatprep.subr.mxu0 0.0
  %5377 = vmatpush1.msra.mxu0 0.0
  %5378 = vmatprep.subr.mxu0 0.0
  %5379 = vmatpush1.msra.mxu0 0.0
  %5380 = vmatprep.subr.mxu0 0.0
  %5381 = vmatpush1.msra.mxu0 0.0
  %5382 = vmatprep.subr.mxu0 0.0
  %5383 = vmatpush1.msra.mxu0 0.0
  %5384 = vmatprep.subr.mxu0 0.0
  %5385 = vmatpush1.msra.mxu0 0.0
  %5386 = vmatprep.subr.mxu0 0.0
  %5387 = vmatpush1.msra.mxu0 0.0
  %5388 = vmatprep.subr.mxu0 0.0
  %5389 = vmatpush1.msra.mxu0 0.0
  %5390 = vmatprep.subr.mxu0 0.0
  %5391 = vmatpush1.msra.mxu0 0.0
  %5392 = vmatprep.subr.mxu0 0.0
  %5393 = vmatpush1.msra.mxu0 0.0
  %5394 = vmatprep.mubr.f32.mxu0 0.0
  %5395 = vmatmul.mubr.f32.gmra.mrb[0].mxu0 %v5323
  %v5396 = vpop.f32.mrb[0].mxu0
  %v5397 = vadd.f32 0.0, %v5396
  %v5398 = vpop.f32.mrb[0].mxu0
  %5399 = vmatprep.mubr.f32.mxu0 0.0
  %5400 = vmatmul.mubr.f32.gmra.mrb[0].mxu0 %v5326
  %v5401 = vpop.f32.mrb[0].mxu0
  %v5402 = vadd.f32 0.0, %v5401
  %v5403 = vpop.f32.mrb[0].mxu0
  %5404 = vdwg.mxu0
  %5407 = vrot.lane.b32.xlu0 %v5397, 32
  %v5408 = vpop.permute.xlu0 %5407
  %5409 = vrot.lane.b32.xlu0 %v5402, 32
  %v5410 = vpop.permute.xlu0 %5409
  %v5413 = vmul.f32 %v5053, %v5408
  %v5414 = vmul.f32 %v5054, %v5410
  %5417 = vrot.lane.b32.xlu0 %v5413, 96
  %v5418 = vpop.permute.xlu0 %5417
  %5419 = vrot.lane.b32.xlu0 %v5414, 96
  %v5420 = vpop.permute.xlu0 %5419
  %v5423 = vsel %vm638, %v5418, 0.0
  %5424 = vadd.xlane.f32.xlu0 %v5423
  %v5425 = vpop.xlane.xlu0 %5424
  %vm5426 = vcmask 254976
  %v5427 = vsel %vm5426, %v5420, 0.0
  %5428 = vadd.xlane.f32.xlu0 %v5427
  %v5429 = vpop.xlane.xlu0 %5428
  %vm5430 = vcmp.gt.f32.partialorder %v5055, 0.5
  %vm5431 = vcmp.gt.f32.partialorder %v5056, 0.5
  %v5432 = vsel %vm5430, %v5425, -1e+30
  %v5433 = vsel %vm5431, %v5429, -1e+30
  %v5434 = vsel %vm5321, %v5432, -inf
  %vm5435 = vcmask 9216
  %v5436 = vsel %vm5435, %v5433, -inf
  %v5437 = vmax.f32 %v5434, %v5436
  %v5438 = vrot.slane %v5437, 4
  %v5439 = vmax.f32 %v5437, %v5438
  %v5440 = vrot.slane %v5439, 2
  %v5441 = vmax.f32 %v5439, %v5440
  %v5442 = vrot.slane %v5441, 1
  %v5443 = vmax.f32 %v5441, %v5442
  %v5444 = vmul.f32 %v5055, %v5443
  %v5445 = vmul.f32 %v5056, %v5443
  %v5446 = vsel %vm5321, %v5444, 0.0
  %5447 = vadd.xlane.f32.xlu0 %v5446
  %v5448 = vpop.xlane.xlu0 %5447
  %v5449 = vsel %vm5435, %v5445, 0.0
  %5450 = vadd.xlane.f32.xlu0 %v5449
  %v5451 = vpop.xlane.xlu0 %5450
  %v5452 = vsub.f32 %v5425, %v5448
  %v5453 = vsub.f32 %v5429, %v5451
  %v5454 = vmul.f32 %v5452, 1.442695
  %v5455 = vpow.pop %v5454
  %v5456 = vmul.f32 %v5453, 1.442695
  %v5457 = vpow.pop %v5456
  %v5459 = vsel %vm178, %v5057, 0
  %v5462 = vsel %vm188, %v5457, 0
  %5464 = vmatprep.subr.mxu0 0.0
  %5465 = vmatpush1.msra.mxu0 %v5455
  %5466 = vmatprep.subr.mxu0 0.0
  %5467 = vmatpush1.msra.mxu0 %v5462
  %5468 = vmatprep.subr.mxu0 0.0
  %5469 = vmatpush1.msra.mxu0 0.0
  %5470 = vmatprep.subr.mxu0 0.0
  %5471 = vmatpush1.msra.mxu0 0.0
  %5472 = vmatprep.subr.mxu0 0.0
  %5473 = vmatpush1.msra.mxu0 0.0
  %5474 = vmatprep.subr.mxu0 0.0
  %5475 = vmatpush1.msra.mxu0 0.0
  %5476 = vmatprep.subr.mxu0 0.0
  %5477 = vmatpush1.msra.mxu0 0.0
  %5478 = vmatprep.subr.mxu0 0.0
  %5479 = vmatpush1.msra.mxu0 0.0
  %5480 = vmatprep.subr.mxu0 0.0
  %5481 = vmatpush1.msra.mxu0 0.0
  %5482 = vmatprep.subr.mxu0 0.0
  %5483 = vmatpush1.msra.mxu0 0.0
  %5484 = vmatprep.subr.mxu0 0.0
  %5485 = vmatpush1.msra.mxu0 0.0
  %5486 = vmatprep.subr.mxu0 0.0
  %5487 = vmatpush1.msra.mxu0 0.0
  %5488 = vmatprep.subr.mxu0 0.0
  %5489 = vmatpush1.msra.mxu0 0.0
  %5490 = vmatprep.subr.mxu0 0.0
  %5491 = vmatpush1.msra.mxu0 0.0
  %5492 = vmatprep.subr.mxu0 0.0
  %5493 = vmatpush1.msra.mxu0 0.0
  %5494 = vmatprep.subr.mxu0 0.0
  %5495 = vmatpush1.msra.mxu0 0.0
  %5496 = vmatprep.subr.mxu0 0.0
  %5497 = vmatpush1.msra.mxu0 0.0
  %5498 = vmatprep.subr.mxu0 0.0
  %5499 = vmatpush1.msra.mxu0 0.0
  %5500 = vmatprep.subr.mxu0 0.0
  %5501 = vmatpush1.msra.mxu0 0.0
  %5502 = vmatprep.subr.mxu0 0.0
  %5503 = vmatpush1.msra.mxu0 0.0
  %5504 = vmatprep.subr.mxu0 0.0
  %5505 = vmatpush1.msra.mxu0 0.0
  %5506 = vmatprep.subr.mxu0 0.0
  %5507 = vmatpush1.msra.mxu0 0.0
  %5508 = vmatprep.subr.mxu0 0.0
  %5509 = vmatpush1.msra.mxu0 0.0
  %5510 = vmatprep.subr.mxu0 0.0
  %5511 = vmatpush1.msra.mxu0 0.0
  %5512 = vmatprep.subr.mxu0 0.0
  %5513 = vmatpush1.msra.mxu0 0.0
  %5514 = vmatprep.subr.mxu0 0.0
  %5515 = vmatpush1.msra.mxu0 0.0
  %5516 = vmatprep.subr.mxu0 0.0
  %5517 = vmatpush1.msra.mxu0 0.0
  %5518 = vmatprep.subr.mxu0 0.0
  %5519 = vmatpush1.msra.mxu0 0.0
  %5520 = vmatprep.subr.mxu0 0.0
  %5521 = vmatpush1.msra.mxu0 0.0
  %5522 = vmatprep.subr.mxu0 0.0
  %5523 = vmatpush1.msra.mxu0 0.0
  %5524 = vmatprep.subr.mxu0 0.0
  %5525 = vmatpush1.msra.mxu0 0.0
  %5526 = vmatprep.subr.mxu0 0.0
  %5527 = vmatpush1.msra.mxu0 0.0
  %5528 = vmatprep.mubr.f32.mxu0 0.0
  %5529 = vmatmul.mubr.f32.gmra.mrb[0].mxu0 %v5459
  %v5530 = vpop.f32.mrb[0].mxu0
  %v5531 = vadd.f32 0.0, %v5530
  %v5532 = vpop.f32.mrb[0].mxu0
  %5533 = vdwg.mxu0
  %v5535 = vsel %vm188, %v5531, 0
  %5537 = vmatprep.subr.mxu0 0.0
  %5538 = vmatpush1.msra.mxu0 %v5535
  %5539 = vmatprep.subr.mxu0 0.0
  %5540 = vmatpush1.msra.mxu0 0.0
  %5541 = vmatprep.subr.mxu0 0.0
  %5542 = vmatpush1.msra.mxu0 0.0
  %5543 = vmatprep.subr.mxu0 0.0
  %5544 = vmatpush1.msra.mxu0 0.0
  %5545 = vmatprep.subr.mxu0 0.0
  %5546 = vmatpush1.msra.mxu0 0.0
  %5547 = vmatprep.subr.mxu0 0.0
  %5548 = vmatpush1.msra.mxu0 0.0
  %5549 = vmatprep.subr.mxu0 0.0
  %5550 = vmatpush1.msra.mxu0 0.0
  %5551 = vmatprep.subr.mxu0 0.0
  %5552 = vmatpush1.msra.mxu0 0.0
  %5553 = vmatprep.subr.mxu0 0.0
  %5554 = vmatpush1.msra.mxu0 0.0
  %5555 = vmatprep.subr.mxu0 0.0
  %5556 = vmatpush1.msra.mxu0 0.0
  %5557 = vmatprep.subr.mxu0 0.0
  %5558 = vmatpush1.msra.mxu0 0.0
  %5559 = vmatprep.subr.mxu0 0.0
  %5560 = vmatpush1.msra.mxu0 0.0
  %5561 = vmatprep.subr.mxu0 0.0
  %5562 = vmatpush1.msra.mxu0 0.0
  %5563 = vmatprep.subr.mxu0 0.0
  %5564 = vmatpush1.msra.mxu0 0.0
  %5565 = vmatprep.subr.mxu0 0.0
  %5566 = vmatpush1.msra.mxu0 0.0
  %5567 = vmatprep.subr.mxu0 0.0
  %5568 = vmatpush1.msra.mxu0 0.0
  %5569 = vmatprep.subr.mxu0 0.0
  %5570 = vmatpush1.msra.mxu0 0.0
  %5571 = vmatprep.subr.mxu0 0.0
  %5572 = vmatpush1.msra.mxu0 0.0
  %5573 = vmatprep.subr.mxu0 0.0
  %5574 = vmatpush1.msra.mxu0 0.0
  %5575 = vmatprep.subr.mxu0 0.0
  %5576 = vmatpush1.msra.mxu0 0.0
  %5577 = vmatprep.subr.mxu0 0.0
  %5578 = vmatpush1.msra.mxu0 0.0
  %5579 = vmatprep.subr.mxu0 0.0
  %5580 = vmatpush1.msra.mxu0 0.0
  %5581 = vmatprep.subr.mxu0 0.0
  %5582 = vmatpush1.msra.mxu0 0.0
  %5583 = vmatprep.subr.mxu0 0.0
  %5584 = vmatpush1.msra.mxu0 0.0
  %5585 = vmatprep.subr.mxu0 0.0
  %5586 = vmatpush1.msra.mxu0 0.0
  %5587 = vmatprep.subr.mxu0 0.0
  %5588 = vmatpush1.msra.mxu0 0.0
  %5589 = vmatprep.subr.mxu0 0.0
  %5590 = vmatpush1.msra.mxu0 0.0
  %5591 = vmatprep.subr.mxu0 0.0
  %5592 = vmatpush1.msra.mxu0 0.0
  %5593 = vmatprep.subr.mxu0 0.0
  %5594 = vmatpush1.msra.mxu0 0.0
  %5595 = vmatprep.subr.mxu0 0.0
  %5596 = vmatpush1.msra.mxu0 0.0
  %5597 = vmatprep.subr.mxu0 0.0
  %5598 = vmatpush1.msra.mxu0 0.0
  %5599 = vmatprep.subr.mxu0 0.0
  %5600 = vmatpush1.msra.mxu0 0.0
  %5601 = vmatprep.mubr.f32.mxu0 0.0
  %5602 = vmatmul.mubr.f32.gmra.mrb[0].mxu0 %v5323
  %v5603 = vpop.f32.mrb[0].mxu0
  %v5604 = vadd.f32 0.0, %v5603
  %v5605 = vpop.f32.mrb[0].mxu0
  %5606 = vmatprep.mubr.f32.mxu0 0.0
  %5607 = vmatmul.mubr.f32.gmra.mrb[0].mxu0 %v5326
  %v5608 = vpop.f32.mrb[0].mxu0
  %v5609 = vadd.f32 0.0, %v5608
  %v5610 = vpop.f32.mrb[0].mxu0
  %5611 = vdwg.mxu0
  %v5612 = vrcp.pop %v5604
  %v5613 = vmul.f32 %v5455, %v5612
  %v5614 = vrcp.pop %v5609
  %v5615 = vmul.f32 %v5457, %v5614
  %5617 = vset.pattern.permute.xlu0 0
  %5618 = vperm.xlu0 %5617, %v5613
  %v5619 = vpop.permute.xlu0 %5618
  %5622 = vset.pattern.permute.xlu0 0
  %5623 = vperm.xlu0 %5622, %v5615
  %v5624 = vpop.permute.xlu0 %5623
  %v5626 = vmul.f32 %v5619, %v5053
  %v5627 = vmul.f32 %v5624, %v5054
  %5630 = vrot.lane.b32.xlu0 %v5626, 96
  %v5631 = vpop.permute.xlu0 %5630
  %5632 = vrot.lane.b32.xlu0 %v5627, 96
  %v5633 = vpop.permute.xlu0 %5632
  %v5635 = vsel %vm188, %v5633, 0
  %5637 = vmatprep.subr.mxu0 0.0
  %5638 = vmatpush1.msra.mxu0 %v5631
  %5639 = vmatprep.subr.mxu0 0.0
  %5640 = vmatpush1.msra.mxu0 %v5635
  %5641 = vmatprep.subr.mxu0 0.0
  %5642 = vmatpush1.msra.mxu0 0.0
  %5643 = vmatprep.subr.mxu0 0.0
  %5644 = vmatpush1.msra.mxu0 0.0
  %5645 = vmatprep.subr.mxu0 0.0
  %5646 = vmatpush1.msra.mxu0 0.0
  %5647 = vmatprep.subr.mxu0 0.0
  %5648 = vmatpush1.msra.mxu0 0.0
  %5649 = vmatprep.subr.mxu0 0.0
  %5650 = vmatpush1.msra.mxu0 0.0
  %5651 = vmatprep.subr.mxu0 0.0
  %5652 = vmatpush1.msra.mxu0 0.0
  %5653 = vmatprep.subr.mxu0 0.0
  %5654 = vmatpush1.msra.mxu0 0.0
  %5655 = vmatprep.subr.mxu0 0.0
  %5656 = vmatpush1.msra.mxu0 0.0
  %5657 = vmatprep.subr.mxu0 0.0
  %5658 = vmatpush1.msra.mxu0 0.0
  %5659 = vmatprep.subr.mxu0 0.0
  %5660 = vmatpush1.msra.mxu0 0.0
  %5661 = vmatprep.subr.mxu0 0.0
  %5662 = vmatpush1.msra.mxu0 0.0
  %5663 = vmatprep.subr.mxu0 0.0
  %5664 = vmatpush1.msra.mxu0 0.0
  %5665 = vmatprep.subr.mxu0 0.0
  %5666 = vmatpush1.msra.mxu0 0.0
  %5667 = vmatprep.subr.mxu0 0.0
  %5668 = vmatpush1.msra.mxu0 0.0
  %5669 = vmatprep.subr.mxu0 0.0
  %5670 = vmatpush1.msra.mxu0 0.0
  %5671 = vmatprep.subr.mxu0 0.0
  %5672 = vmatpush1.msra.mxu0 0.0
  %5673 = vmatprep.subr.mxu0 0.0
  %5674 = vmatpush1.msra.mxu0 0.0
  %5675 = vmatprep.subr.mxu0 0.0
  %5676 = vmatpush1.msra.mxu0 0.0
  %5677 = vmatprep.subr.mxu0 0.0
  %5678 = vmatpush1.msra.mxu0 0.0
  %5679 = vmatprep.subr.mxu0 0.0
  %5680 = vmatpush1.msra.mxu0 0.0
  %5681 = vmatprep.subr.mxu0 0.0
  %5682 = vmatpush1.msra.mxu0 0.0
  %5683 = vmatprep.subr.mxu0 0.0
  %5684 = vmatpush1.msra.mxu0 0.0
  %5685 = vmatprep.subr.mxu0 0.0
  %5686 = vmatpush1.msra.mxu0 0.0
  %5687 = vmatprep.subr.mxu0 0.0
  %5688 = vmatpush1.msra.mxu0 0.0
  %5689 = vmatprep.subr.mxu0 0.0
  %5690 = vmatpush1.msra.mxu0 0.0
  %5691 = vmatprep.subr.mxu0 0.0
  %5692 = vmatpush1.msra.mxu0 0.0
  %5693 = vmatprep.subr.mxu0 0.0
  %5694 = vmatpush1.msra.mxu0 0.0
  %5695 = vmatprep.subr.mxu0 0.0
  %5696 = vmatpush1.msra.mxu0 0.0
  %5697 = vmatprep.subr.mxu0 0.0
  %5698 = vmatpush1.msra.mxu0 0.0
  %5699 = vmatprep.subr.mxu0 0.0
  %5700 = vmatpush1.msra.mxu0 0.0
  %5701 = vmatprep.mubr.f32.mxu0 0.0
  %5702 = vmatmul.mubr.f32.gmra.mrb[0].mxu0 %v5459
  %v5703 = vpop.f32.mrb[0].mxu0
  %v5704 = vadd.f32 0.0, %v5703
  %v5705 = vpop.f32.mrb[0].mxu0
  %5706 = vdwg.mxu0
  %v5708 = vsel %vm638, %v5704, 0
  %5710 = vmatprep.subr.mxu0 0.0
  %5711 = vmatpush1.msra.mxu0 %v5062
  %5712 = vmatprep.subr.mxu0 0.0
  %5713 = vmatpush1.msra.mxu0 %v5063
  %5714 = vmatprep.subr.mxu0 0.0
  %5715 = vmatpush1.msra.mxu0 %v5064
  %5716 = vmatprep.subr.mxu0 0.0
  %5717 = vmatpush1.msra.mxu0 %v5065
  %5718 = vmatprep.subr.mxu0 0.0
  %5719 = vmatpush1.msra.mxu0 0.0
  %5720 = vmatprep.subr.mxu0 0.0
  %5721 = vmatpush1.msra.mxu0 0.0
  %5722 = vmatprep.subr.mxu0 0.0
  %5723 = vmatpush1.msra.mxu0 0.0
  %5724 = vmatprep.subr.mxu0 0.0
  %5725 = vmatpush1.msra.mxu0 0.0
  %5726 = vmatprep.subr.mxu0 0.0
  %5727 = vmatpush1.msra.mxu0 0.0
  %5728 = vmatprep.subr.mxu0 0.0
  %5729 = vmatpush1.msra.mxu0 0.0
  %5730 = vmatprep.subr.mxu0 0.0
  %5731 = vmatpush1.msra.mxu0 0.0
  %5732 = vmatprep.subr.mxu0 0.0
  %5733 = vmatpush1.msra.mxu0 0.0
  %5734 = vmatprep.subr.mxu0 0.0
  %5735 = vmatpush1.msra.mxu0 0.0
  %5736 = vmatprep.subr.mxu0 0.0
  %5737 = vmatpush1.msra.mxu0 0.0
  %5738 = vmatprep.subr.mxu0 0.0
  %5739 = vmatpush1.msra.mxu0 0.0
  %5740 = vmatprep.subr.mxu0 0.0
  %5741 = vmatpush1.msra.mxu0 0.0
  %5742 = vmatprep.subr.mxu0 0.0
  %5743 = vmatpush1.msra.mxu0 0.0
  %5744 = vmatprep.subr.mxu0 0.0
  %5745 = vmatpush1.msra.mxu0 0.0
  %5746 = vmatprep.subr.mxu0 0.0
  %5747 = vmatpush1.msra.mxu0 0.0
  %5748 = vmatprep.subr.mxu0 0.0
  %5749 = vmatpush1.msra.mxu0 0.0
  %5750 = vmatprep.subr.mxu0 0.0
  %5751 = vmatpush1.msra.mxu0 0.0
  %5752 = vmatprep.subr.mxu0 0.0
  %5753 = vmatpush1.msra.mxu0 0.0
  %5754 = vmatprep.subr.mxu0 0.0
  %5755 = vmatpush1.msra.mxu0 0.0
  %5756 = vmatprep.subr.mxu0 0.0
  %5757 = vmatpush1.msra.mxu0 0.0
  %5758 = vmatprep.subr.mxu0 0.0
  %5759 = vmatpush1.msra.mxu0 0.0
  %5760 = vmatprep.subr.mxu0 0.0
  %5761 = vmatpush1.msra.mxu0 0.0
  %5762 = vmatprep.subr.mxu0 0.0
  %5763 = vmatpush1.msra.mxu0 0.0
  %5764 = vmatprep.subr.mxu0 0.0
  %5765 = vmatpush1.msra.mxu0 0.0
  %5766 = vmatprep.subr.mxu0 0.0
  %5767 = vmatpush1.msra.mxu0 0.0
  %5768 = vmatprep.subr.mxu0 0.0
  %5769 = vmatpush1.msra.mxu0 0.0
  %5770 = vmatprep.subr.mxu0 0.0
  %5771 = vmatpush1.msra.mxu0 0.0
  %5772 = vmatprep.subr.mxu0 0.0
  %5773 = vmatpush1.msra.mxu0 0.0
  %5774 = vmatprep.mubr.f32.mxu0 0.0
  %5775 = vmatmul.mubr.f32.gmra.mrb[0].mxu0 %v5708
  %v5776 = vpop.f32.mrb[0].mxu0
  %v5777 = vadd.f32 0.0, %v5776
  %v5778 = vpop.f32.mrb[0].mxu0
  %5779 = vdwg.mxu0
  %v5780 = vsel %vm638, %v5320, 0
  %5782 = vmatprep.subr.mxu0 0.0
  %5783 = vmatpush1.msra.mxu0 %v5058
  %5784 = vmatprep.subr.mxu0 0.0
  %5785 = vmatpush1.msra.mxu0 %v5059
  %5786 = vmatprep.subr.mxu0 0.0
  %5787 = vmatpush1.msra.mxu0 %v5060
  %5788 = vmatprep.subr.mxu0 0.0
  %5789 = vmatpush1.msra.mxu0 %v5061
  %5790 = vmatprep.subr.mxu0 0.0
  %5791 = vmatpush1.msra.mxu0 0.0
  %5792 = vmatprep.subr.mxu0 0.0
  %5793 = vmatpush1.msra.mxu0 0.0
  %5794 = vmatprep.subr.mxu0 0.0
  %5795 = vmatpush1.msra.mxu0 0.0
  %5796 = vmatprep.subr.mxu0 0.0
  %5797 = vmatpush1.msra.mxu0 0.0
  %5798 = vmatprep.subr.mxu0 0.0
  %5799 = vmatpush1.msra.mxu0 0.0
  %5800 = vmatprep.subr.mxu0 0.0
  %5801 = vmatpush1.msra.mxu0 0.0
  %5802 = vmatprep.subr.mxu0 0.0
  %5803 = vmatpush1.msra.mxu0 0.0
  %5804 = vmatprep.subr.mxu0 0.0
  %5805 = vmatpush1.msra.mxu0 0.0
  %5806 = vmatprep.subr.mxu0 0.0
  %5807 = vmatpush1.msra.mxu0 0.0
  %5808 = vmatprep.subr.mxu0 0.0
  %5809 = vmatpush1.msra.mxu0 0.0
  %5810 = vmatprep.subr.mxu0 0.0
  %5811 = vmatpush1.msra.mxu0 0.0
  %5812 = vmatprep.subr.mxu0 0.0
  %5813 = vmatpush1.msra.mxu0 0.0
  %5814 = vmatprep.subr.mxu0 0.0
  %5815 = vmatpush1.msra.mxu0 0.0
  %5816 = vmatprep.subr.mxu0 0.0
  %5817 = vmatpush1.msra.mxu0 0.0
  %5818 = vmatprep.subr.mxu0 0.0
  %5819 = vmatpush1.msra.mxu0 0.0
  %5820 = vmatprep.subr.mxu0 0.0
  %5821 = vmatpush1.msra.mxu0 0.0
  %5822 = vmatprep.subr.mxu0 0.0
  %5823 = vmatpush1.msra.mxu0 0.0
  %5824 = vmatprep.subr.mxu0 0.0
  %5825 = vmatpush1.msra.mxu0 0.0
  %5826 = vmatprep.subr.mxu0 0.0
  %5827 = vmatpush1.msra.mxu0 0.0
  %5828 = vmatprep.subr.mxu0 0.0
  %5829 = vmatpush1.msra.mxu0 0.0
  %5830 = vmatprep.subr.mxu0 0.0
  %5831 = vmatpush1.msra.mxu0 0.0
  %5832 = vmatprep.subr.mxu0 0.0
  %5833 = vmatpush1.msra.mxu0 0.0
  %5834 = vmatprep.subr.mxu0 0.0
  %5835 = vmatpush1.msra.mxu0 0.0
  %5836 = vmatprep.subr.mxu0 0.0
  %5837 = vmatpush1.msra.mxu0 0.0
  %5838 = vmatprep.subr.mxu0 0.0
  %5839 = vmatpush1.msra.mxu0 0.0
  %5840 = vmatprep.subr.mxu0 0.0
  %5841 = vmatpush1.msra.mxu0 0.0
  %5842 = vmatprep.subr.mxu0 0.0
  %5843 = vmatpush1.msra.mxu0 0.0
  %5844 = vmatprep.subr.mxu0 0.0
  %5845 = vmatpush1.msra.mxu0 0.0
  %5846 = vmatprep.mubr.f32.mxu0 0.0
  %5847 = vmatmul.mubr.f32.gmra.mrb[0].mxu0 %v5780
  %v5848 = vpop.f32.mrb[0].mxu0
  %v5849 = vadd.f32 %v5777, %v5848
  %v5850 = vpop.f32.mrb[0].mxu0
  %5851 = vdwg.mxu0
  %5852 = vmatprep.subr.mxu0 0.0
  %5853 = vmatpush1.msra.mxu0 %v5066
  %5854 = vmatprep.subr.mxu0 0.0
  %5855 = vmatpush1.msra.mxu0 %v5067
  %5856 = vmatprep.subr.mxu0 0.0
  %5857 = vmatpush1.msra.mxu0 %v5068
  %5858 = vmatprep.subr.mxu0 0.0
  %5859 = vmatpush1.msra.mxu0 %v5069
  %5860 = vmatprep.subr.mxu0 0.0
  %5861 = vmatpush1.msra.mxu0 0.0
  %5862 = vmatprep.subr.mxu0 0.0
  %5863 = vmatpush1.msra.mxu0 0.0
  %5864 = vmatprep.subr.mxu0 0.0
  %5865 = vmatpush1.msra.mxu0 0.0
  %5866 = vmatprep.subr.mxu0 0.0
  %5867 = vmatpush1.msra.mxu0 0.0
  %5868 = vmatprep.subr.mxu0 0.0
  %5869 = vmatpush1.msra.mxu0 0.0
  %5870 = vmatprep.subr.mxu0 0.0
  %5871 = vmatpush1.msra.mxu0 0.0
  %5872 = vmatprep.subr.mxu0 0.0
  %5873 = vmatpush1.msra.mxu0 0.0
  %5874 = vmatprep.subr.mxu0 0.0
  %5875 = vmatpush1.msra.mxu0 0.0
  %5876 = vmatprep.subr.mxu0 0.0
  %5877 = vmatpush1.msra.mxu0 0.0
  %5878 = vmatprep.subr.mxu0 0.0
  %5879 = vmatpush1.msra.mxu0 0.0
  %5880 = vmatprep.subr.mxu0 0.0
  %5881 = vmatpush1.msra.mxu0 0.0
  %5882 = vmatprep.subr.mxu0 0.0
  %5883 = vmatpush1.msra.mxu0 0.0
  %5884 = vmatprep.subr.mxu0 0.0
  %5885 = vmatpush1.msra.mxu0 0.0
  %5886 = vmatprep.subr.mxu0 0.0
  %5887 = vmatpush1.msra.mxu0 0.0
  %5888 = vmatprep.subr.mxu0 0.0
  %5889 = vmatpush1.msra.mxu0 0.0
  %5890 = vmatprep.subr.mxu0 0.0
  %5891 = vmatpush1.msra.mxu0 0.0
  %5892 = vmatprep.subr.mxu0 0.0
  %5893 = vmatpush1.msra.mxu0 0.0
  %5894 = vmatprep.subr.mxu0 0.0
  %5895 = vmatpush1.msra.mxu0 0.0
  %5896 = vmatprep.subr.mxu0 0.0
  %5897 = vmatpush1.msra.mxu0 0.0
  %5898 = vmatprep.subr.mxu0 0.0
  %5899 = vmatpush1.msra.mxu0 0.0
  %5900 = vmatprep.subr.mxu0 0.0
  %5901 = vmatpush1.msra.mxu0 0.0
  %5902 = vmatprep.subr.mxu0 0.0
  %5903 = vmatpush1.msra.mxu0 0.0
  %5904 = vmatprep.subr.mxu0 0.0
  %5905 = vmatpush1.msra.mxu0 0.0
  %5906 = vmatprep.subr.mxu0 0.0
  %5907 = vmatpush1.msra.mxu0 0.0
  %5908 = vmatprep.subr.mxu0 0.0
  %5909 = vmatpush1.msra.mxu0 0.0
  %5910 = vmatprep.subr.mxu0 0.0
  %5911 = vmatpush1.msra.mxu0 0.0
  %5912 = vmatprep.subr.mxu0 0.0
  %5913 = vmatpush1.msra.mxu0 0.0
  %5914 = vmatprep.subr.mxu0 0.0
  %5915 = vmatpush1.msra.mxu0 0.0
  %5916 = vmatprep.mubr.f32.mxu0 0.0
  %5917 = vmatmul.mubr.f32.gmra.mrb[0].mxu0 %v5780
  %v5918 = vpop.f32.mrb[0].mxu0
  %v5919 = vadd.f32 0.0, %v5918
  %v5920 = vpop.f32.mrb[0].mxu0
  %5921 = vdwg.mxu0
  %v5922 = vadd.f32 %v5849, %v5919
  %v5923 = vadd.f32 %v5922, %v5291
  %v5924 = vxor.u32 %v5923, 2147483648
  %v5925 = vmul.f32 %v5924, 1.442695
  %v5926 = vpow.pop %v5925
  %v5927 = vadd.f32 %v5926, 1.0
  %v5928 = vrcp.pop %v5927
  %v5929 = vmul.f32 1.0, %v5928
  %v5930 = vtanh.pop %v5923
  %v5931 = vmul.f32 %v5929, %v5311
  %5933 = vrot.lane.b32.xlu0 %v5930, 64
  %v5934 = vpop.permute.xlu0 %5933
  %v5936 = vmul.f32 %v5929, %v5934
  %5938 = vrot.lane.b32.xlu0 %v5936, 32
  %v5939 = vpop.permute.xlu0 %5938
  %v5941 = vadd.f32 %v5931, %v5939
  %v5942 = vtanh.pop %v5941
  %5944 = vrot.lane.b32.xlu0 %v5942, 64
  %v5945 = vpop.permute.xlu0 %5944
  %v5947 = vmul.f32 %v5929, %v5945
  %5949 = vrot.lane.b32.xlu0 %v5947, 32
  %v5950 = vpop.permute.xlu0 %5949
  %v5951 = vsel %vm188, %v5950, 0
  %5953 = vmatprep.subr.mxu0 0.0
  %5954 = vmatpush1.msra.mxu0 %v5951
  %5955 = vmatprep.subr.mxu0 0.0
  %5956 = vmatpush1.msra.mxu0 0.0
  %5957 = vmatprep.subr.mxu0 0.0
  %5958 = vmatpush1.msra.mxu0 0.0
  %5959 = vmatprep.subr.mxu0 0.0
  %5960 = vmatpush1.msra.mxu0 0.0
  %5961 = vmatprep.subr.mxu0 0.0
  %5962 = vmatpush1.msra.mxu0 0.0
  %5963 = vmatprep.subr.mxu0 0.0
  %5964 = vmatpush1.msra.mxu0 0.0
  %5965 = vmatprep.subr.mxu0 0.0
  %5966 = vmatpush1.msra.mxu0 0.0
  %5967 = vmatprep.subr.mxu0 0.0
  %5968 = vmatpush1.msra.mxu0 0.0
  %5969 = vmatprep.subr.mxu0 0.0
  %5970 = vmatpush1.msra.mxu0 0.0
  %5971 = vmatprep.subr.mxu0 0.0
  %5972 = vmatpush1.msra.mxu0 0.0
  %5973 = vmatprep.subr.mxu0 0.0
  %5974 = vmatpush1.msra.mxu0 0.0
  %5975 = vmatprep.subr.mxu0 0.0
  %5976 = vmatpush1.msra.mxu0 0.0
  %5977 = vmatprep.subr.mxu0 0.0
  %5978 = vmatpush1.msra.mxu0 0.0
  %5979 = vmatprep.subr.mxu0 0.0
  %5980 = vmatpush1.msra.mxu0 0.0
  %5981 = vmatprep.subr.mxu0 0.0
  %5982 = vmatpush1.msra.mxu0 0.0
  %5983 = vmatprep.subr.mxu0 0.0
  %5984 = vmatpush1.msra.mxu0 0.0
  %5985 = vmatprep.subr.mxu0 0.0
  %5986 = vmatpush1.msra.mxu0 0.0
  %5987 = vmatprep.subr.mxu0 0.0
  %5988 = vmatpush1.msra.mxu0 0.0
  %5989 = vmatprep.subr.mxu0 0.0
  %5990 = vmatpush1.msra.mxu0 0.0
  %5991 = vmatprep.subr.mxu0 0.0
  %5992 = vmatpush1.msra.mxu0 0.0
  %5993 = vmatprep.subr.mxu0 0.0
  %5994 = vmatpush1.msra.mxu0 0.0
  %5995 = vmatprep.subr.mxu0 0.0
  %5996 = vmatpush1.msra.mxu0 0.0
  %5997 = vmatprep.subr.mxu0 0.0
  %5998 = vmatpush1.msra.mxu0 0.0
  %5999 = vmatprep.subr.mxu0 0.0
  %6000 = vmatpush1.msra.mxu0 0.0
  %6001 = vmatprep.subr.mxu0 0.0
  %6002 = vmatpush1.msra.mxu0 0.0
  %6003 = vmatprep.subr.mxu0 0.0
  %6004 = vmatpush1.msra.mxu0 0.0
  %6005 = vmatprep.subr.mxu0 0.0
  %6006 = vmatpush1.msra.mxu0 0.0
  %6007 = vmatprep.subr.mxu0 0.0
  %6008 = vmatpush1.msra.mxu0 0.0
  %6009 = vmatprep.subr.mxu0 0.0
  %6010 = vmatpush1.msra.mxu0 0.0
  %6011 = vmatprep.subr.mxu0 0.0
  %6012 = vmatpush1.msra.mxu0 0.0
  %6013 = vmatprep.subr.mxu0 0.0
  %6014 = vmatpush1.msra.mxu0 0.0
  %6015 = vmatprep.subr.mxu0 0.0
  %6016 = vmatpush1.msra.mxu0 0.0
  %6017 = vmatprep.mubr.f32.mxu0 0.0
  %6018 = vmatmul.mubr.f32.gmra.mrb[0].mxu0 %v5323
  %v6019 = vpop.f32.mrb[0].mxu0
  %v6020 = vadd.f32 0.0, %v6019
  %v6021 = vpop.f32.mrb[0].mxu0
  %6022 = vmatprep.mubr.f32.mxu0 0.0
  %6023 = vmatmul.mubr.f32.gmra.mrb[0].mxu0 %v5326
  %v6024 = vpop.f32.mrb[0].mxu0
  %v6025 = vadd.f32 0.0, %v6024
  %v6026 = vpop.f32.mrb[0].mxu0
  %6027 = vdwg.mxu0
  %6030 = vrot.lane.b32.xlu0 %v6020, 32
  %v6031 = vpop.permute.xlu0 %6030
  %6032 = vrot.lane.b32.xlu0 %v6025, 32
  %v6033 = vpop.permute.xlu0 %6032
  %v6036 = vmul.f32 %v5053, %v6031
  %v6037 = vmul.f32 %v5054, %v6033
  %6040 = vrot.lane.b32.xlu0 %v6036, 96
  %v6041 = vpop.permute.xlu0 %6040
  %6042 = vrot.lane.b32.xlu0 %v6037, 96
  %v6043 = vpop.permute.xlu0 %6042
  %v6046 = vsel %vm638, %v6041, 0.0
  %6047 = vadd.xlane.f32.xlu0 %v6046
  %v6048 = vpop.xlane.xlu0 %6047
  %v6049 = vsel %vm5426, %v6043, 0.0
  %6050 = vadd.xlane.f32.xlu0 %v6049
  %v6051 = vpop.xlane.xlu0 %6050
  %v6052 = vsel %vm5430, %v6048, -1e+30
  %v6053 = vsel %vm5431, %v6051, -1e+30
  %v6054 = vsel %vm5321, %v6052, -inf
  %v6055 = vsel %vm5435, %v6053, -inf
  %v6056 = vmax.f32 %v6054, %v6055
  %v6057 = vrot.slane %v6056, 4
  %v6058 = vmax.f32 %v6056, %v6057
  %v6059 = vrot.slane %v6058, 2
  %v6060 = vmax.f32 %v6058, %v6059
  %v6061 = vrot.slane %v6060, 1
  %v6062 = vmax.f32 %v6060, %v6061
  %v6063 = vmul.f32 %v5055, %v6062
  %v6064 = vmul.f32 %v5056, %v6062
  %v6065 = vsel %vm5321, %v6063, 0.0
  %6066 = vadd.xlane.f32.xlu0 %v6065
  %v6067 = vpop.xlane.xlu0 %6066
  %v6068 = vsel %vm5435, %v6064, 0.0
  %6069 = vadd.xlane.f32.xlu0 %v6068
  %v6070 = vpop.xlane.xlu0 %6069
  %v6071 = vsub.f32 %v6048, %v6067
  %v6072 = vsub.f32 %v6051, %v6070
  %v6073 = vmul.f32 %v6071, 1.442695
  %v6074 = vpow.pop %v6073
  %v6075 = vmul.f32 %v6072, 1.442695
  %v6076 = vpow.pop %v6075
  %v6078 = vsel %vm188, %v6076, 0
  %6080 = vmatprep.subr.mxu0 0.0
  %6081 = vmatpush1.msra.mxu0 %v6074
  %6082 = vmatprep.subr.mxu0 0.0
  %6083 = vmatpush1.msra.mxu0 %v6078
  %6084 = vmatprep.subr.mxu0 0.0
  %6085 = vmatpush1.msra.mxu0 0.0
  %6086 = vmatprep.subr.mxu0 0.0
  %6087 = vmatpush1.msra.mxu0 0.0
  %6088 = vmatprep.subr.mxu0 0.0
  %6089 = vmatpush1.msra.mxu0 0.0
  %6090 = vmatprep.subr.mxu0 0.0
  %6091 = vmatpush1.msra.mxu0 0.0
  %6092 = vmatprep.subr.mxu0 0.0
  %6093 = vmatpush1.msra.mxu0 0.0
  %6094 = vmatprep.subr.mxu0 0.0
  %6095 = vmatpush1.msra.mxu0 0.0
  %6096 = vmatprep.subr.mxu0 0.0
  %6097 = vmatpush1.msra.mxu0 0.0
  %6098 = vmatprep.subr.mxu0 0.0
  %6099 = vmatpush1.msra.mxu0 0.0
  %6100 = vmatprep.subr.mxu0 0.0
  %6101 = vmatpush1.msra.mxu0 0.0
  %6102 = vmatprep.subr.mxu0 0.0
  %6103 = vmatpush1.msra.mxu0 0.0
  %6104 = vmatprep.subr.mxu0 0.0
  %6105 = vmatpush1.msra.mxu0 0.0
  %6106 = vmatprep.subr.mxu0 0.0
  %6107 = vmatpush1.msra.mxu0 0.0
  %6108 = vmatprep.subr.mxu0 0.0
  %6109 = vmatpush1.msra.mxu0 0.0
  %6110 = vmatprep.subr.mxu0 0.0
  %6111 = vmatpush1.msra.mxu0 0.0
  %6112 = vmatprep.subr.mxu0 0.0
  %6113 = vmatpush1.msra.mxu0 0.0
  %6114 = vmatprep.subr.mxu0 0.0
  %6115 = vmatpush1.msra.mxu0 0.0
  %6116 = vmatprep.subr.mxu0 0.0
  %6117 = vmatpush1.msra.mxu0 0.0
  %6118 = vmatprep.subr.mxu0 0.0
  %6119 = vmatpush1.msra.mxu0 0.0
  %6120 = vmatprep.subr.mxu0 0.0
  %6121 = vmatpush1.msra.mxu0 0.0
  %6122 = vmatprep.subr.mxu0 0.0
  %6123 = vmatpush1.msra.mxu0 0.0
  %6124 = vmatprep.subr.mxu0 0.0
  %6125 = vmatpush1.msra.mxu0 0.0
  %6126 = vmatprep.subr.mxu0 0.0
  %6127 = vmatpush1.msra.mxu0 0.0
  %6128 = vmatprep.subr.mxu0 0.0
  %6129 = vmatpush1.msra.mxu0 0.0
  %6130 = vmatprep.subr.mxu0 0.0
  %6131 = vmatpush1.msra.mxu0 0.0
  %6132 = vmatprep.subr.mxu0 0.0
  %6133 = vmatpush1.msra.mxu0 0.0
  %6134 = vmatprep.subr.mxu0 0.0
  %6135 = vmatpush1.msra.mxu0 0.0
  %6136 = vmatprep.subr.mxu0 0.0
  %6137 = vmatpush1.msra.mxu0 0.0
  %6138 = vmatprep.subr.mxu0 0.0
  %6139 = vmatpush1.msra.mxu0 0.0
  %6140 = vmatprep.subr.mxu0 0.0
  %6141 = vmatpush1.msra.mxu0 0.0
  %6142 = vmatprep.subr.mxu0 0.0
  %6143 = vmatpush1.msra.mxu0 0.0
  %6144 = vmatprep.mubr.f32.mxu0 0.0
  %6145 = vmatmul.mubr.f32.gmra.mrb[0].mxu0 %v5459
  %v6146 = vpop.f32.mrb[0].mxu0
  %v6147 = vadd.f32 0.0, %v6146
  %v6148 = vpop.f32.mrb[0].mxu0
  %6149 = vdwg.mxu0
  %v6151 = vsel %vm188, %v6147, 0
  %6153 = vmatprep.subr.mxu0 0.0
  %6154 = vmatpush1.msra.mxu0 %v6151
  %6155 = vmatprep.subr.mxu0 0.0
  %6156 = vmatpush1.msra.mxu0 0.0
  %6157 = vmatprep.subr.mxu0 0.0
  %6158 = vmatpush1.msra.mxu0 0.0
  %6159 = vmatprep.subr.mxu0 0.0
  %6160 = vmatpush1.msra.mxu0 0.0
  %6161 = vmatprep.subr.mxu0 0.0
  %6162 = vmatpush1.msra.mxu0 0.0
  %6163 = vmatprep.subr.mxu0 0.0
  %6164 = vmatpush1.msra.mxu0 0.0
  %6165 = vmatprep.subr.mxu0 0.0
  %6166 = vmatpush1.msra.mxu0 0.0
  %6167 = vmatprep.subr.mxu0 0.0
  %6168 = vmatpush1.msra.mxu0 0.0
  %6169 = vmatprep.subr.mxu0 0.0
  %6170 = vmatpush1.msra.mxu0 0.0
  %6171 = vmatprep.subr.mxu0 0.0
  %6172 = vmatpush1.msra.mxu0 0.0
  %6173 = vmatprep.subr.mxu0 0.0
  %6174 = vmatpush1.msra.mxu0 0.0
  %6175 = vmatprep.subr.mxu0 0.0
  %6176 = vmatpush1.msra.mxu0 0.0
  %6177 = vmatprep.subr.mxu0 0.0
  %6178 = vmatpush1.msra.mxu0 0.0
  %6179 = vmatprep.subr.mxu0 0.0
  %6180 = vmatpush1.msra.mxu0 0.0
  %6181 = vmatprep.subr.mxu0 0.0
  %6182 = vmatpush1.msra.mxu0 0.0
  %6183 = vmatprep.subr.mxu0 0.0
  %6184 = vmatpush1.msra.mxu0 0.0
  %6185 = vmatprep.subr.mxu0 0.0
  %6186 = vmatpush1.msra.mxu0 0.0
  %6187 = vmatprep.subr.mxu0 0.0
  %6188 = vmatpush1.msra.mxu0 0.0
  %6189 = vmatprep.subr.mxu0 0.0
  %6190 = vmatpush1.msra.mxu0 0.0
  %6191 = vmatprep.subr.mxu0 0.0
  %6192 = vmatpush1.msra.mxu0 0.0
  %6193 = vmatprep.subr.mxu0 0.0
  %6194 = vmatpush1.msra.mxu0 0.0
  %6195 = vmatprep.subr.mxu0 0.0
  %6196 = vmatpush1.msra.mxu0 0.0
  %6197 = vmatprep.subr.mxu0 0.0
  %6198 = vmatpush1.msra.mxu0 0.0
  %6199 = vmatprep.subr.mxu0 0.0
  %6200 = vmatpush1.msra.mxu0 0.0
  %6201 = vmatprep.subr.mxu0 0.0
  %6202 = vmatpush1.msra.mxu0 0.0
  %6203 = vmatprep.subr.mxu0 0.0
  %6204 = vmatpush1.msra.mxu0 0.0
  %6205 = vmatprep.subr.mxu0 0.0
  %6206 = vmatpush1.msra.mxu0 0.0
  %6207 = vmatprep.subr.mxu0 0.0
  %6208 = vmatpush1.msra.mxu0 0.0
  %6209 = vmatprep.subr.mxu0 0.0
  %6210 = vmatpush1.msra.mxu0 0.0
  %6211 = vmatprep.subr.mxu0 0.0
  %6212 = vmatpush1.msra.mxu0 0.0
  %6213 = vmatprep.subr.mxu0 0.0
  %6214 = vmatpush1.msra.mxu0 0.0
  %6215 = vmatprep.subr.mxu0 0.0
  %6216 = vmatpush1.msra.mxu0 0.0
  %6217 = vmatprep.mubr.f32.mxu0 0.0
  %6218 = vmatmul.mubr.f32.gmra.mrb[0].mxu0 %v5323
  %v6219 = vpop.f32.mrb[0].mxu0
  %v6220 = vadd.f32 0.0, %v6219
  %v6221 = vpop.f32.mrb[0].mxu0
  %6222 = vmatprep.mubr.f32.mxu0 0.0
  %6223 = vmatmul.mubr.f32.gmra.mrb[0].mxu0 %v5326
  %v6224 = vpop.f32.mrb[0].mxu0
  %v6225 = vadd.f32 0.0, %v6224
  %v6226 = vpop.f32.mrb[0].mxu0
  %6227 = vdwg.mxu0
  %v6228 = vrcp.pop %v6220
  %v6229 = vmul.f32 %v6074, %v6228
  %v6230 = vrcp.pop %v6225
  %v6231 = vmul.f32 %v6076, %v6230
  %6233 = vset.pattern.permute.xlu0 0
  %6234 = vperm.xlu0 %6233, %v6229
  %v6235 = vpop.permute.xlu0 %6234
  %6238 = vset.pattern.permute.xlu0 0
  %6239 = vperm.xlu0 %6238, %v6231
  %v6240 = vpop.permute.xlu0 %6239
  %v6242 = vmul.f32 %v6235, %v5053
  %v6243 = vmul.f32 %v6240, %v5054
  %6246 = vrot.lane.b32.xlu0 %v6242, 96
  %v6247 = vpop.permute.xlu0 %6246
  %6248 = vrot.lane.b32.xlu0 %v6243, 96
  %v6249 = vpop.permute.xlu0 %6248
  %v6251 = vsel %vm188, %v6249, 0
  %6253 = vmatprep.subr.mxu0 0.0
  %6254 = vmatpush1.msra.mxu0 %v6247
  %6255 = vmatprep.subr.mxu0 0.0
  %6256 = vmatpush1.msra.mxu0 %v6251
  %6257 = vmatprep.subr.mxu0 0.0
  %6258 = vmatpush1.msra.mxu0 0.0
  %6259 = vmatprep.subr.mxu0 0.0
  %6260 = vmatpush1.msra.mxu0 0.0
  %6261 = vmatprep.subr.mxu0 0.0
  %6262 = vmatpush1.msra.mxu0 0.0
  %6263 = vmatprep.subr.mxu0 0.0
  %6264 = vmatpush1.msra.mxu0 0.0
  %6265 = vmatprep.subr.mxu0 0.0
  %6266 = vmatpush1.msra.mxu0 0.0
  %6267 = vmatprep.subr.mxu0 0.0
  %6268 = vmatpush1.msra.mxu0 0.0
  %6269 = vmatprep.subr.mxu0 0.0
  %6270 = vmatpush1.msra.mxu0 0.0
  %6271 = vmatprep.subr.mxu0 0.0
  %6272 = vmatpush1.msra.mxu0 0.0
  %6273 = vmatprep.subr.mxu0 0.0
  %6274 = vmatpush1.msra.mxu0 0.0
  %6275 = vmatprep.subr.mxu0 0.0
  %6276 = vmatpush1.msra.mxu0 0.0
  %6277 = vmatprep.subr.mxu0 0.0
  %6278 = vmatpush1.msra.mxu0 0.0
  %6279 = vmatprep.subr.mxu0 0.0
  %6280 = vmatpush1.msra.mxu0 0.0
  %6281 = vmatprep.subr.mxu0 0.0
  %6282 = vmatpush1.msra.mxu0 0.0
  %6283 = vmatprep.subr.mxu0 0.0
  %6284 = vmatpush1.msra.mxu0 0.0
  %6285 = vmatprep.subr.mxu0 0.0
  %6286 = vmatpush1.msra.mxu0 0.0
  %6287 = vmatprep.subr.mxu0 0.0
  %6288 = vmatpush1.msra.mxu0 0.0
  %6289 = vmatprep.subr.mxu0 0.0
  %6290 = vmatpush1.msra.mxu0 0.0
  %6291 = vmatprep.subr.mxu0 0.0
  %6292 = vmatpush1.msra.mxu0 0.0
  %6293 = vmatprep.subr.mxu0 0.0
  %6294 = vmatpush1.msra.mxu0 0.0
  %6295 = vmatprep.subr.mxu0 0.0
  %6296 = vmatpush1.msra.mxu0 0.0
  %6297 = vmatprep.subr.mxu0 0.0
  %6298 = vmatpush1.msra.mxu0 0.0
  %6299 = vmatprep.subr.mxu0 0.0
  %6300 = vmatpush1.msra.mxu0 0.0
  %6301 = vmatprep.subr.mxu0 0.0
  %6302 = vmatpush1.msra.mxu0 0.0
  %6303 = vmatprep.subr.mxu0 0.0
  %6304 = vmatpush1.msra.mxu0 0.0
  %6305 = vmatprep.subr.mxu0 0.0
  %6306 = vmatpush1.msra.mxu0 0.0
  %6307 = vmatprep.subr.mxu0 0.0
  %6308 = vmatpush1.msra.mxu0 0.0
  %6309 = vmatprep.subr.mxu0 0.0
  %6310 = vmatpush1.msra.mxu0 0.0
  %6311 = vmatprep.subr.mxu0 0.0
  %6312 = vmatpush1.msra.mxu0 0.0
  %6313 = vmatprep.subr.mxu0 0.0
  %6314 = vmatpush1.msra.mxu0 0.0
  %6315 = vmatprep.subr.mxu0 0.0
  %6316 = vmatpush1.msra.mxu0 0.0
  %6317 = vmatprep.mubr.f32.mxu0 0.0
  %6318 = vmatmul.mubr.f32.gmra.mrb[0].mxu0 %v5459
  %v6319 = vpop.f32.mrb[0].mxu0
  %v6320 = vadd.f32 0.0, %v6319
  %v6321 = vpop.f32.mrb[0].mxu0
  %6322 = vdwg.mxu0
  %v6324 = vsel %vm638, %v6320, 0
  %6326 = vmatprep.subr.mxu0 0.0
  %6327 = vmatpush1.msra.mxu0 %v5062
  %6328 = vmatprep.subr.mxu0 0.0
  %6329 = vmatpush1.msra.mxu0 %v5063
  %6330 = vmatprep.subr.mxu0 0.0
  %6331 = vmatpush1.msra.mxu0 %v5064
  %6332 = vmatprep.subr.mxu0 0.0
  %6333 = vmatpush1.msra.mxu0 %v5065
  %6334 = vmatprep.subr.mxu0 0.0
  %6335 = vmatpush1.msra.mxu0 0.0
  %6336 = vmatprep.subr.mxu0 0.0
  %6337 = vmatpush1.msra.mxu0 0.0
  %6338 = vmatprep.subr.mxu0 0.0
  %6339 = vmatpush1.msra.mxu0 0.0
  %6340 = vmatprep.subr.mxu0 0.0
  %6341 = vmatpush1.msra.mxu0 0.0
  %6342 = vmatprep.subr.mxu0 0.0
  %6343 = vmatpush1.msra.mxu0 0.0
  %6344 = vmatprep.subr.mxu0 0.0
  %6345 = vmatpush1.msra.mxu0 0.0
  %6346 = vmatprep.subr.mxu0 0.0
  %6347 = vmatpush1.msra.mxu0 0.0
  %6348 = vmatprep.subr.mxu0 0.0
  %6349 = vmatpush1.msra.mxu0 0.0
  %6350 = vmatprep.subr.mxu0 0.0
  %6351 = vmatpush1.msra.mxu0 0.0
  %6352 = vmatprep.subr.mxu0 0.0
  %6353 = vmatpush1.msra.mxu0 0.0
  %6354 = vmatprep.subr.mxu0 0.0
  %6355 = vmatpush1.msra.mxu0 0.0
  %6356 = vmatprep.subr.mxu0 0.0
  %6357 = vmatpush1.msra.mxu0 0.0
  %6358 = vmatprep.subr.mxu0 0.0
  %6359 = vmatpush1.msra.mxu0 0.0
  %6360 = vmatprep.subr.mxu0 0.0
  %6361 = vmatpush1.msra.mxu0 0.0
  %6362 = vmatprep.subr.mxu0 0.0
  %6363 = vmatpush1.msra.mxu0 0.0
  %6364 = vmatprep.subr.mxu0 0.0
  %6365 = vmatpush1.msra.mxu0 0.0
  %6366 = vmatprep.subr.mxu0 0.0
  %6367 = vmatpush1.msra.mxu0 0.0
  %6368 = vmatprep.subr.mxu0 0.0
  %6369 = vmatpush1.msra.mxu0 0.0
  %6370 = vmatprep.subr.mxu0 0.0
  %6371 = vmatpush1.msra.mxu0 0.0
  %6372 = vmatprep.subr.mxu0 0.0
  %6373 = vmatpush1.msra.mxu0 0.0
  %6374 = vmatprep.subr.mxu0 0.0
  %6375 = vmatpush1.msra.mxu0 0.0
  %6376 = vmatprep.subr.mxu0 0.0
  %6377 = vmatpush1.msra.mxu0 0.0
  %6378 = vmatprep.subr.mxu0 0.0
  %6379 = vmatpush1.msra.mxu0 0.0
  %6380 = vmatprep.subr.mxu0 0.0
  %6381 = vmatpush1.msra.mxu0 0.0
  %6382 = vmatprep.subr.mxu0 0.0
  %6383 = vmatpush1.msra.mxu0 0.0
  %6384 = vmatprep.subr.mxu0 0.0
  %6385 = vmatpush1.msra.mxu0 0.0
  %6386 = vmatprep.subr.mxu0 0.0
  %6387 = vmatpush1.msra.mxu0 0.0
  %6388 = vmatprep.subr.mxu0 0.0
  %6389 = vmatpush1.msra.mxu0 0.0
  %6390 = vmatprep.mubr.f32.mxu0 0.0
  %6391 = vmatmul.mubr.f32.gmra.mrb[0].mxu0 %v6324
  %v6392 = vpop.f32.mrb[0].mxu0
  %v6393 = vadd.f32 0.0, %v6392
  %v6394 = vpop.f32.mrb[0].mxu0
  %6395 = vdwg.mxu0
  %v6396 = vsel %vm638, %v5950, 0
  %6398 = vmatprep.subr.mxu0 0.0
  %6399 = vmatpush1.msra.mxu0 %v5058
  %6400 = vmatprep.subr.mxu0 0.0
  %6401 = vmatpush1.msra.mxu0 %v5059
  %6402 = vmatprep.subr.mxu0 0.0
  %6403 = vmatpush1.msra.mxu0 %v5060
  %6404 = vmatprep.subr.mxu0 0.0
  %6405 = vmatpush1.msra.mxu0 %v5061
  %6406 = vmatprep.subr.mxu0 0.0
  %6407 = vmatpush1.msra.mxu0 0.0
  %6408 = vmatprep.subr.mxu0 0.0
  %6409 = vmatpush1.msra.mxu0 0.0
  %6410 = vmatprep.subr.mxu0 0.0
  %6411 = vmatpush1.msra.mxu0 0.0
  %6412 = vmatprep.subr.mxu0 0.0
  %6413 = vmatpush1.msra.mxu0 0.0
  %6414 = vmatprep.subr.mxu0 0.0
  %6415 = vmatpush1.msra.mxu0 0.0
  %6416 = vmatprep.subr.mxu0 0.0
  %6417 = vmatpush1.msra.mxu0 0.0
  %6418 = vmatprep.subr.mxu0 0.0
  %6419 = vmatpush1.msra.mxu0 0.0
  %6420 = vmatprep.subr.mxu0 0.0
  %6421 = vmatpush1.msra.mxu0 0.0
  %6422 = vmatprep.subr.mxu0 0.0
  %6423 = vmatpush1.msra.mxu0 0.0
  %6424 = vmatprep.subr.mxu0 0.0
  %6425 = vmatpush1.msra.mxu0 0.0
  %6426 = vmatprep.subr.mxu0 0.0
  %6427 = vmatpush1.msra.mxu0 0.0
  %6428 = vmatprep.subr.mxu0 0.0
  %6429 = vmatpush1.msra.mxu0 0.0
  %6430 = vmatprep.subr.mxu0 0.0
  %6431 = vmatpush1.msra.mxu0 0.0
  %6432 = vmatprep.subr.mxu0 0.0
  %6433 = vmatpush1.msra.mxu0 0.0
  %6434 = vmatprep.subr.mxu0 0.0
  %6435 = vmatpush1.msra.mxu0 0.0
  %6436 = vmatprep.subr.mxu0 0.0
  %6437 = vmatpush1.msra.mxu0 0.0
  %6438 = vmatprep.subr.mxu0 0.0
  %6439 = vmatpush1.msra.mxu0 0.0
  %6440 = vmatprep.subr.mxu0 0.0
  %6441 = vmatpush1.msra.mxu0 0.0
  %6442 = vmatprep.subr.mxu0 0.0
  %6443 = vmatpush1.msra.mxu0 0.0
  %6444 = vmatprep.subr.mxu0 0.0
  %6445 = vmatpush1.msra.mxu0 0.0
  %6446 = vmatprep.subr.mxu0 0.0
  %6447 = vmatpush1.msra.mxu0 0.0
  %6448 = vmatprep.subr.mxu0 0.0
  %6449 = vmatpush1.msra.mxu0 0.0
  %6450 = vmatprep.subr.mxu0 0.0
  %6451 = vmatpush1.msra.mxu0 0.0
  %6452 = vmatprep.subr.mxu0 0.0
  %6453 = vmatpush1.msra.mxu0 0.0
  %6454 = vmatprep.subr.mxu0 0.0
  %6455 = vmatpush1.msra.mxu0 0.0
  %6456 = vmatprep.subr.mxu0 0.0
  %6457 = vmatpush1.msra.mxu0 0.0
  %6458 = vmatprep.subr.mxu0 0.0
  %6459 = vmatpush1.msra.mxu0 0.0
  %6460 = vmatprep.subr.mxu0 0.0
  %6461 = vmatpush1.msra.mxu0 0.0
  %6462 = vmatprep.mubr.f32.mxu0 0.0
  %6463 = vmatmul.mubr.f32.gmra.mrb[0].mxu0 %v6396
  %v6464 = vpop.f32.mrb[0].mxu0
  %v6465 = vadd.f32 %v6393, %v6464
  %v6466 = vpop.f32.mrb[0].mxu0
  %6467 = vdwg.mxu0
  %6468 = vmatprep.subr.mxu0 0.0
  %6469 = vmatpush1.msra.mxu0 %v5066
  %6470 = vmatprep.subr.mxu0 0.0
  %6471 = vmatpush1.msra.mxu0 %v5067
  %6472 = vmatprep.subr.mxu0 0.0
  %6473 = vmatpush1.msra.mxu0 %v5068
  %6474 = vmatprep.subr.mxu0 0.0
  %6475 = vmatpush1.msra.mxu0 %v5069
  %6476 = vmatprep.subr.mxu0 0.0
  %6477 = vmatpush1.msra.mxu0 0.0
  %6478 = vmatprep.subr.mxu0 0.0
  %6479 = vmatpush1.msra.mxu0 0.0
  %6480 = vmatprep.subr.mxu0 0.0
  %6481 = vmatpush1.msra.mxu0 0.0
  %6482 = vmatprep.subr.mxu0 0.0
  %6483 = vmatpush1.msra.mxu0 0.0
  %6484 = vmatprep.subr.mxu0 0.0
  %6485 = vmatpush1.msra.mxu0 0.0
  %6486 = vmatprep.subr.mxu0 0.0
  %6487 = vmatpush1.msra.mxu0 0.0
  %6488 = vmatprep.subr.mxu0 0.0
  %6489 = vmatpush1.msra.mxu0 0.0
  %6490 = vmatprep.subr.mxu0 0.0
  %6491 = vmatpush1.msra.mxu0 0.0
  %6492 = vmatprep.subr.mxu0 0.0
  %6493 = vmatpush1.msra.mxu0 0.0
  %6494 = vmatprep.subr.mxu0 0.0
  %6495 = vmatpush1.msra.mxu0 0.0
  %6496 = vmatprep.subr.mxu0 0.0
  %6497 = vmatpush1.msra.mxu0 0.0
  %6498 = vmatprep.subr.mxu0 0.0
  %6499 = vmatpush1.msra.mxu0 0.0
  %6500 = vmatprep.subr.mxu0 0.0
  %6501 = vmatpush1.msra.mxu0 0.0
  %6502 = vmatprep.subr.mxu0 0.0
  %6503 = vmatpush1.msra.mxu0 0.0
  %6504 = vmatprep.subr.mxu0 0.0
  %6505 = vmatpush1.msra.mxu0 0.0
  %6506 = vmatprep.subr.mxu0 0.0
  %6507 = vmatpush1.msra.mxu0 0.0
  %6508 = vmatprep.subr.mxu0 0.0
  %6509 = vmatpush1.msra.mxu0 0.0
  %6510 = vmatprep.subr.mxu0 0.0
  %6511 = vmatpush1.msra.mxu0 0.0
  %6512 = vmatprep.subr.mxu0 0.0
  %6513 = vmatpush1.msra.mxu0 0.0
  %6514 = vmatprep.subr.mxu0 0.0
  %6515 = vmatpush1.msra.mxu0 0.0
  %6516 = vmatprep.subr.mxu0 0.0
  %6517 = vmatpush1.msra.mxu0 0.0
  %6518 = vmatprep.subr.mxu0 0.0
  %6519 = vmatpush1.msra.mxu0 0.0
  %6520 = vmatprep.subr.mxu0 0.0
  %6521 = vmatpush1.msra.mxu0 0.0
  %6522 = vmatprep.subr.mxu0 0.0
  %6523 = vmatpush1.msra.mxu0 0.0
  %6524 = vmatprep.subr.mxu0 0.0
  %6525 = vmatpush1.msra.mxu0 0.0
  %6526 = vmatprep.subr.mxu0 0.0
  %6527 = vmatpush1.msra.mxu0 0.0
  %6528 = vmatprep.subr.mxu0 0.0
  %6529 = vmatpush1.msra.mxu0 0.0
  %6530 = vmatprep.subr.mxu0 0.0
  %6531 = vmatpush1.msra.mxu0 0.0
  %6532 = vmatprep.mubr.f32.mxu0 0.0
  %6533 = vmatmul.mubr.f32.gmra.mrb[0].mxu0 %v6396
  %v6534 = vpop.f32.mrb[0].mxu0
  %v6535 = vadd.f32 0.0, %v6534
  %v6536 = vpop.f32.mrb[0].mxu0
  %6537 = vdwg.mxu0
  %v6538 = vadd.f32 %v6465, %v6535
  %v6539 = vadd.f32 %v6538, %v5291
  %v6540 = vxor.u32 %v6539, 2147483648
  %v6541 = vmul.f32 %v6540, 1.442695
  %v6542 = vpow.pop %v6541
  %v6543 = vadd.f32 %v6542, 1.0
  %v6544 = vrcp.pop %v6543
  %v6545 = vmul.f32 1.0, %v6544
  %v6546 = vtanh.pop %v6539
  %v6547 = vmul.f32 %v6545, %v5941
  %6549 = vrot.lane.b32.xlu0 %v6546, 64
  %v6550 = vpop.permute.xlu0 %6549
  %v6552 = vmul.f32 %v6545, %v6550
  %6554 = vrot.lane.b32.xlu0 %v6552, 32
  %v6555 = vpop.permute.xlu0 %6554
  %v6557 = vadd.f32 %v6547, %v6555
  %v6558 = vtanh.pop %v6557
  %6560 = vrot.lane.b32.xlu0 %v6558, 64
  %v6561 = vpop.permute.xlu0 %6560
  %v6563 = vmul.f32 %v6545, %v6561
  %6565 = vrot.lane.b32.xlu0 %v6563, 32
  %v6566 = vpop.permute.xlu0 %6565
  %v6567 = vsel %vm188, %v6566, 0
  %6569 = vmatprep.subr.mxu0 0.0
  %6570 = vmatpush1.msra.mxu0 %v6567
  %6571 = vmatprep.subr.mxu0 0.0
  %6572 = vmatpush1.msra.mxu0 0.0
  %6573 = vmatprep.subr.mxu0 0.0
  %6574 = vmatpush1.msra.mxu0 0.0
  %6575 = vmatprep.subr.mxu0 0.0
  %6576 = vmatpush1.msra.mxu0 0.0
  %6577 = vmatprep.subr.mxu0 0.0
  %6578 = vmatpush1.msra.mxu0 0.0
  %6579 = vmatprep.subr.mxu0 0.0
  %6580 = vmatpush1.msra.mxu0 0.0
  %6581 = vmatprep.subr.mxu0 0.0
  %6582 = vmatpush1.msra.mxu0 0.0
  %6583 = vmatprep.subr.mxu0 0.0
  %6584 = vmatpush1.msra.mxu0 0.0
  %6585 = vmatprep.subr.mxu0 0.0
  %6586 = vmatpush1.msra.mxu0 0.0
  %6587 = vmatprep.subr.mxu0 0.0
  %6588 = vmatpush1.msra.mxu0 0.0
  %6589 = vmatprep.subr.mxu0 0.0
  %6590 = vmatpush1.msra.mxu0 0.0
  %6591 = vmatprep.subr.mxu0 0.0
  %6592 = vmatpush1.msra.mxu0 0.0
  %6593 = vmatprep.subr.mxu0 0.0
  %6594 = vmatpush1.msra.mxu0 0.0
  %6595 = vmatprep.subr.mxu0 0.0
  %6596 = vmatpush1.msra.mxu0 0.0
  %6597 = vmatprep.subr.mxu0 0.0
  %6598 = vmatpush1.msra.mxu0 0.0
  %6599 = vmatprep.subr.mxu0 0.0
  %6600 = vmatpush1.msra.mxu0 0.0
  %6601 = vmatprep.subr.mxu0 0.0
  %6602 = vmatpush1.msra.mxu0 0.0
  %6603 = vmatprep.subr.mxu0 0.0
  %6604 = vmatpush1.msra.mxu0 0.0
  %6605 = vmatprep.subr.mxu0 0.0
  %6606 = vmatpush1.msra.mxu0 0.0
  %6607 = vmatprep.subr.mxu0 0.0
  %6608 = vmatpush1.msra.mxu0 0.0
  %6609 = vmatprep.subr.mxu0 0.0
  %6610 = vmatpush1.msra.mxu0 0.0
  %6611 = vmatprep.subr.mxu0 0.0
  %6612 = vmatpush1.msra.mxu0 0.0
  %6613 = vmatprep.subr.mxu0 0.0
  %6614 = vmatpush1.msra.mxu0 0.0
  %6615 = vmatprep.subr.mxu0 0.0
  %6616 = vmatpush1.msra.mxu0 0.0
  %6617 = vmatprep.subr.mxu0 0.0
  %6618 = vmatpush1.msra.mxu0 0.0
  %6619 = vmatprep.subr.mxu0 0.0
  %6620 = vmatpush1.msra.mxu0 0.0
  %6621 = vmatprep.subr.mxu0 0.0
  %6622 = vmatpush1.msra.mxu0 0.0
  %6623 = vmatprep.subr.mxu0 0.0
  %6624 = vmatpush1.msra.mxu0 0.0
  %6625 = vmatprep.subr.mxu0 0.0
  %6626 = vmatpush1.msra.mxu0 0.0
  %6627 = vmatprep.subr.mxu0 0.0
  %6628 = vmatpush1.msra.mxu0 0.0
  %6629 = vmatprep.subr.mxu0 0.0
  %6630 = vmatpush1.msra.mxu0 0.0
  %6631 = vmatprep.subr.mxu0 0.0
  %6632 = vmatpush1.msra.mxu0 0.0
  %6633 = vmatprep.mubr.f32.mxu0 0.0
  %6634 = vmatmul.mubr.f32.gmra.mrb[0].mxu0 %v5323
  %v6635 = vpop.f32.mrb[0].mxu0
  %v6636 = vadd.f32 0.0, %v6635
  %v6637 = vpop.f32.mrb[0].mxu0
  %6638 = vmatprep.mubr.f32.mxu0 0.0
  %6639 = vmatmul.mubr.f32.gmra.mrb[0].mxu0 %v5326
  %v6640 = vpop.f32.mrb[0].mxu0
  %v6641 = vadd.f32 0.0, %v6640
  %v6642 = vpop.f32.mrb[0].mxu0
  %6643 = vdwg.mxu0
  %6646 = vrot.lane.b32.xlu0 %v6636, 32
  %v6647 = vpop.permute.xlu0 %6646
  %6648 = vrot.lane.b32.xlu0 %v6641, 32
  %v6649 = vpop.permute.xlu0 %6648
  %v6652 = vmul.f32 %v5053, %v6647
  %v6653 = vmul.f32 %v5054, %v6649
  %6656 = vrot.lane.b32.xlu0 %v6652, 96
  %v6657 = vpop.permute.xlu0 %6656
  %6658 = vrot.lane.b32.xlu0 %v6653, 96
  %v6659 = vpop.permute.xlu0 %6658
  %v6662 = vsel %vm638, %v6657, 0.0
  %6663 = vadd.xlane.f32.xlu0 %v6662
  %v6664 = vpop.xlane.xlu0 %6663
  %v6665 = vsel %vm5426, %v6659, 0.0
  %6666 = vadd.xlane.f32.xlu0 %v6665
  %v6667 = vpop.xlane.xlu0 %6666
  %v6668 = vsel %vm5430, %v6664, -1e+30
  %v6669 = vsel %vm5431, %v6667, -1e+30
  %v6670 = vsel %vm5321, %v6668, -inf
  %v6671 = vsel %vm5435, %v6669, -inf
  %v6672 = vmax.f32 %v6670, %v6671
  %v6673 = vrot.slane %v6672, 4
  %v6674 = vmax.f32 %v6672, %v6673
  %v6675 = vrot.slane %v6674, 2
  %v6676 = vmax.f32 %v6674, %v6675
  %v6677 = vrot.slane %v6676, 1
  %v6678 = vmax.f32 %v6676, %v6677
  %v6679 = vmul.f32 %v5055, %v6678
  %v6680 = vmul.f32 %v5056, %v6678
  %v6681 = vsel %vm5321, %v6679, 0.0
  %6682 = vadd.xlane.f32.xlu0 %v6681
  %v6683 = vpop.xlane.xlu0 %6682
  %v6684 = vsel %vm5435, %v6680, 0.0
  %6685 = vadd.xlane.f32.xlu0 %v6684
  %v6686 = vpop.xlane.xlu0 %6685
  %v6687 = vsub.f32 %v6664, %v6683
  %v6688 = vsub.f32 %v6667, %v6686
  %v6689 = vmul.f32 %v6687, 1.442695
  %v6690 = vpow.pop %v6689
  %v6691 = vmul.f32 %v6688, 1.442695
  %v6692 = vpow.pop %v6691
  %v6694 = vsel %vm188, %v6692, 0
  %6696 = vmatprep.subr.mxu0 0.0
  %6697 = vmatpush1.msra.mxu0 %v6690
  %6698 = vmatprep.subr.mxu0 0.0
  %6699 = vmatpush1.msra.mxu0 %v6694
  %6700 = vmatprep.subr.mxu0 0.0
  %6701 = vmatpush1.msra.mxu0 0.0
  %6702 = vmatprep.subr.mxu0 0.0
  %6703 = vmatpush1.msra.mxu0 0.0
  %6704 = vmatprep.subr.mxu0 0.0
  %6705 = vmatpush1.msra.mxu0 0.0
  %6706 = vmatprep.subr.mxu0 0.0
  %6707 = vmatpush1.msra.mxu0 0.0
  %6708 = vmatprep.subr.mxu0 0.0
  %6709 = vmatpush1.msra.mxu0 0.0
  %6710 = vmatprep.subr.mxu0 0.0
  %6711 = vmatpush1.msra.mxu0 0.0
  %6712 = vmatprep.subr.mxu0 0.0
  %6713 = vmatpush1.msra.mxu0 0.0
  %6714 = vmatprep.subr.mxu0 0.0
  %6715 = vmatpush1.msra.mxu0 0.0
  %6716 = vmatprep.subr.mxu0 0.0
  %6717 = vmatpush1.msra.mxu0 0.0
  %6718 = vmatprep.subr.mxu0 0.0
  %6719 = vmatpush1.msra.mxu0 0.0
  %6720 = vmatprep.subr.mxu0 0.0
  %6721 = vmatpush1.msra.mxu0 0.0
  %6722 = vmatprep.subr.mxu0 0.0
  %6723 = vmatpush1.msra.mxu0 0.0
  %6724 = vmatprep.subr.mxu0 0.0
  %6725 = vmatpush1.msra.mxu0 0.0
  %6726 = vmatprep.subr.mxu0 0.0
  %6727 = vmatpush1.msra.mxu0 0.0
  %6728 = vmatprep.subr.mxu0 0.0
  %6729 = vmatpush1.msra.mxu0 0.0
  %6730 = vmatprep.subr.mxu0 0.0
  %6731 = vmatpush1.msra.mxu0 0.0
  %6732 = vmatprep.subr.mxu0 0.0
  %6733 = vmatpush1.msra.mxu0 0.0
  %6734 = vmatprep.subr.mxu0 0.0
  %6735 = vmatpush1.msra.mxu0 0.0
  %6736 = vmatprep.subr.mxu0 0.0
  %6737 = vmatpush1.msra.mxu0 0.0
  %6738 = vmatprep.subr.mxu0 0.0
  %6739 = vmatpush1.msra.mxu0 0.0
  %6740 = vmatprep.subr.mxu0 0.0
  %6741 = vmatpush1.msra.mxu0 0.0
  %6742 = vmatprep.subr.mxu0 0.0
  %6743 = vmatpush1.msra.mxu0 0.0
  %6744 = vmatprep.subr.mxu0 0.0
  %6745 = vmatpush1.msra.mxu0 0.0
  %6746 = vmatprep.subr.mxu0 0.0
  %6747 = vmatpush1.msra.mxu0 0.0
  %6748 = vmatprep.subr.mxu0 0.0
  %6749 = vmatpush1.msra.mxu0 0.0
  %6750 = vmatprep.subr.mxu0 0.0
  %6751 = vmatpush1.msra.mxu0 0.0
  %6752 = vmatprep.subr.mxu0 0.0
  %6753 = vmatpush1.msra.mxu0 0.0
  %6754 = vmatprep.subr.mxu0 0.0
  %6755 = vmatpush1.msra.mxu0 0.0
  %6756 = vmatprep.subr.mxu0 0.0
  %6757 = vmatpush1.msra.mxu0 0.0
  %6758 = vmatprep.subr.mxu0 0.0
  %6759 = vmatpush1.msra.mxu0 0.0
  %6760 = vmatprep.mubr.f32.mxu0 0.0
  %6761 = vmatmul.mubr.f32.gmra.mrb[0].mxu0 %v5459
  %v6762 = vpop.f32.mrb[0].mxu0
  %v6763 = vadd.f32 0.0, %v6762
  %v6764 = vpop.f32.mrb[0].mxu0
  %6765 = vdwg.mxu0
  %v6767 = vsel %vm188, %v6763, 0
  %6769 = vmatprep.subr.mxu0 0.0
  %6770 = vmatpush1.msra.mxu0 %v6767
  %6771 = vmatprep.subr.mxu0 0.0
  %6772 = vmatpush1.msra.mxu0 0.0
  %6773 = vmatprep.subr.mxu0 0.0
  %6774 = vmatpush1.msra.mxu0 0.0
  %6775 = vmatprep.subr.mxu0 0.0
  %6776 = vmatpush1.msra.mxu0 0.0
  %6777 = vmatprep.subr.mxu0 0.0
  %6778 = vmatpush1.msra.mxu0 0.0
  %6779 = vmatprep.subr.mxu0 0.0
  %6780 = vmatpush1.msra.mxu0 0.0
  %6781 = vmatprep.subr.mxu0 0.0
  %6782 = vmatpush1.msra.mxu0 0.0
  %6783 = vmatprep.subr.mxu0 0.0
  %6784 = vmatpush1.msra.mxu0 0.0
  %6785 = vmatprep.subr.mxu0 0.0
  %6786 = vmatpush1.msra.mxu0 0.0
  %6787 = vmatprep.subr.mxu0 0.0
  %6788 = vmatpush1.msra.mxu0 0.0
  %6789 = vmatprep.subr.mxu0 0.0
  %6790 = vmatpush1.msra.mxu0 0.0
  %6791 = vmatprep.subr.mxu0 0.0
  %6792 = vmatpush1.msra.mxu0 0.0
  %6793 = vmatprep.subr.mxu0 0.0
  %6794 = vmatpush1.msra.mxu0 0.0
  %6795 = vmatprep.subr.mxu0 0.0
  %6796 = vmatpush1.msra.mxu0 0.0
  %6797 = vmatprep.subr.mxu0 0.0
  %6798 = vmatpush1.msra.mxu0 0.0
  %6799 = vmatprep.subr.mxu0 0.0
  %6800 = vmatpush1.msra.mxu0 0.0
  %6801 = vmatprep.subr.mxu0 0.0
  %6802 = vmatpush1.msra.mxu0 0.0
  %6803 = vmatprep.subr.mxu0 0.0
  %6804 = vmatpush1.msra.mxu0 0.0
  %6805 = vmatprep.subr.mxu0 0.0
  %6806 = vmatpush1.msra.mxu0 0.0
  %6807 = vmatprep.subr.mxu0 0.0
  %6808 = vmatpush1.msra.mxu0 0.0
  %6809 = vmatprep.subr.mxu0 0.0
  %6810 = vmatpush1.msra.mxu0 0.0
  %6811 = vmatprep.subr.mxu0 0.0
  %6812 = vmatpush1.msra.mxu0 0.0
  %6813 = vmatprep.subr.mxu0 0.0
  %6814 = vmatpush1.msra.mxu0 0.0
  %6815 = vmatprep.subr.mxu0 0.0
  %6816 = vmatpush1.msra.mxu0 0.0
  %6817 = vmatprep.subr.mxu0 0.0
  %6818 = vmatpush1.msra.mxu0 0.0
  %6819 = vmatprep.subr.mxu0 0.0
  %6820 = vmatpush1.msra.mxu0 0.0
  %6821 = vmatprep.subr.mxu0 0.0
  %6822 = vmatpush1.msra.mxu0 0.0
  %6823 = vmatprep.subr.mxu0 0.0
  %6824 = vmatpush1.msra.mxu0 0.0
  %6825 = vmatprep.subr.mxu0 0.0
  %6826 = vmatpush1.msra.mxu0 0.0
  %6827 = vmatprep.subr.mxu0 0.0
  %6828 = vmatpush1.msra.mxu0 0.0
  %6829 = vmatprep.subr.mxu0 0.0
  %6830 = vmatpush1.msra.mxu0 0.0
  %6831 = vmatprep.subr.mxu0 0.0
  %6832 = vmatpush1.msra.mxu0 0.0
  %6833 = vmatprep.mubr.f32.mxu0 0.0
  %6834 = vmatmul.mubr.f32.gmra.mrb[0].mxu0 %v5323
  %v6835 = vpop.f32.mrb[0].mxu0
  %v6836 = vadd.f32 0.0, %v6835
  %v6837 = vpop.f32.mrb[0].mxu0
  %6838 = vmatprep.mubr.f32.mxu0 0.0
  %6839 = vmatmul.mubr.f32.gmra.mrb[0].mxu0 %v5326
  %v6840 = vpop.f32.mrb[0].mxu0
  %v6841 = vadd.f32 0.0, %v6840
  %v6842 = vpop.f32.mrb[0].mxu0
  %6843 = vdwg.mxu0
  %v6844 = vrcp.pop %v6836
  %v6845 = vmul.f32 %v6690, %v6844
  %v6846 = vrcp.pop %v6841
  %v6847 = vmul.f32 %v6692, %v6846
  %6849 = vset.pattern.permute.xlu0 0
  %6850 = vperm.xlu0 %6849, %v6845
  %v6851 = vpop.permute.xlu0 %6850
  %6854 = vset.pattern.permute.xlu0 0
  %6855 = vperm.xlu0 %6854, %v6847
  %v6856 = vpop.permute.xlu0 %6855
  %v6858 = vmul.f32 %v6851, %v5053
  %v6859 = vmul.f32 %v6856, %v5054
  %6862 = vrot.lane.b32.xlu0 %v6858, 96
  %v6863 = vpop.permute.xlu0 %6862
  %6864 = vrot.lane.b32.xlu0 %v6859, 96
  %v6865 = vpop.permute.xlu0 %6864
  %v6867 = vsel %vm188, %v6865, 0
  %6869 = vmatprep.subr.mxu0 0.0
  %6870 = vmatpush1.msra.mxu0 %v6863
  %6871 = vmatprep.subr.mxu0 0.0
  %6872 = vmatpush1.msra.mxu0 %v6867
  %6873 = vmatprep.subr.mxu0 0.0
  %6874 = vmatpush1.msra.mxu0 0.0
  %6875 = vmatprep.subr.mxu0 0.0
  %6876 = vmatpush1.msra.mxu0 0.0
  %6877 = vmatprep.subr.mxu0 0.0
  %6878 = vmatpush1.msra.mxu0 0.0
  %6879 = vmatprep.subr.mxu0 0.0
  %6880 = vmatpush1.msra.mxu0 0.0
  %6881 = vmatprep.subr.mxu0 0.0
  %6882 = vmatpush1.msra.mxu0 0.0
  %6883 = vmatprep.subr.mxu0 0.0
  %6884 = vmatpush1.msra.mxu0 0.0
  %6885 = vmatprep.subr.mxu0 0.0
  %6886 = vmatpush1.msra.mxu0 0.0
  %6887 = vmatprep.subr.mxu0 0.0
  %6888 = vmatpush1.msra.mxu0 0.0
  %6889 = vmatprep.subr.mxu0 0.0
  %6890 = vmatpush1.msra.mxu0 0.0
  %6891 = vmatprep.subr.mxu0 0.0
  %6892 = vmatpush1.msra.mxu0 0.0
  %6893 = vmatprep.subr.mxu0 0.0
  %6894 = vmatpush1.msra.mxu0 0.0
  %6895 = vmatprep.subr.mxu0 0.0
  %6896 = vmatpush1.msra.mxu0 0.0
  %6897 = vmatprep.subr.mxu0 0.0
  %6898 = vmatpush1.msra.mxu0 0.0
  %6899 = vmatprep.subr.mxu0 0.0
  %6900 = vmatpush1.msra.mxu0 0.0
  %6901 = vmatprep.subr.mxu0 0.0
  %6902 = vmatpush1.msra.mxu0 0.0
  %6903 = vmatprep.subr.mxu0 0.0
  %6904 = vmatpush1.msra.mxu0 0.0
  %6905 = vmatprep.subr.mxu0 0.0
  %6906 = vmatpush1.msra.mxu0 0.0
  %6907 = vmatprep.subr.mxu0 0.0
  %6908 = vmatpush1.msra.mxu0 0.0
  %6909 = vmatprep.subr.mxu0 0.0
  %6910 = vmatpush1.msra.mxu0 0.0
  %6911 = vmatprep.subr.mxu0 0.0
  %6912 = vmatpush1.msra.mxu0 0.0
  %6913 = vmatprep.subr.mxu0 0.0
  %6914 = vmatpush1.msra.mxu0 0.0
  %6915 = vmatprep.subr.mxu0 0.0
  %6916 = vmatpush1.msra.mxu0 0.0
  %6917 = vmatprep.subr.mxu0 0.0
  %6918 = vmatpush1.msra.mxu0 0.0
  %6919 = vmatprep.subr.mxu0 0.0
  %6920 = vmatpush1.msra.mxu0 0.0
  %6921 = vmatprep.subr.mxu0 0.0
  %6922 = vmatpush1.msra.mxu0 0.0
  %6923 = vmatprep.subr.mxu0 0.0
  %6924 = vmatpush1.msra.mxu0 0.0
  %6925 = vmatprep.subr.mxu0 0.0
  %6926 = vmatpush1.msra.mxu0 0.0
  %6927 = vmatprep.subr.mxu0 0.0
  %6928 = vmatpush1.msra.mxu0 0.0
  %6929 = vmatprep.subr.mxu0 0.0
  %6930 = vmatpush1.msra.mxu0 0.0
  %6931 = vmatprep.subr.mxu0 0.0
  %6932 = vmatpush1.msra.mxu0 0.0
  %6933 = vmatprep.mubr.f32.mxu0 0.0
  %6934 = vmatmul.mubr.f32.gmra.mrb[0].mxu0 %v5459
  %v6935 = vpop.f32.mrb[0].mxu0
  %v6936 = vadd.f32 0.0, %v6935
  %v6937 = vpop.f32.mrb[0].mxu0
  %6938 = vdwg.mxu0
  %v6939 = vld [vmem:[%s15] sm:$0xff]
  %v6940 = vld [vmem:[%s15 + $0x8] sm:$0xff]
  %v6941 = vld [vmem:[%s15 + $0x10] sm:$0xff]
  %v6942 = vld [vmem:[%s15 + $0x18] sm:$0xff]
  %v6943 = vld [vmem:[%s15 + $0x20] sm:$0xff]
  %v6944 = vld [vmem:[%s15 + $0x28] sm:$0xff]
  %v6945 = vld [vmem:[%s15 + $0x30] sm:$0xff]
  %v6946 = vld [vmem:[%s15 + $0x38] sm:$0xff]
  %v6948 = vsel %vm638, %v6936, 0
  %6950 = vmatprep.subr.mxu0 0.0
  %6951 = vmatpush1.msra.mxu0 %v6943
  %6952 = vmatprep.subr.mxu0 0.0
  %6953 = vmatpush1.msra.mxu0 %v6944
  %6954 = vmatprep.subr.mxu0 0.0
  %6955 = vmatpush1.msra.mxu0 %v6945
  %6956 = vmatprep.subr.mxu0 0.0
  %6957 = vmatpush1.msra.mxu0 %v6946
  %6958 = vmatprep.subr.mxu0 0.0
  %6959 = vmatpush1.msra.mxu0 0.0
  %6960 = vmatprep.subr.mxu0 0.0
  %6961 = vmatpush1.msra.mxu0 0.0
  %6962 = vmatprep.subr.mxu0 0.0
  %6963 = vmatpush1.msra.mxu0 0.0
  %6964 = vmatprep.subr.mxu0 0.0
  %6965 = vmatpush1.msra.mxu0 0.0
  %6966 = vmatprep.subr.mxu0 0.0
  %6967 = vmatpush1.msra.mxu0 0.0
  %6968 = vmatprep.subr.mxu0 0.0
  %6969 = vmatpush1.msra.mxu0 0.0
  %6970 = vmatprep.subr.mxu0 0.0
  %6971 = vmatpush1.msra.mxu0 0.0
  %6972 = vmatprep.subr.mxu0 0.0
  %6973 = vmatpush1.msra.mxu0 0.0
  %6974 = vmatprep.subr.mxu0 0.0
  %6975 = vmatpush1.msra.mxu0 0.0
  %6976 = vmatprep.subr.mxu0 0.0
  %6977 = vmatpush1.msra.mxu0 0.0
  %6978 = vmatprep.subr.mxu0 0.0
  %6979 = vmatpush1.msra.mxu0 0.0
  %6980 = vmatprep.subr.mxu0 0.0
  %6981 = vmatpush1.msra.mxu0 0.0
  %6982 = vmatprep.subr.mxu0 0.0
  %6983 = vmatpush1.msra.mxu0 0.0
  %6984 = vmatprep.subr.mxu0 0.0
  %6985 = vmatpush1.msra.mxu0 0.0
  %6986 = vmatprep.subr.mxu0 0.0
  %6987 = vmatpush1.msra.mxu0 0.0
  %6988 = vmatprep.subr.mxu0 0.0
  %6989 = vmatpush1.msra.mxu0 0.0
  %6990 = vmatprep.subr.mxu0 0.0
  %6991 = vmatpush1.msra.mxu0 0.0
  %6992 = vmatprep.subr.mxu0 0.0
  %6993 = vmatpush1.msra.mxu0 0.0
  %6994 = vmatprep.subr.mxu0 0.0
  %6995 = vmatpush1.msra.mxu0 0.0
  %6996 = vmatprep.subr.mxu0 0.0
  %6997 = vmatpush1.msra.mxu0 0.0
  %6998 = vmatprep.subr.mxu0 0.0
  %6999 = vmatpush1.msra.mxu0 0.0
  %7000 = vmatprep.subr.mxu0 0.0
  %7001 = vmatpush1.msra.mxu0 0.0
  %7002 = vmatprep.subr.mxu0 0.0
  %7003 = vmatpush1.msra.mxu0 0.0
  %7004 = vmatprep.subr.mxu0 0.0
  %7005 = vmatpush1.msra.mxu0 0.0
  %7006 = vmatprep.subr.mxu0 0.0
  %7007 = vmatpush1.msra.mxu0 0.0
  %7008 = vmatprep.subr.mxu0 0.0
  %7009 = vmatpush1.msra.mxu0 0.0
  %7010 = vmatprep.subr.mxu0 0.0
  %7011 = vmatpush1.msra.mxu0 0.0
  %7012 = vmatprep.subr.mxu0 0.0
  %7013 = vmatpush1.msra.mxu0 0.0
  %7014 = vmatprep.mubr.f32.mxu0 0.0
  %7015 = vmatmul.mubr.f32.gmra.mrb[0].mxu0 %v6948
  %v7016 = vpop.f32.mrb[0].mxu0
  %v7017 = vadd.f32 0.0, %v7016
  %v7018 = vpop.f32.mrb[0].mxu0
  %7019 = vdwg.mxu0
  %v7020 = vsel %vm638, %v6566, 0
  %7022 = vmatprep.subr.mxu0 0.0
  %7023 = vmatpush1.msra.mxu0 %v6939
  %7024 = vmatprep.subr.mxu0 0.0
  %7025 = vmatpush1.msra.mxu0 %v6940
  %7026 = vmatprep.subr.mxu0 0.0
  %7027 = vmatpush1.msra.mxu0 %v6941
  %7028 = vmatprep.subr.mxu0 0.0
  %7029 = vmatpush1.msra.mxu0 %v6942
  %7030 = vmatprep.subr.mxu0 0.0
  %7031 = vmatpush1.msra.mxu0 0.0
  %7032 = vmatprep.subr.mxu0 0.0
  %7033 = vmatpush1.msra.mxu0 0.0
  %7034 = vmatprep.subr.mxu0 0.0
  %7035 = vmatpush1.msra.mxu0 0.0
  %7036 = vmatprep.subr.mxu0 0.0
  %7037 = vmatpush1.msra.mxu0 0.0
  %7038 = vmatprep.subr.mxu0 0.0
  %7039 = vmatpush1.msra.mxu0 0.0
  %7040 = vmatprep.subr.mxu0 0.0
  %7041 = vmatpush1.msra.mxu0 0.0
  %7042 = vmatprep.subr.mxu0 0.0
  %7043 = vmatpush1.msra.mxu0 0.0
  %7044 = vmatprep.subr.mxu0 0.0
  %7045 = vmatpush1.msra.mxu0 0.0
  %7046 = vmatprep.subr.mxu0 0.0
  %7047 = vmatpush1.msra.mxu0 0.0
  %7048 = vmatprep.subr.mxu0 0.0
  %7049 = vmatpush1.msra.mxu0 0.0
  %7050 = vmatprep.subr.mxu0 0.0
  %7051 = vmatpush1.msra.mxu0 0.0
  %7052 = vmatprep.subr.mxu0 0.0
  %7053 = vmatpush1.msra.mxu0 0.0
  %7054 = vmatprep.subr.mxu0 0.0
  %7055 = vmatpush1.msra.mxu0 0.0
  %7056 = vmatprep.subr.mxu0 0.0
  %7057 = vmatpush1.msra.mxu0 0.0
  %7058 = vmatprep.subr.mxu0 0.0
  %7059 = vmatpush1.msra.mxu0 0.0
  %7060 = vmatprep.subr.mxu0 0.0
  %7061 = vmatpush1.msra.mxu0 0.0
  %7062 = vmatprep.subr.mxu0 0.0
  %7063 = vmatpush1.msra.mxu0 0.0
  %7064 = vmatprep.subr.mxu0 0.0
  %7065 = vmatpush1.msra.mxu0 0.0
  %7066 = vmatprep.subr.mxu0 0.0
  %7067 = vmatpush1.msra.mxu0 0.0
  %7068 = vmatprep.subr.mxu0 0.0
  %7069 = vmatpush1.msra.mxu0 0.0
  %7070 = vmatprep.subr.mxu0 0.0
  %7071 = vmatpush1.msra.mxu0 0.0
  %7072 = vmatprep.subr.mxu0 0.0
  %7073 = vmatpush1.msra.mxu0 0.0
  %7074 = vmatprep.subr.mxu0 0.0
  %7075 = vmatpush1.msra.mxu0 0.0
  %7076 = vmatprep.subr.mxu0 0.0
  %7077 = vmatpush1.msra.mxu0 0.0
  %7078 = vmatprep.subr.mxu0 0.0
  %7079 = vmatpush1.msra.mxu0 0.0
  %7080 = vmatprep.subr.mxu0 0.0
  %7081 = vmatpush1.msra.mxu0 0.0
  %7082 = vmatprep.subr.mxu0 0.0
  %7083 = vmatpush1.msra.mxu0 0.0
  %7084 = vmatprep.subr.mxu0 0.0
  %7085 = vmatpush1.msra.mxu0 0.0
  %7086 = vmatprep.mubr.f32.mxu0 0.0
  %7087 = vmatmul.mubr.f32.gmra.mrb[0].mxu0 %v7020
  %v7088 = vpop.f32.mrb[0].mxu0
  %v7089 = vadd.f32 %v7017, %v7088
  %v7090 = vpop.f32.mrb[0].mxu0
  %7091 = vdwg.mxu0
  %v7092 = vld [vmem:[%s16] sm:$0x1]
  %v7094 = vlaneseq
  %v7095 = vshrl.u32 %v7094, 7
  %v7096 = vsub.s32 0, %v7095
  %v7097 = vrot.slane %v7092, %v7096
  %v7099 = vadd.f32 %v7089, %v7097
  %v7100 = vmax.f32 %v7099, 0.0
  %v7101 = vld [vmem:[%s17] sm:$0xff]
  %v7102 = vld [vmem:[%s17 + $0x8] sm:$0xff]
  %v7103 = vld [vmem:[%s17 + $0x10] sm:$0xff]
  %v7104 = vld [vmem:[%s17 + $0x18] sm:$0xff]
  %v7105 = vld [vmem:[#allocation2] sm:$0x1]
  %v7107 = vlaneseq
  %v7108 = vshrl.u32 %v7107, 7
  %v7109 = vsub.s32 0, %v7108
  %v7110 = vrot.slane %v7105, %v7109
  %v7113 = vsel %vm638, %v7100, 0
  %7115 = vmatprep.subr.mxu0 0.0
  %7116 = vmatpush1.msra.mxu0 %v7101
  %7117 = vmatprep.subr.mxu0 0.0
  %7118 = vmatpush1.msra.mxu0 %v7102
  %7119 = vmatprep.subr.mxu0 0.0
  %7120 = vmatpush1.msra.mxu0 %v7103
  %7121 = vmatprep.subr.mxu0 0.0
  %7122 = vmatpush1.msra.mxu0 %v7104
  %7123 = vmatprep.subr.mxu0 0.0
  %7124 = vmatpush1.msra.mxu0 0.0
  %7125 = vmatprep.subr.mxu0 0.0
  %7126 = vmatpush1.msra.mxu0 0.0
  %7127 = vmatprep.subr.mxu0 0.0
  %7128 = vmatpush1.msra.mxu0 0.0
  %7129 = vmatprep.subr.mxu0 0.0
  %7130 = vmatpush1.msra.mxu0 0.0
  %7131 = vmatprep.subr.mxu0 0.0
  %7132 = vmatpush1.msra.mxu0 0.0
  %7133 = vmatprep.subr.mxu0 0.0
  %7134 = vmatpush1.msra.mxu0 0.0
  %7135 = vmatprep.subr.mxu0 0.0
  %7136 = vmatpush1.msra.mxu0 0.0
  %7137 = vmatprep.subr.mxu0 0.0
  %7138 = vmatpush1.msra.mxu0 0.0
  %7139 = vmatprep.subr.mxu0 0.0
  %7140 = vmatpush1.msra.mxu0 0.0
  %7141 = vmatprep.subr.mxu0 0.0
  %7142 = vmatpush1.msra.mxu0 0.0
  %7143 = vmatprep.subr.mxu0 0.0
  %7144 = vmatpush1.msra.mxu0 0.0
  %7145 = vmatprep.subr.mxu0 0.0
  %7146 = vmatpush1.msra.mxu0 0.0
  %7147 = vmatprep.subr.mxu0 0.0
  %7148 = vmatpush1.msra.mxu0 0.0
  %7149 = vmatprep.subr.mxu0 0.0
  %7150 = vmatpush1.msra.mxu0 0.0
  %7151 = vmatprep.subr.mxu0 0.0
  %7152 = vmatpush1.msra.mxu0 0.0
  %7153 = vmatprep.subr.mxu0 0.0
  %7154 = vmatpush1.msra.mxu0 0.0
  %7155 = vmatprep.subr.mxu0 0.0
  %7156 = vmatpush1.msra.mxu0 0.0
  %7157 = vmatprep.subr.mxu0 0.0
  %7158 = vmatpush1.msra.mxu0 0.0
  %7159 = vmatprep.subr.mxu0 0.0
  %7160 = vmatpush1.msra.mxu0 0.0
  %7161 = vmatprep.subr.mxu0 0.0
  %7162 = vmatpush1.msra.mxu0 0.0
  %7163 = vmatprep.subr.mxu0 0.0
  %7164 = vmatpush1.msra.mxu0 0.0
  %7165 = vmatprep.subr.mxu0 0.0
  %7166 = vmatpush1.msra.mxu0 0.0
  %7167 = vmatprep.subr.mxu0 0.0
  %7168 = vmatpush1.msra.mxu0 0.0
  %7169 = vmatprep.subr.mxu0 0.0
  %7170 = vmatpush1.msra.mxu0 0.0
  %7171 = vmatprep.subr.mxu0 0.0
  %7172 = vmatpush1.msra.mxu0 0.0
  %7173 = vmatprep.subr.mxu0 0.0
  %7174 = vmatpush1.msra.mxu0 0.0
  %7175 = vmatprep.subr.mxu0 0.0
  %7176 = vmatpush1.msra.mxu0 0.0
  %7177 = vmatprep.subr.mxu0 0.0
  %7178 = vmatpush1.msra.mxu0 0.0
  %7179 = vmatprep.mubr.f32.mxu0 0.0
  %7180 = vmatmul.mubr.f32.gmra.mrb[0].mxu0 %v7113
  %v7181 = vpop.f32.mrb[0].mxu0
  %v7182 = vadd.f32 %v7110, %v7181
  %v7183 = vpop.f32.mrb[0].mxu0
  %7184 = vdwg.mxu0
  %vm7185 = vcmask 1024
  %7186 = vst.msk [vmem:[%s19] sm:$0x3] %vm7185, %v7182
  // Predicated region
  $region78: #{net_forward.3} parent=0 // pred_check
    _
  $region79: #{net_forward.3} parent=0 // pred_check_branch
    %7188 = sbr.rel (0) target = $region81
  $region80: #{net_forward.3} parent=0 // pred_region
    _
  $region81: #{net_forward.3} parent=0 // pred_fallthru
    _
  // Predicated region
  $region82: #{net_forward.3} parent=0 // pred_check
    _
  $region83: #{net_forward.3} parent=0 // pred_check_branch
    %7190 = sbr.rel (0) target = $region85
  $region84: #{net_forward.3} parent=0 // pred_region
    _
  $region85: #{net_forward.3} parent=0 // pred_fallthru
    _

</llo_original>
